<compile_context>
chip_gen: v7x
topology: tpu7x:2x2x1
jax: 0.10.0
libtpu: 0.0.40
codegen_flags: <defaults>
</compile_context>

<pallas_src>
import jax
import jax.numpy as jnp
import numpy as np
from jax.experimental import pallas as pl
from jax.experimental.pallas import tpu as pltpu


# ----------------------------------------------------------------------------
# Fused Pallas kernel: whole forward pass for one batch tile
# ----------------------------------------------------------------------------
def _mnist_fused_kernel(x_ref, t1_ref, b1_ref, t2_ref, b2_ref,
                        fw1_ref, fb1_ref, fw2_ref, fb2_ref,
                        o_ref,
                        c1_scr, h1_scr, c2_scr, h2_scr):
    """Shapes (bn = batch tile):
       x_ref:   (bn, 28, 28) f32    raw image rows
       t1_ref:  (5, 28, 256) bf16   conv1 Toeplitz: [dy, k, p*128 + j*10 + c]
       b1_ref:  (1, 128) f32        conv1 bias tiled over j (lanes 120.. = 0)
       t2_ref:  (5, 128, 256) bf16  conv2 Toeplitz: [dy, j*10+ci, p*128+q*20+co]
       b2_ref:  (1, 128) f32        conv2 bias tiled over q (lanes 80.. = 0)
       fw1_ref: (4, 128, 128) bf16  fc1 split per pooled row i2
       fb1_ref: (1, 128) f32        fc1 bias (lanes 50.. = 0)
       fw2_ref: (128, 128) bf16     fc2 (rows 50.., cols 10.. = 0)
       fb2_ref: (1, 128) f32        fc2 bias (lanes 10.. = -1e9 -> masked)
       o_ref:   (bn, 128) f32       log-probs in lanes 0..9 (lane-dense store)
    """
    bn = x_ref.shape[0]
    f32 = jnp.float32
    bf16 = jnp.bfloat16

    # ---- Stage 1: conv1 as 5 Toeplitz GEMMs on the MXU ----------------------
    # rows = (n, y) y in 0..23, cols = p1x*128 + j*10 + c  (j = pooled col)
    cf = None
    for dy in range(5):
        a = x_ref[:, dy:dy + 24, :].reshape(bn * 24, 28).astype(bf16)
        d = jnp.dot(a, t1_ref[dy], preferred_element_type=f32)
        cf = d if cf is None else cf + d                      # (bn*24, 256)
    # 2x2 max-pool, x direction: aligned 128-lane halves (free slices).
    xm = jnp.maximum(cf[:, :128], cf[:, 128:])                # (bn*24, 128)
    c1_scr[...] = xm.reshape(bn, 24, 128)
    # 2x2 max-pool, y direction: stride-2 sublane reads from VMEM scratch.
    ym = jnp.maximum(c1_scr[:, pl.ds(0, 12, stride=2), :],
                     c1_scr[:, pl.ds(1, 12, stride=2), :])    # (bn, 12, 128)
    # relu(maxpool(conv)+b) == relu(max(conv)+b) for a per-channel bias.
    h1_scr[...] = jnp.maximum(ym + b1_ref[...], 0.0)          # lanes j*10+c

    # ---- Stage 2: conv2 as 5 Toeplitz GEMMs ---------------------------------
    # conv2_drop (Dropout2d) is identity in eval mode.
    # rows = (n, i') i' in 0..7, cols = p2x*128 + q*20 + co  (q = pooled col)
    cf2 = None
    for dy in range(5):
        a2 = h1_scr[:, dy:dy + 8, :].reshape(bn * 8, 128).astype(bf16)
        d2 = jnp.dot(a2, t2_ref[dy], preferred_element_type=f32)
        cf2 = d2 if cf2 is None else cf2 + d2                 # (bn*8, 256)
    xm2 = jnp.maximum(cf2[:, :128], cf2[:, 128:])             # (bn*8, 128)
    c2_scr[...] = xm2.reshape(bn, 8, 128)
    ym2 = jnp.maximum(c2_scr[:, pl.ds(0, 4, stride=2), :],
                      c2_scr[:, pl.ds(1, 4, stride=2), :])    # (bn, 4, 128)
    h2_scr[...] = jnp.maximum(ym2 + b2_ref[...], 0.0)         # lanes q*20+co

    # ---- Head: fc1 as 4 accumulated dots (no flatten/concat), fc2, lsm ------
    acc = jnp.zeros((bn, 128), f32)
    for r in range(4):                                        # pooled row i2
        acc = acc + jnp.dot(h2_scr[:, r, :].astype(bf16), fw1_ref[r],
                            preferred_element_type=f32)
    h3 = jnp.maximum(acc + fb1_ref[...], 0.0).astype(bf16)    # (bn, 128)
    logits = jnp.dot(h3, fw2_ref[...],
                     preferred_element_type=f32) + fb2_ref[...]   # (bn, 128)
    # Dead lanes carry -1e9 bias -> exp() underflows to 0, softmax unaffected.
    mx = jnp.max(logits, axis=-1, keepdims=True)
    lse = mx + jnp.log(jnp.sum(jnp.exp(logits - mx), axis=-1, keepdims=True))
    o_ref[...] = logits - lse


# ----------------------------------------------------------------------------
# Parameter prep (host side, traced under jit): Toeplitz / split GEMM weights
# ----------------------------------------------------------------------------
def _prep_params(params):
    f32, bf16 = jnp.float32, jnp.bfloat16
    w1 = params["conv1_w"].astype(f32)[:, 0]          # (10, 5, 5)   (c, dy, dx)
    b1 = params["conv1_b"].astype(f32)                # (10,)
    w2 = params["conv2_w"].astype(f32)                # (20, 10, 5, 5)
    b2 = params["conv2_b"].astype(f32)                # (20,)
    fw1 = params["fc1_w"].astype(f32)                 # (50, 320)
    fb1 = params["fc1_b"].astype(f32)                 # (50,)
    fw2 = params["fc2_w"].astype(f32)                 # (10, 50)
    fb2 = params["fc2_b"].astype(f32)                 # (10,)

    # conv1 Toeplitz: T1[dy, k, p*128 + j*10 + c] = w1[c, dy, k - (2j + p)]
    dx = np.arange(5)[:, None, None, None]
    k = np.arange(28)[None, :, None, None]
    j = np.arange(12)[None, None, :, None]
    p = np.arange(2)[None, None, None, :]
    S1 = (k == 2 * j + p + dx).astype(np.float32)             # (5, 28, 12, 2)
    T1 = jnp.einsum("cyx,xkjp->ykpjc", w1, jnp.asarray(S1))   # (5,28,2,12,10)
    T1 = jnp.pad(T1.reshape(5, 28, 2, 120), ((0, 0), (0, 0), (0, 0), (0, 8)))
    T1 = T1.reshape(5, 28, 256).astype(bf16)

    b1t = jnp.pad(jnp.tile(b1, 12), (0, 8)).reshape(1, 128)

    # conv2 Toeplitz: T2[dy, j*10+ci, p*128 + q*20 + co] = w2[co,ci,dy, j-(2q+p)]
    dx = np.arange(5)[:, None, None, None]
    j = np.arange(12)[None, :, None, None]
    p = np.arange(2)[None, None, :, None]
    q = np.arange(4)[None, None, None, :]
    S2 = (j == 2 * q + p + dx).astype(np.float32)             # (5, 12, 2, 4)
    T2 = jnp.einsum("oiyx,xjpq->yjipqo", w2, jnp.asarray(S2))  # (5,12,10,2,4,20)
    T2 = jnp.pad(T2.reshape(5, 120, 2, 80), ((0, 0), (0, 8), (0, 0), (0, 48)))
    T2 = T2.reshape(5, 128, 256).astype(bf16)

    b2t = jnp.pad(jnp.tile(b2, 4), (0, 48)).reshape(1, 128)

    # fc1 split per pooled row i2: FW1[i2, j2*20+co, u] = fc1_w[u, co*16+i2*4+j2]
    FW1 = fw1.reshape(50, 20, 4, 4)                   # (u, co, i2, j2)
    FW1 = FW1.transpose(2, 3, 1, 0).reshape(4, 80, 50)
    FW1 = jnp.pad(FW1, ((0, 0), (0, 48), (0, 78))).astype(bf16)   # (4,128,128)
    fb1p = jnp.pad(fb1, (0, 78)).reshape(1, 128)

    FW2 = jnp.pad(fw2.T, ((0, 78), (0, 118))).astype(bf16)        # (128, 128)
    fb2p = jnp.concatenate([fb2, jnp.full((118,), -1e9, f32)]).reshape(1, 128)

    return T1, b1t, T2, b2t, FW1, fb1p, FW2, fb2p


# ----------------------------------------------------------------------------
# Wrapper: batch-tiled 1-D grid, pipelined BlockSpecs, resident weights
# ----------------------------------------------------------------------------
def net_forward(x_nchw, params, *, block_n=128):
    # Keep >= 2 grid steps per TensorCore on v7x by choosing block_n <= n/4
    # for large batches; v6e/v5e can raise block_n / vmem further.
    assert block_n % 8 == 0
    n = x_nchw.shape[0]
    assert x_nchw.shape[1:] == (1, 28, 28)
    x = x_nchw.astype(jnp.float32).reshape(n, 28, 28)

    n_pad = ((n + block_n - 1) // block_n) * block_n
    if n_pad != n:
        x = jnp.pad(x, ((0, n_pad - n), (0, 0), (0, 0)))

    T1, b1t, T2, b2t, FW1, fb1p, FW2, fb2p = _prep_params(params)

    grid = (n_pad // block_n,)
    flops = 2 * n_pad * (5 * 24 * 28 * 256 + 5 * 8 * 128 * 256
                         + 4 * 128 * 128 + 128 * 128)
    bytes_accessed = int(
        n_pad * (28 * 28 + 128) * 4
        + (T1.size + T2.size + FW1.size + FW2.size) * 2
        + (b1t.size + b2t.size + fb1p.size + fb2p.size) * 4)

    out = pl.pallas_call(
        _mnist_fused_kernel,
        out_shape=jax.ShapeDtypeStruct((n_pad, 128), jnp.float32),
        grid=grid,
        in_specs=[
            pl.BlockSpec((block_n, 28, 28), lambda i: (i, 0, 0)),
            pl.BlockSpec((5, 28, 256), lambda i: (0, 0, 0)),
            pl.BlockSpec((1, 128), lambda i: (0, 0)),
            pl.BlockSpec((5, 128, 256), lambda i: (0, 0, 0)),
            pl.BlockSpec((1, 128), lambda i: (0, 0)),
            pl.BlockSpec((4, 128, 128), lambda i: (0, 0, 0)),
            pl.BlockSpec((1, 128), lambda i: (0, 0)),
            pl.BlockSpec((128, 128), lambda i: (0, 0)),
            pl.BlockSpec((1, 128), lambda i: (0, 0)),
        ],
        out_specs=pl.BlockSpec((block_n, 128), lambda i: (i, 0)),
        scratch_shapes=[
            pltpu.VMEM((block_n, 24, 128), jnp.float32),   # conv1 x-pooled
            pltpu.VMEM((block_n, 12, 128), jnp.float32),   # h1
            pltpu.VMEM((block_n, 8, 128), jnp.float32),    # conv2 x-pooled
            pltpu.VMEM((block_n, 4, 128), jnp.float32),    # h2
        ],
        compiler_params=pltpu.CompilerParams(
            dimension_semantics=("parallel",),
            vmem_limit_bytes=48 * 1024 * 1024,   # sized for v7x's 64 MiB VMEM
        ),
        cost_estimate=pl.CostEstimate(
            flops=flops, transcendentals=129 * n_pad,
            bytes_accessed=bytes_accessed),
    )(x, T1, b1t, T2, b2t, FW1, fb1p, FW2, fb2p)
    return out[:n, :10]


# ----------------------------------------------------------------------------
# Pure-JAX reference (matches the PyTorch eval-mode forward exactly)
# ----------------------------------------------------------------------------
def reference_forward(x_nchw, params):
    x = x_nchw.astype(jnp.float32)

    def conv(z, w, b):
        y = jax.lax.conv_general_dilated(
            z, w.astype(jnp.float32), window_strides=(1, 1), padding="VALID",
            dimension_numbers=("NCHW", "OIHW", "NCHW"))
        return y + b.reshape(1, -1, 1, 1)

    def pool(z):
        return jax.lax.reduce_window(
            z, -jnp.inf, jax.lax.max, (1, 1, 2, 2), (1, 1, 2, 2), "VALID")

    h = jax.nn.relu(pool(conv(x, params["conv1_w"], params["conv1_b"])))
    h = jax.nn.relu(pool(conv(h, params["conv2_w"], params["conv2_b"])))
    h = h.reshape(h.shape[0], 320)
    h = jax.nn.relu(h @ params["fc1_w"].T + params["fc1_b"])
    logits = h @ params["fc2_w"].T + params["fc2_b"]
    return jax.nn.log_softmax(logits, axis=-1)


def init_params(key):
    ks = jax.random.split(key, 8)
    s = 0.1
    return {
        "conv1_w": s * jax.random.normal(ks[0], (10, 1, 5, 5), jnp.float32),
        "conv1_b": s * jax.random.normal(ks[1], (10,), jnp.float32),
        "conv2_w": s * jax.random.normal(ks[2], (20, 10, 5, 5), jnp.float32),
        "conv2_b": s * jax.random.normal(ks[3], (20,), jnp.float32),
        "fc1_w": s * jax.random.normal(ks[4], (50, 320), jnp.float32),
        "fc1_b": s * jax.random.normal(ks[5], (50,), jnp.float32),
        "fc2_w": s * jax.random.normal(ks[6], (10, 50), jnp.float32),
        "fc2_b": s * jax.random.normal(ks[7], (10,), jnp.float32),
    }


if __name__ == "__main__":
    key = jax.random.PRNGKey(0)
    kx, kp = jax.random.split(key)
    x = jax.random.normal(kx, (50, 1, 28, 28), jnp.float32)   # pads to 2 tiles
    params = init_params(kp)

    fwd = jax.jit(lambda a, p: net_forward(a, p, block_n=32))
    out = jax.block_until_ready(fwd(x, params))

    assert out.shape == (50, 10)
    # log_softmax rows should (numerically) sum to 1 after exp
    assert bool(jnp.all(jnp.abs(jnp.sum(jnp.exp(out), axis=-1) - 1.0) < 1e-3))
    # match the full-precision reference (kernel uses bf16 on the MXU path)
    ref = jax.jit(reference_forward)(x, params)
    err = float(jnp.max(jnp.abs(out - ref)))
    assert err < 2.5e-1, f"max abs err vs reference: {err}"
    agree = float(jnp.mean(
        (jnp.argmax(out, -1) == jnp.argmax(ref, -1)).astype(jnp.float32)))
    assert agree >= 0.9, f"top-1 agreement vs reference too low: {agree}"
    print("KERNEL_OK")
</pallas_src>

<mosaic_0001>
module attributes {stable_mosaic.version = 11 : i64} {
  func.func @_mnist_fused_kernel(%arg0: i32, %arg1: memref<32x28x28xf32, #tpu.memory_space<vmem>>, %arg2: memref<5x28x256xbf16, #tpu.memory_space<vmem>>, %arg3: memref<1x128xf32, #tpu.memory_space<vmem>>, %arg4: memref<5x128x256xbf16, #tpu.memory_space<vmem>>, %arg5: memref<1x128xf32, #tpu.memory_space<vmem>>, %arg6: memref<4x128x128xbf16, #tpu.memory_space<vmem>>, %arg7: memref<1x128xf32, #tpu.memory_space<vmem>>, %arg8: memref<128x128xbf16, #tpu.memory_space<vmem>>, %arg9: memref<1x128xf32, #tpu.memory_space<vmem>>, %arg10: memref<32x128xf32, #tpu.memory_space<vmem>>, %arg11: memref<32x24x128xf32, #tpu.memory_space<vmem>>, %arg12: memref<32x12x128xf32, #tpu.memory_space<vmem>>, %arg13: memref<32x8x128xf32, #tpu.memory_space<vmem>>, %arg14: memref<32x4x128xf32, #tpu.memory_space<vmem>>) attributes {dimension_semantics = [#tpu.dimension_semantics<parallel>], iteration_bounds = array<i64: 2>, scalar_prefetch = 0 : i64, scratch_operands = 4 : i64, tpu.core_type = #tpu.core_type<tc>, window_params = [{transform_indices = @transform_0, window_bounds = array<i64: 32, 28, 28>}, {pipeline_mode = #tpu.pipeline_mode<synchronous>, transform_indices = @transform_1, window_bounds = array<i64: 5, 28, 256>}, {pipeline_mode = #tpu.pipeline_mode<synchronous>, transform_indices = @transform_2, window_bounds = array<i64: 1, 128>}, {pipeline_mode = #tpu.pipeline_mode<synchronous>, transform_indices = @transform_3, window_bounds = array<i64: 5, 128, 256>}, {pipeline_mode = #tpu.pipeline_mode<synchronous>, transform_indices = @transform_4, window_bounds = array<i64: 1, 128>}, {pipeline_mode = #tpu.pipeline_mode<synchronous>, transform_indices = @transform_5, window_bounds = array<i64: 4, 128, 128>}, {pipeline_mode = #tpu.pipeline_mode<synchronous>, transform_indices = @transform_6, window_bounds = array<i64: 1, 128>}, {pipeline_mode = #tpu.pipeline_mode<synchronous>, transform_indices = @transform_7, window_bounds = array<i64: 128, 128>}, {pipeline_mode = #tpu.pipeline_mode<synchronous>, transform_indices = @transform_8, window_bounds = array<i64: 1, 128>}, {transform_indices = @transform_9, window_bounds = array<i64: 32, 128>}]} {
    %c0 = arith.constant 0 : index
    %c0_0 = arith.constant 0 : index
    %c0_1 = arith.constant 0 : index
    %0 = vector.load %arg1[%c0, %c0_0, %c0_1] : memref<32x28x28xf32, #tpu.memory_space<vmem>>, vector<32x24x28xf32>
    %1 = vector.shape_cast %0 : vector<32x24x28xf32> to vector<768x28xf32>
    %2 = arith.truncf %1 : vector<768x28xf32> to vector<768x28xbf16>
    %c0_2 = arith.constant 0 : index
    %c0_3 = arith.constant 0 : index
    %c0_4 = arith.constant 0 : index
    %3 = vector.load %arg2[%c0_2, %c0_3, %c0_4] : memref<5x28x256xbf16, #tpu.memory_space<vmem>>, vector<1x28x256xbf16>
    %4 = vector.shape_cast %3 : vector<1x28x256xbf16> to vector<28x256xbf16>
    %cst = arith.constant dense<0.000000e+00> : vector<768x256xf32>
    %5 = tpu.matmul %2, %4, %cst {dimension_numbers = #tpu.dot_dimension_numbers<[1], [0], [0], [1], [0, 0, 1, 1], [], []>} : vector<768x28xbf16>, vector<28x256xbf16>, vector<768x256xf32> -> vector<768x256xf32>
    %c0_5 = arith.constant 0 : index
    %c1 = arith.constant 1 : index
    %c0_6 = arith.constant 0 : index
    %6 = vector.load %arg1[%c0_5, %c1, %c0_6] : memref<32x28x28xf32, #tpu.memory_space<vmem>>, vector<32x24x28xf32>
    %7 = vector.shape_cast %6 : vector<32x24x28xf32> to vector<768x28xf32>
    %8 = arith.truncf %7 : vector<768x28xf32> to vector<768x28xbf16>
    %c1_7 = arith.constant 1 : index
    %c0_8 = arith.constant 0 : index
    %c0_9 = arith.constant 0 : index
    %9 = vector.load %arg2[%c1_7, %c0_8, %c0_9] : memref<5x28x256xbf16, #tpu.memory_space<vmem>>, vector<1x28x256xbf16>
    %10 = vector.shape_cast %9 : vector<1x28x256xbf16> to vector<28x256xbf16>
    %cst_10 = arith.constant dense<0.000000e+00> : vector<768x256xf32>
    %11 = tpu.matmul %8, %10, %cst_10 {dimension_numbers = #tpu.dot_dimension_numbers<[1], [0], [0], [1], [0, 0, 1, 1], [], []>} : vector<768x28xbf16>, vector<28x256xbf16>, vector<768x256xf32> -> vector<768x256xf32>
    %12 = arith.addf %5, %11 : vector<768x256xf32>
    %c0_11 = arith.constant 0 : index
    %c2 = arith.constant 2 : index
    %c0_12 = arith.constant 0 : index
    %13 = vector.load %arg1[%c0_11, %c2, %c0_12] : memref<32x28x28xf32, #tpu.memory_space<vmem>>, vector<32x24x28xf32>
    %14 = vector.shape_cast %13 : vector<32x24x28xf32> to vector<768x28xf32>
    %15 = arith.truncf %14 : vector<768x28xf32> to vector<768x28xbf16>
    %c2_13 = arith.constant 2 : index
    %c0_14 = arith.constant 0 : index
    %c0_15 = arith.constant 0 : index
    %16 = vector.load %arg2[%c2_13, %c0_14, %c0_15] : memref<5x28x256xbf16, #tpu.memory_space<vmem>>, vector<1x28x256xbf16>
    %17 = vector.shape_cast %16 : vector<1x28x256xbf16> to vector<28x256xbf16>
    %cst_16 = arith.constant dense<0.000000e+00> : vector<768x256xf32>
    %18 = tpu.matmul %15, %17, %cst_16 {dimension_numbers = #tpu.dot_dimension_numbers<[1], [0], [0], [1], [0, 0, 1, 1], [], []>} : vector<768x28xbf16>, vector<28x256xbf16>, vector<768x256xf32> -> vector<768x256xf32>
    %19 = arith.addf %12, %18 : vector<768x256xf32>
    %c0_17 = arith.constant 0 : index
    %c3 = arith.constant 3 : index
    %c0_18 = arith.constant 0 : index
    %20 = vector.load %arg1[%c0_17, %c3, %c0_18] : memref<32x28x28xf32, #tpu.memory_space<vmem>>, vector<32x24x28xf32>
    %21 = vector.shape_cast %20 : vector<32x24x28xf32> to vector<768x28xf32>
    %22 = arith.truncf %21 : vector<768x28xf32> to vector<768x28xbf16>
    %c3_19 = arith.constant 3 : index
    %c0_20 = arith.constant 0 : index
    %c0_21 = arith.constant 0 : index
    %23 = vector.load %arg2[%c3_19, %c0_20, %c0_21] : memref<5x28x256xbf16, #tpu.memory_space<vmem>>, vector<1x28x256xbf16>
    %24 = vector.shape_cast %23 : vector<1x28x256xbf16> to vector<28x256xbf16>
    %cst_22 = arith.constant dense<0.000000e+00> : vector<768x256xf32>
    %25 = tpu.matmul %22, %24, %cst_22 {dimension_numbers = #tpu.dot_dimension_numbers<[1], [0], [0], [1], [0, 0, 1, 1], [], []>} : vector<768x28xbf16>, vector<28x256xbf16>, vector<768x256xf32> -> vector<768x256xf32>
    %26 = arith.addf %19, %25 : vector<768x256xf32>
    %c0_23 = arith.constant 0 : index
    %c4 = arith.constant 4 : index
    %c0_24 = arith.constant 0 : index
    %27 = vector.load %arg1[%c0_23, %c4, %c0_24] : memref<32x28x28xf32, #tpu.memory_space<vmem>>, vector<32x24x28xf32>
    %28 = vector.shape_cast %27 : vector<32x24x28xf32> to vector<768x28xf32>
    %29 = arith.truncf %28 : vector<768x28xf32> to vector<768x28xbf16>
    %c4_25 = arith.constant 4 : index
    %c0_26 = arith.constant 0 : index
    %c0_27 = arith.constant 0 : index
    %30 = vector.load %arg2[%c4_25, %c0_26, %c0_27] : memref<5x28x256xbf16, #tpu.memory_space<vmem>>, vector<1x28x256xbf16>
    %31 = vector.shape_cast %30 : vector<1x28x256xbf16> to vector<28x256xbf16>
    %cst_28 = arith.constant dense<0.000000e+00> : vector<768x256xf32>
    %32 = tpu.matmul %29, %31, %cst_28 {dimension_numbers = #tpu.dot_dimension_numbers<[1], [0], [0], [1], [0, 0, 1, 1], [], []>} : vector<768x28xbf16>, vector<28x256xbf16>, vector<768x256xf32> -> vector<768x256xf32>
    %33 = arith.addf %26, %32 : vector<768x256xf32>
    %34 = vector.extract_strided_slice %33 {offsets = [0, 0], sizes = [768, 128], strides = [1, 1]} : vector<768x256xf32> to vector<768x128xf32>
    %35 = vector.extract_strided_slice %33 {offsets = [0, 128], sizes = [768, 128], strides = [1, 1]} : vector<768x256xf32> to vector<768x128xf32>
    %36 = arith.maximumf %34, %35 : vector<768x128xf32>
    %37 = vector.shape_cast %36 : vector<768x128xf32> to vector<32x24x128xf32>
    %c0_29 = arith.constant 0 : index
    %c0_30 = arith.constant 0 : index
    %c0_31 = arith.constant 0 : index
    %38 = vector.load %arg11[%c0_29, %c0_30, %c0_31] : memref<32x24x128xf32, #tpu.memory_space<vmem>>, vector<32x24x128xf32>
    tpu.vector_store %arg11[%c0_29, %c0_30, %c0_31], %37 {strides = array<i32>} : memref<32x24x128xf32, #tpu.memory_space<vmem>>, vector<32x24x128xf32>,
    %c0_32 = arith.constant 0 : index
    %c0_33 = arith.constant 0 : index
    %c0_34 = arith.constant 0 : index
    %39 = tpu.strided_load %arg11[%c0_32, %c0_33, %c0_34] {strides = array<i32: 1, 2, 1>} : memref<32x24x128xf32, #tpu.memory_space<vmem>>, vector<32x12x128xf32>
    %c0_35 = arith.constant 0 : index
    %c1_36 = arith.constant 1 : index
    %c0_37 = arith.constant 0 : index
    %40 = tpu.strided_load %arg11[%c0_35, %c1_36, %c0_37] {strides = array<i32: 1, 2, 1>} : memref<32x24x128xf32, #tpu.memory_space<vmem>>, vector<32x12x128xf32>
    %41 = arith.maximumf %39, %40 : vector<32x12x128xf32>
    %c0_38 = arith.constant 0 : index
    %c0_39 = arith.constant 0 : index
    %42 = vector.load %arg3[%c0_38, %c0_39] : memref<1x128xf32, #tpu.memory_space<vmem>>, vector<1x128xf32>
    %43 = vector.shape_cast %42 : vector<1x128xf32> to vector<1x1x128xf32>
    %44 = vector.broadcast %43 : vector<1x1x128xf32> to vector<32x12x128xf32>
    %45 = arith.addf %41, %44 : vector<32x12x128xf32>
    %cst_40 = arith.constant 0.000000e+00 : f32
    %46 = vector.broadcast %cst_40 : f32 to vector<32x12x128xf32>
    %47 = arith.maximumf %45, %46 : vector<32x12x128xf32>
    %c0_41 = arith.constant 0 : index
    %c0_42 = arith.constant 0 : index
    %c0_43 = arith.constant 0 : index
    %48 = vector.load %arg12[%c0_41, %c0_42, %c0_43] : memref<32x12x128xf32, #tpu.memory_space<vmem>>, vector<32x12x128xf32>
    tpu.vector_store %arg12[%c0_41, %c0_42, %c0_43], %47 {strides = array<i32>} : memref<32x12x128xf32, #tpu.memory_space<vmem>>, vector<32x12x128xf32>,
    %c0_44 = arith.constant 0 : index
    %c0_45 = arith.constant 0 : index
    %c0_46 = arith.constant 0 : index
    %49 = vector.load %arg12[%c0_44, %c0_45, %c0_46] : memref<32x12x128xf32, #tpu.memory_space<vmem>>, vector<32x8x128xf32>
    %50 = vector.shape_cast %49 : vector<32x8x128xf32> to vector<256x128xf32>
    %51 = arith.truncf %50 : vector<256x128xf32> to vector<256x128xbf16>
    %c0_47 = arith.constant 0 : index
    %c0_48 = arith.constant 0 : index
    %c0_49 = arith.constant 0 : index
    %52 = vector.load %arg4[%c0_47, %c0_48, %c0_49] : memref<5x128x256xbf16, #tpu.memory_space<vmem>>, vector<1x128x256xbf16>
    %53 = vector.shape_cast %52 : vector<1x128x256xbf16> to vector<128x256xbf16>
    %cst_50 = arith.constant dense<0.000000e+00> : vector<256x256xf32>
    %54 = tpu.matmul %51, %53, %cst_50 {dimension_numbers = #tpu.dot_dimension_numbers<[1], [0], [0], [1], [0, 0, 1, 1], [], []>} : vector<256x128xbf16>, vector<128x256xbf16>, vector<256x256xf32> -> vector<256x256xf32>
    %c0_51 = arith.constant 0 : index
    %c1_52 = arith.constant 1 : index
    %c0_53 = arith.constant 0 : index
    %55 = vector.load %arg12[%c0_51, %c1_52, %c0_53] : memref<32x12x128xf32, #tpu.memory_space<vmem>>, vector<32x8x128xf32>
    %56 = vector.shape_cast %55 : vector<32x8x128xf32> to vector<256x128xf32>
    %57 = arith.truncf %56 : vector<256x128xf32> to vector<256x128xbf16>
    %c1_54 = arith.constant 1 : index
    %c0_55 = arith.constant 0 : index
    %c0_56 = arith.constant 0 : index
    %58 = vector.load %arg4[%c1_54, %c0_55, %c0_56] : memref<5x128x256xbf16, #tpu.memory_space<vmem>>, vector<1x128x256xbf16>
    %59 = vector.shape_cast %58 : vector<1x128x256xbf16> to vector<128x256xbf16>
    %cst_57 = arith.constant dense<0.000000e+00> : vector<256x256xf32>
    %60 = tpu.matmul %57, %59, %cst_57 {dimension_numbers = #tpu.dot_dimension_numbers<[1], [0], [0], [1], [0, 0, 1, 1], [], []>} : vector<256x128xbf16>, vector<128x256xbf16>, vector<256x256xf32> -> vector<256x256xf32>
    %61 = arith.addf %54, %60 : vector<256x256xf32>
    %c0_58 = arith.constant 0 : index
    %c2_59 = arith.constant 2 : index
    %c0_60 = arith.constant 0 : index
    %62 = vector.load %arg12[%c0_58, %c2_59, %c0_60] : memref<32x12x128xf32, #tpu.memory_space<vmem>>, vector<32x8x128xf32>
    %63 = vector.shape_cast %62 : vector<32x8x128xf32> to vector<256x128xf32>
    %64 = arith.truncf %63 : vector<256x128xf32> to vector<256x128xbf16>
    %c2_61 = arith.constant 2 : index
    %c0_62 = arith.constant 0 : index
    %c0_63 = arith.constant 0 : index
    %65 = vector.load %arg4[%c2_61, %c0_62, %c0_63] : memref<5x128x256xbf16, #tpu.memory_space<vmem>>, vector<1x128x256xbf16>
    %66 = vector.shape_cast %65 : vector<1x128x256xbf16> to vector<128x256xbf16>
    %cst_64 = arith.constant dense<0.000000e+00> : vector<256x256xf32>
    %67 = tpu.matmul %64, %66, %cst_64 {dimension_numbers = #tpu.dot_dimension_numbers<[1], [0], [0], [1], [0, 0, 1, 1], [], []>} : vector<256x128xbf16>, vector<128x256xbf16>, vector<256x256xf32> -> vector<256x256xf32>
    %68 = arith.addf %61, %67 : vector<256x256xf32>
    %c0_65 = arith.constant 0 : index
    %c3_66 = arith.constant 3 : index
    %c0_67 = arith.constant 0 : index
    %69 = vector.load %arg12[%c0_65, %c3_66, %c0_67] : memref<32x12x128xf32, #tpu.memory_space<vmem>>, vector<32x8x128xf32>
    %70 = vector.shape_cast %69 : vector<32x8x128xf32> to vector<256x128xf32>
    %71 = arith.truncf %70 : vector<256x128xf32> to vector<256x128xbf16>
    %c3_68 = arith.constant 3 : index
    %c0_69 = arith.constant 0 : index
    %c0_70 = arith.constant 0 : index
    %72 = vector.load %arg4[%c3_68, %c0_69, %c0_70] : memref<5x128x256xbf16, #tpu.memory_space<vmem>>, vector<1x128x256xbf16>
    %73 = vector.shape_cast %72 : vector<1x128x256xbf16> to vector<128x256xbf16>
    %cst_71 = arith.constant dense<0.000000e+00> : vector<256x256xf32>
    %74 = tpu.matmul %71, %73, %cst_71 {dimension_numbers = #tpu.dot_dimension_numbers<[1], [0], [0], [1], [0, 0, 1, 1], [], []>} : vector<256x128xbf16>, vector<128x256xbf16>, vector<256x256xf32> -> vector<256x256xf32>
    %75 = arith.addf %68, %74 : vector<256x256xf32>
    %c0_72 = arith.constant 0 : index
    %c4_73 = arith.constant 4 : index
    %c0_74 = arith.constant 0 : index
    %76 = vector.load %arg12[%c0_72, %c4_73, %c0_74] : memref<32x12x128xf32, #tpu.memory_space<vmem>>, vector<32x8x128xf32>
    %77 = vector.shape_cast %76 : vector<32x8x128xf32> to vector<256x128xf32>
    %78 = arith.truncf %77 : vector<256x128xf32> to vector<256x128xbf16>
    %c4_75 = arith.constant 4 : index
    %c0_76 = arith.constant 0 : index
    %c0_77 = arith.constant 0 : index
    %79 = vector.load %arg4[%c4_75, %c0_76, %c0_77] : memref<5x128x256xbf16, #tpu.memory_space<vmem>>, vector<1x128x256xbf16>
    %80 = vector.shape_cast %79 : vector<1x128x256xbf16> to vector<128x256xbf16>
    %cst_78 = arith.constant dense<0.000000e+00> : vector<256x256xf32>
    %81 = tpu.matmul %78, %80, %cst_78 {dimension_numbers = #tpu.dot_dimension_numbers<[1], [0], [0], [1], [0, 0, 1, 1], [], []>} : vector<256x128xbf16>, vector<128x256xbf16>, vector<256x256xf32> -> vector<256x256xf32>
    %82 = arith.addf %75, %81 : vector<256x256xf32>
    %83 = vector.extract_strided_slice %82 {offsets = [0, 0], sizes = [256, 128], strides = [1, 1]} : vector<256x256xf32> to vector<256x128xf32>
    %84 = vector.extract_strided_slice %82 {offsets = [0, 128], sizes = [256, 128], strides = [1, 1]} : vector<256x256xf32> to vector<256x128xf32>
    %85 = arith.maximumf %83, %84 : vector<256x128xf32>
    %86 = vector.shape_cast %85 : vector<256x128xf32> to vector<32x8x128xf32>
    %c0_79 = arith.constant 0 : index
    %c0_80 = arith.constant 0 : index
    %c0_81 = arith.constant 0 : index
    %87 = vector.load %arg13[%c0_79, %c0_80, %c0_81] : memref<32x8x128xf32, #tpu.memory_space<vmem>>, vector<32x8x128xf32>
    tpu.vector_store %arg13[%c0_79, %c0_80, %c0_81], %86 {strides = array<i32>} : memref<32x8x128xf32, #tpu.memory_space<vmem>>, vector<32x8x128xf32>,
    %c0_82 = arith.constant 0 : index
    %c0_83 = arith.constant 0 : index
    %c0_84 = arith.constant 0 : index
    %88 = tpu.strided_load %arg13[%c0_82, %c0_83, %c0_84] {strides = array<i32: 1, 2, 1>} : memref<32x8x128xf32, #tpu.memory_space<vmem>>, vector<32x4x128xf32>
    %c0_85 = arith.constant 0 : index
    %c1_86 = arith.constant 1 : index
    %c0_87 = arith.constant 0 : index
    %89 = tpu.strided_load %arg13[%c0_85, %c1_86, %c0_87] {strides = array<i32: 1, 2, 1>} : memref<32x8x128xf32, #tpu.memory_space<vmem>>, vector<32x4x128xf32>
    %90 = arith.maximumf %88, %89 : vector<32x4x128xf32>
    %c0_88 = arith.constant 0 : index
    %c0_89 = arith.constant 0 : index
    %91 = vector.load %arg5[%c0_88, %c0_89] : memref<1x128xf32, #tpu.memory_space<vmem>>, vector<1x128xf32>
    %92 = vector.shape_cast %91 : vector<1x128xf32> to vector<1x1x128xf32>
    %93 = vector.broadcast %92 : vector<1x1x128xf32> to vector<32x4x128xf32>
    %94 = arith.addf %90, %93 : vector<32x4x128xf32>
    %cst_90 = arith.constant 0.000000e+00 : f32
    %95 = vector.broadcast %cst_90 : f32 to vector<32x4x128xf32>
    %96 = arith.maximumf %94, %95 : vector<32x4x128xf32>
    %c0_91 = arith.constant 0 : index
    %c0_92 = arith.constant 0 : index
    %c0_93 = arith.constant 0 : index
    %97 = vector.load %arg14[%c0_91, %c0_92, %c0_93] : memref<32x4x128xf32, #tpu.memory_space<vmem>>, vector<32x4x128xf32>
    tpu.vector_store %arg14[%c0_91, %c0_92, %c0_93], %96 {strides = array<i32>} : memref<32x4x128xf32, #tpu.memory_space<vmem>>, vector<32x4x128xf32>,
    %cst_94 = arith.constant 0.000000e+00 : f32
    %98 = vector.broadcast %cst_94 : f32 to vector<32x128xf32>
    %c0_95 = arith.constant 0 : index
    %c0_96 = arith.constant 0 : index
    %c0_97 = arith.constant 0 : index
    %99 = vector.load %arg14[%c0_95, %c0_96, %c0_97] : memref<32x4x128xf32, #tpu.memory_space<vmem>>, vector<32x1x128xf32>
    %100 = vector.shape_cast %99 : vector<32x1x128xf32> to vector<32x128xf32>
    %101 = arith.truncf %100 : vector<32x128xf32> to vector<32x128xbf16>
    %c0_98 = arith.constant 0 : index
    %c0_99 = arith.constant 0 : index
    %c0_100 = arith.constant 0 : index
    %102 = vector.load %arg6[%c0_98, %c0_99, %c0_100] : memref<4x128x128xbf16, #tpu.memory_space<vmem>>, vector<1x128x128xbf16>
    %103 = vector.shape_cast %102 : vector<1x128x128xbf16> to vector<128x128xbf16>
    %cst_101 = arith.constant dense<0.000000e+00> : vector<32x128xf32>
    %104 = tpu.matmul %101, %103, %cst_101 {dimension_numbers = #tpu.dot_dimension_numbers<[1], [0], [0], [1], [0, 0, 1, 1], [], []>} : vector<32x128xbf16>, vector<128x128xbf16>, vector<32x128xf32> -> vector<32x128xf32>
    %105 = arith.addf %98, %104 : vector<32x128xf32>
    %c0_102 = arith.constant 0 : index
    %c1_103 = arith.constant 1 : index
    %c0_104 = arith.constant 0 : index
    %106 = vector.load %arg14[%c0_102, %c1_103, %c0_104] : memref<32x4x128xf32, #tpu.memory_space<vmem>>, vector<32x1x128xf32>
    %107 = vector.shape_cast %106 : vector<32x1x128xf32> to vector<32x128xf32>
    %108 = arith.truncf %107 : vector<32x128xf32> to vector<32x128xbf16>
    %c1_105 = arith.constant 1 : index
    %c0_106 = arith.constant 0 : index
    %c0_107 = arith.constant 0 : index
    %109 = vector.load %arg6[%c1_105, %c0_106, %c0_107] : memref<4x128x128xbf16, #tpu.memory_space<vmem>>, vector<1x128x128xbf16>
    %110 = vector.shape_cast %109 : vector<1x128x128xbf16> to vector<128x128xbf16>
    %cst_108 = arith.constant dense<0.000000e+00> : vector<32x128xf32>
    %111 = tpu.matmul %108, %110, %cst_108 {dimension_numbers = #tpu.dot_dimension_numbers<[1], [0], [0], [1], [0, 0, 1, 1], [], []>} : vector<32x128xbf16>, vector<128x128xbf16>, vector<32x128xf32> -> vector<32x128xf32>
    %112 = arith.addf %105, %111 : vector<32x128xf32>
    %c0_109 = arith.constant 0 : index
    %c2_110 = arith.constant 2 : index
    %c0_111 = arith.constant 0 : index
    %113 = vector.load %arg14[%c0_109, %c2_110, %c0_111] : memref<32x4x128xf32, #tpu.memory_space<vmem>>, vector<32x1x128xf32>
    %114 = vector.shape_cast %113 : vector<32x1x128xf32> to vector<32x128xf32>
    %115 = arith.truncf %114 : vector<32x128xf32> to vector<32x128xbf16>
    %c2_112 = arith.constant 2 : index
    %c0_113 = arith.constant 0 : index
    %c0_114 = arith.constant 0 : index
    %116 = vector.load %arg6[%c2_112, %c0_113, %c0_114] : memref<4x128x128xbf16, #tpu.memory_space<vmem>>, vector<1x128x128xbf16>
    %117 = vector.shape_cast %116 : vector<1x128x128xbf16> to vector<128x128xbf16>
    %cst_115 = arith.constant dense<0.000000e+00> : vector<32x128xf32>
    %118 = tpu.matmul %115, %117, %cst_115 {dimension_numbers = #tpu.dot_dimension_numbers<[1], [0], [0], [1], [0, 0, 1, 1], [], []>} : vector<32x128xbf16>, vector<128x128xbf16>, vector<32x128xf32> -> vector<32x128xf32>
    %119 = arith.addf %112, %118 : vector<32x128xf32>
    %c0_116 = arith.constant 0 : index
    %c3_117 = arith.constant 3 : index
    %c0_118 = arith.constant 0 : index
    %120 = vector.load %arg14[%c0_116, %c3_117, %c0_118] : memref<32x4x128xf32, #tpu.memory_space<vmem>>, vector<32x1x128xf32>
    %121 = vector.shape_cast %120 : vector<32x1x128xf32> to vector<32x128xf32>
    %122 = arith.truncf %121 : vector<32x128xf32> to vector<32x128xbf16>
    %c3_119 = arith.constant 3 : index
    %c0_120 = arith.constant 0 : index
    %c0_121 = arith.constant 0 : index
    %123 = vector.load %arg6[%c3_119, %c0_120, %c0_121] : memref<4x128x128xbf16, #tpu.memory_space<vmem>>, vector<1x128x128xbf16>
    %124 = vector.shape_cast %123 : vector<1x128x128xbf16> to vector<128x128xbf16>
    %cst_122 = arith.constant dense<0.000000e+00> : vector<32x128xf32>
    %125 = tpu.matmul %122, %124, %cst_122 {dimension_numbers = #tpu.dot_dimension_numbers<[1], [0], [0], [1], [0, 0, 1, 1], [], []>} : vector<32x128xbf16>, vector<128x128xbf16>, vector<32x128xf32> -> vector<32x128xf32>
    %126 = arith.addf %119, %125 : vector<32x128xf32>
    %c0_123 = arith.constant 0 : index
    %c0_124 = arith.constant 0 : index
    %127 = vector.load %arg7[%c0_123, %c0_124] : memref<1x128xf32, #tpu.memory_space<vmem>>, vector<1x128xf32>
    %128 = vector.broadcast %127 : vector<1x128xf32> to vector<32x128xf32>
    %129 = arith.addf %126, %128 : vector<32x128xf32>
    %cst_125 = arith.constant 0.000000e+00 : f32
    %130 = vector.broadcast %cst_125 : f32 to vector<32x128xf32>
    %131 = arith.maximumf %129, %130 : vector<32x128xf32>
    %132 = arith.truncf %131 : vector<32x128xf32> to vector<32x128xbf16>
    %c0_126 = arith.constant 0 : index
    %c0_127 = arith.constant 0 : index
    %133 = vector.load %arg8[%c0_126, %c0_127] : memref<128x128xbf16, #tpu.memory_space<vmem>>, vector<128x128xbf16>
    %cst_128 = arith.constant dense<0.000000e+00> : vector<32x128xf32>
    %134 = tpu.matmul %132, %133, %cst_128 {dimension_numbers = #tpu.dot_dimension_numbers<[1], [0], [0], [1], [0, 0, 1, 1], [], []>} : vector<32x128xbf16>, vector<128x128xbf16>, vector<32x128xf32> -> vector<32x128xf32>
    %c0_129 = arith.constant 0 : index
    %c0_130 = arith.constant 0 : index
    %135 = vector.load %arg9[%c0_129, %c0_130] : memref<1x128xf32, #tpu.memory_space<vmem>>, vector<1x128xf32>
    %136 = vector.broadcast %135 : vector<1x128xf32> to vector<32x128xf32>
    %137 = arith.addf %134, %136 : vector<32x128xf32>
    %cst_131 = arith.constant dense<0xFF800000> : vector<32xf32>
    %138 = vector.multi_reduction <maximumf>, %137, %cst_131 [1] : vector<32x128xf32> to vector<32xf32>
    %139 = vector.shape_cast %138 : vector<32xf32> to vector<32x1xf32>
    %140 = vector.broadcast %139 : vector<32x1xf32> to vector<32x128xf32>
    %141 = arith.subf %137, %140 : vector<32x128xf32>
    %142 = math.exp %141 : vector<32x128xf32>
    %cst_132 = arith.constant dense<0.000000e+00> : vector<32xf32>
    %143 = vector.multi_reduction <add>, %142, %cst_132 [1] : vector<32x128xf32> to vector<32xf32>
    %144 = vector.shape_cast %143 : vector<32xf32> to vector<32x1xf32>
    %145 = math.log %144 : vector<32x1xf32>
    %146 = arith.addf %139, %145 : vector<32x1xf32>
    %147 = vector.broadcast %146 : vector<32x1xf32> to vector<32x128xf32>
    %148 = arith.subf %137, %147 : vector<32x128xf32>
    %c0_133 = arith.constant 0 : index
    %c0_134 = arith.constant 0 : index
    %149 = vector.load %arg10[%c0_133, %c0_134] : memref<32x128xf32, #tpu.memory_space<vmem>>, vector<32x128xf32>
    tpu.vector_store %arg10[%c0_133, %c0_134], %148 {strides = array<i32>} : memref<32x128xf32, #tpu.memory_space<vmem>>, vector<32x128xf32>,
    return
  }
  func.func @transform_0(%arg0: i32) -> (i32, i32, i32) {
    %c0_i32 = arith.constant 0 : i32
    %c0_i32_0 = arith.constant 0 : i32
    %c0_i32_1 = arith.constant 0 : i32
    return %arg0, %c0_i32, %c0_i32_0 : i32, i32, i32
  }
  func.func @transform_1(%arg0: i32) -> (i32, i32, i32) {
    %c0_i32 = arith.constant 0 : i32
    %c0_i32_0 = arith.constant 0 : i32
    %c0_i32_1 = arith.constant 0 : i32
    %c0_i32_2 = arith.constant 0 : i32
    return %c0_i32, %c0_i32_0, %c0_i32_1 : i32, i32, i32
  }
  func.func @transform_2(%arg0: i32) -> (i32, i32) {
    %c0_i32 = arith.constant 0 : i32
    %c0_i32_0 = arith.constant 0 : i32
    %c0_i32_1 = arith.constant 0 : i32
    return %c0_i32, %c0_i32_0 : i32, i32
  }
  func.func @transform_3(%arg0: i32) -> (i32, i32, i32) {
    %c0_i32 = arith.constant 0 : i32
    %c0_i32_0 = arith.constant 0 : i32
    %c0_i32_1 = arith.constant 0 : i32
    %c0_i32_2 = arith.constant 0 : i32
    return %c0_i32, %c0_i32_0, %c0_i32_1 : i32, i32, i32
  }
  func.func @transform_4(%arg0: i32) -> (i32, i32) {
    %c0_i32 = arith.constant 0 : i32
    %c0_i32_0 = arith.constant 0 : i32
    %c0_i32_1 = arith.constant 0 : i32
    return %c0_i32, %c0_i32_0 : i32, i32
  }
  func.func @transform_5(%arg0: i32) -> (i32, i32, i32) {
    %c0_i32 = arith.constant 0 : i32
    %c0_i32_0 = arith.constant 0 : i32
    %c0_i32_1 = arith.constant 0 : i32
    %c0_i32_2 = arith.constant 0 : i32
    return %c0_i32, %c0_i32_0, %c0_i32_1 : i32, i32, i32
  }
  func.func @transform_6(%arg0: i32) -> (i32, i32) {
    %c0_i32 = arith.constant 0 : i32
    %c0_i32_0 = arith.constant 0 : i32
    %c0_i32_1 = arith.constant 0 : i32
    return %c0_i32, %c0_i32_0 : i32, i32
  }
  func.func @transform_7(%arg0: i32) -> (i32, i32) {
    %c0_i32 = arith.constant 0 : i32
    %c0_i32_0 = arith.constant 0 : i32
    %c0_i32_1 = arith.constant 0 : i32
    return %c0_i32, %c0_i32_0 : i32, i32
  }
  func.func @transform_8(%arg0: i32) -> (i32, i32) {
    %c0_i32 = arith.constant 0 : i32
    %c0_i32_0 = arith.constant 0 : i32
    %c0_i32_1 = arith.constant 0 : i32
    return %c0_i32, %c0_i32_0 : i32, i32
  }
  func.func @transform_9(%arg0: i32) -> (i32, i32) {
    %c0_i32 = arith.constant 0 : i32
    %c0_i32_0 = arith.constant 0 : i32
    return %arg0, %c0_i32 : i32, i32
  }
}

</mosaic_0001>

<llo_original>
// kernel: tile.19
$region0: #{tile.19}
  %s0 = inlined_call_operand.vmem [shape: f32[4,20], index: 0, kind: input, shape index: {}]
  %s1 = inlined_call_operand.vmem [shape: f32[80], index: 1, kind: output, shape index: {}]
  $region1: #{tile.19} parent=0
    #allocation0 [shape = 'u8[4096]{0}', space=vmem, size = 0x1000, scoped, tag = 'scoped mem for output reshape']
    #allocation1 [shape = 'u8[4096]{0}', space=vmem, size = 0x1000, scoped, tag = 'scoped mem for input reshape']
    %s3 = sshllo.u32 0, 4
    %v4 = vld [vmem:[%s0] sm:%s3]
    %5 = vst [vmem:[#allocation1] sm:%s3] %v4
    %v6 = vld [vmem:[#allocation1] sm:$0x1]
    %vm7 = vcmask 162816
    %8 = vst.msk [vmem:[#allocation0] sm:$0x1] %vm7, %v6
    %s9 = scalar_lea.vmem [#allocation1], 3
    %v10 = vld [vmem:[%s9] sm:$0x1]
    %11 = vrot.lane.b32.xlu0 %v10, 60
    %v12 = vpop.permute.xlu0 %11
    %vm13 = vcmask 654816
    %14 = vst.msk [vmem:[#allocation0] sm:$0x1] %vm13, %v12
    %s15 = scalar_lea.vmem [#allocation1], 2
    %v16 = vld [vmem:[%s15] sm:$0x1]
    %17 = vrot.lane.b32.xlu0 %v16, 40
    %v18 = vpop.permute.xlu0 %17
    %vm19 = vcmask 490816
    %20 = vst.msk [vmem:[#allocation0] sm:$0x1] %vm19, %v18
    %s21 = scalar_lea.vmem [#allocation1], 1
    %v22 = vld [vmem:[%s21] sm:$0x1]
    %23 = vrot.lane.b32.xlu0 %v22, 20
    %v24 = vpop.permute.xlu0 %23
    %vm25 = vcmask 326816
    %26 = vst.msk [vmem:[#allocation0] sm:$0x1] %vm25, %v24
    %s28 = sshllo.u32 0, 1
    %v30 = vld [vmem:[#allocation0] sm:%s28]
    %s31 = sshllo.u32 0, 1
    %32 = vst [vmem:[%s1] sm:%s31] %v30

// kernel: tile.14
$region0: #{tile.14}
  %s0 = inlined_call_operand.vmem [shape: f32[12,10], index: 0, kind: input, shape index: {}]
  %s1 = inlined_call_operand.vmem [shape: f32[120], index: 1, kind: output, shape index: {}]
  $region1: #{tile.14} parent=0
    #allocation0 [shape = 'u8[4096]{0}', space=vmem, size = 0x1000, scoped, tag = 'scoped mem for output reshape']
    %v2 = vld [vmem:[%s0] sm:$0x1]
    %vm3 = vcmask 80896
    %4 = vst.msk [vmem:[#allocation0] sm:$0x1] %vm3, %v2
    %s5 = scalar_lea.vmem %s0, 11
    %v6 = vld [vmem:[%s5] sm:$0x1]
    %7 = vrot.lane.b32.xlu0 %v6, 110
    %v8 = vpop.permute.xlu0 %7
    %vm9 = vcmask 982896
    %10 = vst.msk [vmem:[#allocation0] sm:$0x1] %vm9, %v8
    %s11 = scalar_lea.vmem %s0, 10
    %v12 = vld [vmem:[%s11] sm:$0x1]
    %13 = vrot.lane.b32.xlu0 %v12, 100
    %v14 = vpop.permute.xlu0 %13
    %vm15 = vcmask 900896
    %16 = vst.msk [vmem:[#allocation0] sm:$0x1] %vm15, %v14
    %s17 = scalar_lea.vmem %s0, 9
    %v18 = vld [vmem:[%s17] sm:$0x1]
    %19 = vrot.lane.b32.xlu0 %v18, 90
    %v20 = vpop.permute.xlu0 %19
    %vm21 = vcmask 818896
    %22 = vst.msk [vmem:[#allocation0] sm:$0x1] %vm21, %v20
    %s23 = scalar_lea.vmem %s0, 8
    %v24 = vld [vmem:[%s23] sm:$0x1]
    %25 = vrot.lane.b32.xlu0 %v24, 80
    %v26 = vpop.permute.xlu0 %25
    %vm27 = vcmask 736896
    %28 = vst.msk [vmem:[#allocation0] sm:$0x1] %vm27, %v26
    %s29 = scalar_lea.vmem %s0, 7
    %v30 = vld [vmem:[%s29] sm:$0x1]
    %31 = vrot.lane.b32.xlu0 %v30, 70
    %v32 = vpop.permute.xlu0 %31
    %vm33 = vcmask 654896
    %34 = vst.msk [vmem:[#allocation0] sm:$0x1] %vm33, %v32
    %s35 = scalar_lea.vmem %s0, 6
    %v36 = vld [vmem:[%s35] sm:$0x1]
    %37 = vrot.lane.b32.xlu0 %v36, 60
    %v38 = vpop.permute.xlu0 %37
    %vm39 = vcmask 572896
    %40 = vst.msk [vmem:[#allocation0] sm:$0x1] %vm39, %v38
    %s41 = scalar_lea.vmem %s0, 5
    %v42 = vld [vmem:[%s41] sm:$0x1]
    %43 = vrot.lane.b32.xlu0 %v42, 50
    %v44 = vpop.permute.xlu0 %43
    %vm45 = vcmask 490896
    %46 = vst.msk [vmem:[#allocation0] sm:$0x1] %vm45, %v44
    %s47 = scalar_lea.vmem %s0, 4
    %v48 = vld [vmem:[%s47] sm:$0x1]
    %49 = vrot.lane.b32.xlu0 %v48, 40
    %v50 = vpop.permute.xlu0 %49
    %vm51 = vcmask 408896
    %52 = vst.msk [vmem:[#allocation0] sm:$0x1] %vm51, %v50
    %s53 = scalar_lea.vmem %s0, 3
    %v54 = vld [vmem:[%s53] sm:$0x1]
    %55 = vrot.lane.b32.xlu0 %v54, 30
    %v56 = vpop.permute.xlu0 %55
    %vm57 = vcmask 326896
    %58 = vst.msk [vmem:[#allocation0] sm:$0x1] %vm57, %v56
    %s59 = scalar_lea.vmem %s0, 2
    %v60 = vld [vmem:[%s59] sm:$0x1]
    %61 = vrot.lane.b32.xlu0 %v60, 20
    %v62 = vpop.permute.xlu0 %61
    %vm63 = vcmask 244896
    %64 = vst.msk [vmem:[#allocation0] sm:$0x1] %vm63, %v62
    %s65 = scalar_lea.vmem %s0, 1
    %v66 = vld [vmem:[%s65] sm:$0x1]
    %67 = vrot.lane.b32.xlu0 %v66, 10
    %v68 = vpop.permute.xlu0 %67
    %vm69 = vcmask 162896
    %70 = vst.msk [vmem:[#allocation0] sm:$0x1] %vm69, %v68
    %s72 = sshllo.u32 0, 1
    %v74 = vld [vmem:[#allocation0] sm:%s72]
    %s75 = sshllo.u32 0, 1
    %76 = vst [vmem:[%s1] sm:%s75] %v74

// kernel: tile.18
$region0: #{tile.18}
  #allocation2 [shape = 's32[1]{0}', space=sflag, size = 0x4, scoped, tag = 'scoped memory for tile.18']
  %s0 = inlined_call_operand.hbm [shape: f32[20], index: 0, kind: input, shape index: {}]
  %s1 = inlined_call_operand.vmem [shape: f32[4,20], index: 1, kind: output, shape index: {}]
  $region1: #{tile.18} parent=0
    #allocation0 [shape = 'u8[512]{0}', space=vmem, size = 0x400, scoped, tag = 'operand span for operand 0']
    #allocation1 [shape = 's32[1]{0}', space=sflag, size = 0x4, scoped, tag = 'scoped memory for tile.18']
    %2 = vsyncpa [#allocation1], 0
    // Predicated region
    $region2: #{tile.18} parent=1 // pred_check
      _
    $region3: #{tile.18} parent=1 // pred_check_branch
      %4 = sbr.rel (0) target = $region5
    $region4: #{tile.18} parent=1 // pred_region
      %s6 = ssub.s32 16, 16
      %7 = vsyncadd [#allocation1], %s6
      %s9 = sshll.u32 [#allocation0], 4
      %s10 = int_to_ptr.vmem [resolvable:$true] %s9
      %12 = dma.hbm_to_vmem [thread:$0]  %s0, 16, %s10, [#allocation1]
    $region5: #{tile.18} parent=1 // pred_fallthru
      _
    // Predicated region
    $region6: #{tile.18} parent=1 // pred_check
      _
    $region7: #{tile.18} parent=1 // pred_check_branch
      %14 = sbr.rel (0) target = $region9
    $region8: #{tile.18} parent=1 // pred_region
      %15 = dma.done [#allocation1], 16
    $region9: #{tile.18} parent=1 // pred_fallthru
      _
    %v16 = vld [vmem:[#allocation0] ss:$0 sm:$0xff]
    %17 = vst [vmem:[%s1] sm:$0xf] %v16
    %18 = vsyncpa [#allocation1], 1

// kernel: tile.13
$region0: #{tile.13}
  #allocation2 [shape = 's32[1]{0}', space=sflag, size = 0x4, scoped, tag = 'scoped memory for tile.13']
  %s0 = inlined_call_operand.hbm [shape: f32[10], index: 0, kind: input, shape index: {}]
  %s1 = inlined_call_operand.vmem [shape: f32[12,10], index: 1, kind: output, shape index: {}]
  $region1: #{tile.13} parent=0
    #allocation0 [shape = 'u8[512]{0}', space=vmem, size = 0x400, scoped, tag = 'operand span for operand 0']
    #allocation1 [shape = 's32[1]{0}', space=sflag, size = 0x4, scoped, tag = 'scoped memory for tile.13']
    %2 = vsyncpa [#allocation1], 0
    // Predicated region
    $region2: #{tile.13} parent=1 // pred_check
      _
    $region3: #{tile.13} parent=1 // pred_check_branch
      %4 = sbr.rel (0) target = $region5
    $region4: #{tile.13} parent=1 // pred_region
      %s6 = ssub.s32 16, 16
      %7 = vsyncadd [#allocation1], %s6
      %s9 = sshll.u32 [#allocation0], 4
      %s10 = int_to_ptr.vmem [resolvable:$true] %s9
      %12 = dma.hbm_to_vmem [thread:$0]  %s0, 16, %s10, [#allocation1]
    $region5: #{tile.13} parent=1 // pred_fallthru
      _
    // Predicated region
    $region6: #{tile.13} parent=1 // pred_check
      _
    $region7: #{tile.13} parent=1 // pred_check_branch
      %14 = sbr.rel (0) target = $region9
    $region8: #{tile.13} parent=1 // pred_region
      %15 = dma.done [#allocation1], 16
    $region9: #{tile.13} parent=1 // pred_fallthru
      _
    %v16 = vld [vmem:[#allocation0] ss:$0 sm:$0xff]
    %17 = vst [vmem:[%s1] sm:$0xff] %v16
    %s18 = scalar_lea.vmem %s1, 8
    %19 = vst [vmem:[%s18] sm:$0xff] %v16
    %20 = vsyncpa [#allocation1], 1

// kernel: _lambda_.1
$region0: #{_lambda_.1}
  #allocation0 [shape = 'u32[]', space=smem, size = 0x4, offset = 0x4, fixed_abs, tag = 'smem constant byte address 0x4 - core index']
  #allocation1 [shape = 'u32[144,128]{1,0:T(1,128)}', space=vmem, size = 0x12000, scoped, tag = 'internal scratch']
  #allocation2 [shape = 'f32[32,24,128]{2,1,0:T(8,128)}', space=vmem, size = 0x60000, scoped, tag = 'scratch operand']
  #allocation3 [shape = 'f32[32,12,128]{2,1,0:T(8,128)}', space=vmem, size = 0x40000, scoped, tag = 'scratch operand']
  #allocation4 [shape = 'f32[32,8,128]{2,1,0:T(8,128)}', space=vmem, size = 0x20000, scoped, tag = 'scratch operand']
  #allocation5 [shape = 'f32[32,4,128]{2,1,0:T(4,128)}', space=vmem, size = 0x10000, scoped, tag = 'scratch operand']
  %s0 = inlined_call_operand.vmem [shape: f32[64,28,28], index: 0, kind: input, shape index: {}]
  %s1 = inlined_call_operand.vmem [shape: bf16[5,28,256], index: 1, kind: input, shape index: {}]
  %s2 = inlined_call_operand.vmem [shape: f32[1,128], index: 2, kind: input, shape index: {}]
  %s3 = inlined_call_operand.vmem [shape: bf16[5,128,256], index: 3, kind: input, shape index: {}]
  %s4 = inlined_call_operand.vmem [shape: f32[1,128], index: 4, kind: input, shape index: {}]
  %s5 = inlined_call_operand.vmem [shape: bf16[4,128,128], index: 5, kind: input, shape index: {}]
  %s6 = inlined_call_operand.vmem [shape: f32[1,128], index: 6, kind: input, shape index: {}]
  %s7 = inlined_call_operand.vmem [shape: bf16[128,128], index: 7, kind: input, shape index: {}]
  %s8 = inlined_call_operand.vmem [shape: f32[1,128], index: 8, kind: input, shape index: {}]
  %s9 = inlined_call_operand.vmem [shape: f32[64,128], index: 9, kind: output, shape index: {}]
  %s10 = sld [smem:[#allocation0]]
  $region69: #{_lambda_.1} parent=0
    _
  %s12 = ssub.s32 1, %s10
  %s13 = scalar_select 0, %s12, %s10
  loop: start=0, step=1, limit=4
  $region2: #{_lambda_.1} parent=0 // loop_pre_header
    _
  $region3: #{_lambda_.1} parent=0 // loop_header
    %s15 = sphi 0, %s19
    %p16 = scmp.ge.s32.totalorder %s15, 4
    %s25 = sphi 0, %s27
    %s28 = sphi 0, %s25
    %s29 = sphi 0, %s28
    %s45 = sphi 0, %s29
    %s49 = sphi 0, %s49
    %s51 = sphi 0, %s49
    %s52 = sphi 0, %s51
    %s66 = sphi 0, %s52
    %s70 = sphi 0, %s70
    %s72 = sphi 0, %s70
    %s73 = sphi 0, %s72
    %s87 = sphi 0, %s73
    %s91 = sphi 0, %s91
    %s93 = sphi 0, %s91
    %s94 = sphi 0, %s93
    %s108 = sphi 0, %s94
    %s112 = sphi 0, %s112
    %s114 = sphi 0, %s112
    %s115 = sphi 0, %s114
    %s129 = sphi 0, %s115
    %s133 = sphi 0, %s133
    %s135 = sphi 0, %s133
    %s136 = sphi 0, %s135
    %s150 = sphi 0, %s136
    %s154 = sphi 0, %s154
    %s156 = sphi 0, %s154
    %s157 = sphi 0, %s156
    %s171 = sphi 0, %s157
    %s175 = sphi 0, %s175
    %s177 = sphi 0, %s175
    %s178 = sphi 0, %s177
    %s192 = sphi 0, %s178
    %s196 = sphi 0, %s196
    %s198 = sphi 0, %s196
    %s199 = sphi 0, %s198
    %s213 = sphi 0, %s199
    %s219 = sphi 0, %s221
    %s222 = sphi 0, %s219
    %s223 = sphi 0, %s222
    %s239 = sphi 0, %s223
  $region4: #{_lambda_.1} parent=0 // loop_header_branch
    %18 = sbr.rel (%p16) target = $region8
  $region5: #{_lambda_.1} parent=0 // loop_body
    %s20 = ssub.s32 %s15, 1
    %s21 = ssub.s32 %s15, 2
    %s22 = sadd.s32 %s15, 1
    %s23 = ssub.s32 %s15, %s22
    %p24 = scmp.eq.s32.totalorder %s23, 0
    %s26 = sadd.s32 %s25, 1
    %s27 = scalar_select %p24, %s25, %s26
    %p30 = pneg %p24
    %p31 = scmp.eq.s32.totalorder %s15, 1
    %p32 = por %p30, %p31
    %p33 = scmp.ne.s32.totalorder %s25, %s28
    %p34 = scmp.eq.s32.totalorder %s15, 0
    %p35 = por %p33, %p34
    %p36 = scmp.ne.s32.totalorder %s25, %s28
    %p37 = scmp.eq.s32.totalorder %s20, 1
    %p38 = por %p36, %p37
    %p39 = scmp.ne.s32.totalorder %s28, %s29
    %p40 = scmp.eq.s32.totalorder %s20, 0
    %p41 = por %p39, %p40
    %p42 = scmp.ne.s32.totalorder %s28, %s29
    %p43 = scmp.eq.s32.totalorder %s21, 1
    %p44 = por %p42, %p43
    %p46 = scmp.ne.s32.totalorder %s29, %s45
    %p47 = scmp.eq.s32.totalorder %s21, 0
    %p48 = por %p46, %p47
    %s50 = sadd.s32 %s49, 1
    %p53 = scmp.eq.s32.totalorder %s15, 1
    %p54 = scmp.ne.s32.totalorder %s49, %s51
    %p55 = scmp.eq.s32.totalorder %s15, 0
    %p56 = por %p54, %p55
    %p57 = scmp.ne.s32.totalorder %s49, %s51
    %p58 = scmp.eq.s32.totalorder %s20, 1
    %p59 = por %p57, %p58
    %p60 = scmp.ne.s32.totalorder %s51, %s52
    %p61 = scmp.eq.s32.totalorder %s20, 0
    %p62 = por %p60, %p61
    %p63 = scmp.ne.s32.totalorder %s51, %s52
    %p64 = scmp.eq.s32.totalorder %s21, 1
    %p65 = por %p63, %p64
    %p67 = scmp.ne.s32.totalorder %s52, %s66
    %p68 = scmp.eq.s32.totalorder %s21, 0
    %p69 = por %p67, %p68
    %s71 = sadd.s32 %s70, 1
    %p74 = scmp.eq.s32.totalorder %s15, 1
    %p75 = scmp.ne.s32.totalorder %s70, %s72
    %p76 = scmp.eq.s32.totalorder %s15, 0
    %p77 = por %p75, %p76
    %p78 = scmp.ne.s32.totalorder %s70, %s72
    %p79 = scmp.eq.s32.totalorder %s20, 1
    %p80 = por %p78, %p79
    %p81 = scmp.ne.s32.totalorder %s72, %s73
    %p82 = scmp.eq.s32.totalorder %s20, 0
    %p83 = por %p81, %p82
    %p84 = scmp.ne.s32.totalorder %s72, %s73
    %p85 = scmp.eq.s32.totalorder %s21, 1
    %p86 = por %p84, %p85
    %p88 = scmp.ne.s32.totalorder %s73, %s87
    %p89 = scmp.eq.s32.totalorder %s21, 0
    %p90 = por %p88, %p89
    %s92 = sadd.s32 %s91, 1
    %p95 = scmp.eq.s32.totalorder %s15, 1
    %p96 = scmp.ne.s32.totalorder %s91, %s93
    %p97 = scmp.eq.s32.totalorder %s15, 0
    %p98 = por %p96, %p97
    %p99 = scmp.ne.s32.totalorder %s91, %s93
    %p100 = scmp.eq.s32.totalorder %s20, 1
    %p101 = por %p99, %p100
    %p102 = scmp.ne.s32.totalorder %s93, %s94
    %p103 = scmp.eq.s32.totalorder %s20, 0
    %p104 = por %p102, %p103
    %p105 = scmp.ne.s32.totalorder %s93, %s94
    %p106 = scmp.eq.s32.totalorder %s21, 1
    %p107 = por %p105, %p106
    %p109 = scmp.ne.s32.totalorder %s94, %s108
    %p110 = scmp.eq.s32.totalorder %s21, 0
    %p111 = por %p109, %p110
    %s113 = sadd.s32 %s112, 1
    %p116 = scmp.eq.s32.totalorder %s15, 1
    %p117 = scmp.ne.s32.totalorder %s112, %s114
    %p118 = scmp.eq.s32.totalorder %s15, 0
    %p119 = por %p117, %p118
    %p120 = scmp.ne.s32.totalorder %s112, %s114
    %p121 = scmp.eq.s32.totalorder %s20, 1
    %p122 = por %p120, %p121
    %p123 = scmp.ne.s32.totalorder %s114, %s115
    %p124 = scmp.eq.s32.totalorder %s20, 0
    %p125 = por %p123, %p124
    %p126 = scmp.ne.s32.totalorder %s114, %s115
    %p127 = scmp.eq.s32.totalorder %s21, 1
    %p128 = por %p126, %p127
    %p130 = scmp.ne.s32.totalorder %s115, %s129
    %p131 = scmp.eq.s32.totalorder %s21, 0
    %p132 = por %p130, %p131
    %s134 = sadd.s32 %s133, 1
    %p137 = scmp.eq.s32.totalorder %s15, 1
    %p138 = scmp.ne.s32.totalorder %s133, %s135
    %p139 = scmp.eq.s32.totalorder %s15, 0
    %p140 = por %p138, %p139
    %p141 = scmp.ne.s32.totalorder %s133, %s135
    %p142 = scmp.eq.s32.totalorder %s20, 1
    %p143 = por %p141, %p142
    %p144 = scmp.ne.s32.totalorder %s135, %s136
    %p145 = scmp.eq.s32.totalorder %s20, 0
    %p146 = por %p144, %p145
    %p147 = scmp.ne.s32.totalorder %s135, %s136
    %p148 = scmp.eq.s32.totalorder %s21, 1
    %p149 = por %p147, %p148
    %p151 = scmp.ne.s32.totalorder %s136, %s150
    %p152 = scmp.eq.s32.totalorder %s21, 0
    %p153 = por %p151, %p152
    %s155 = sadd.s32 %s154, 1
    %p158 = scmp.eq.s32.totalorder %s15, 1
    %p159 = scmp.ne.s32.totalorder %s154, %s156
    %p160 = scmp.eq.s32.totalorder %s15, 0
    %p161 = por %p159, %p160
    %p162 = scmp.ne.s32.totalorder %s154, %s156
    %p163 = scmp.eq.s32.totalorder %s20, 1
    %p164 = por %p162, %p163
    %p165 = scmp.ne.s32.totalorder %s156, %s157
    %p166 = scmp.eq.s32.totalorder %s20, 0
    %p167 = por %p165, %p166
    %p168 = scmp.ne.s32.totalorder %s156, %s157
    %p169 = scmp.eq.s32.totalorder %s21, 1
    %p170 = por %p168, %p169
    %p172 = scmp.ne.s32.totalorder %s157, %s171
    %p173 = scmp.eq.s32.totalorder %s21, 0
    %p174 = por %p172, %p173
    %s176 = sadd.s32 %s175, 1
    %p179 = scmp.eq.s32.totalorder %s15, 1
    %p180 = scmp.ne.s32.totalorder %s175, %s177
    %p181 = scmp.eq.s32.totalorder %s15, 0
    %p182 = por %p180, %p181
    %p183 = scmp.ne.s32.totalorder %s175, %s177
    %p184 = scmp.eq.s32.totalorder %s20, 1
    %p185 = por %p183, %p184
    %p186 = scmp.ne.s32.totalorder %s177, %s178
    %p187 = scmp.eq.s32.totalorder %s20, 0
    %p188 = por %p186, %p187
    %p189 = scmp.ne.s32.totalorder %s177, %s178
    %p190 = scmp.eq.s32.totalorder %s21, 1
    %p191 = por %p189, %p190
    %p193 = scmp.ne.s32.totalorder %s178, %s192
    %p194 = scmp.eq.s32.totalorder %s21, 0
    %p195 = por %p193, %p194
    %s197 = sadd.s32 %s196, 1
    %p200 = scmp.eq.s32.totalorder %s15, 1
    %p201 = scmp.ne.s32.totalorder %s196, %s198
    %p202 = scmp.eq.s32.totalorder %s15, 0
    %p203 = por %p201, %p202
    %p204 = scmp.ne.s32.totalorder %s196, %s198
    %p205 = scmp.eq.s32.totalorder %s20, 1
    %p206 = por %p204, %p205
    %p207 = scmp.ne.s32.totalorder %s198, %s199
    %p208 = scmp.eq.s32.totalorder %s20, 0
    %p209 = por %p207, %p208
    %p210 = scmp.ne.s32.totalorder %s198, %s199
    %p211 = scmp.eq.s32.totalorder %s21, 1
    %p212 = por %p210, %p211
    %p214 = scmp.ne.s32.totalorder %s199, %s213
    %p215 = scmp.eq.s32.totalorder %s21, 0
    %p216 = por %p214, %p215
    %s217 = ssub.s32 %s15, %s22
    %p218 = scmp.eq.s32.totalorder %s217, 0
    %s220 = sadd.s32 %s219, 1
    %s221 = scalar_select %p218, %s219, %s220
    %p224 = pneg %p218
    %p225 = scmp.eq.s32.totalorder %s15, 1
    %p226 = por %p224, %p225
    %p227 = scmp.ne.s32.totalorder %s219, %s222
    %p228 = scmp.eq.s32.totalorder %s15, 0
    %p229 = por %p227, %p228
    %p230 = scmp.ne.s32.totalorder %s219, %s222
    %p231 = scmp.eq.s32.totalorder %s20, 1
    %p232 = por %p230, %p231
    %p233 = scmp.ne.s32.totalorder %s222, %s223
    %p234 = scmp.eq.s32.totalorder %s20, 0
    %p235 = por %p233, %p234
    %p236 = scmp.ne.s32.totalorder %s222, %s223
    %p237 = scmp.eq.s32.totalorder %s21, 1
    %p238 = por %p236, %p237
    %p240 = scmp.ne.s32.totalorder %s223, %s239
    %p241 = scmp.eq.s32.totalorder %s21, 0
    %p242 = por %p240, %p241
    %p243 = scmp.le.s32.totalorder 1, %s15
    %p244 = scmp.lt.s32.totalorder %s15, 3
    %p245 = pnand %p243, %p244
    %p246 = pneg %p245
    // Predicated region
    $region9: #{_lambda_.1} parent=5 // pred_check
      _
    $region10: #{_lambda_.1} parent=5 // pred_check_branch
      %248 = sbr.rel (%p245) target = $region12
    $region11: #{_lambda_.1} parent=5 // pred_region
      %s249 = ssub.s32 %s15, 1
      // Predicated region
      $region13: #{_lambda_.1} parent=11 // pred_check
        %p250 = pneg %p62
      $region14: #{_lambda_.1} parent=11 // pred_check_branch
        %252 = sbr.rel (%p250) target = $region16
      $region15: #{_lambda_.1} parent=11 // pred_region
        _
      $region16: #{_lambda_.1} parent=11 // pred_fallthru
        _
      // Predicated region
      $region17: #{_lambda_.1} parent=11 // pred_check
        %p253 = pneg %p83
      $region18: #{_lambda_.1} parent=11 // pred_check_branch
        %255 = sbr.rel (%p253) target = $region20
      $region19: #{_lambda_.1} parent=11 // pred_region
        _
      $region20: #{_lambda_.1} parent=11 // pred_fallthru
        _
      // Predicated region
      $region21: #{_lambda_.1} parent=11 // pred_check
        %p256 = pneg %p104
      $region22: #{_lambda_.1} parent=11 // pred_check_branch
        %258 = sbr.rel (%p256) target = $region24
      $region23: #{_lambda_.1} parent=11 // pred_region
        _
      $region24: #{_lambda_.1} parent=11 // pred_fallthru
        _
      // Predicated region
      $region25: #{_lambda_.1} parent=11 // pred_check
        %p259 = pneg %p125
      $region26: #{_lambda_.1} parent=11 // pred_check_branch
        %261 = sbr.rel (%p259) target = $region28
      $region27: #{_lambda_.1} parent=11 // pred_region
        _
      $region28: #{_lambda_.1} parent=11 // pred_fallthru
        _
      // Predicated region
      $region29: #{_lambda_.1} parent=11 // pred_check
        %p262 = pneg %p146
      $region30: #{_lambda_.1} parent=11 // pred_check_branch
        %264 = sbr.rel (%p262) target = $region32
      $region31: #{_lambda_.1} parent=11 // pred_region
        _
      $region32: #{_lambda_.1} parent=11 // pred_fallthru
        _
      // Predicated region
      $region33: #{_lambda_.1} parent=11 // pred_check
        %p265 = pneg %p167
      $region34: #{_lambda_.1} parent=11 // pred_check_branch
        %267 = sbr.rel (%p265) target = $region36
      $region35: #{_lambda_.1} parent=11 // pred_region
        _
      $region36: #{_lambda_.1} parent=11 // pred_fallthru
        _
      // Predicated region
      $region37: #{_lambda_.1} parent=11 // pred_check
        %p268 = pneg %p188
      $region38: #{_lambda_.1} parent=11 // pred_check_branch
        %270 = sbr.rel (%p268) target = $region40
      $region39: #{_lambda_.1} parent=11 // pred_region
        _
      $region40: #{_lambda_.1} parent=11 // pred_fallthru
        _
      // Predicated region
      $region41: #{_lambda_.1} parent=11 // pred_check
        %p271 = pneg %p209
      $region42: #{_lambda_.1} parent=11 // pred_check_branch
        %273 = sbr.rel (%p271) target = $region44
      $region43: #{_lambda_.1} parent=11 // pred_region
        _
      $region44: #{_lambda_.1} parent=11 // pred_fallthru
        _
    $region12: #{_lambda_.1} parent=5 // pred_fallthru
      _
    %p274 = scmp.lt.s32.totalorder %s15, 2
    // Predicated region
    $region45: #{_lambda_.1} parent=5 // pred_check
      %p275 = pneg %p274
    $region46: #{_lambda_.1} parent=5 // pred_check_branch
      %277 = sbr.rel (%p275) target = $region48
    $region47: #{_lambda_.1} parent=5 // pred_region
      // Predicated region
      $region49: #{_lambda_.1} parent=47 // pred_check
        %p278 = pneg %p35
      $region50: #{_lambda_.1} parent=47 // pred_check_branch
        %280 = sbr.rel (%p278) target = $region52
      $region51: #{_lambda_.1} parent=47 // pred_region
        %s281 = smul.u32 32, %s15
        %p282 = scmp.lt.s32.totalorder %s281, 63
        %s283 = scalar_select %p282, %s281, 63
        %s284 = smul.addr %s283, 4
        %s285 = smul.addr %s284, 8
        %s286 = scalar_lea.vmem %s0, %s285
        %s287 = smul.u32 32, %s15
      $region52: #{_lambda_.1} parent=47 // pred_fallthru
        _
    $region48: #{_lambda_.1} parent=5 // pred_fallthru
      _
    %p288 = scmp.le.s32.totalorder 1, %s15
    %p289 = scmp.lt.s32.totalorder %s15, 3
    %p290 = pnand %p288, %p289
    %p291 = pneg %p290
    // Predicated region
    $region53: #{_lambda_.1} parent=5 // pred_check
      _
    $region54: #{_lambda_.1} parent=5 // pred_check_branch
      %293 = sbr.rel (%p290) target = $region56
    $region55: #{_lambda_.1} parent=5 // pred_region
      %s294 = ssub.s32 %s15, 1
      %s295 = smul.u32 32, %s20
      %p296 = scmp.lt.s32.totalorder %s295, 63
      %s297 = scalar_select %p296, %s295, 63
      %s298 = smul.addr %s297, 4
      %s299 = smul.addr %s298, 8
      %s300 = scalar_lea.vmem %s0, %s299
      %p301 = pneg %p41
      %p302 = pneg %p38
      %p303 = pneg %p62
      %p304 = pneg %p59
      %p305 = pneg %p83
      %p306 = pneg %p80
      %p307 = pneg %p104
      %p308 = pneg %p101
      %p309 = pneg %p125
      %p310 = pneg %p122
      %p311 = pneg %p146
      %p312 = pneg %p143
      %p313 = pneg %p167
      %p314 = pneg %p164
      %p315 = pneg %p188
      %p316 = pneg %p185
      %p317 = pneg %p209
      %p318 = pneg %p206
      %p319 = pneg %p235
      %p320 = pneg %p232
      %s321 = smul.u32 4, %s20
      %p322 = scmp.lt.s32.totalorder %s321, 7
      %s323 = scalar_select %p322, %s321, 7
      %s324 = smul.addr %s323, 8
      %s325 = scalar_lea.vmem %s9, %s324
      %s326 = smul.u32 32, %s20
      %p327 = scmp.lt.s32.totalorder %s326, 63
      %s328 = scalar_select %p327, %s326, 63
      %s329 = smul.addr %s328, 4
      %s330 = smul.addr %s329, 8
      %s331 = scalar_lea.vmem %s0, %s330
      %s332 = smul.u32 32, %s20
      %s333 = smul.u32 4, %s20
      %p334 = scmp.lt.s32.totalorder %s333, 7
      %s335 = scalar_select %p334, %s333, 7
      %s336 = smul.addr %s335, 8
      %s337 = scalar_lea.vmem %s9, %s336
      %s338 = smul.u32 4, %s20
      %v340 = vld [vmem:[%s331] sm:$0xff]
      %v341 = vld [vmem:[%s331 + $0x8] sm:$0xff]
      %v342 = vld [vmem:[%s331 + $0x10] sm:$0xff]
      %v343 = vld [vmem:[%s331 + $0x20] sm:$0xff]
      %v344 = vld [vmem:[%s331 + $0x28] sm:$0xff]
      %v345 = vld [vmem:[%s331 + $0x30] sm:$0xff]
      %v346 = vld [vmem:[%s331 + $0x40] sm:$0xff]
      %v347 = vld [vmem:[%s331 + $0x48] sm:$0xff]
      %v348 = vld [vmem:[%s331 + $0x50] sm:$0xff]
      %v349 = vld [vmem:[%s331 + $0x60] sm:$0xff]
      %v350 = vld [vmem:[%s331 + $0x68] sm:$0xff]
      %v351 = vld [vmem:[%s331 + $0x70] sm:$0xff]
      %v352 = vld [vmem:[%s331 + $0x80] sm:$0xff]
      %v353 = vld [vmem:[%s331 + $0x88] sm:$0xff]
      %v354 = vld [vmem:[%s331 + $0x90] sm:$0xff]
      %v355 = vld [vmem:[%s331 + $0xa0] sm:$0xff]
      %v356 = vld [vmem:[%s331 + $0xa8] sm:$0xff]
      %v357 = vld [vmem:[%s331 + $0xb0] sm:$0xff]
      %v358 = vld [vmem:[%s331 + $0xc0] sm:$0xff]
      %v359 = vld [vmem:[%s331 + $0xc8] sm:$0xff]
      %v360 = vld [vmem:[%s331 + $0xd0] sm:$0xff]
      %v361 = vld [vmem:[%s331 + $0xe0] sm:$0xff]
      %v362 = vld [vmem:[%s331 + $0xe8] sm:$0xff]
      %v363 = vld [vmem:[%s331 + $0xf0] sm:$0xff]
      %v364 = vld [vmem:[%s331 + $0x100] sm:$0xff]
      %v365 = vld [vmem:[%s331 + $0x108] sm:$0xff]
      %v366 = vld [vmem:[%s331 + $0x110] sm:$0xff]
      %v367 = vld [vmem:[%s331 + $0x120] sm:$0xff]
      %v368 = vld [vmem:[%s331 + $0x128] sm:$0xff]
      %v369 = vld [vmem:[%s331 + $0x130] sm:$0xff]
      %v370 = vld [vmem:[%s331 + $0x140] sm:$0xff]
      %v371 = vld [vmem:[%s331 + $0x148] sm:$0xff]
      %v372 = vld [vmem:[%s331 + $0x150] sm:$0xff]
      %v373 = vld [vmem:[%s331 + $0x160] sm:$0xff]
      %v374 = vld [vmem:[%s331 + $0x168] sm:$0xff]
      %v375 = vld [vmem:[%s331 + $0x170] sm:$0xff]
      %v376 = vld [vmem:[%s331 + $0x180] sm:$0xff]
      %v377 = vld [vmem:[%s331 + $0x188] sm:$0xff]
      %v378 = vld [vmem:[%s331 + $0x190] sm:$0xff]
      %v379 = vld [vmem:[%s331 + $0x1a0] sm:$0xff]
      %v380 = vld [vmem:[%s331 + $0x1a8] sm:$0xff]
      %v381 = vld [vmem:[%s331 + $0x1b0] sm:$0xff]
      %v382 = vld [vmem:[%s331 + $0x1c0] sm:$0xff]
      %v383 = vld [vmem:[%s331 + $0x1c8] sm:$0xff]
      %v384 = vld [vmem:[%s331 + $0x1d0] sm:$0xff]
      %v385 = vld [vmem:[%s331 + $0x1e0] sm:$0xff]
      %v386 = vld [vmem:[%s331 + $0x1e8] sm:$0xff]
      %v387 = vld [vmem:[%s331 + $0x1f0] sm:$0xff]
      %v388 = vld [vmem:[%s331 + $0x200] sm:$0xff]
      %v389 = vld [vmem:[%s331 + $0x208] sm:$0xff]
      %v390 = vld [vmem:[%s331 + $0x210] sm:$0xff]
      %v391 = vld [vmem:[%s331 + $0x220] sm:$0xff]
      %v392 = vld [vmem:[%s331 + $0x228] sm:$0xff]
      %v393 = vld [vmem:[%s331 + $0x230] sm:$0xff]
      %v394 = vld [vmem:[%s331 + $0x240] sm:$0xff]
      %v395 = vld [vmem:[%s331 + $0x248] sm:$0xff]
      %v396 = vld [vmem:[%s331 + $0x250] sm:$0xff]
      %v397 = vld [vmem:[%s331 + $0x260] sm:$0xff]
      %v398 = vld [vmem:[%s331 + $0x268] sm:$0xff]
      %v399 = vld [vmem:[%s331 + $0x270] sm:$0xff]
      %v400 = vld [vmem:[%s331 + $0x280] sm:$0xff]
      %v401 = vld [vmem:[%s331 + $0x288] sm:$0xff]
      %v402 = vld [vmem:[%s331 + $0x290] sm:$0xff]
      %v403 = vld [vmem:[%s331 + $0x2a0] sm:$0xff]
      %v404 = vld [vmem:[%s331 + $0x2a8] sm:$0xff]
      %v405 = vld [vmem:[%s331 + $0x2b0] sm:$0xff]
      %v406 = vld [vmem:[%s331 + $0x2c0] sm:$0xff]
      %v407 = vld [vmem:[%s331 + $0x2c8] sm:$0xff]
      %v408 = vld [vmem:[%s331 + $0x2d0] sm:$0xff]
      %v409 = vld [vmem:[%s331 + $0x2e0] sm:$0xff]
      %v410 = vld [vmem:[%s331 + $0x2e8] sm:$0xff]
      %v411 = vld [vmem:[%s331 + $0x2f0] sm:$0xff]
      %v412 = vld [vmem:[%s331 + $0x300] sm:$0xff]
      %v413 = vld [vmem:[%s331 + $0x308] sm:$0xff]
      %v414 = vld [vmem:[%s331 + $0x310] sm:$0xff]
      %v415 = vld [vmem:[%s331 + $0x320] sm:$0xff]
      %v416 = vld [vmem:[%s331 + $0x328] sm:$0xff]
      %v417 = vld [vmem:[%s331 + $0x330] sm:$0xff]
      %v418 = vld [vmem:[%s331 + $0x340] sm:$0xff]
      %v419 = vld [vmem:[%s331 + $0x348] sm:$0xff]
      %v420 = vld [vmem:[%s331 + $0x350] sm:$0xff]
      %v421 = vld [vmem:[%s331 + $0x360] sm:$0xff]
      %v422 = vld [vmem:[%s331 + $0x368] sm:$0xff]
      %v423 = vld [vmem:[%s331 + $0x370] sm:$0xff]
      %v424 = vld [vmem:[%s331 + $0x380] sm:$0xff]
      %v425 = vld [vmem:[%s331 + $0x388] sm:$0xff]
      %v426 = vld [vmem:[%s331 + $0x390] sm:$0xff]
      %v427 = vld [vmem:[%s331 + $0x3a0] sm:$0xff]
      %v428 = vld [vmem:[%s331 + $0x3a8] sm:$0xff]
      %v429 = vld [vmem:[%s331 + $0x3b0] sm:$0xff]
      %v430 = vld [vmem:[%s331 + $0x3c0] sm:$0xff]
      %v431 = vld [vmem:[%s331 + $0x3c8] sm:$0xff]
      %v432 = vld [vmem:[%s331 + $0x3d0] sm:$0xff]
      %v433 = vld [vmem:[%s331 + $0x3e0] sm:$0xff]
      %v434 = vld [vmem:[%s331 + $0x3e8] sm:$0xff]
      %v435 = vld [vmem:[%s331 + $0x3f0] sm:$0xff]
      %v436 = vpack.c.bf16 %v341, %v340
      %v437 = vpack.c.bf16 %v343, %v342
      %v438 = vpack.c.bf16 %v345, %v344
      %v439 = vpack.c.bf16 %v347, %v346
      %v440 = vpack.c.bf16 %v349, %v348
      %v441 = vpack.c.bf16 %v351, %v350
      %v442 = vpack.c.bf16 %v353, %v352
      %v443 = vpack.c.bf16 %v355, %v354
      %v444 = vpack.c.bf16 %v357, %v356
      %v445 = vpack.c.bf16 %v359, %v358
      %v446 = vpack.c.bf16 %v361, %v360
      %v447 = vpack.c.bf16 %v363, %v362
      %v448 = vpack.c.bf16 %v365, %v364
      %v449 = vpack.c.bf16 %v367, %v366
      %v450 = vpack.c.bf16 %v369, %v368
      %v451 = vpack.c.bf16 %v371, %v370
      %v452 = vpack.c.bf16 %v373, %v372
      %v453 = vpack.c.bf16 %v375, %v374
      %v454 = vpack.c.bf16 %v377, %v376
      %v455 = vpack.c.bf16 %v379, %v378
      %v456 = vpack.c.bf16 %v381, %v380
      %v457 = vpack.c.bf16 %v383, %v382
      %v458 = vpack.c.bf16 %v385, %v384
      %v459 = vpack.c.bf16 %v387, %v386
      %v460 = vpack.c.bf16 %v389, %v388
      %v461 = vpack.c.bf16 %v391, %v390
      %v462 = vpack.c.bf16 %v393, %v392
      %v463 = vpack.c.bf16 %v395, %v394
      %v464 = vpack.c.bf16 %v397, %v396
      %v465 = vpack.c.bf16 %v399, %v398
      %v466 = vpack.c.bf16 %v401, %v400
      %v467 = vpack.c.bf16 %v403, %v402
      %v468 = vpack.c.bf16 %v405, %v404
      %v469 = vpack.c.bf16 %v407, %v406
      %v470 = vpack.c.bf16 %v409, %v408
      %v471 = vpack.c.bf16 %v411, %v410
      %v472 = vpack.c.bf16 %v413, %v412
      %v473 = vpack.c.bf16 %v415, %v414
      %v474 = vpack.c.bf16 %v417, %v416
      %v475 = vpack.c.bf16 %v419, %v418
      %v476 = vpack.c.bf16 %v421, %v420
      %v477 = vpack.c.bf16 %v423, %v422
      %v478 = vpack.c.bf16 %v425, %v424
      %v479 = vpack.c.bf16 %v427, %v426
      %v480 = vpack.c.bf16 %v429, %v428
      %v481 = vpack.c.bf16 %v431, %v430
      %v482 = vpack.c.bf16 %v433, %v432
      %v483 = vpack.c.bf16 %v435, %v434
      %v484 = vld [vmem:[%s1] sm:$0xff]
      %v485 = vld [vmem:[%s1 + $0x8] sm:$0xff]
      %v486 = vld [vmem:[%s1 + $0x10] sm:$0xff]
      %v487 = vld [vmem:[%s1 + $0x18] sm:$0x33]
      %v488 = vld [vmem:[%s331 + $0x1] sm:$0xff]
      %v489 = vld [vmem:[%s331 + $0x9] sm:$0xff]
      %v490 = vld [vmem:[%s331 + $0x11] sm:$0xff]
      %v491 = vld [vmem:[%s331 + $0x21] sm:$0xff]
      %v492 = vld [vmem:[%s331 + $0x29] sm:$0xff]
      %v493 = vld [vmem:[%s331 + $0x31] sm:$0xff]
      %v494 = vld [vmem:[%s331 + $0x41] sm:$0xff]
      %v495 = vld [vmem:[%s331 + $0x49] sm:$0xff]
      %v496 = vld [vmem:[%s331 + $0x51] sm:$0xff]
      %v497 = vld [vmem:[%s331 + $0x61] sm:$0xff]
      %v498 = vld [vmem:[%s331 + $0x69] sm:$0xff]
      %v499 = vld [vmem:[%s331 + $0x71] sm:$0xff]
      %v500 = vld [vmem:[%s331 + $0x81] sm:$0xff]
      %v501 = vld [vmem:[%s331 + $0x89] sm:$0xff]
      %v502 = vld [vmem:[%s331 + $0x91] sm:$0xff]
      %v503 = vld [vmem:[%s331 + $0xa1] sm:$0xff]
      %v504 = vld [vmem:[%s331 + $0xa9] sm:$0xff]
      %v505 = vld [vmem:[%s331 + $0xb1] sm:$0xff]
      %v506 = vld [vmem:[%s331 + $0xc1] sm:$0xff]
      %v507 = vld [vmem:[%s331 + $0xc9] sm:$0xff]
      %v508 = vld [vmem:[%s331 + $0xd1] sm:$0xff]
      %v509 = vld [vmem:[%s331 + $0xe1] sm:$0xff]
      %v510 = vld [vmem:[%s331 + $0xe9] sm:$0xff]
      %v511 = vld [vmem:[%s331 + $0xf1] sm:$0xff]
      %v512 = vld [vmem:[%s331 + $0x101] sm:$0xff]
      %v513 = vld [vmem:[%s331 + $0x109] sm:$0xff]
      %v514 = vld [vmem:[%s331 + $0x111] sm:$0xff]
      %v515 = vld [vmem:[%s331 + $0x121] sm:$0xff]
      %v516 = vld [vmem:[%s331 + $0x129] sm:$0xff]
      %v517 = vld [vmem:[%s331 + $0x131] sm:$0xff]
      %v518 = vld [vmem:[%s331 + $0x141] sm:$0xff]
      %v519 = vld [vmem:[%s331 + $0x149] sm:$0xff]
      %v520 = vld [vmem:[%s331 + $0x151] sm:$0xff]
      %v521 = vld [vmem:[%s331 + $0x161] sm:$0xff]
      %v522 = vld [vmem:[%s331 + $0x169] sm:$0xff]
      %v523 = vld [vmem:[%s331 + $0x171] sm:$0xff]
      %v524 = vld [vmem:[%s331 + $0x181] sm:$0xff]
      %v525 = vld [vmem:[%s331 + $0x189] sm:$0xff]
      %v526 = vld [vmem:[%s331 + $0x191] sm:$0xff]
      %v527 = vld [vmem:[%s331 + $0x1a1] sm:$0xff]
      %v528 = vld [vmem:[%s331 + $0x1a9] sm:$0xff]
      %v529 = vld [vmem:[%s331 + $0x1b1] sm:$0xff]
      %v530 = vld [vmem:[%s331 + $0x1c1] sm:$0xff]
      %v531 = vld [vmem:[%s331 + $0x1c9] sm:$0xff]
      %v532 = vld [vmem:[%s331 + $0x1d1] sm:$0xff]
      %v533 = vld [vmem:[%s331 + $0x1e1] sm:$0xff]
      %v534 = vld [vmem:[%s331 + $0x1e9] sm:$0xff]
      %v535 = vld [vmem:[%s331 + $0x1f1] sm:$0xff]
      %v536 = vld [vmem:[%s331 + $0x201] sm:$0xff]
      %v537 = vld [vmem:[%s331 + $0x209] sm:$0xff]
      %v538 = vld [vmem:[%s331 + $0x211] sm:$0xff]
      %v539 = vld [vmem:[%s331 + $0x221] sm:$0xff]
      %v540 = vld [vmem:[%s331 + $0x229] sm:$0xff]
      %v541 = vld [vmem:[%s331 + $0x231] sm:$0xff]
      %v542 = vld [vmem:[%s331 + $0x241] sm:$0xff]
      %v543 = vld [vmem:[%s331 + $0x249] sm:$0xff]
      %v544 = vld [vmem:[%s331 + $0x251] sm:$0xff]
      %v545 = vld [vmem:[%s331 + $0x261] sm:$0xff]
      %v546 = vld [vmem:[%s331 + $0x269] sm:$0xff]
      %v547 = vld [vmem:[%s331 + $0x271] sm:$0xff]
      %v548 = vld [vmem:[%s331 + $0x281] sm:$0xff]
      %v549 = vld [vmem:[%s331 + $0x289] sm:$0xff]
      %v550 = vld [vmem:[%s331 + $0x291] sm:$0xff]
      %v551 = vld [vmem:[%s331 + $0x2a1] sm:$0xff]
      %v552 = vld [vmem:[%s331 + $0x2a9] sm:$0xff]
      %v553 = vld [vmem:[%s331 + $0x2b1] sm:$0xff]
      %v554 = vld [vmem:[%s331 + $0x2c1] sm:$0xff]
      %v555 = vld [vmem:[%s331 + $0x2c9] sm:$0xff]
      %v556 = vld [vmem:[%s331 + $0x2d1] sm:$0xff]
      %v557 = vld [vmem:[%s331 + $0x2e1] sm:$0xff]
      %v558 = vld [vmem:[%s331 + $0x2e9] sm:$0xff]
      %v559 = vld [vmem:[%s331 + $0x2f1] sm:$0xff]
      %v560 = vld [vmem:[%s331 + $0x301] sm:$0xff]
      %v561 = vld [vmem:[%s331 + $0x309] sm:$0xff]
      %v562 = vld [vmem:[%s331 + $0x311] sm:$0xff]
      %v563 = vld [vmem:[%s331 + $0x321] sm:$0xff]
      %v564 = vld [vmem:[%s331 + $0x329] sm:$0xff]
      %v565 = vld [vmem:[%s331 + $0x331] sm:$0xff]
      %v566 = vld [vmem:[%s331 + $0x341] sm:$0xff]
      %v567 = vld [vmem:[%s331 + $0x349] sm:$0xff]
      %v568 = vld [vmem:[%s331 + $0x351] sm:$0xff]
      %v569 = vld [vmem:[%s331 + $0x361] sm:$0xff]
      %v570 = vld [vmem:[%s331 + $0x369] sm:$0xff]
      %v571 = vld [vmem:[%s331 + $0x371] sm:$0xff]
      %v572 = vld [vmem:[%s331 + $0x381] sm:$0xff]
      %v573 = vld [vmem:[%s331 + $0x389] sm:$0xff]
      %v574 = vld [vmem:[%s331 + $0x391] sm:$0xff]
      %v575 = vld [vmem:[%s331 + $0x3a1] sm:$0xff]
      %v576 = vld [vmem:[%s331 + $0x3a9] sm:$0xff]
      %v577 = vld [vmem:[%s331 + $0x3b1] sm:$0xff]
      %v578 = vld [vmem:[%s331 + $0x3c1] sm:$0xff]
      %v579 = vld [vmem:[%s331 + $0x3c9] sm:$0xff]
      %v580 = vld [vmem:[%s331 + $0x3d1] sm:$0xff]
      %v581 = vld [vmem:[%s331 + $0x3e1] sm:$0xff]
      %v582 = vld [vmem:[%s331 + $0x3e9] sm:$0xff]
      %v583 = vld [vmem:[%s331 + $0x3f1] sm:$0xff]
      %v584 = vpack.c.bf16 %v489, %v488
      %v585 = vpack.c.bf16 %v491, %v490
      %v586 = vpack.c.bf16 %v493, %v492
      %v587 = vpack.c.bf16 %v495, %v494
      %v588 = vpack.c.bf16 %v497, %v496
      %v589 = vpack.c.bf16 %v499, %v498
      %v590 = vpack.c.bf16 %v501, %v500
      %v591 = vpack.c.bf16 %v503, %v502
      %v592 = vpack.c.bf16 %v505, %v504
      %v593 = vpack.c.bf16 %v507, %v506
      %v594 = vpack.c.bf16 %v509, %v508
      %v595 = vpack.c.bf16 %v511, %v510
      %v596 = vpack.c.bf16 %v513, %v512
      %v597 = vpack.c.bf16 %v515, %v514
      %v598 = vpack.c.bf16 %v517, %v516
      %v599 = vpack.c.bf16 %v519, %v518
      %v600 = vpack.c.bf16 %v521, %v520
      %v601 = vpack.c.bf16 %v523, %v522
      %v602 = vpack.c.bf16 %v525, %v524
      %v603 = vpack.c.bf16 %v527, %v526
      %v604 = vpack.c.bf16 %v529, %v528
      %v605 = vpack.c.bf16 %v531, %v530
      %v606 = vpack.c.bf16 %v533, %v532
      %v607 = vpack.c.bf16 %v535, %v534
      %v608 = vpack.c.bf16 %v537, %v536
      %v609 = vpack.c.bf16 %v539, %v538
      %v610 = vpack.c.bf16 %v541, %v540
      %v611 = vpack.c.bf16 %v543, %v542
      %v612 = vpack.c.bf16 %v545, %v544
      %v613 = vpack.c.bf16 %v547, %v546
      %v614 = vpack.c.bf16 %v549, %v548
      %v615 = vpack.c.bf16 %v551, %v550
      %v616 = vpack.c.bf16 %v553, %v552
      %v617 = vpack.c.bf16 %v555, %v554
      %v618 = vpack.c.bf16 %v557, %v556
      %v619 = vpack.c.bf16 %v559, %v558
      %v620 = vpack.c.bf16 %v561, %v560
      %v621 = vpack.c.bf16 %v563, %v562
      %v622 = vpack.c.bf16 %v565, %v564
      %v623 = vpack.c.bf16 %v567, %v566
      %v624 = vpack.c.bf16 %v569, %v568
      %v625 = vpack.c.bf16 %v571, %v570
      %v626 = vpack.c.bf16 %v573, %v572
      %v627 = vpack.c.bf16 %v575, %v574
      %v628 = vpack.c.bf16 %v577, %v576
      %v629 = vpack.c.bf16 %v579, %v578
      %v630 = vpack.c.bf16 %v581, %v580
      %v631 = vpack.c.bf16 %v583, %v582
      %s632 = scalar_lea.vmem %s1, 32
      %v633 = vld [vmem:[%s632] sm:$0xff]
      %v634 = vld [vmem:[%s632 + $0x8] sm:$0xff]
      %v635 = vld [vmem:[%s632 + $0x10] sm:$0xff]
      %v636 = vld [vmem:[%s632 + $0x18] sm:$0x33]
      %v641 = vunpack.c.l.b16 %v633
      %v642 = vunpack.c.h.b16 %v633
      %v643 = vunpack.c.l.b16 %v634
      %v644 = vunpack.c.h.b16 %v634
      %v645 = vunpack.c.l.b16 %v635
      %v646 = vunpack.c.h.b16 %v635
      %v647 = vunpack.c.l.b16 %v636
      %v648 = vunpack.c.h.b16 %v636
      %v649 = vpack.c.b16 %v643, %v641
      %v650 = vpack.c.b16 %v644, %v642
      %v651 = vpack.c.b16 %v647, %v645
      %v652 = vpack.c.b16 %v648, %v646
      %vm655 = vcmask 228352
      %v657 = vsel %vm655, %v584, 0
      %v660 = vsel %vm655, %v585, 0
      %v663 = vsel %vm655, %v586, 0
      %v666 = vsel %vm655, %v587, 0
      %v669 = vsel %vm655, %v588, 0
      %v672 = vsel %vm655, %v589, 0
      %v675 = vsel %vm655, %v590, 0
      %v678 = vsel %vm655, %v591, 0
      %v681 = vsel %vm655, %v592, 0
      %v684 = vsel %vm655, %v593, 0
      %v687 = vsel %vm655, %v594, 0
      %v690 = vsel %vm655, %v595, 0
      %v693 = vsel %vm655, %v596, 0
      %v696 = vsel %vm655, %v597, 0
      %v699 = vsel %vm655, %v598, 0
      %v702 = vsel %vm655, %v599, 0
      %v705 = vsel %vm655, %v600, 0
      %v708 = vsel %vm655, %v601, 0
      %v711 = vsel %vm655, %v602, 0
      %v714 = vsel %vm655, %v603, 0
      %v717 = vsel %vm655, %v604, 0
      %v720 = vsel %vm655, %v605, 0
      %v723 = vsel %vm655, %v606, 0
      %v726 = vsel %vm655, %v607, 0
      %v729 = vsel %vm655, %v608, 0
      %v732 = vsel %vm655, %v609, 0
      %v735 = vsel %vm655, %v610, 0
      %v738 = vsel %vm655, %v611, 0
      %v741 = vsel %vm655, %v612, 0
      %v744 = vsel %vm655, %v613, 0
      %v747 = vsel %vm655, %v614, 0
      %v750 = vsel %vm655, %v615, 0
      %v753 = vsel %vm655, %v616, 0
      %v756 = vsel %vm655, %v617, 0
      %v759 = vsel %vm655, %v618, 0
      %v762 = vsel %vm655, %v619, 0
      %v765 = vsel %vm655, %v620, 0
      %v768 = vsel %vm655, %v621, 0
      %v771 = vsel %vm655, %v622, 0
      %v774 = vsel %vm655, %v623, 0
      %v777 = vsel %vm655, %v624, 0
      %v780 = vsel %vm655, %v625, 0
      %v783 = vsel %vm655, %v626, 0
      %v786 = vsel %vm655, %v627, 0
      %v789 = vsel %vm655, %v628, 0
      %v792 = vsel %vm655, %v629, 0
      %v795 = vsel %vm655, %v630, 0
      %v798 = vsel %vm655, %v631, 0
      %vm800 = vcmask 1045504
      %v802 = vsel %vm800, %v651, 0
      %v805 = vsel %vm800, %v652, 0
      %807 = vmatprep.subr.bf16.mxu0 %v650
      %808 = vmatpush1.bf16.msra.mxu0 %v649
      %809 = vmatprep.subr.bf16.mxu0 %v805
      %810 = vmatpush1.bf16.msra.mxu0 %v802
      %811 = vmatprep.subr.bf16.mxu0 0
      %812 = vmatpush1.bf16.msra.mxu0 0
      %813 = vmatprep.subr.bf16.mxu0 0
      %814 = vmatpush1.bf16.msra.mxu0 0
      %815 = vmatprep.subr.bf16.mxu0 0
      %816 = vmatpush1.bf16.msra.mxu0 0
      %817 = vmatprep.subr.bf16.mxu0 0
      %818 = vmatpush1.bf16.msra.mxu0 0
      %819 = vmatprep.subr.bf16.mxu0 0
      %820 = vmatpush1.bf16.msra.mxu0 0
      %821 = vmatprep.subr.bf16.mxu0 0
      %822 = vmatpush1.bf16.msra.mxu0 0
      %823 = vmatprep.subr.bf16.mxu0 0
      %824 = vmatpush1.bf16.msra.mxu0 0
      %825 = vmatprep.subr.bf16.mxu0 0
      %826 = vmatpush1.bf16.msra.mxu0 0
      %827 = vmatprep.subr.bf16.mxu0 0
      %828 = vmatpush1.bf16.msra.mxu0 0
      %829 = vmatprep.subr.bf16.mxu0 0
      %830 = vmatpush1.bf16.msra.mxu0 0
      %831 = vmatprep.subr.bf16.mxu0 0
      %832 = vmatpush1.bf16.msra.mxu0 0
      %833 = vmatprep.subr.bf16.mxu0 0
      %834 = vmatpush1.bf16.msra.mxu0 0
      %835 = vmatprep.subr.bf16.mxu0 0
      %836 = vmatpush1.bf16.msra.mxu0 0
      %837 = vmatprep.subr.bf16.mxu0 0
      %838 = vmatpush1.bf16.msra.mxu0 0
      %839 = vmatprep.mubr.bf16.mxu0 0
      %840 = vmatmul.mubr.bf16.gmra.mrb[0].mxu0 %v657
      %v841 = vpop.f32.mrb[0].mxu0
      %v842 = vadd.f32 0.0, %v841
      %v843 = vpop.f32.mrb[0].mxu0
      %v844 = vadd.f32 0.0, %v843
      %v845 = vpop.f32.mrb[0].mxu0
      %v846 = vadd.f32 0.0, %v845
      %v847 = vpop.f32.mrb[0].mxu0
      %v848 = vadd.f32 0.0, %v847
      %849 = vmatprep.mubr.bf16.mxu0 0
      %850 = vmatmul.mubr.bf16.gmra.mrb[0].mxu0 %v660
      %v851 = vpop.f32.mrb[0].mxu0
      %v852 = vadd.f32 0.0, %v851
      %v853 = vpop.f32.mrb[0].mxu0
      %v854 = vadd.f32 0.0, %v853
      %v855 = vpop.f32.mrb[0].mxu0
      %v856 = vadd.f32 0.0, %v855
      %v857 = vpop.f32.mrb[0].mxu0
      %v858 = vadd.f32 0.0, %v857
      %859 = vmatprep.mubr.bf16.mxu0 0
      %860 = vmatmul.mubr.bf16.gmra.mrb[0].mxu0 %v663
      %v861 = vpop.f32.mrb[0].mxu0
      %v862 = vadd.f32 0.0, %v861
      %v863 = vpop.f32.mrb[0].mxu0
      %v864 = vadd.f32 0.0, %v863
      %v865 = vpop.f32.mrb[0].mxu0
      %v866 = vadd.f32 0.0, %v865
      %v867 = vpop.f32.mrb[0].mxu0
      %v868 = vadd.f32 0.0, %v867
      %869 = vmatprep.mubr.bf16.mxu0 0
      %870 = vmatmul.mubr.bf16.gmra.mrb[0].mxu0 %v666
      %v871 = vpop.f32.mrb[0].mxu0
      %v872 = vadd.f32 0.0, %v871
      %v873 = vpop.f32.mrb[0].mxu0
      %v874 = vadd.f32 0.0, %v873
      %v875 = vpop.f32.mrb[0].mxu0
      %v876 = vadd.f32 0.0, %v875
      %v877 = vpop.f32.mrb[0].mxu0
      %v878 = vadd.f32 0.0, %v877
      %879 = vmatprep.mubr.bf16.mxu0 0
      %880 = vmatmul.mubr.bf16.gmra.mrb[0].mxu0 %v669
      %v881 = vpop.f32.mrb[0].mxu0
      %v882 = vadd.f32 0.0, %v881
      %v883 = vpop.f32.mrb[0].mxu0
      %v884 = vadd.f32 0.0, %v883
      %v885 = vpop.f32.mrb[0].mxu0
      %v886 = vadd.f32 0.0, %v885
      %v887 = vpop.f32.mrb[0].mxu0
      %v888 = vadd.f32 0.0, %v887
      %889 = vmatprep.mubr.bf16.mxu0 0
      %890 = vmatmul.mubr.bf16.gmra.mrb[0].mxu0 %v672
      %v891 = vpop.f32.mrb[0].mxu0
      %v892 = vadd.f32 0.0, %v891
      %v893 = vpop.f32.mrb[0].mxu0
      %v894 = vadd.f32 0.0, %v893
      %v895 = vpop.f32.mrb[0].mxu0
      %v896 = vadd.f32 0.0, %v895
      %v897 = vpop.f32.mrb[0].mxu0
      %v898 = vadd.f32 0.0, %v897
      %899 = vmatprep.mubr.bf16.mxu0 0
      %900 = vmatmul.mubr.bf16.gmra.mrb[0].mxu0 %v675
      %v901 = vpop.f32.mrb[0].mxu0
      %v902 = vadd.f32 0.0, %v901
      %v903 = vpop.f32.mrb[0].mxu0
      %v904 = vadd.f32 0.0, %v903
      %v905 = vpop.f32.mrb[0].mxu0
      %v906 = vadd.f32 0.0, %v905
      %v907 = vpop.f32.mrb[0].mxu0
      %v908 = vadd.f32 0.0, %v907
      %909 = vmatprep.mubr.bf16.mxu0 0
      %910 = vmatmul.mubr.bf16.gmra.mrb[0].mxu0 %v678
      %v911 = vpop.f32.mrb[0].mxu0
      %v912 = vadd.f32 0.0, %v911
      %v913 = vpop.f32.mrb[0].mxu0
      %v914 = vadd.f32 0.0, %v913
      %v915 = vpop.f32.mrb[0].mxu0
      %v916 = vadd.f32 0.0, %v915
      %v917 = vpop.f32.mrb[0].mxu0
      %v918 = vadd.f32 0.0, %v917
      %919 = vmatprep.mubr.bf16.mxu0 0
      %920 = vmatmul.mubr.bf16.gmra.mrb[0].mxu0 %v681
      %v921 = vpop.f32.mrb[0].mxu0
      %v922 = vadd.f32 0.0, %v921
      %v923 = vpop.f32.mrb[0].mxu0
      %v924 = vadd.f32 0.0, %v923
      %v925 = vpop.f32.mrb[0].mxu0
      %v926 = vadd.f32 0.0, %v925
      %v927 = vpop.f32.mrb[0].mxu0
      %v928 = vadd.f32 0.0, %v927
      %929 = vmatprep.mubr.bf16.mxu0 0
      %930 = vmatmul.mubr.bf16.gmra.mrb[0].mxu0 %v684
      %v931 = vpop.f32.mrb[0].mxu0
      %v932 = vadd.f32 0.0, %v931
      %v933 = vpop.f32.mrb[0].mxu0
      %v934 = vadd.f32 0.0, %v933
      %v935 = vpop.f32.mrb[0].mxu0
      %v936 = vadd.f32 0.0, %v935
      %v937 = vpop.f32.mrb[0].mxu0
      %v938 = vadd.f32 0.0, %v937
      %939 = vmatprep.mubr.bf16.mxu0 0
      %940 = vmatmul.mubr.bf16.gmra.mrb[0].mxu0 %v687
      %v941 = vpop.f32.mrb[0].mxu0
      %v942 = vadd.f32 0.0, %v941
      %v943 = vpop.f32.mrb[0].mxu0
      %v944 = vadd.f32 0.0, %v943
      %v945 = vpop.f32.mrb[0].mxu0
      %v946 = vadd.f32 0.0, %v945
      %v947 = vpop.f32.mrb[0].mxu0
      %v948 = vadd.f32 0.0, %v947
      %949 = vmatprep.mubr.bf16.mxu0 0
      %950 = vmatmul.mubr.bf16.gmra.mrb[0].mxu0 %v690
      %v951 = vpop.f32.mrb[0].mxu0
      %v952 = vadd.f32 0.0, %v951
      %v953 = vpop.f32.mrb[0].mxu0
      %v954 = vadd.f32 0.0, %v953
      %v955 = vpop.f32.mrb[0].mxu0
      %v956 = vadd.f32 0.0, %v955
      %v957 = vpop.f32.mrb[0].mxu0
      %v958 = vadd.f32 0.0, %v957
      %959 = vmatprep.mubr.bf16.mxu0 0
      %960 = vmatmul.mubr.bf16.gmra.mrb[0].mxu0 %v693
      %v961 = vpop.f32.mrb[0].mxu0
      %v962 = vadd.f32 0.0, %v961
      %v963 = vpop.f32.mrb[0].mxu0
      %v964 = vadd.f32 0.0, %v963
      %v965 = vpop.f32.mrb[0].mxu0
      %v966 = vadd.f32 0.0, %v965
      %v967 = vpop.f32.mrb[0].mxu0
      %v968 = vadd.f32 0.0, %v967
      %969 = vmatprep.mubr.bf16.mxu0 0
      %970 = vmatmul.mubr.bf16.gmra.mrb[0].mxu0 %v696
      %v971 = vpop.f32.mrb[0].mxu0
      %v972 = vadd.f32 0.0, %v971
      %v973 = vpop.f32.mrb[0].mxu0
      %v974 = vadd.f32 0.0, %v973
      %v975 = vpop.f32.mrb[0].mxu0
      %v976 = vadd.f32 0.0, %v975
      %v977 = vpop.f32.mrb[0].mxu0
      %v978 = vadd.f32 0.0, %v977
      %979 = vmatprep.mubr.bf16.mxu0 0
      %980 = vmatmul.mubr.bf16.gmra.mrb[0].mxu0 %v699
      %v981 = vpop.f32.mrb[0].mxu0
      %v982 = vadd.f32 0.0, %v981
      %v983 = vpop.f32.mrb[0].mxu0
      %v984 = vadd.f32 0.0, %v983
      %v985 = vpop.f32.mrb[0].mxu0
      %v986 = vadd.f32 0.0, %v985
      %v987 = vpop.f32.mrb[0].mxu0
      %v988 = vadd.f32 0.0, %v987
      %989 = vmatprep.mubr.bf16.mxu0 0
      %990 = vmatmul.mubr.bf16.gmra.mrb[0].mxu0 %v702
      %v991 = vpop.f32.mrb[0].mxu0
      %v992 = vadd.f32 0.0, %v991
      %v993 = vpop.f32.mrb[0].mxu0
      %v994 = vadd.f32 0.0, %v993
      %v995 = vpop.f32.mrb[0].mxu0
      %v996 = vadd.f32 0.0, %v995
      %v997 = vpop.f32.mrb[0].mxu0
      %v998 = vadd.f32 0.0, %v997
      %999 = vmatprep.mubr.bf16.mxu0 0
      %1000 = vmatmul.mubr.bf16.gmra.mrb[0].mxu0 %v705
      %v1001 = vpop.f32.mrb[0].mxu0
      %v1002 = vadd.f32 0.0, %v1001
      %v1003 = vpop.f32.mrb[0].mxu0
      %v1004 = vadd.f32 0.0, %v1003
      %v1005 = vpop.f32.mrb[0].mxu0
      %v1006 = vadd.f32 0.0, %v1005
      %v1007 = vpop.f32.mrb[0].mxu0
      %v1008 = vadd.f32 0.0, %v1007
      %1009 = vmatprep.mubr.bf16.mxu0 0
      %1010 = vmatmul.mubr.bf16.gmra.mrb[0].mxu0 %v708
      %v1011 = vpop.f32.mrb[0].mxu0
      %v1012 = vadd.f32 0.0, %v1011
      %v1013 = vpop.f32.mrb[0].mxu0
      %v1014 = vadd.f32 0.0, %v1013
      %v1015 = vpop.f32.mrb[0].mxu0
      %v1016 = vadd.f32 0.0, %v1015
      %v1017 = vpop.f32.mrb[0].mxu0
      %v1018 = vadd.f32 0.0, %v1017
      %1019 = vmatprep.mubr.bf16.mxu0 0
      %1020 = vmatmul.mubr.bf16.gmra.mrb[0].mxu0 %v711
      %v1021 = vpop.f32.mrb[0].mxu0
      %v1022 = vadd.f32 0.0, %v1021
      %v1023 = vpop.f32.mrb[0].mxu0
      %v1024 = vadd.f32 0.0, %v1023
      %v1025 = vpop.f32.mrb[0].mxu0
      %v1026 = vadd.f32 0.0, %v1025
      %v1027 = vpop.f32.mrb[0].mxu0
      %v1028 = vadd.f32 0.0, %v1027
      %1029 = vmatprep.mubr.bf16.mxu0 0
      %1030 = vmatmul.mubr.bf16.gmra.mrb[0].mxu0 %v714
      %v1031 = vpop.f32.mrb[0].mxu0
      %v1032 = vadd.f32 0.0, %v1031
      %v1033 = vpop.f32.mrb[0].mxu0
      %v1034 = vadd.f32 0.0, %v1033
      %v1035 = vpop.f32.mrb[0].mxu0
      %v1036 = vadd.f32 0.0, %v1035
      %v1037 = vpop.f32.mrb[0].mxu0
      %v1038 = vadd.f32 0.0, %v1037
      %1039 = vmatprep.mubr.bf16.mxu0 0
      %1040 = vmatmul.mubr.bf16.gmra.mrb[0].mxu0 %v717
      %v1041 = vpop.f32.mrb[0].mxu0
      %v1042 = vadd.f32 0.0, %v1041
      %v1043 = vpop.f32.mrb[0].mxu0
      %v1044 = vadd.f32 0.0, %v1043
      %v1045 = vpop.f32.mrb[0].mxu0
      %v1046 = vadd.f32 0.0, %v1045
      %v1047 = vpop.f32.mrb[0].mxu0
      %v1048 = vadd.f32 0.0, %v1047
      %1049 = vmatprep.mubr.bf16.mxu0 0
      %1050 = vmatmul.mubr.bf16.gmra.mrb[0].mxu0 %v720
      %v1051 = vpop.f32.mrb[0].mxu0
      %v1052 = vadd.f32 0.0, %v1051
      %v1053 = vpop.f32.mrb[0].mxu0
      %v1054 = vadd.f32 0.0, %v1053
      %v1055 = vpop.f32.mrb[0].mxu0
      %v1056 = vadd.f32 0.0, %v1055
      %v1057 = vpop.f32.mrb[0].mxu0
      %v1058 = vadd.f32 0.0, %v1057
      %1059 = vmatprep.mubr.bf16.mxu0 0
      %1060 = vmatmul.mubr.bf16.gmra.mrb[0].mxu0 %v723
      %v1061 = vpop.f32.mrb[0].mxu0
      %v1062 = vadd.f32 0.0, %v1061
      %v1063 = vpop.f32.mrb[0].mxu0
      %v1064 = vadd.f32 0.0, %v1063
      %v1065 = vpop.f32.mrb[0].mxu0
      %v1066 = vadd.f32 0.0, %v1065
      %v1067 = vpop.f32.mrb[0].mxu0
      %v1068 = vadd.f32 0.0, %v1067
      %1069 = vmatprep.mubr.bf16.mxu0 0
      %1070 = vmatmul.mubr.bf16.gmra.mrb[0].mxu0 %v726
      %v1071 = vpop.f32.mrb[0].mxu0
      %v1072 = vadd.f32 0.0, %v1071
      %v1073 = vpop.f32.mrb[0].mxu0
      %v1074 = vadd.f32 0.0, %v1073
      %v1075 = vpop.f32.mrb[0].mxu0
      %v1076 = vadd.f32 0.0, %v1075
      %v1077 = vpop.f32.mrb[0].mxu0
      %v1078 = vadd.f32 0.0, %v1077
      %1079 = vmatprep.mubr.bf16.mxu0 0
      %1080 = vmatmul.mubr.bf16.gmra.mrb[0].mxu0 %v729
      %v1081 = vpop.f32.mrb[0].mxu0
      %v1082 = vadd.f32 0.0, %v1081
      %v1083 = vpop.f32.mrb[0].mxu0
      %v1084 = vadd.f32 0.0, %v1083
      %v1085 = vpop.f32.mrb[0].mxu0
      %v1086 = vadd.f32 0.0, %v1085
      %v1087 = vpop.f32.mrb[0].mxu0
      %v1088 = vadd.f32 0.0, %v1087
      %1089 = vmatprep.mubr.bf16.mxu0 0
      %1090 = vmatmul.mubr.bf16.gmra.mrb[0].mxu0 %v732
      %v1091 = vpop.f32.mrb[0].mxu0
      %v1092 = vadd.f32 0.0, %v1091
      %v1093 = vpop.f32.mrb[0].mxu0
      %v1094 = vadd.f32 0.0, %v1093
      %v1095 = vpop.f32.mrb[0].mxu0
      %v1096 = vadd.f32 0.0, %v1095
      %v1097 = vpop.f32.mrb[0].mxu0
      %v1098 = vadd.f32 0.0, %v1097
      %1099 = vmatprep.mubr.bf16.mxu0 0
      %1100 = vmatmul.mubr.bf16.gmra.mrb[0].mxu0 %v735
      %v1101 = vpop.f32.mrb[0].mxu0
      %v1102 = vadd.f32 0.0, %v1101
      %v1103 = vpop.f32.mrb[0].mxu0
      %v1104 = vadd.f32 0.0, %v1103
      %v1105 = vpop.f32.mrb[0].mxu0
      %v1106 = vadd.f32 0.0, %v1105
      %v1107 = vpop.f32.mrb[0].mxu0
      %v1108 = vadd.f32 0.0, %v1107
      %1109 = vmatprep.mubr.bf16.mxu0 0
      %1110 = vmatmul.mubr.bf16.gmra.mrb[0].mxu0 %v738
      %v1111 = vpop.f32.mrb[0].mxu0
      %v1112 = vadd.f32 0.0, %v1111
      %v1113 = vpop.f32.mrb[0].mxu0
      %v1114 = vadd.f32 0.0, %v1113
      %v1115 = vpop.f32.mrb[0].mxu0
      %v1116 = vadd.f32 0.0, %v1115
      %v1117 = vpop.f32.mrb[0].mxu0
      %v1118 = vadd.f32 0.0, %v1117
      %1119 = vmatprep.mubr.bf16.mxu0 0
      %1120 = vmatmul.mubr.bf16.gmra.mrb[0].mxu0 %v741
      %v1121 = vpop.f32.mrb[0].mxu0
      %v1122 = vadd.f32 0.0, %v1121
      %v1123 = vpop.f32.mrb[0].mxu0
      %v1124 = vadd.f32 0.0, %v1123
      %v1125 = vpop.f32.mrb[0].mxu0
      %v1126 = vadd.f32 0.0, %v1125
      %v1127 = vpop.f32.mrb[0].mxu0
      %v1128 = vadd.f32 0.0, %v1127
      %1129 = vmatprep.mubr.bf16.mxu0 0
      %1130 = vmatmul.mubr.bf16.gmra.mrb[0].mxu0 %v744
      %v1131 = vpop.f32.mrb[0].mxu0
      %v1132 = vadd.f32 0.0, %v1131
      %v1133 = vpop.f32.mrb[0].mxu0
      %v1134 = vadd.f32 0.0, %v1133
      %v1135 = vpop.f32.mrb[0].mxu0
      %v1136 = vadd.f32 0.0, %v1135
      %v1137 = vpop.f32.mrb[0].mxu0
      %v1138 = vadd.f32 0.0, %v1137
      %1139 = vmatprep.mubr.bf16.mxu0 0
      %1140 = vmatmul.mubr.bf16.gmra.mrb[0].mxu0 %v747
      %v1141 = vpop.f32.mrb[0].mxu0
      %v1142 = vadd.f32 0.0, %v1141
      %v1143 = vpop.f32.mrb[0].mxu0
      %v1144 = vadd.f32 0.0, %v1143
      %v1145 = vpop.f32.mrb[0].mxu0
      %v1146 = vadd.f32 0.0, %v1145
      %v1147 = vpop.f32.mrb[0].mxu0
      %v1148 = vadd.f32 0.0, %v1147
      %1149 = vmatprep.mubr.bf16.mxu0 0
      %1150 = vmatmul.mubr.bf16.gmra.mrb[0].mxu0 %v750
      %v1151 = vpop.f32.mrb[0].mxu0
      %v1152 = vadd.f32 0.0, %v1151
      %v1153 = vpop.f32.mrb[0].mxu0
      %v1154 = vadd.f32 0.0, %v1153
      %v1155 = vpop.f32.mrb[0].mxu0
      %v1156 = vadd.f32 0.0, %v1155
      %v1157 = vpop.f32.mrb[0].mxu0
      %v1158 = vadd.f32 0.0, %v1157
      %1159 = vmatprep.mubr.bf16.mxu0 0
      %1160 = vmatmul.mubr.bf16.gmra.mrb[0].mxu0 %v753
      %v1161 = vpop.f32.mrb[0].mxu0
      %v1162 = vadd.f32 0.0, %v1161
      %v1163 = vpop.f32.mrb[0].mxu0
      %v1164 = vadd.f32 0.0, %v1163
      %v1165 = vpop.f32.mrb[0].mxu0
      %v1166 = vadd.f32 0.0, %v1165
      %v1167 = vpop.f32.mrb[0].mxu0
      %v1168 = vadd.f32 0.0, %v1167
      %1169 = vmatprep.mubr.bf16.mxu0 0
      %1170 = vmatmul.mubr.bf16.gmra.mrb[0].mxu0 %v756
      %v1171 = vpop.f32.mrb[0].mxu0
      %v1172 = vadd.f32 0.0, %v1171
      %v1173 = vpop.f32.mrb[0].mxu0
      %v1174 = vadd.f32 0.0, %v1173
      %v1175 = vpop.f32.mrb[0].mxu0
      %v1176 = vadd.f32 0.0, %v1175
      %v1177 = vpop.f32.mrb[0].mxu0
      %v1178 = vadd.f32 0.0, %v1177
      %1179 = vmatprep.mubr.bf16.mxu0 0
      %1180 = vmatmul.mubr.bf16.gmra.mrb[0].mxu0 %v759
      %v1181 = vpop.f32.mrb[0].mxu0
      %v1182 = vadd.f32 0.0, %v1181
      %v1183 = vpop.f32.mrb[0].mxu0
      %v1184 = vadd.f32 0.0, %v1183
      %v1185 = vpop.f32.mrb[0].mxu0
      %v1186 = vadd.f32 0.0, %v1185
      %v1187 = vpop.f32.mrb[0].mxu0
      %v1188 = vadd.f32 0.0, %v1187
      %1189 = vmatprep.mubr.bf16.mxu0 0
      %1190 = vmatmul.mubr.bf16.gmra.mrb[0].mxu0 %v762
      %v1191 = vpop.f32.mrb[0].mxu0
      %v1192 = vadd.f32 0.0, %v1191
      %v1193 = vpop.f32.mrb[0].mxu0
      %v1194 = vadd.f32 0.0, %v1193
      %v1195 = vpop.f32.mrb[0].mxu0
      %v1196 = vadd.f32 0.0, %v1195
      %v1197 = vpop.f32.mrb[0].mxu0
      %v1198 = vadd.f32 0.0, %v1197
      %1199 = vmatprep.mubr.bf16.mxu0 0
      %1200 = vmatmul.mubr.bf16.gmra.mrb[0].mxu0 %v765
      %v1201 = vpop.f32.mrb[0].mxu0
      %v1202 = vadd.f32 0.0, %v1201
      %v1203 = vpop.f32.mrb[0].mxu0
      %v1204 = vadd.f32 0.0, %v1203
      %v1205 = vpop.f32.mrb[0].mxu0
      %v1206 = vadd.f32 0.0, %v1205
      %v1207 = vpop.f32.mrb[0].mxu0
      %v1208 = vadd.f32 0.0, %v1207
      %1209 = vmatprep.mubr.bf16.mxu0 0
      %1210 = vmatmul.mubr.bf16.gmra.mrb[0].mxu0 %v768
      %v1211 = vpop.f32.mrb[0].mxu0
      %v1212 = vadd.f32 0.0, %v1211
      %v1213 = vpop.f32.mrb[0].mxu0
      %v1214 = vadd.f32 0.0, %v1213
      %v1215 = vpop.f32.mrb[0].mxu0
      %v1216 = vadd.f32 0.0, %v1215
      %v1217 = vpop.f32.mrb[0].mxu0
      %v1218 = vadd.f32 0.0, %v1217
      %1219 = vmatprep.mubr.bf16.mxu0 0
      %1220 = vmatmul.mubr.bf16.gmra.mrb[0].mxu0 %v771
      %v1221 = vpop.f32.mrb[0].mxu0
      %v1222 = vadd.f32 0.0, %v1221
      %v1223 = vpop.f32.mrb[0].mxu0
      %v1224 = vadd.f32 0.0, %v1223
      %v1225 = vpop.f32.mrb[0].mxu0
      %v1226 = vadd.f32 0.0, %v1225
      %v1227 = vpop.f32.mrb[0].mxu0
      %v1228 = vadd.f32 0.0, %v1227
      %1229 = vmatprep.mubr.bf16.mxu0 0
      %1230 = vmatmul.mubr.bf16.gmra.mrb[0].mxu0 %v774
      %v1231 = vpop.f32.mrb[0].mxu0
      %v1232 = vadd.f32 0.0, %v1231
      %v1233 = vpop.f32.mrb[0].mxu0
      %v1234 = vadd.f32 0.0, %v1233
      %v1235 = vpop.f32.mrb[0].mxu0
      %v1236 = vadd.f32 0.0, %v1235
      %v1237 = vpop.f32.mrb[0].mxu0
      %v1238 = vadd.f32 0.0, %v1237
      %1239 = vmatprep.mubr.bf16.mxu0 0
      %1240 = vmatmul.mubr.bf16.gmra.mrb[0].mxu0 %v777
      %v1241 = vpop.f32.mrb[0].mxu0
      %v1242 = vadd.f32 0.0, %v1241
      %v1243 = vpop.f32.mrb[0].mxu0
      %v1244 = vadd.f32 0.0, %v1243
      %v1245 = vpop.f32.mrb[0].mxu0
      %v1246 = vadd.f32 0.0, %v1245
      %v1247 = vpop.f32.mrb[0].mxu0
      %v1248 = vadd.f32 0.0, %v1247
      %1249 = vmatprep.mubr.bf16.mxu0 0
      %1250 = vmatmul.mubr.bf16.gmra.mrb[0].mxu0 %v780
      %v1251 = vpop.f32.mrb[0].mxu0
      %v1252 = vadd.f32 0.0, %v1251
      %v1253 = vpop.f32.mrb[0].mxu0
      %v1254 = vadd.f32 0.0, %v1253
      %v1255 = vpop.f32.mrb[0].mxu0
      %v1256 = vadd.f32 0.0, %v1255
      %v1257 = vpop.f32.mrb[0].mxu0
      %v1258 = vadd.f32 0.0, %v1257
      %1259 = vmatprep.mubr.bf16.mxu0 0
      %1260 = vmatmul.mubr.bf16.gmra.mrb[0].mxu0 %v783
      %v1261 = vpop.f32.mrb[0].mxu0
      %v1262 = vadd.f32 0.0, %v1261
      %v1263 = vpop.f32.mrb[0].mxu0
      %v1264 = vadd.f32 0.0, %v1263
      %v1265 = vpop.f32.mrb[0].mxu0
      %v1266 = vadd.f32 0.0, %v1265
      %v1267 = vpop.f32.mrb[0].mxu0
      %v1268 = vadd.f32 0.0, %v1267
      %1269 = vmatprep.mubr.bf16.mxu0 0
      %1270 = vmatmul.mubr.bf16.gmra.mrb[0].mxu0 %v786
      %v1271 = vpop.f32.mrb[0].mxu0
      %v1272 = vadd.f32 0.0, %v1271
      %v1273 = vpop.f32.mrb[0].mxu0
      %v1274 = vadd.f32 0.0, %v1273
      %v1275 = vpop.f32.mrb[0].mxu0
      %v1276 = vadd.f32 0.0, %v1275
      %v1277 = vpop.f32.mrb[0].mxu0
      %v1278 = vadd.f32 0.0, %v1277
      %1279 = vmatprep.mubr.bf16.mxu0 0
      %1280 = vmatmul.mubr.bf16.gmra.mrb[0].mxu0 %v789
      %v1281 = vpop.f32.mrb[0].mxu0
      %v1282 = vadd.f32 0.0, %v1281
      %v1283 = vpop.f32.mrb[0].mxu0
      %v1284 = vadd.f32 0.0, %v1283
      %v1285 = vpop.f32.mrb[0].mxu0
      %v1286 = vadd.f32 0.0, %v1285
      %v1287 = vpop.f32.mrb[0].mxu0
      %v1288 = vadd.f32 0.0, %v1287
      %1289 = vmatprep.mubr.bf16.mxu0 0
      %1290 = vmatmul.mubr.bf16.gmra.mrb[0].mxu0 %v792
      %v1291 = vpop.f32.mrb[0].mxu0
      %v1292 = vadd.f32 0.0, %v1291
      %v1293 = vpop.f32.mrb[0].mxu0
      %v1294 = vadd.f32 0.0, %v1293
      %v1295 = vpop.f32.mrb[0].mxu0
      %v1296 = vadd.f32 0.0, %v1295
      %v1297 = vpop.f32.mrb[0].mxu0
      %v1298 = vadd.f32 0.0, %v1297
      %1299 = vmatprep.mubr.bf16.mxu0 0
      %1300 = vmatmul.mubr.bf16.gmra.mrb[0].mxu0 %v795
      %v1301 = vpop.f32.mrb[0].mxu0
      %v1302 = vadd.f32 0.0, %v1301
      %v1303 = vpop.f32.mrb[0].mxu0
      %v1304 = vadd.f32 0.0, %v1303
      %v1305 = vpop.f32.mrb[0].mxu0
      %v1306 = vadd.f32 0.0, %v1305
      %v1307 = vpop.f32.mrb[0].mxu0
      %v1308 = vadd.f32 0.0, %v1307
      %1309 = vmatprep.mubr.bf16.mxu0 0
      %1310 = vmatmul.mubr.bf16.gmra.mrb[0].mxu0 %v798
      %v1311 = vpop.f32.mrb[0].mxu0
      %v1312 = vadd.f32 0.0, %v1311
      %v1313 = vpop.f32.mrb[0].mxu0
      %v1314 = vadd.f32 0.0, %v1313
      %v1315 = vpop.f32.mrb[0].mxu0
      %v1316 = vadd.f32 0.0, %v1315
      %v1317 = vpop.f32.mrb[0].mxu0
      %v1318 = vadd.f32 0.0, %v1317
      %1319 = vdwg.mxu0
      %v1324 = vunpack.c.l.b16 %v484
      %v1325 = vunpack.c.h.b16 %v484
      %v1326 = vunpack.c.l.b16 %v485
      %v1327 = vunpack.c.h.b16 %v485
      %v1328 = vunpack.c.l.b16 %v486
      %v1329 = vunpack.c.h.b16 %v486
      %v1330 = vunpack.c.l.b16 %v487
      %v1331 = vunpack.c.h.b16 %v487
      %v1332 = vpack.c.b16 %v1326, %v1324
      %v1333 = vpack.c.b16 %v1327, %v1325
      %v1334 = vpack.c.b16 %v1330, %v1328
      %v1335 = vpack.c.b16 %v1331, %v1329
      %v1339 = vsel %vm655, %v436, 0
      %v1342 = vsel %vm655, %v437, 0
      %v1345 = vsel %vm655, %v438, 0
      %v1348 = vsel %vm655, %v439, 0
      %v1351 = vsel %vm655, %v440, 0
      %v1354 = vsel %vm655, %v441, 0
      %v1357 = vsel %vm655, %v442, 0
      %v1360 = vsel %vm655, %v443, 0
      %v1363 = vsel %vm655, %v444, 0
      %v1366 = vsel %vm655, %v445, 0
      %v1369 = vsel %vm655, %v446, 0
      %v1372 = vsel %vm655, %v447, 0
      %v1375 = vsel %vm655, %v448, 0
      %v1378 = vsel %vm655, %v449, 0
      %v1381 = vsel %vm655, %v450, 0
      %v1384 = vsel %vm655, %v451, 0
      %v1387 = vsel %vm655, %v452, 0
      %v1390 = vsel %vm655, %v453, 0
      %v1393 = vsel %vm655, %v454, 0
      %v1396 = vsel %vm655, %v455, 0
      %v1399 = vsel %vm655, %v456, 0
      %v1402 = vsel %vm655, %v457, 0
      %v1405 = vsel %vm655, %v458, 0
      %v1408 = vsel %vm655, %v459, 0
      %v1411 = vsel %vm655, %v460, 0
      %v1414 = vsel %vm655, %v461, 0
      %v1417 = vsel %vm655, %v462, 0
      %v1420 = vsel %vm655, %v463, 0
      %v1423 = vsel %vm655, %v464, 0
      %v1426 = vsel %vm655, %v465, 0
      %v1429 = vsel %vm655, %v466, 0
      %v1432 = vsel %vm655, %v467, 0
      %v1435 = vsel %vm655, %v468, 0
      %v1438 = vsel %vm655, %v469, 0
      %v1441 = vsel %vm655, %v470, 0
      %v1444 = vsel %vm655, %v471, 0
      %v1447 = vsel %vm655, %v472, 0
      %v1450 = vsel %vm655, %v473, 0
      %v1453 = vsel %vm655, %v474, 0
      %v1456 = vsel %vm655, %v475, 0
      %v1459 = vsel %vm655, %v476, 0
      %v1462 = vsel %vm655, %v477, 0
      %v1465 = vsel %vm655, %v478, 0
      %v1468 = vsel %vm655, %v479, 0
      %v1471 = vsel %vm655, %v480, 0
      %v1474 = vsel %vm655, %v481, 0
      %v1477 = vsel %vm655, %v482, 0
      %v1480 = vsel %vm655, %v483, 0
      %v1483 = vsel %vm800, %v1334, 0
      %v1486 = vsel %vm800, %v1335, 0
      %1488 = vmatprep.subr.bf16.mxu0 %v1333
      %1489 = vmatpush1.bf16.msra.mxu0 %v1332
      %1490 = vmatprep.subr.bf16.mxu0 %v1486
      %1491 = vmatpush1.bf16.msra.mxu0 %v1483
      %1492 = vmatprep.subr.bf16.mxu0 0
      %1493 = vmatpush1.bf16.msra.mxu0 0
      %1494 = vmatprep.subr.bf16.mxu0 0
      %1495 = vmatpush1.bf16.msra.mxu0 0
      %1496 = vmatprep.subr.bf16.mxu0 0
      %1497 = vmatpush1.bf16.msra.mxu0 0
      %1498 = vmatprep.subr.bf16.mxu0 0
      %1499 = vmatpush1.bf16.msra.mxu0 0
      %1500 = vmatprep.subr.bf16.mxu0 0
      %1501 = vmatpush1.bf16.msra.mxu0 0
      %1502 = vmatprep.subr.bf16.mxu0 0
      %1503 = vmatpush1.bf16.msra.mxu0 0
      %1504 = vmatprep.subr.bf16.mxu0 0
      %1505 = vmatpush1.bf16.msra.mxu0 0
      %1506 = vmatprep.subr.bf16.mxu0 0
      %1507 = vmatpush1.bf16.msra.mxu0 0
      %1508 = vmatprep.subr.bf16.mxu0 0
      %1509 = vmatpush1.bf16.msra.mxu0 0
      %1510 = vmatprep.subr.bf16.mxu0 0
      %1511 = vmatpush1.bf16.msra.mxu0 0
      %1512 = vmatprep.subr.bf16.mxu0 0
      %1513 = vmatpush1.bf16.msra.mxu0 0
      %1514 = vmatprep.subr.bf16.mxu0 0
      %1515 = vmatpush1.bf16.msra.mxu0 0
      %1516 = vmatprep.subr.bf16.mxu0 0
      %1517 = vmatpush1.bf16.msra.mxu0 0
      %1518 = vmatprep.subr.bf16.mxu0 0
      %1519 = vmatpush1.bf16.msra.mxu0 0
      %1520 = vmatprep.mubr.bf16.mxu0 0
      %1521 = vmatmul.mubr.bf16.gmra.mrb[0].mxu0 %v1339
      %v1522 = vpop.f32.mrb[0].mxu0
      %v1523 = vadd.f32 %v842, %v1522
      %v1524 = vpop.f32.mrb[0].mxu0
      %v1525 = vadd.f32 %v844, %v1524
      %v1526 = vpop.f32.mrb[0].mxu0
      %v1527 = vadd.f32 %v846, %v1526
      %v1528 = vpop.f32.mrb[0].mxu0
      %v1529 = vadd.f32 %v848, %v1528
      %1530 = vmatprep.mubr.bf16.mxu0 0
      %1531 = vmatmul.mubr.bf16.gmra.mrb[0].mxu0 %v1342
      %v1532 = vpop.f32.mrb[0].mxu0
      %v1533 = vadd.f32 %v852, %v1532
      %v1534 = vpop.f32.mrb[0].mxu0
      %v1535 = vadd.f32 %v854, %v1534
      %v1536 = vpop.f32.mrb[0].mxu0
      %v1537 = vadd.f32 %v856, %v1536
      %v1538 = vpop.f32.mrb[0].mxu0
      %v1539 = vadd.f32 %v858, %v1538
      %1540 = vmatprep.mubr.bf16.mxu0 0
      %1541 = vmatmul.mubr.bf16.gmra.mrb[0].mxu0 %v1345
      %v1542 = vpop.f32.mrb[0].mxu0
      %v1543 = vadd.f32 %v862, %v1542
      %v1544 = vpop.f32.mrb[0].mxu0
      %v1545 = vadd.f32 %v864, %v1544
      %v1546 = vpop.f32.mrb[0].mxu0
      %v1547 = vadd.f32 %v866, %v1546
      %v1548 = vpop.f32.mrb[0].mxu0
      %v1549 = vadd.f32 %v868, %v1548
      %1550 = vmatprep.mubr.bf16.mxu0 0
      %1551 = vmatmul.mubr.bf16.gmra.mrb[0].mxu0 %v1348
      %v1552 = vpop.f32.mrb[0].mxu0
      %v1553 = vadd.f32 %v872, %v1552
      %v1554 = vpop.f32.mrb[0].mxu0
      %v1555 = vadd.f32 %v874, %v1554
      %v1556 = vpop.f32.mrb[0].mxu0
      %v1557 = vadd.f32 %v876, %v1556
      %v1558 = vpop.f32.mrb[0].mxu0
      %v1559 = vadd.f32 %v878, %v1558
      %1560 = vmatprep.mubr.bf16.mxu0 0
      %1561 = vmatmul.mubr.bf16.gmra.mrb[0].mxu0 %v1351
      %v1562 = vpop.f32.mrb[0].mxu0
      %v1563 = vadd.f32 %v882, %v1562
      %v1564 = vpop.f32.mrb[0].mxu0
      %v1565 = vadd.f32 %v884, %v1564
      %v1566 = vpop.f32.mrb[0].mxu0
      %v1567 = vadd.f32 %v886, %v1566
      %v1568 = vpop.f32.mrb[0].mxu0
      %v1569 = vadd.f32 %v888, %v1568
      %1570 = vmatprep.mubr.bf16.mxu0 0
      %1571 = vmatmul.mubr.bf16.gmra.mrb[0].mxu0 %v1354
      %v1572 = vpop.f32.mrb[0].mxu0
      %v1573 = vadd.f32 %v892, %v1572
      %v1574 = vpop.f32.mrb[0].mxu0
      %v1575 = vadd.f32 %v894, %v1574
      %v1576 = vpop.f32.mrb[0].mxu0
      %v1577 = vadd.f32 %v896, %v1576
      %v1578 = vpop.f32.mrb[0].mxu0
      %v1579 = vadd.f32 %v898, %v1578
      %1580 = vmatprep.mubr.bf16.mxu0 0
      %1581 = vmatmul.mubr.bf16.gmra.mrb[0].mxu0 %v1357
      %v1582 = vpop.f32.mrb[0].mxu0
      %v1583 = vadd.f32 %v902, %v1582
      %v1584 = vpop.f32.mrb[0].mxu0
      %v1585 = vadd.f32 %v904, %v1584
      %v1586 = vpop.f32.mrb[0].mxu0
      %v1587 = vadd.f32 %v906, %v1586
      %v1588 = vpop.f32.mrb[0].mxu0
      %v1589 = vadd.f32 %v908, %v1588
      %1590 = vmatprep.mubr.bf16.mxu0 0
      %1591 = vmatmul.mubr.bf16.gmra.mrb[0].mxu0 %v1360
      %v1592 = vpop.f32.mrb[0].mxu0
      %v1593 = vadd.f32 %v912, %v1592
      %v1594 = vpop.f32.mrb[0].mxu0
      %v1595 = vadd.f32 %v914, %v1594
      %v1596 = vpop.f32.mrb[0].mxu0
      %v1597 = vadd.f32 %v916, %v1596
      %v1598 = vpop.f32.mrb[0].mxu0
      %v1599 = vadd.f32 %v918, %v1598
      %1600 = vmatprep.mubr.bf16.mxu0 0
      %1601 = vmatmul.mubr.bf16.gmra.mrb[0].mxu0 %v1363
      %v1602 = vpop.f32.mrb[0].mxu0
      %v1603 = vadd.f32 %v922, %v1602
      %v1604 = vpop.f32.mrb[0].mxu0
      %v1605 = vadd.f32 %v924, %v1604
      %v1606 = vpop.f32.mrb[0].mxu0
      %v1607 = vadd.f32 %v926, %v1606
      %v1608 = vpop.f32.mrb[0].mxu0
      %v1609 = vadd.f32 %v928, %v1608
      %1610 = vmatprep.mubr.bf16.mxu0 0
      %1611 = vmatmul.mubr.bf16.gmra.mrb[0].mxu0 %v1366
      %v1612 = vpop.f32.mrb[0].mxu0
      %v1613 = vadd.f32 %v932, %v1612
      %v1614 = vpop.f32.mrb[0].mxu0
      %v1615 = vadd.f32 %v934, %v1614
      %v1616 = vpop.f32.mrb[0].mxu0
      %v1617 = vadd.f32 %v936, %v1616
      %v1618 = vpop.f32.mrb[0].mxu0
      %v1619 = vadd.f32 %v938, %v1618
      %1620 = vmatprep.mubr.bf16.mxu0 0
      %1621 = vmatmul.mubr.bf16.gmra.mrb[0].mxu0 %v1369
      %v1622 = vpop.f32.mrb[0].mxu0
      %v1623 = vadd.f32 %v942, %v1622
      %v1624 = vpop.f32.mrb[0].mxu0
      %v1625 = vadd.f32 %v944, %v1624
      %v1626 = vpop.f32.mrb[0].mxu0
      %v1627 = vadd.f32 %v946, %v1626
      %v1628 = vpop.f32.mrb[0].mxu0
      %v1629 = vadd.f32 %v948, %v1628
      %1630 = vmatprep.mubr.bf16.mxu0 0
      %1631 = vmatmul.mubr.bf16.gmra.mrb[0].mxu0 %v1372
      %v1632 = vpop.f32.mrb[0].mxu0
      %v1633 = vadd.f32 %v952, %v1632
      %v1634 = vpop.f32.mrb[0].mxu0
      %v1635 = vadd.f32 %v954, %v1634
      %v1636 = vpop.f32.mrb[0].mxu0
      %v1637 = vadd.f32 %v956, %v1636
      %v1638 = vpop.f32.mrb[0].mxu0
      %v1639 = vadd.f32 %v958, %v1638
      %1640 = vmatprep.mubr.bf16.mxu0 0
      %1641 = vmatmul.mubr.bf16.gmra.mrb[0].mxu0 %v1375
      %v1642 = vpop.f32.mrb[0].mxu0
      %v1643 = vadd.f32 %v962, %v1642
      %v1644 = vpop.f32.mrb[0].mxu0
      %v1645 = vadd.f32 %v964, %v1644
      %v1646 = vpop.f32.mrb[0].mxu0
      %v1647 = vadd.f32 %v966, %v1646
      %v1648 = vpop.f32.mrb[0].mxu0
      %v1649 = vadd.f32 %v968, %v1648
      %1650 = vmatprep.mubr.bf16.mxu0 0
      %1651 = vmatmul.mubr.bf16.gmra.mrb[0].mxu0 %v1378
      %v1652 = vpop.f32.mrb[0].mxu0
      %v1653 = vadd.f32 %v972, %v1652
      %v1654 = vpop.f32.mrb[0].mxu0
      %v1655 = vadd.f32 %v974, %v1654
      %v1656 = vpop.f32.mrb[0].mxu0
      %v1657 = vadd.f32 %v976, %v1656
      %v1658 = vpop.f32.mrb[0].mxu0
      %v1659 = vadd.f32 %v978, %v1658
      %1660 = vmatprep.mubr.bf16.mxu0 0
      %1661 = vmatmul.mubr.bf16.gmra.mrb[0].mxu0 %v1381
      %v1662 = vpop.f32.mrb[0].mxu0
      %v1663 = vadd.f32 %v982, %v1662
      %v1664 = vpop.f32.mrb[0].mxu0
      %v1665 = vadd.f32 %v984, %v1664
      %v1666 = vpop.f32.mrb[0].mxu0
      %v1667 = vadd.f32 %v986, %v1666
      %v1668 = vpop.f32.mrb[0].mxu0
      %v1669 = vadd.f32 %v988, %v1668
      %1670 = vmatprep.mubr.bf16.mxu0 0
      %1671 = vmatmul.mubr.bf16.gmra.mrb[0].mxu0 %v1384
      %v1672 = vpop.f32.mrb[0].mxu0
      %v1673 = vadd.f32 %v992, %v1672
      %v1674 = vpop.f32.mrb[0].mxu0
      %v1675 = vadd.f32 %v994, %v1674
      %v1676 = vpop.f32.mrb[0].mxu0
      %v1677 = vadd.f32 %v996, %v1676
      %v1678 = vpop.f32.mrb[0].mxu0
      %v1679 = vadd.f32 %v998, %v1678
      %1680 = vmatprep.mubr.bf16.mxu0 0
      %1681 = vmatmul.mubr.bf16.gmra.mrb[0].mxu0 %v1387
      %v1682 = vpop.f32.mrb[0].mxu0
      %v1683 = vadd.f32 %v1002, %v1682
      %v1684 = vpop.f32.mrb[0].mxu0
      %v1685 = vadd.f32 %v1004, %v1684
      %v1686 = vpop.f32.mrb[0].mxu0
      %v1687 = vadd.f32 %v1006, %v1686
      %v1688 = vpop.f32.mrb[0].mxu0
      %v1689 = vadd.f32 %v1008, %v1688
      %1690 = vmatprep.mubr.bf16.mxu0 0
      %1691 = vmatmul.mubr.bf16.gmra.mrb[0].mxu0 %v1390
      %v1692 = vpop.f32.mrb[0].mxu0
      %v1693 = vadd.f32 %v1012, %v1692
      %v1694 = vpop.f32.mrb[0].mxu0
      %v1695 = vadd.f32 %v1014, %v1694
      %v1696 = vpop.f32.mrb[0].mxu0
      %v1697 = vadd.f32 %v1016, %v1696
      %v1698 = vpop.f32.mrb[0].mxu0
      %v1699 = vadd.f32 %v1018, %v1698
      %1700 = vmatprep.mubr.bf16.mxu0 0
      %1701 = vmatmul.mubr.bf16.gmra.mrb[0].mxu0 %v1393
      %v1702 = vpop.f32.mrb[0].mxu0
      %v1703 = vadd.f32 %v1022, %v1702
      %v1704 = vpop.f32.mrb[0].mxu0
      %v1705 = vadd.f32 %v1024, %v1704
      %v1706 = vpop.f32.mrb[0].mxu0
      %v1707 = vadd.f32 %v1026, %v1706
      %v1708 = vpop.f32.mrb[0].mxu0
      %v1709 = vadd.f32 %v1028, %v1708
      %1710 = vmatprep.mubr.bf16.mxu0 0
      %1711 = vmatmul.mubr.bf16.gmra.mrb[0].mxu0 %v1396
      %v1712 = vpop.f32.mrb[0].mxu0
      %v1713 = vadd.f32 %v1032, %v1712
      %v1714 = vpop.f32.mrb[0].mxu0
      %v1715 = vadd.f32 %v1034, %v1714
      %v1716 = vpop.f32.mrb[0].mxu0
      %v1717 = vadd.f32 %v1036, %v1716
      %v1718 = vpop.f32.mrb[0].mxu0
      %v1719 = vadd.f32 %v1038, %v1718
      %1720 = vmatprep.mubr.bf16.mxu0 0
      %1721 = vmatmul.mubr.bf16.gmra.mrb[0].mxu0 %v1399
      %v1722 = vpop.f32.mrb[0].mxu0
      %v1723 = vadd.f32 %v1042, %v1722
      %v1724 = vpop.f32.mrb[0].mxu0
      %v1725 = vadd.f32 %v1044, %v1724
      %v1726 = vpop.f32.mrb[0].mxu0
      %v1727 = vadd.f32 %v1046, %v1726
      %v1728 = vpop.f32.mrb[0].mxu0
      %v1729 = vadd.f32 %v1048, %v1728
      %1730 = vmatprep.mubr.bf16.mxu0 0
      %1731 = vmatmul.mubr.bf16.gmra.mrb[0].mxu0 %v1402
      %v1732 = vpop.f32.mrb[0].mxu0
      %v1733 = vadd.f32 %v1052, %v1732
      %v1734 = vpop.f32.mrb[0].mxu0
      %v1735 = vadd.f32 %v1054, %v1734
      %v1736 = vpop.f32.mrb[0].mxu0
      %v1737 = vadd.f32 %v1056, %v1736
      %v1738 = vpop.f32.mrb[0].mxu0
      %v1739 = vadd.f32 %v1058, %v1738
      %1740 = vmatprep.mubr.bf16.mxu0 0
      %1741 = vmatmul.mubr.bf16.gmra.mrb[0].mxu0 %v1405
      %v1742 = vpop.f32.mrb[0].mxu0
      %v1743 = vadd.f32 %v1062, %v1742
      %v1744 = vpop.f32.mrb[0].mxu0
      %v1745 = vadd.f32 %v1064, %v1744
      %v1746 = vpop.f32.mrb[0].mxu0
      %v1747 = vadd.f32 %v1066, %v1746
      %v1748 = vpop.f32.mrb[0].mxu0
      %v1749 = vadd.f32 %v1068, %v1748
      %1750 = vmatprep.mubr.bf16.mxu0 0
      %1751 = vmatmul.mubr.bf16.gmra.mrb[0].mxu0 %v1408
      %v1752 = vpop.f32.mrb[0].mxu0
      %v1753 = vadd.f32 %v1072, %v1752
      %v1754 = vpop.f32.mrb[0].mxu0
      %v1755 = vadd.f32 %v1074, %v1754
      %v1756 = vpop.f32.mrb[0].mxu0
      %v1757 = vadd.f32 %v1076, %v1756
      %v1758 = vpop.f32.mrb[0].mxu0
      %v1759 = vadd.f32 %v1078, %v1758
      %1760 = vmatprep.mubr.bf16.mxu0 0
      %1761 = vmatmul.mubr.bf16.gmra.mrb[0].mxu0 %v1411
      %v1762 = vpop.f32.mrb[0].mxu0
      %v1763 = vadd.f32 %v1082, %v1762
      %v1764 = vpop.f32.mrb[0].mxu0
      %v1765 = vadd.f32 %v1084, %v1764
      %v1766 = vpop.f32.mrb[0].mxu0
      %v1767 = vadd.f32 %v1086, %v1766
      %v1768 = vpop.f32.mrb[0].mxu0
      %v1769 = vadd.f32 %v1088, %v1768
      %1770 = vmatprep.mubr.bf16.mxu0 0
      %1771 = vmatmul.mubr.bf16.gmra.mrb[0].mxu0 %v1414
      %v1772 = vpop.f32.mrb[0].mxu0
      %v1773 = vadd.f32 %v1092, %v1772
      %v1774 = vpop.f32.mrb[0].mxu0
      %v1775 = vadd.f32 %v1094, %v1774
      %v1776 = vpop.f32.mrb[0].mxu0
      %v1777 = vadd.f32 %v1096, %v1776
      %v1778 = vpop.f32.mrb[0].mxu0
      %v1779 = vadd.f32 %v1098, %v1778
      %1780 = vmatprep.mubr.bf16.mxu0 0
      %1781 = vmatmul.mubr.bf16.gmra.mrb[0].mxu0 %v1417
      %v1782 = vpop.f32.mrb[0].mxu0
      %v1783 = vadd.f32 %v1102, %v1782
      %v1784 = vpop.f32.mrb[0].mxu0
      %v1785 = vadd.f32 %v1104, %v1784
      %v1786 = vpop.f32.mrb[0].mxu0
      %v1787 = vadd.f32 %v1106, %v1786
      %v1788 = vpop.f32.mrb[0].mxu0
      %v1789 = vadd.f32 %v1108, %v1788
      %1790 = vmatprep.mubr.bf16.mxu0 0
      %1791 = vmatmul.mubr.bf16.gmra.mrb[0].mxu0 %v1420
      %v1792 = vpop.f32.mrb[0].mxu0
      %v1793 = vadd.f32 %v1112, %v1792
      %v1794 = vpop.f32.mrb[0].mxu0
      %v1795 = vadd.f32 %v1114, %v1794
      %v1796 = vpop.f32.mrb[0].mxu0
      %v1797 = vadd.f32 %v1116, %v1796
      %v1798 = vpop.f32.mrb[0].mxu0
      %v1799 = vadd.f32 %v1118, %v1798
      %1800 = vmatprep.mubr.bf16.mxu0 0
      %1801 = vmatmul.mubr.bf16.gmra.mrb[0].mxu0 %v1423
      %v1802 = vpop.f32.mrb[0].mxu0
      %v1803 = vadd.f32 %v1122, %v1802
      %v1804 = vpop.f32.mrb[0].mxu0
      %v1805 = vadd.f32 %v1124, %v1804
      %v1806 = vpop.f32.mrb[0].mxu0
      %v1807 = vadd.f32 %v1126, %v1806
      %v1808 = vpop.f32.mrb[0].mxu0
      %v1809 = vadd.f32 %v1128, %v1808
      %1810 = vmatprep.mubr.bf16.mxu0 0
      %1811 = vmatmul.mubr.bf16.gmra.mrb[0].mxu0 %v1426
      %v1812 = vpop.f32.mrb[0].mxu0
      %v1813 = vadd.f32 %v1132, %v1812
      %v1814 = vpop.f32.mrb[0].mxu0
      %v1815 = vadd.f32 %v1134, %v1814
      %v1816 = vpop.f32.mrb[0].mxu0
      %v1817 = vadd.f32 %v1136, %v1816
      %v1818 = vpop.f32.mrb[0].mxu0
      %v1819 = vadd.f32 %v1138, %v1818
      %1820 = vmatprep.mubr.bf16.mxu0 0
      %1821 = vmatmul.mubr.bf16.gmra.mrb[0].mxu0 %v1429
      %v1822 = vpop.f32.mrb[0].mxu0
      %v1823 = vadd.f32 %v1142, %v1822
      %v1824 = vpop.f32.mrb[0].mxu0
      %v1825 = vadd.f32 %v1144, %v1824
      %v1826 = vpop.f32.mrb[0].mxu0
      %v1827 = vadd.f32 %v1146, %v1826
      %v1828 = vpop.f32.mrb[0].mxu0
      %v1829 = vadd.f32 %v1148, %v1828
      %1830 = vmatprep.mubr.bf16.mxu0 0
      %1831 = vmatmul.mubr.bf16.gmra.mrb[0].mxu0 %v1432
      %v1832 = vpop.f32.mrb[0].mxu0
      %v1833 = vadd.f32 %v1152, %v1832
      %v1834 = vpop.f32.mrb[0].mxu0
      %v1835 = vadd.f32 %v1154, %v1834
      %v1836 = vpop.f32.mrb[0].mxu0
      %v1837 = vadd.f32 %v1156, %v1836
      %v1838 = vpop.f32.mrb[0].mxu0
      %v1839 = vadd.f32 %v1158, %v1838
      %1840 = vmatprep.mubr.bf16.mxu0 0
      %1841 = vmatmul.mubr.bf16.gmra.mrb[0].mxu0 %v1435
      %v1842 = vpop.f32.mrb[0].mxu0
      %v1843 = vadd.f32 %v1162, %v1842
      %v1844 = vpop.f32.mrb[0].mxu0
      %v1845 = vadd.f32 %v1164, %v1844
      %v1846 = vpop.f32.mrb[0].mxu0
      %v1847 = vadd.f32 %v1166, %v1846
      %v1848 = vpop.f32.mrb[0].mxu0
      %v1849 = vadd.f32 %v1168, %v1848
      %1850 = vmatprep.mubr.bf16.mxu0 0
      %1851 = vmatmul.mubr.bf16.gmra.mrb[0].mxu0 %v1438
      %v1852 = vpop.f32.mrb[0].mxu0
      %v1853 = vadd.f32 %v1172, %v1852
      %v1854 = vpop.f32.mrb[0].mxu0
      %v1855 = vadd.f32 %v1174, %v1854
      %v1856 = vpop.f32.mrb[0].mxu0
      %v1857 = vadd.f32 %v1176, %v1856
      %v1858 = vpop.f32.mrb[0].mxu0
      %v1859 = vadd.f32 %v1178, %v1858
      %1860 = vmatprep.mubr.bf16.mxu0 0
      %1861 = vmatmul.mubr.bf16.gmra.mrb[0].mxu0 %v1441
      %v1862 = vpop.f32.mrb[0].mxu0
      %v1863 = vadd.f32 %v1182, %v1862
      %v1864 = vpop.f32.mrb[0].mxu0
      %v1865 = vadd.f32 %v1184, %v1864
      %v1866 = vpop.f32.mrb[0].mxu0
      %v1867 = vadd.f32 %v1186, %v1866
      %v1868 = vpop.f32.mrb[0].mxu0
      %v1869 = vadd.f32 %v1188, %v1868
      %1870 = vmatprep.mubr.bf16.mxu0 0
      %1871 = vmatmul.mubr.bf16.gmra.mrb[0].mxu0 %v1444
      %v1872 = vpop.f32.mrb[0].mxu0
      %v1873 = vadd.f32 %v1192, %v1872
      %v1874 = vpop.f32.mrb[0].mxu0
      %v1875 = vadd.f32 %v1194, %v1874
      %v1876 = vpop.f32.mrb[0].mxu0
      %v1877 = vadd.f32 %v1196, %v1876
      %v1878 = vpop.f32.mrb[0].mxu0
      %v1879 = vadd.f32 %v1198, %v1878
      %1880 = vmatprep.mubr.bf16.mxu0 0
      %1881 = vmatmul.mubr.bf16.gmra.mrb[0].mxu0 %v1447
      %v1882 = vpop.f32.mrb[0].mxu0
      %v1883 = vadd.f32 %v1202, %v1882
      %v1884 = vpop.f32.mrb[0].mxu0
      %v1885 = vadd.f32 %v1204, %v1884
      %v1886 = vpop.f32.mrb[0].mxu0
      %v1887 = vadd.f32 %v1206, %v1886
      %v1888 = vpop.f32.mrb[0].mxu0
      %v1889 = vadd.f32 %v1208, %v1888
      %1890 = vmatprep.mubr.bf16.mxu0 0
      %1891 = vmatmul.mubr.bf16.gmra.mrb[0].mxu0 %v1450
      %v1892 = vpop.f32.mrb[0].mxu0
      %v1893 = vadd.f32 %v1212, %v1892
      %v1894 = vpop.f32.mrb[0].mxu0
      %v1895 = vadd.f32 %v1214, %v1894
      %v1896 = vpop.f32.mrb[0].mxu0
      %v1897 = vadd.f32 %v1216, %v1896
      %v1898 = vpop.f32.mrb[0].mxu0
      %v1899 = vadd.f32 %v1218, %v1898
      %1900 = vmatprep.mubr.bf16.mxu0 0
      %1901 = vmatmul.mubr.bf16.gmra.mrb[0].mxu0 %v1453
      %v1902 = vpop.f32.mrb[0].mxu0
      %v1903 = vadd.f32 %v1222, %v1902
      %v1904 = vpop.f32.mrb[0].mxu0
      %v1905 = vadd.f32 %v1224, %v1904
      %v1906 = vpop.f32.mrb[0].mxu0
      %v1907 = vadd.f32 %v1226, %v1906
      %v1908 = vpop.f32.mrb[0].mxu0
      %v1909 = vadd.f32 %v1228, %v1908
      %1910 = vmatprep.mubr.bf16.mxu0 0
      %1911 = vmatmul.mubr.bf16.gmra.mrb[0].mxu0 %v1456
      %v1912 = vpop.f32.mrb[0].mxu0
      %v1913 = vadd.f32 %v1232, %v1912
      %v1914 = vpop.f32.mrb[0].mxu0
      %v1915 = vadd.f32 %v1234, %v1914
      %v1916 = vpop.f32.mrb[0].mxu0
      %v1917 = vadd.f32 %v1236, %v1916
      %v1918 = vpop.f32.mrb[0].mxu0
      %v1919 = vadd.f32 %v1238, %v1918
      %1920 = vmatprep.mubr.bf16.mxu0 0
      %1921 = vmatmul.mubr.bf16.gmra.mrb[0].mxu0 %v1459
      %v1922 = vpop.f32.mrb[0].mxu0
      %v1923 = vadd.f32 %v1242, %v1922
      %v1924 = vpop.f32.mrb[0].mxu0
      %v1925 = vadd.f32 %v1244, %v1924
      %v1926 = vpop.f32.mrb[0].mxu0
      %v1927 = vadd.f32 %v1246, %v1926
      %v1928 = vpop.f32.mrb[0].mxu0
      %v1929 = vadd.f32 %v1248, %v1928
      %1930 = vmatprep.mubr.bf16.mxu0 0
      %1931 = vmatmul.mubr.bf16.gmra.mrb[0].mxu0 %v1462
      %v1932 = vpop.f32.mrb[0].mxu0
      %v1933 = vadd.f32 %v1252, %v1932
      %v1934 = vpop.f32.mrb[0].mxu0
      %v1935 = vadd.f32 %v1254, %v1934
      %v1936 = vpop.f32.mrb[0].mxu0
      %v1937 = vadd.f32 %v1256, %v1936
      %v1938 = vpop.f32.mrb[0].mxu0
      %v1939 = vadd.f32 %v1258, %v1938
      %1940 = vmatprep.mubr.bf16.mxu0 0
      %1941 = vmatmul.mubr.bf16.gmra.mrb[0].mxu0 %v1465
      %v1942 = vpop.f32.mrb[0].mxu0
      %v1943 = vadd.f32 %v1262, %v1942
      %v1944 = vpop.f32.mrb[0].mxu0
      %v1945 = vadd.f32 %v1264, %v1944
      %v1946 = vpop.f32.mrb[0].mxu0
      %v1947 = vadd.f32 %v1266, %v1946
      %v1948 = vpop.f32.mrb[0].mxu0
      %v1949 = vadd.f32 %v1268, %v1948
      %1950 = vmatprep.mubr.bf16.mxu0 0
      %1951 = vmatmul.mubr.bf16.gmra.mrb[0].mxu0 %v1468
      %v1952 = vpop.f32.mrb[0].mxu0
      %v1953 = vadd.f32 %v1272, %v1952
      %v1954 = vpop.f32.mrb[0].mxu0
      %v1955 = vadd.f32 %v1274, %v1954
      %v1956 = vpop.f32.mrb[0].mxu0
      %v1957 = vadd.f32 %v1276, %v1956
      %v1958 = vpop.f32.mrb[0].mxu0
      %v1959 = vadd.f32 %v1278, %v1958
      %1960 = vmatprep.mubr.bf16.mxu0 0
      %1961 = vmatmul.mubr.bf16.gmra.mrb[0].mxu0 %v1471
      %v1962 = vpop.f32.mrb[0].mxu0
      %v1963 = vadd.f32 %v1282, %v1962
      %v1964 = vpop.f32.mrb[0].mxu0
      %v1965 = vadd.f32 %v1284, %v1964
      %v1966 = vpop.f32.mrb[0].mxu0
      %v1967 = vadd.f32 %v1286, %v1966
      %v1968 = vpop.f32.mrb[0].mxu0
      %v1969 = vadd.f32 %v1288, %v1968
      %1970 = vmatprep.mubr.bf16.mxu0 0
      %1971 = vmatmul.mubr.bf16.gmra.mrb[0].mxu0 %v1474
      %v1972 = vpop.f32.mrb[0].mxu0
      %v1973 = vadd.f32 %v1292, %v1972
      %v1974 = vpop.f32.mrb[0].mxu0
      %v1975 = vadd.f32 %v1294, %v1974
      %v1976 = vpop.f32.mrb[0].mxu0
      %v1977 = vadd.f32 %v1296, %v1976
      %v1978 = vpop.f32.mrb[0].mxu0
      %v1979 = vadd.f32 %v1298, %v1978
      %1980 = vmatprep.mubr.bf16.mxu0 0
      %1981 = vmatmul.mubr.bf16.gmra.mrb[0].mxu0 %v1477
      %v1982 = vpop.f32.mrb[0].mxu0
      %v1983 = vadd.f32 %v1302, %v1982
      %v1984 = vpop.f32.mrb[0].mxu0
      %v1985 = vadd.f32 %v1304, %v1984
      %v1986 = vpop.f32.mrb[0].mxu0
      %v1987 = vadd.f32 %v1306, %v1986
      %v1988 = vpop.f32.mrb[0].mxu0
      %v1989 = vadd.f32 %v1308, %v1988
      %1990 = vmatprep.mubr.bf16.mxu0 0
      %1991 = vmatmul.mubr.bf16.gmra.mrb[0].mxu0 %v1480
      %v1992 = vpop.f32.mrb[0].mxu0
      %v1993 = vadd.f32 %v1312, %v1992
      %v1994 = vpop.f32.mrb[0].mxu0
      %v1995 = vadd.f32 %v1314, %v1994
      %v1996 = vpop.f32.mrb[0].mxu0
      %v1997 = vadd.f32 %v1316, %v1996
      %v1998 = vpop.f32.mrb[0].mxu0
      %v1999 = vadd.f32 %v1318, %v1998
      %2000 = vdwg.mxu0
      %v2001 = vld [vmem:[%s331 + $0x2] sm:$0xff]
      %v2002 = vld [vmem:[%s331 + $0xa] sm:$0xff]
      %v2003 = vld [vmem:[%s331 + $0x12] sm:$0xff]
      %v2004 = vld [vmem:[%s331 + $0x22] sm:$0xff]
      %v2005 = vld [vmem:[%s331 + $0x2a] sm:$0xff]
      %v2006 = vld [vmem:[%s331 + $0x32] sm:$0xff]
      %v2007 = vld [vmem:[%s331 + $0x42] sm:$0xff]
      %v2008 = vld [vmem:[%s331 + $0x4a] sm:$0xff]
      %v2009 = vld [vmem:[%s331 + $0x52] sm:$0xff]
      %v2010 = vld [vmem:[%s331 + $0x62] sm:$0xff]
      %v2011 = vld [vmem:[%s331 + $0x6a] sm:$0xff]
      %v2012 = vld [vmem:[%s331 + $0x72] sm:$0xff]
      %v2013 = vld [vmem:[%s331 + $0x82] sm:$0xff]
      %v2014 = vld [vmem:[%s331 + $0x8a] sm:$0xff]
      %v2015 = vld [vmem:[%s331 + $0x92] sm:$0xff]
      %v2016 = vld [vmem:[%s331 + $0xa2] sm:$0xff]
      %v2017 = vld [vmem:[%s331 + $0xaa] sm:$0xff]
      %v2018 = vld [vmem:[%s331 + $0xb2] sm:$0xff]
      %v2019 = vld [vmem:[%s331 + $0xc2] sm:$0xff]
      %v2020 = vld [vmem:[%s331 + $0xca] sm:$0xff]
      %v2021 = vld [vmem:[%s331 + $0xd2] sm:$0xff]
      %v2022 = vld [vmem:[%s331 + $0xe2] sm:$0xff]
      %v2023 = vld [vmem:[%s331 + $0xea] sm:$0xff]
      %v2024 = vld [vmem:[%s331 + $0xf2] sm:$0xff]
      %v2025 = vld [vmem:[%s331 + $0x102] sm:$0xff]
      %v2026 = vld [vmem:[%s331 + $0x10a] sm:$0xff]
      %v2027 = vld [vmem:[%s331 + $0x112] sm:$0xff]
      %v2028 = vld [vmem:[%s331 + $0x122] sm:$0xff]
      %v2029 = vld [vmem:[%s331 + $0x12a] sm:$0xff]
      %v2030 = vld [vmem:[%s331 + $0x132] sm:$0xff]
      %v2031 = vld [vmem:[%s331 + $0x142] sm:$0xff]
      %v2032 = vld [vmem:[%s331 + $0x14a] sm:$0xff]
      %v2033 = vld [vmem:[%s331 + $0x152] sm:$0xff]
      %v2034 = vld [vmem:[%s331 + $0x162] sm:$0xff]
      %v2035 = vld [vmem:[%s331 + $0x16a] sm:$0xff]
      %v2036 = vld [vmem:[%s331 + $0x172] sm:$0xff]
      %v2037 = vld [vmem:[%s331 + $0x182] sm:$0xff]
      %v2038 = vld [vmem:[%s331 + $0x18a] sm:$0xff]
      %v2039 = vld [vmem:[%s331 + $0x192] sm:$0xff]
      %v2040 = vld [vmem:[%s331 + $0x1a2] sm:$0xff]
      %v2041 = vld [vmem:[%s331 + $0x1aa] sm:$0xff]
      %v2042 = vld [vmem:[%s331 + $0x1b2] sm:$0xff]
      %v2043 = vld [vmem:[%s331 + $0x1c2] sm:$0xff]
      %v2044 = vld [vmem:[%s331 + $0x1ca] sm:$0xff]
      %v2045 = vld [vmem:[%s331 + $0x1d2] sm:$0xff]
      %v2046 = vld [vmem:[%s331 + $0x1e2] sm:$0xff]
      %v2047 = vld [vmem:[%s331 + $0x1ea] sm:$0xff]
      %v2048 = vld [vmem:[%s331 + $0x1f2] sm:$0xff]
      %v2049 = vld [vmem:[%s331 + $0x202] sm:$0xff]
      %v2050 = vld [vmem:[%s331 + $0x20a] sm:$0xff]
      %v2051 = vld [vmem:[%s331 + $0x212] sm:$0xff]
      %v2052 = vld [vmem:[%s331 + $0x222] sm:$0xff]
      %v2053 = vld [vmem:[%s331 + $0x22a] sm:$0xff]
      %v2054 = vld [vmem:[%s331 + $0x232] sm:$0xff]
      %v2055 = vld [vmem:[%s331 + $0x242] sm:$0xff]
      %v2056 = vld [vmem:[%s331 + $0x24a] sm:$0xff]
      %v2057 = vld [vmem:[%s331 + $0x252] sm:$0xff]
      %v2058 = vld [vmem:[%s331 + $0x262] sm:$0xff]
      %v2059 = vld [vmem:[%s331 + $0x26a] sm:$0xff]
      %v2060 = vld [vmem:[%s331 + $0x272] sm:$0xff]
      %v2061 = vld [vmem:[%s331 + $0x282] sm:$0xff]
      %v2062 = vld [vmem:[%s331 + $0x28a] sm:$0xff]
      %v2063 = vld [vmem:[%s331 + $0x292] sm:$0xff]
      %v2064 = vld [vmem:[%s331 + $0x2a2] sm:$0xff]
      %v2065 = vld [vmem:[%s331 + $0x2aa] sm:$0xff]
      %v2066 = vld [vmem:[%s331 + $0x2b2] sm:$0xff]
      %v2067 = vld [vmem:[%s331 + $0x2c2] sm:$0xff]
      %v2068 = vld [vmem:[%s331 + $0x2ca] sm:$0xff]
      %v2069 = vld [vmem:[%s331 + $0x2d2] sm:$0xff]
      %v2070 = vld [vmem:[%s331 + $0x2e2] sm:$0xff]
      %v2071 = vld [vmem:[%s331 + $0x2ea] sm:$0xff]
      %v2072 = vld [vmem:[%s331 + $0x2f2] sm:$0xff]
      %v2073 = vld [vmem:[%s331 + $0x302] sm:$0xff]
      %v2074 = vld [vmem:[%s331 + $0x30a] sm:$0xff]
      %v2075 = vld [vmem:[%s331 + $0x312] sm:$0xff]
      %v2076 = vld [vmem:[%s331 + $0x322] sm:$0xff]
      %v2077 = vld [vmem:[%s331 + $0x32a] sm:$0xff]
      %v2078 = vld [vmem:[%s331 + $0x332] sm:$0xff]
      %v2079 = vld [vmem:[%s331 + $0x342] sm:$0xff]
      %v2080 = vld [vmem:[%s331 + $0x34a] sm:$0xff]
      %v2081 = vld [vmem:[%s331 + $0x352] sm:$0xff]
      %v2082 = vld [vmem:[%s331 + $0x362] sm:$0xff]
      %v2083 = vld [vmem:[%s331 + $0x36a] sm:$0xff]
      %v2084 = vld [vmem:[%s331 + $0x372] sm:$0xff]
      %v2085 = vld [vmem:[%s331 + $0x382] sm:$0xff]
      %v2086 = vld [vmem:[%s331 + $0x38a] sm:$0xff]
      %v2087 = vld [vmem:[%s331 + $0x392] sm:$0xff]
      %v2088 = vld [vmem:[%s331 + $0x3a2] sm:$0xff]
      %v2089 = vld [vmem:[%s331 + $0x3aa] sm:$0xff]
      %v2090 = vld [vmem:[%s331 + $0x3b2] sm:$0xff]
      %v2091 = vld [vmem:[%s331 + $0x3c2] sm:$0xff]
      %v2092 = vld [vmem:[%s331 + $0x3ca] sm:$0xff]
      %v2093 = vld [vmem:[%s331 + $0x3d2] sm:$0xff]
      %v2094 = vld [vmem:[%s331 + $0x3e2] sm:$0xff]
      %v2095 = vld [vmem:[%s331 + $0x3ea] sm:$0xff]
      %v2096 = vld [vmem:[%s331 + $0x3f2] sm:$0xff]
      %v2097 = vpack.c.bf16 %v2002, %v2001
      %v2098 = vpack.c.bf16 %v2004, %v2003
      %v2099 = vpack.c.bf16 %v2006, %v2005
      %v2100 = vpack.c.bf16 %v2008, %v2007
      %v2101 = vpack.c.bf16 %v2010, %v2009
      %v2102 = vpack.c.bf16 %v2012, %v2011
      %v2103 = vpack.c.bf16 %v2014, %v2013
      %v2104 = vpack.c.bf16 %v2016, %v2015
      %v2105 = vpack.c.bf16 %v2018, %v2017
      %v2106 = vpack.c.bf16 %v2020, %v2019
      %v2107 = vpack.c.bf16 %v2022, %v2021
      %v2108 = vpack.c.bf16 %v2024, %v2023
      %v2109 = vpack.c.bf16 %v2026, %v2025
      %v2110 = vpack.c.bf16 %v2028, %v2027
      %v2111 = vpack.c.bf16 %v2030, %v2029
      %v2112 = vpack.c.bf16 %v2032, %v2031
      %v2113 = vpack.c.bf16 %v2034, %v2033
      %v2114 = vpack.c.bf16 %v2036, %v2035
      %v2115 = vpack.c.bf16 %v2038, %v2037
      %v2116 = vpack.c.bf16 %v2040, %v2039
      %v2117 = vpack.c.bf16 %v2042, %v2041
      %v2118 = vpack.c.bf16 %v2044, %v2043
      %v2119 = vpack.c.bf16 %v2046, %v2045
      %v2120 = vpack.c.bf16 %v2048, %v2047
      %v2121 = vpack.c.bf16 %v2050, %v2049
      %v2122 = vpack.c.bf16 %v2052, %v2051
      %v2123 = vpack.c.bf16 %v2054, %v2053
      %v2124 = vpack.c.bf16 %v2056, %v2055
      %v2125 = vpack.c.bf16 %v2058, %v2057
      %v2126 = vpack.c.bf16 %v2060, %v2059
      %v2127 = vpack.c.bf16 %v2062, %v2061
      %v2128 = vpack.c.bf16 %v2064, %v2063
      %v2129 = vpack.c.bf16 %v2066, %v2065
      %v2130 = vpack.c.bf16 %v2068, %v2067
      %v2131 = vpack.c.bf16 %v2070, %v2069
      %v2132 = vpack.c.bf16 %v2072, %v2071
      %v2133 = vpack.c.bf16 %v2074, %v2073
      %v2134 = vpack.c.bf16 %v2076, %v2075
      %v2135 = vpack.c.bf16 %v2078, %v2077
      %v2136 = vpack.c.bf16 %v2080, %v2079
      %v2137 = vpack.c.bf16 %v2082, %v2081
      %v2138 = vpack.c.bf16 %v2084, %v2083
      %v2139 = vpack.c.bf16 %v2086, %v2085
      %v2140 = vpack.c.bf16 %v2088, %v2087
      %v2141 = vpack.c.bf16 %v2090, %v2089
      %v2142 = vpack.c.bf16 %v2092, %v2091
      %v2143 = vpack.c.bf16 %v2094, %v2093
      %v2144 = vpack.c.bf16 %v2096, %v2095
      %s2145 = scalar_lea.vmem %s1, 64
      %v2146 = vld [vmem:[%s2145] sm:$0xff]
      %v2147 = vld [vmem:[%s2145 + $0x8] sm:$0xff]
      %v2148 = vld [vmem:[%s2145 + $0x10] sm:$0xff]
      %v2149 = vld [vmem:[%s2145 + $0x18] sm:$0x33]
      %v2154 = vunpack.c.l.b16 %v2146
      %v2155 = vunpack.c.h.b16 %v2146
      %v2156 = vunpack.c.l.b16 %v2147
      %v2157 = vunpack.c.h.b16 %v2147
      %v2158 = vunpack.c.l.b16 %v2148
      %v2159 = vunpack.c.h.b16 %v2148
      %v2160 = vunpack.c.l.b16 %v2149
      %v2161 = vunpack.c.h.b16 %v2149
      %v2162 = vpack.c.b16 %v2156, %v2154
      %v2163 = vpack.c.b16 %v2157, %v2155
      %v2164 = vpack.c.b16 %v2160, %v2158
      %v2165 = vpack.c.b16 %v2161, %v2159
      %v2169 = vsel %vm655, %v2097, 0
      %v2172 = vsel %vm655, %v2098, 0
      %v2175 = vsel %vm655, %v2099, 0
      %v2178 = vsel %vm655, %v2100, 0
      %v2181 = vsel %vm655, %v2101, 0
      %v2184 = vsel %vm655, %v2102, 0
      %v2187 = vsel %vm655, %v2103, 0
      %v2190 = vsel %vm655, %v2104, 0
      %v2193 = vsel %vm655, %v2105, 0
      %v2196 = vsel %vm655, %v2106, 0
      %v2199 = vsel %vm655, %v2107, 0
      %v2202 = vsel %vm655, %v2108, 0
      %v2205 = vsel %vm655, %v2109, 0
      %v2208 = vsel %vm655, %v2110, 0
      %v2211 = vsel %vm655, %v2111, 0
      %v2214 = vsel %vm655, %v2112, 0
      %v2217 = vsel %vm655, %v2113, 0
      %v2220 = vsel %vm655, %v2114, 0
      %v2223 = vsel %vm655, %v2115, 0
      %v2226 = vsel %vm655, %v2116, 0
      %v2229 = vsel %vm655, %v2117, 0
      %v2232 = vsel %vm655, %v2118, 0
      %v2235 = vsel %vm655, %v2119, 0
      %v2238 = vsel %vm655, %v2120, 0
      %v2241 = vsel %vm655, %v2121, 0
      %v2244 = vsel %vm655, %v2122, 0
      %v2247 = vsel %vm655, %v2123, 0
      %v2250 = vsel %vm655, %v2124, 0
      %v2253 = vsel %vm655, %v2125, 0
      %v2256 = vsel %vm655, %v2126, 0
      %v2259 = vsel %vm655, %v2127, 0
      %v2262 = vsel %vm655, %v2128, 0
      %v2265 = vsel %vm655, %v2129, 0
      %v2268 = vsel %vm655, %v2130, 0
      %v2271 = vsel %vm655, %v2131, 0
      %v2274 = vsel %vm655, %v2132, 0
      %v2277 = vsel %vm655, %v2133, 0
      %v2280 = vsel %vm655, %v2134, 0
      %v2283 = vsel %vm655, %v2135, 0
      %v2286 = vsel %vm655, %v2136, 0
      %v2289 = vsel %vm655, %v2137, 0
      %v2292 = vsel %vm655, %v2138, 0
      %v2295 = vsel %vm655, %v2139, 0
      %v2298 = vsel %vm655, %v2140, 0
      %v2301 = vsel %vm655, %v2141, 0
      %v2304 = vsel %vm655, %v2142, 0
      %v2307 = vsel %vm655, %v2143, 0
      %v2310 = vsel %vm655, %v2144, 0
      %v2313 = vsel %vm800, %v2164, 0
      %v2316 = vsel %vm800, %v2165, 0
      %2318 = vmatprep.subr.bf16.mxu0 %v2163
      %2319 = vmatpush1.bf16.msra.mxu0 %v2162
      %2320 = vmatprep.subr.bf16.mxu0 %v2316
      %2321 = vmatpush1.bf16.msra.mxu0 %v2313
      %2322 = vmatprep.subr.bf16.mxu0 0
      %2323 = vmatpush1.bf16.msra.mxu0 0
      %2324 = vmatprep.subr.bf16.mxu0 0
      %2325 = vmatpush1.bf16.msra.mxu0 0
      %2326 = vmatprep.subr.bf16.mxu0 0
      %2327 = vmatpush1.bf16.msra.mxu0 0
      %2328 = vmatprep.subr.bf16.mxu0 0
      %2329 = vmatpush1.bf16.msra.mxu0 0
      %2330 = vmatprep.subr.bf16.mxu0 0
      %2331 = vmatpush1.bf16.msra.mxu0 0
      %2332 = vmatprep.subr.bf16.mxu0 0
      %2333 = vmatpush1.bf16.msra.mxu0 0
      %2334 = vmatprep.subr.bf16.mxu0 0
      %2335 = vmatpush1.bf16.msra.mxu0 0
      %2336 = vmatprep.subr.bf16.mxu0 0
      %2337 = vmatpush1.bf16.msra.mxu0 0
      %2338 = vmatprep.subr.bf16.mxu0 0
      %2339 = vmatpush1.bf16.msra.mxu0 0
      %2340 = vmatprep.subr.bf16.mxu0 0
      %2341 = vmatpush1.bf16.msra.mxu0 0
      %2342 = vmatprep.subr.bf16.mxu0 0
      %2343 = vmatpush1.bf16.msra.mxu0 0
      %2344 = vmatprep.subr.bf16.mxu0 0
      %2345 = vmatpush1.bf16.msra.mxu0 0
      %2346 = vmatprep.subr.bf16.mxu0 0
      %2347 = vmatpush1.bf16.msra.mxu0 0
      %2348 = vmatprep.subr.bf16.mxu0 0
      %2349 = vmatpush1.bf16.msra.mxu0 0
      %2350 = vmatprep.mubr.bf16.mxu0 0
      %2351 = vmatmul.mubr.bf16.gmra.mrb[0].mxu0 %v2169
      %v2352 = vpop.f32.mrb[0].mxu0
      %v2353 = vadd.f32 0.0, %v2352
      %v2354 = vpop.f32.mrb[0].mxu0
      %v2355 = vadd.f32 0.0, %v2354
      %v2356 = vpop.f32.mrb[0].mxu0
      %v2357 = vadd.f32 0.0, %v2356
      %v2358 = vpop.f32.mrb[0].mxu0
      %v2359 = vadd.f32 0.0, %v2358
      %2360 = vmatprep.mubr.bf16.mxu0 0
      %2361 = vmatmul.mubr.bf16.gmra.mrb[0].mxu0 %v2172
      %v2362 = vpop.f32.mrb[0].mxu0
      %v2363 = vadd.f32 0.0, %v2362
      %v2364 = vpop.f32.mrb[0].mxu0
      %v2365 = vadd.f32 0.0, %v2364
      %v2366 = vpop.f32.mrb[0].mxu0
      %v2367 = vadd.f32 0.0, %v2366
      %v2368 = vpop.f32.mrb[0].mxu0
      %v2369 = vadd.f32 0.0, %v2368
      %2370 = vmatprep.mubr.bf16.mxu0 0
      %2371 = vmatmul.mubr.bf16.gmra.mrb[0].mxu0 %v2175
      %v2372 = vpop.f32.mrb[0].mxu0
      %v2373 = vadd.f32 0.0, %v2372
      %v2374 = vpop.f32.mrb[0].mxu0
      %v2375 = vadd.f32 0.0, %v2374
      %v2376 = vpop.f32.mrb[0].mxu0
      %v2377 = vadd.f32 0.0, %v2376
      %v2378 = vpop.f32.mrb[0].mxu0
      %v2379 = vadd.f32 0.0, %v2378
      %2380 = vmatprep.mubr.bf16.mxu0 0
      %2381 = vmatmul.mubr.bf16.gmra.mrb[0].mxu0 %v2178
      %v2382 = vpop.f32.mrb[0].mxu0
      %v2383 = vadd.f32 0.0, %v2382
      %v2384 = vpop.f32.mrb[0].mxu0
      %v2385 = vadd.f32 0.0, %v2384
      %v2386 = vpop.f32.mrb[0].mxu0
      %v2387 = vadd.f32 0.0, %v2386
      %v2388 = vpop.f32.mrb[0].mxu0
      %v2389 = vadd.f32 0.0, %v2388
      %2390 = vmatprep.mubr.bf16.mxu0 0
      %2391 = vmatmul.mubr.bf16.gmra.mrb[0].mxu0 %v2181
      %v2392 = vpop.f32.mrb[0].mxu0
      %v2393 = vadd.f32 0.0, %v2392
      %v2394 = vpop.f32.mrb[0].mxu0
      %v2395 = vadd.f32 0.0, %v2394
      %v2396 = vpop.f32.mrb[0].mxu0
      %v2397 = vadd.f32 0.0, %v2396
      %v2398 = vpop.f32.mrb[0].mxu0
      %v2399 = vadd.f32 0.0, %v2398
      %2400 = vmatprep.mubr.bf16.mxu0 0
      %2401 = vmatmul.mubr.bf16.gmra.mrb[0].mxu0 %v2184
      %v2402 = vpop.f32.mrb[0].mxu0
      %v2403 = vadd.f32 0.0, %v2402
      %v2404 = vpop.f32.mrb[0].mxu0
      %v2405 = vadd.f32 0.0, %v2404
      %v2406 = vpop.f32.mrb[0].mxu0
      %v2407 = vadd.f32 0.0, %v2406
      %v2408 = vpop.f32.mrb[0].mxu0
      %v2409 = vadd.f32 0.0, %v2408
      %2410 = vmatprep.mubr.bf16.mxu0 0
      %2411 = vmatmul.mubr.bf16.gmra.mrb[0].mxu0 %v2187
      %v2412 = vpop.f32.mrb[0].mxu0
      %v2413 = vadd.f32 0.0, %v2412
      %v2414 = vpop.f32.mrb[0].mxu0
      %v2415 = vadd.f32 0.0, %v2414
      %v2416 = vpop.f32.mrb[0].mxu0
      %v2417 = vadd.f32 0.0, %v2416
      %v2418 = vpop.f32.mrb[0].mxu0
      %v2419 = vadd.f32 0.0, %v2418
      %2420 = vmatprep.mubr.bf16.mxu0 0
      %2421 = vmatmul.mubr.bf16.gmra.mrb[0].mxu0 %v2190
      %v2422 = vpop.f32.mrb[0].mxu0
      %v2423 = vadd.f32 0.0, %v2422
      %v2424 = vpop.f32.mrb[0].mxu0
      %v2425 = vadd.f32 0.0, %v2424
      %v2426 = vpop.f32.mrb[0].mxu0
      %v2427 = vadd.f32 0.0, %v2426
      %v2428 = vpop.f32.mrb[0].mxu0
      %v2429 = vadd.f32 0.0, %v2428
      %2430 = vmatprep.mubr.bf16.mxu0 0
      %2431 = vmatmul.mubr.bf16.gmra.mrb[0].mxu0 %v2193
      %v2432 = vpop.f32.mrb[0].mxu0
      %v2433 = vadd.f32 0.0, %v2432
      %v2434 = vpop.f32.mrb[0].mxu0
      %v2435 = vadd.f32 0.0, %v2434
      %v2436 = vpop.f32.mrb[0].mxu0
      %v2437 = vadd.f32 0.0, %v2436
      %v2438 = vpop.f32.mrb[0].mxu0
      %v2439 = vadd.f32 0.0, %v2438
      %2440 = vmatprep.mubr.bf16.mxu0 0
      %2441 = vmatmul.mubr.bf16.gmra.mrb[0].mxu0 %v2196
      %v2442 = vpop.f32.mrb[0].mxu0
      %v2443 = vadd.f32 0.0, %v2442
      %v2444 = vpop.f32.mrb[0].mxu0
      %v2445 = vadd.f32 0.0, %v2444
      %v2446 = vpop.f32.mrb[0].mxu0
      %v2447 = vadd.f32 0.0, %v2446
      %v2448 = vpop.f32.mrb[0].mxu0
      %v2449 = vadd.f32 0.0, %v2448
      %2450 = vmatprep.mubr.bf16.mxu0 0
      %2451 = vmatmul.mubr.bf16.gmra.mrb[0].mxu0 %v2199
      %v2452 = vpop.f32.mrb[0].mxu0
      %v2453 = vadd.f32 0.0, %v2452
      %v2454 = vpop.f32.mrb[0].mxu0
      %v2455 = vadd.f32 0.0, %v2454
      %v2456 = vpop.f32.mrb[0].mxu0
      %v2457 = vadd.f32 0.0, %v2456
      %v2458 = vpop.f32.mrb[0].mxu0
      %v2459 = vadd.f32 0.0, %v2458
      %2460 = vmatprep.mubr.bf16.mxu0 0
      %2461 = vmatmul.mubr.bf16.gmra.mrb[0].mxu0 %v2202
      %v2462 = vpop.f32.mrb[0].mxu0
      %v2463 = vadd.f32 0.0, %v2462
      %v2464 = vpop.f32.mrb[0].mxu0
      %v2465 = vadd.f32 0.0, %v2464
      %v2466 = vpop.f32.mrb[0].mxu0
      %v2467 = vadd.f32 0.0, %v2466
      %v2468 = vpop.f32.mrb[0].mxu0
      %v2469 = vadd.f32 0.0, %v2468
      %2470 = vmatprep.mubr.bf16.mxu0 0
      %2471 = vmatmul.mubr.bf16.gmra.mrb[0].mxu0 %v2205
      %v2472 = vpop.f32.mrb[0].mxu0
      %v2473 = vadd.f32 0.0, %v2472
      %v2474 = vpop.f32.mrb[0].mxu0
      %v2475 = vadd.f32 0.0, %v2474
      %v2476 = vpop.f32.mrb[0].mxu0
      %v2477 = vadd.f32 0.0, %v2476
      %v2478 = vpop.f32.mrb[0].mxu0
      %v2479 = vadd.f32 0.0, %v2478
      %2480 = vmatprep.mubr.bf16.mxu0 0
      %2481 = vmatmul.mubr.bf16.gmra.mrb[0].mxu0 %v2208
      %v2482 = vpop.f32.mrb[0].mxu0
      %v2483 = vadd.f32 0.0, %v2482
      %v2484 = vpop.f32.mrb[0].mxu0
      %v2485 = vadd.f32 0.0, %v2484
      %v2486 = vpop.f32.mrb[0].mxu0
      %v2487 = vadd.f32 0.0, %v2486
      %v2488 = vpop.f32.mrb[0].mxu0
      %v2489 = vadd.f32 0.0, %v2488
      %2490 = vmatprep.mubr.bf16.mxu0 0
      %2491 = vmatmul.mubr.bf16.gmra.mrb[0].mxu0 %v2211
      %v2492 = vpop.f32.mrb[0].mxu0
      %v2493 = vadd.f32 0.0, %v2492
      %v2494 = vpop.f32.mrb[0].mxu0
      %v2495 = vadd.f32 0.0, %v2494
      %v2496 = vpop.f32.mrb[0].mxu0
      %v2497 = vadd.f32 0.0, %v2496
      %v2498 = vpop.f32.mrb[0].mxu0
      %v2499 = vadd.f32 0.0, %v2498
      %2500 = vmatprep.mubr.bf16.mxu0 0
      %2501 = vmatmul.mubr.bf16.gmra.mrb[0].mxu0 %v2214
      %v2502 = vpop.f32.mrb[0].mxu0
      %v2503 = vadd.f32 0.0, %v2502
      %v2504 = vpop.f32.mrb[0].mxu0
      %v2505 = vadd.f32 0.0, %v2504
      %v2506 = vpop.f32.mrb[0].mxu0
      %v2507 = vadd.f32 0.0, %v2506
      %v2508 = vpop.f32.mrb[0].mxu0
      %v2509 = vadd.f32 0.0, %v2508
      %2510 = vmatprep.mubr.bf16.mxu0 0
      %2511 = vmatmul.mubr.bf16.gmra.mrb[0].mxu0 %v2217
      %v2512 = vpop.f32.mrb[0].mxu0
      %v2513 = vadd.f32 0.0, %v2512
      %v2514 = vpop.f32.mrb[0].mxu0
      %v2515 = vadd.f32 0.0, %v2514
      %v2516 = vpop.f32.mrb[0].mxu0
      %v2517 = vadd.f32 0.0, %v2516
      %v2518 = vpop.f32.mrb[0].mxu0
      %v2519 = vadd.f32 0.0, %v2518
      %2520 = vmatprep.mubr.bf16.mxu0 0
      %2521 = vmatmul.mubr.bf16.gmra.mrb[0].mxu0 %v2220
      %v2522 = vpop.f32.mrb[0].mxu0
      %v2523 = vadd.f32 0.0, %v2522
      %v2524 = vpop.f32.mrb[0].mxu0
      %v2525 = vadd.f32 0.0, %v2524
      %v2526 = vpop.f32.mrb[0].mxu0
      %v2527 = vadd.f32 0.0, %v2526
      %v2528 = vpop.f32.mrb[0].mxu0
      %v2529 = vadd.f32 0.0, %v2528
      %2530 = vmatprep.mubr.bf16.mxu0 0
      %2531 = vmatmul.mubr.bf16.gmra.mrb[0].mxu0 %v2223
      %v2532 = vpop.f32.mrb[0].mxu0
      %v2533 = vadd.f32 0.0, %v2532
      %v2534 = vpop.f32.mrb[0].mxu0
      %v2535 = vadd.f32 0.0, %v2534
      %v2536 = vpop.f32.mrb[0].mxu0
      %v2537 = vadd.f32 0.0, %v2536
      %v2538 = vpop.f32.mrb[0].mxu0
      %v2539 = vadd.f32 0.0, %v2538
      %2540 = vmatprep.mubr.bf16.mxu0 0
      %2541 = vmatmul.mubr.bf16.gmra.mrb[0].mxu0 %v2226
      %v2542 = vpop.f32.mrb[0].mxu0
      %v2543 = vadd.f32 0.0, %v2542
      %v2544 = vpop.f32.mrb[0].mxu0
      %v2545 = vadd.f32 0.0, %v2544
      %v2546 = vpop.f32.mrb[0].mxu0
      %v2547 = vadd.f32 0.0, %v2546
      %v2548 = vpop.f32.mrb[0].mxu0
      %v2549 = vadd.f32 0.0, %v2548
      %2550 = vmatprep.mubr.bf16.mxu0 0
      %2551 = vmatmul.mubr.bf16.gmra.mrb[0].mxu0 %v2229
      %v2552 = vpop.f32.mrb[0].mxu0
      %v2553 = vadd.f32 0.0, %v2552
      %v2554 = vpop.f32.mrb[0].mxu0
      %v2555 = vadd.f32 0.0, %v2554
      %v2556 = vpop.f32.mrb[0].mxu0
      %v2557 = vadd.f32 0.0, %v2556
      %v2558 = vpop.f32.mrb[0].mxu0
      %v2559 = vadd.f32 0.0, %v2558
      %2560 = vmatprep.mubr.bf16.mxu0 0
      %2561 = vmatmul.mubr.bf16.gmra.mrb[0].mxu0 %v2232
      %v2562 = vpop.f32.mrb[0].mxu0
      %v2563 = vadd.f32 0.0, %v2562
      %v2564 = vpop.f32.mrb[0].mxu0
      %v2565 = vadd.f32 0.0, %v2564
      %v2566 = vpop.f32.mrb[0].mxu0
      %v2567 = vadd.f32 0.0, %v2566
      %v2568 = vpop.f32.mrb[0].mxu0
      %v2569 = vadd.f32 0.0, %v2568
      %2570 = vmatprep.mubr.bf16.mxu0 0
      %2571 = vmatmul.mubr.bf16.gmra.mrb[0].mxu0 %v2235
      %v2572 = vpop.f32.mrb[0].mxu0
      %v2573 = vadd.f32 0.0, %v2572
      %v2574 = vpop.f32.mrb[0].mxu0
      %v2575 = vadd.f32 0.0, %v2574
      %v2576 = vpop.f32.mrb[0].mxu0
      %v2577 = vadd.f32 0.0, %v2576
      %v2578 = vpop.f32.mrb[0].mxu0
      %v2579 = vadd.f32 0.0, %v2578
      %2580 = vmatprep.mubr.bf16.mxu0 0
      %2581 = vmatmul.mubr.bf16.gmra.mrb[0].mxu0 %v2238
      %v2582 = vpop.f32.mrb[0].mxu0
      %v2583 = vadd.f32 0.0, %v2582
      %v2584 = vpop.f32.mrb[0].mxu0
      %v2585 = vadd.f32 0.0, %v2584
      %v2586 = vpop.f32.mrb[0].mxu0
      %v2587 = vadd.f32 0.0, %v2586
      %v2588 = vpop.f32.mrb[0].mxu0
      %v2589 = vadd.f32 0.0, %v2588
      %2590 = vmatprep.mubr.bf16.mxu0 0
      %2591 = vmatmul.mubr.bf16.gmra.mrb[0].mxu0 %v2241
      %v2592 = vpop.f32.mrb[0].mxu0
      %v2593 = vadd.f32 0.0, %v2592
      %v2594 = vpop.f32.mrb[0].mxu0
      %v2595 = vadd.f32 0.0, %v2594
      %v2596 = vpop.f32.mrb[0].mxu0
      %v2597 = vadd.f32 0.0, %v2596
      %v2598 = vpop.f32.mrb[0].mxu0
      %v2599 = vadd.f32 0.0, %v2598
      %2600 = vmatprep.mubr.bf16.mxu0 0
      %2601 = vmatmul.mubr.bf16.gmra.mrb[0].mxu0 %v2244
      %v2602 = vpop.f32.mrb[0].mxu0
      %v2603 = vadd.f32 0.0, %v2602
      %v2604 = vpop.f32.mrb[0].mxu0
      %v2605 = vadd.f32 0.0, %v2604
      %v2606 = vpop.f32.mrb[0].mxu0
      %v2607 = vadd.f32 0.0, %v2606
      %v2608 = vpop.f32.mrb[0].mxu0
      %v2609 = vadd.f32 0.0, %v2608
      %2610 = vmatprep.mubr.bf16.mxu0 0
      %2611 = vmatmul.mubr.bf16.gmra.mrb[0].mxu0 %v2247
      %v2612 = vpop.f32.mrb[0].mxu0
      %v2613 = vadd.f32 0.0, %v2612
      %v2614 = vpop.f32.mrb[0].mxu0
      %v2615 = vadd.f32 0.0, %v2614
      %v2616 = vpop.f32.mrb[0].mxu0
      %v2617 = vadd.f32 0.0, %v2616
      %v2618 = vpop.f32.mrb[0].mxu0
      %v2619 = vadd.f32 0.0, %v2618
      %2620 = vmatprep.mubr.bf16.mxu0 0
      %2621 = vmatmul.mubr.bf16.gmra.mrb[0].mxu0 %v2250
      %v2622 = vpop.f32.mrb[0].mxu0
      %v2623 = vadd.f32 0.0, %v2622
      %v2624 = vpop.f32.mrb[0].mxu0
      %v2625 = vadd.f32 0.0, %v2624
      %v2626 = vpop.f32.mrb[0].mxu0
      %v2627 = vadd.f32 0.0, %v2626
      %v2628 = vpop.f32.mrb[0].mxu0
      %v2629 = vadd.f32 0.0, %v2628
      %2630 = vmatprep.mubr.bf16.mxu0 0
      %2631 = vmatmul.mubr.bf16.gmra.mrb[0].mxu0 %v2253
      %v2632 = vpop.f32.mrb[0].mxu0
      %v2633 = vadd.f32 0.0, %v2632
      %v2634 = vpop.f32.mrb[0].mxu0
      %v2635 = vadd.f32 0.0, %v2634
      %v2636 = vpop.f32.mrb[0].mxu0
      %v2637 = vadd.f32 0.0, %v2636
      %v2638 = vpop.f32.mrb[0].mxu0
      %v2639 = vadd.f32 0.0, %v2638
      %2640 = vmatprep.mubr.bf16.mxu0 0
      %2641 = vmatmul.mubr.bf16.gmra.mrb[0].mxu0 %v2256
      %v2642 = vpop.f32.mrb[0].mxu0
      %v2643 = vadd.f32 0.0, %v2642
      %v2644 = vpop.f32.mrb[0].mxu0
      %v2645 = vadd.f32 0.0, %v2644
      %v2646 = vpop.f32.mrb[0].mxu0
      %v2647 = vadd.f32 0.0, %v2646
      %v2648 = vpop.f32.mrb[0].mxu0
      %v2649 = vadd.f32 0.0, %v2648
      %2650 = vmatprep.mubr.bf16.mxu0 0
      %2651 = vmatmul.mubr.bf16.gmra.mrb[0].mxu0 %v2259
      %v2652 = vpop.f32.mrb[0].mxu0
      %v2653 = vadd.f32 0.0, %v2652
      %v2654 = vpop.f32.mrb[0].mxu0
      %v2655 = vadd.f32 0.0, %v2654
      %v2656 = vpop.f32.mrb[0].mxu0
      %v2657 = vadd.f32 0.0, %v2656
      %v2658 = vpop.f32.mrb[0].mxu0
      %v2659 = vadd.f32 0.0, %v2658
      %2660 = vmatprep.mubr.bf16.mxu0 0
      %2661 = vmatmul.mubr.bf16.gmra.mrb[0].mxu0 %v2262
      %v2662 = vpop.f32.mrb[0].mxu0
      %v2663 = vadd.f32 0.0, %v2662
      %v2664 = vpop.f32.mrb[0].mxu0
      %v2665 = vadd.f32 0.0, %v2664
      %v2666 = vpop.f32.mrb[0].mxu0
      %v2667 = vadd.f32 0.0, %v2666
      %v2668 = vpop.f32.mrb[0].mxu0
      %v2669 = vadd.f32 0.0, %v2668
      %2670 = vmatprep.mubr.bf16.mxu0 0
      %2671 = vmatmul.mubr.bf16.gmra.mrb[0].mxu0 %v2265
      %v2672 = vpop.f32.mrb[0].mxu0
      %v2673 = vadd.f32 0.0, %v2672
      %v2674 = vpop.f32.mrb[0].mxu0
      %v2675 = vadd.f32 0.0, %v2674
      %v2676 = vpop.f32.mrb[0].mxu0
      %v2677 = vadd.f32 0.0, %v2676
      %v2678 = vpop.f32.mrb[0].mxu0
      %v2679 = vadd.f32 0.0, %v2678
      %2680 = vmatprep.mubr.bf16.mxu0 0
      %2681 = vmatmul.mubr.bf16.gmra.mrb[0].mxu0 %v2268
      %v2682 = vpop.f32.mrb[0].mxu0
      %v2683 = vadd.f32 0.0, %v2682
      %v2684 = vpop.f32.mrb[0].mxu0
      %v2685 = vadd.f32 0.0, %v2684
      %v2686 = vpop.f32.mrb[0].mxu0
      %v2687 = vadd.f32 0.0, %v2686
      %v2688 = vpop.f32.mrb[0].mxu0
      %v2689 = vadd.f32 0.0, %v2688
      %2690 = vmatprep.mubr.bf16.mxu0 0
      %2691 = vmatmul.mubr.bf16.gmra.mrb[0].mxu0 %v2271
      %v2692 = vpop.f32.mrb[0].mxu0
      %v2693 = vadd.f32 0.0, %v2692
      %v2694 = vpop.f32.mrb[0].mxu0
      %v2695 = vadd.f32 0.0, %v2694
      %v2696 = vpop.f32.mrb[0].mxu0
      %v2697 = vadd.f32 0.0, %v2696
      %v2698 = vpop.f32.mrb[0].mxu0
      %v2699 = vadd.f32 0.0, %v2698
      %2700 = vmatprep.mubr.bf16.mxu0 0
      %2701 = vmatmul.mubr.bf16.gmra.mrb[0].mxu0 %v2274
      %v2702 = vpop.f32.mrb[0].mxu0
      %v2703 = vadd.f32 0.0, %v2702
      %v2704 = vpop.f32.mrb[0].mxu0
      %v2705 = vadd.f32 0.0, %v2704
      %v2706 = vpop.f32.mrb[0].mxu0
      %v2707 = vadd.f32 0.0, %v2706
      %v2708 = vpop.f32.mrb[0].mxu0
      %v2709 = vadd.f32 0.0, %v2708
      %2710 = vmatprep.mubr.bf16.mxu0 0
      %2711 = vmatmul.mubr.bf16.gmra.mrb[0].mxu0 %v2277
      %v2712 = vpop.f32.mrb[0].mxu0
      %v2713 = vadd.f32 0.0, %v2712
      %v2714 = vpop.f32.mrb[0].mxu0
      %v2715 = vadd.f32 0.0, %v2714
      %v2716 = vpop.f32.mrb[0].mxu0
      %v2717 = vadd.f32 0.0, %v2716
      %v2718 = vpop.f32.mrb[0].mxu0
      %v2719 = vadd.f32 0.0, %v2718
      %2720 = vmatprep.mubr.bf16.mxu0 0
      %2721 = vmatmul.mubr.bf16.gmra.mrb[0].mxu0 %v2280
      %v2722 = vpop.f32.mrb[0].mxu0
      %v2723 = vadd.f32 0.0, %v2722
      %v2724 = vpop.f32.mrb[0].mxu0
      %v2725 = vadd.f32 0.0, %v2724
      %v2726 = vpop.f32.mrb[0].mxu0
      %v2727 = vadd.f32 0.0, %v2726
      %v2728 = vpop.f32.mrb[0].mxu0
      %v2729 = vadd.f32 0.0, %v2728
      %2730 = vmatprep.mubr.bf16.mxu0 0
      %2731 = vmatmul.mubr.bf16.gmra.mrb[0].mxu0 %v2283
      %v2732 = vpop.f32.mrb[0].mxu0
      %v2733 = vadd.f32 0.0, %v2732
      %v2734 = vpop.f32.mrb[0].mxu0
      %v2735 = vadd.f32 0.0, %v2734
      %v2736 = vpop.f32.mrb[0].mxu0
      %v2737 = vadd.f32 0.0, %v2736
      %v2738 = vpop.f32.mrb[0].mxu0
      %v2739 = vadd.f32 0.0, %v2738
      %2740 = vmatprep.mubr.bf16.mxu0 0
      %2741 = vmatmul.mubr.bf16.gmra.mrb[0].mxu0 %v2286
      %v2742 = vpop.f32.mrb[0].mxu0
      %v2743 = vadd.f32 0.0, %v2742
      %v2744 = vpop.f32.mrb[0].mxu0
      %v2745 = vadd.f32 0.0, %v2744
      %v2746 = vpop.f32.mrb[0].mxu0
      %v2747 = vadd.f32 0.0, %v2746
      %v2748 = vpop.f32.mrb[0].mxu0
      %v2749 = vadd.f32 0.0, %v2748
      %2750 = vmatprep.mubr.bf16.mxu0 0
      %2751 = vmatmul.mubr.bf16.gmra.mrb[0].mxu0 %v2289
      %v2752 = vpop.f32.mrb[0].mxu0
      %v2753 = vadd.f32 0.0, %v2752
      %v2754 = vpop.f32.mrb[0].mxu0
      %v2755 = vadd.f32 0.0, %v2754
      %v2756 = vpop.f32.mrb[0].mxu0
      %v2757 = vadd.f32 0.0, %v2756
      %v2758 = vpop.f32.mrb[0].mxu0
      %v2759 = vadd.f32 0.0, %v2758
      %2760 = vmatprep.mubr.bf16.mxu0 0
      %2761 = vmatmul.mubr.bf16.gmra.mrb[0].mxu0 %v2292
      %v2762 = vpop.f32.mrb[0].mxu0
      %v2763 = vadd.f32 0.0, %v2762
      %v2764 = vpop.f32.mrb[0].mxu0
      %v2765 = vadd.f32 0.0, %v2764
      %v2766 = vpop.f32.mrb[0].mxu0
      %v2767 = vadd.f32 0.0, %v2766
      %v2768 = vpop.f32.mrb[0].mxu0
      %v2769 = vadd.f32 0.0, %v2768
      %2770 = vmatprep.mubr.bf16.mxu0 0
      %2771 = vmatmul.mubr.bf16.gmra.mrb[0].mxu0 %v2295
      %v2772 = vpop.f32.mrb[0].mxu0
      %v2773 = vadd.f32 0.0, %v2772
      %v2774 = vpop.f32.mrb[0].mxu0
      %v2775 = vadd.f32 0.0, %v2774
      %v2776 = vpop.f32.mrb[0].mxu0
      %v2777 = vadd.f32 0.0, %v2776
      %v2778 = vpop.f32.mrb[0].mxu0
      %v2779 = vadd.f32 0.0, %v2778
      %2780 = vmatprep.mubr.bf16.mxu0 0
      %2781 = vmatmul.mubr.bf16.gmra.mrb[0].mxu0 %v2298
      %v2782 = vpop.f32.mrb[0].mxu0
      %v2783 = vadd.f32 0.0, %v2782
      %v2784 = vpop.f32.mrb[0].mxu0
      %v2785 = vadd.f32 0.0, %v2784
      %v2786 = vpop.f32.mrb[0].mxu0
      %v2787 = vadd.f32 0.0, %v2786
      %v2788 = vpop.f32.mrb[0].mxu0
      %v2789 = vadd.f32 0.0, %v2788
      %2790 = vmatprep.mubr.bf16.mxu0 0
      %2791 = vmatmul.mubr.bf16.gmra.mrb[0].mxu0 %v2301
      %v2792 = vpop.f32.mrb[0].mxu0
      %v2793 = vadd.f32 0.0, %v2792
      %v2794 = vpop.f32.mrb[0].mxu0
      %v2795 = vadd.f32 0.0, %v2794
      %v2796 = vpop.f32.mrb[0].mxu0
      %v2797 = vadd.f32 0.0, %v2796
      %v2798 = vpop.f32.mrb[0].mxu0
      %v2799 = vadd.f32 0.0, %v2798
      %2800 = vmatprep.mubr.bf16.mxu0 0
      %2801 = vmatmul.mubr.bf16.gmra.mrb[0].mxu0 %v2304
      %v2802 = vpop.f32.mrb[0].mxu0
      %v2803 = vadd.f32 0.0, %v2802
      %v2804 = vpop.f32.mrb[0].mxu0
      %v2805 = vadd.f32 0.0, %v2804
      %v2806 = vpop.f32.mrb[0].mxu0
      %v2807 = vadd.f32 0.0, %v2806
      %v2808 = vpop.f32.mrb[0].mxu0
      %v2809 = vadd.f32 0.0, %v2808
      %2810 = vmatprep.mubr.bf16.mxu0 0
      %2811 = vmatmul.mubr.bf16.gmra.mrb[0].mxu0 %v2307
      %v2812 = vpop.f32.mrb[0].mxu0
      %v2813 = vadd.f32 0.0, %v2812
      %v2814 = vpop.f32.mrb[0].mxu0
      %v2815 = vadd.f32 0.0, %v2814
      %v2816 = vpop.f32.mrb[0].mxu0
      %v2817 = vadd.f32 0.0, %v2816
      %v2818 = vpop.f32.mrb[0].mxu0
      %v2819 = vadd.f32 0.0, %v2818
      %2820 = vmatprep.mubr.bf16.mxu0 0
      %2821 = vmatmul.mubr.bf16.gmra.mrb[0].mxu0 %v2310
      %v2822 = vpop.f32.mrb[0].mxu0
      %v2823 = vadd.f32 0.0, %v2822
      %v2824 = vpop.f32.mrb[0].mxu0
      %v2825 = vadd.f32 0.0, %v2824
      %v2826 = vpop.f32.mrb[0].mxu0
      %v2827 = vadd.f32 0.0, %v2826
      %v2828 = vpop.f32.mrb[0].mxu0
      %v2829 = vadd.f32 0.0, %v2828
      %2830 = vdwg.mxu0
      %v2831 = vadd.f32 %v1523, %v2353
      %v2832 = vadd.f32 %v1525, %v2355
      %v2833 = vadd.f32 %v1527, %v2357
      %v2834 = vadd.f32 %v1529, %v2359
      %v2835 = vadd.f32 %v1533, %v2363
      %v2836 = vadd.f32 %v1535, %v2365
      %v2837 = vadd.f32 %v1537, %v2367
      %v2838 = vadd.f32 %v1539, %v2369
      %v2839 = vadd.f32 %v1543, %v2373
      %v2840 = vadd.f32 %v1545, %v2375
      %v2841 = vadd.f32 %v1547, %v2377
      %v2842 = vadd.f32 %v1549, %v2379
      %v2843 = vadd.f32 %v1553, %v2383
      %v2844 = vadd.f32 %v1555, %v2385
      %v2845 = vadd.f32 %v1557, %v2387
      %v2846 = vadd.f32 %v1559, %v2389
      %v2847 = vadd.f32 %v1563, %v2393
      %v2848 = vadd.f32 %v1565, %v2395
      %v2849 = vadd.f32 %v1567, %v2397
      %v2850 = vadd.f32 %v1569, %v2399
      %v2851 = vadd.f32 %v1573, %v2403
      %v2852 = vadd.f32 %v1575, %v2405
      %v2853 = vadd.f32 %v1577, %v2407
      %v2854 = vadd.f32 %v1579, %v2409
      %v2855 = vadd.f32 %v1583, %v2413
      %v2856 = vadd.f32 %v1585, %v2415
      %v2857 = vadd.f32 %v1587, %v2417
      %v2858 = vadd.f32 %v1589, %v2419
      %v2859 = vadd.f32 %v1593, %v2423
      %v2860 = vadd.f32 %v1595, %v2425
      %v2861 = vadd.f32 %v1597, %v2427
      %v2862 = vadd.f32 %v1599, %v2429
      %v2863 = vadd.f32 %v1603, %v2433
      %v2864 = vadd.f32 %v1605, %v2435
      %v2865 = vadd.f32 %v1607, %v2437
      %v2866 = vadd.f32 %v1609, %v2439
      %v2867 = vadd.f32 %v1613, %v2443
      %v2868 = vadd.f32 %v1615, %v2445
      %v2869 = vadd.f32 %v1617, %v2447
      %v2870 = vadd.f32 %v1619, %v2449
      %v2871 = vadd.f32 %v1623, %v2453
      %v2872 = vadd.f32 %v1625, %v2455
      %v2873 = vadd.f32 %v1627, %v2457
      %v2874 = vadd.f32 %v1629, %v2459
      %v2875 = vadd.f32 %v1633, %v2463
      %v2876 = vadd.f32 %v1635, %v2465
      %v2877 = vadd.f32 %v1637, %v2467
      %v2878 = vadd.f32 %v1639, %v2469
      %v2879 = vadd.f32 %v1643, %v2473
      %v2880 = vadd.f32 %v1645, %v2475
      %v2881 = vadd.f32 %v1647, %v2477
      %v2882 = vadd.f32 %v1649, %v2479
      %v2883 = vadd.f32 %v1653, %v2483
      %v2884 = vadd.f32 %v1655, %v2485
      %v2885 = vadd.f32 %v1657, %v2487
      %v2886 = vadd.f32 %v1659, %v2489
      %v2887 = vadd.f32 %v1663, %v2493
      %v2888 = vadd.f32 %v1665, %v2495
      %v2889 = vadd.f32 %v1667, %v2497
      %v2890 = vadd.f32 %v1669, %v2499
      %v2891 = vadd.f32 %v1673, %v2503
      %v2892 = vadd.f32 %v1675, %v2505
      %v2893 = vadd.f32 %v1677, %v2507
      %v2894 = vadd.f32 %v1679, %v2509
      %v2895 = vadd.f32 %v1683, %v2513
      %v2896 = vadd.f32 %v1685, %v2515
      %v2897 = vadd.f32 %v1687, %v2517
      %v2898 = vadd.f32 %v1689, %v2519
      %v2899 = vadd.f32 %v1693, %v2523
      %v2900 = vadd.f32 %v1695, %v2525
      %v2901 = vadd.f32 %v1697, %v2527
      %v2902 = vadd.f32 %v1699, %v2529
      %v2903 = vadd.f32 %v1703, %v2533
      %v2904 = vadd.f32 %v1705, %v2535
      %v2905 = vadd.f32 %v1707, %v2537
      %v2906 = vadd.f32 %v1709, %v2539
      %v2907 = vadd.f32 %v1713, %v2543
      %v2908 = vadd.f32 %v1715, %v2545
      %v2909 = vadd.f32 %v1717, %v2547
      %v2910 = vadd.f32 %v1719, %v2549
      %v2911 = vadd.f32 %v1723, %v2553
      %v2912 = vadd.f32 %v1725, %v2555
      %v2913 = vadd.f32 %v1727, %v2557
      %v2914 = vadd.f32 %v1729, %v2559
      %v2915 = vadd.f32 %v1733, %v2563
      %v2916 = vadd.f32 %v1735, %v2565
      %v2917 = vadd.f32 %v1737, %v2567
      %v2918 = vadd.f32 %v1739, %v2569
      %v2919 = vadd.f32 %v1743, %v2573
      %v2920 = vadd.f32 %v1745, %v2575
      %v2921 = vadd.f32 %v1747, %v2577
      %v2922 = vadd.f32 %v1749, %v2579
      %v2923 = vadd.f32 %v1753, %v2583
      %v2924 = vadd.f32 %v1755, %v2585
      %v2925 = vadd.f32 %v1757, %v2587
      %v2926 = vadd.f32 %v1759, %v2589
      %v2927 = vadd.f32 %v1763, %v2593
      %v2928 = vadd.f32 %v1765, %v2595
      %v2929 = vadd.f32 %v1767, %v2597
      %v2930 = vadd.f32 %v1769, %v2599
      %v2931 = vadd.f32 %v1773, %v2603
      %v2932 = vadd.f32 %v1775, %v2605
      %v2933 = vadd.f32 %v1777, %v2607
      %v2934 = vadd.f32 %v1779, %v2609
      %v2935 = vadd.f32 %v1783, %v2613
      %v2936 = vadd.f32 %v1785, %v2615
      %v2937 = vadd.f32 %v1787, %v2617
      %v2938 = vadd.f32 %v1789, %v2619
      %v2939 = vadd.f32 %v1793, %v2623
      %v2940 = vadd.f32 %v1795, %v2625
      %v2941 = vadd.f32 %v1797, %v2627
      %v2942 = vadd.f32 %v1799, %v2629
      %v2943 = vadd.f32 %v1803, %v2633
      %v2944 = vadd.f32 %v1805, %v2635
      %v2945 = vadd.f32 %v1807, %v2637
      %v2946 = vadd.f32 %v1809, %v2639
      %v2947 = vadd.f32 %v1813, %v2643
      %v2948 = vadd.f32 %v1815, %v2645
      %v2949 = vadd.f32 %v1817, %v2647
      %v2950 = vadd.f32 %v1819, %v2649
      %v2951 = vadd.f32 %v1823, %v2653
      %v2952 = vadd.f32 %v1825, %v2655
      %v2953 = vadd.f32 %v1827, %v2657
      %v2954 = vadd.f32 %v1829, %v2659
      %v2955 = vadd.f32 %v1833, %v2663
      %v2956 = vadd.f32 %v1835, %v2665
      %v2957 = vadd.f32 %v1837, %v2667
      %v2958 = vadd.f32 %v1839, %v2669
      %v2959 = vadd.f32 %v1843, %v2673
      %v2960 = vadd.f32 %v1845, %v2675
      %v2961 = vadd.f32 %v1847, %v2677
      %v2962 = vadd.f32 %v1849, %v2679
      %v2963 = vadd.f32 %v1853, %v2683
      %v2964 = vadd.f32 %v1855, %v2685
      %v2965 = vadd.f32 %v1857, %v2687
      %v2966 = vadd.f32 %v1859, %v2689
      %v2967 = vadd.f32 %v1863, %v2693
      %v2968 = vadd.f32 %v1865, %v2695
      %v2969 = vadd.f32 %v1867, %v2697
      %v2970 = vadd.f32 %v1869, %v2699
      %v2971 = vadd.f32 %v1873, %v2703
      %v2972 = vadd.f32 %v1875, %v2705
      %v2973 = vadd.f32 %v1877, %v2707
      %v2974 = vadd.f32 %v1879, %v2709
      %v2975 = vadd.f32 %v1883, %v2713
      %v2976 = vadd.f32 %v1885, %v2715
      %v2977 = vadd.f32 %v1887, %v2717
      %v2978 = vadd.f32 %v1889, %v2719
      %v2979 = vadd.f32 %v1893, %v2723
      %v2980 = vadd.f32 %v1895, %v2725
      %v2981 = vadd.f32 %v1897, %v2727
      %v2982 = vadd.f32 %v1899, %v2729
      %v2983 = vadd.f32 %v1903, %v2733
      %v2984 = vadd.f32 %v1905, %v2735
      %v2985 = vadd.f32 %v1907, %v2737
      %v2986 = vadd.f32 %v1909, %v2739
      %v2987 = vadd.f32 %v1913, %v2743
      %v2988 = vadd.f32 %v1915, %v2745
      %v2989 = vadd.f32 %v1917, %v2747
      %v2990 = vadd.f32 %v1919, %v2749
      %v2991 = vadd.f32 %v1923, %v2753
      %v2992 = vadd.f32 %v1925, %v2755
      %v2993 = vadd.f32 %v1927, %v2757
      %v2994 = vadd.f32 %v1929, %v2759
      %v2995 = vadd.f32 %v1933, %v2763
      %v2996 = vadd.f32 %v1935, %v2765
      %v2997 = vadd.f32 %v1937, %v2767
      %v2998 = vadd.f32 %v1939, %v2769
      %v2999 = vadd.f32 %v1943, %v2773
      %v3000 = vadd.f32 %v1945, %v2775
      %v3001 = vadd.f32 %v1947, %v2777
      %v3002 = vadd.f32 %v1949, %v2779
      %v3003 = vadd.f32 %v1953, %v2783
      %v3004 = vadd.f32 %v1955, %v2785
      %v3005 = vadd.f32 %v1957, %v2787
      %v3006 = vadd.f32 %v1959, %v2789
      %v3007 = vadd.f32 %v1963, %v2793
      %v3008 = vadd.f32 %v1965, %v2795
      %v3009 = vadd.f32 %v1967, %v2797
      %v3010 = vadd.f32 %v1969, %v2799
      %v3011 = vadd.f32 %v1973, %v2803
      %v3012 = vadd.f32 %v1975, %v2805
      %v3013 = vadd.f32 %v1977, %v2807
      %v3014 = vadd.f32 %v1979, %v2809
      %v3015 = vadd.f32 %v1983, %v2813
      %v3016 = vadd.f32 %v1985, %v2815
      %v3017 = vadd.f32 %v1987, %v2817
      %v3018 = vadd.f32 %v1989, %v2819
      %v3019 = vadd.f32 %v1993, %v2823
      %v3020 = vadd.f32 %v1995, %v2825
      %v3021 = vadd.f32 %v1997, %v2827
      %v3022 = vadd.f32 %v1999, %v2829
      %v3023 = vld [vmem:[%s331 + $0x3] sm:$0xff]
      %v3024 = vld [vmem:[%s331 + $0xb] sm:$0xff]
      %v3025 = vld [vmem:[%s331 + $0x13] sm:$0xff]
      %v3026 = vld [vmem:[%s331 + $0x23] sm:$0xff]
      %v3027 = vld [vmem:[%s331 + $0x2b] sm:$0xff]
      %v3028 = vld [vmem:[%s331 + $0x33] sm:$0xff]
      %v3029 = vld [vmem:[%s331 + $0x43] sm:$0xff]
      %v3030 = vld [vmem:[%s331 + $0x4b] sm:$0xff]
      %v3031 = vld [vmem:[%s331 + $0x53] sm:$0xff]
      %v3032 = vld [vmem:[%s331 + $0x63] sm:$0xff]
      %v3033 = vld [vmem:[%s331 + $0x6b] sm:$0xff]
      %v3034 = vld [vmem:[%s331 + $0x73] sm:$0xff]
      %v3035 = vld [vmem:[%s331 + $0x83] sm:$0xff]
      %v3036 = vld [vmem:[%s331 + $0x8b] sm:$0xff]
      %v3037 = vld [vmem:[%s331 + $0x93] sm:$0xff]
      %v3038 = vld [vmem:[%s331 + $0xa3] sm:$0xff]
      %v3039 = vld [vmem:[%s331 + $0xab] sm:$0xff]
      %v3040 = vld [vmem:[%s331 + $0xb3] sm:$0xff]
      %v3041 = vld [vmem:[%s331 + $0xc3] sm:$0xff]
      %v3042 = vld [vmem:[%s331 + $0xcb] sm:$0xff]
      %v3043 = vld [vmem:[%s331 + $0xd3] sm:$0xff]
      %v3044 = vld [vmem:[%s331 + $0xe3] sm:$0xff]
      %v3045 = vld [vmem:[%s331 + $0xeb] sm:$0xff]
      %v3046 = vld [vmem:[%s331 + $0xf3] sm:$0xff]
      %v3047 = vld [vmem:[%s331 + $0x103] sm:$0xff]
      %v3048 = vld [vmem:[%s331 + $0x10b] sm:$0xff]
      %v3049 = vld [vmem:[%s331 + $0x113] sm:$0xff]
      %v3050 = vld [vmem:[%s331 + $0x123] sm:$0xff]
      %v3051 = vld [vmem:[%s331 + $0x12b] sm:$0xff]
      %v3052 = vld [vmem:[%s331 + $0x133] sm:$0xff]
      %v3053 = vld [vmem:[%s331 + $0x143] sm:$0xff]
      %v3054 = vld [vmem:[%s331 + $0x14b] sm:$0xff]
      %v3055 = vld [vmem:[%s331 + $0x153] sm:$0xff]
      %v3056 = vld [vmem:[%s331 + $0x163] sm:$0xff]
      %v3057 = vld [vmem:[%s331 + $0x16b] sm:$0xff]
      %v3058 = vld [vmem:[%s331 + $0x173] sm:$0xff]
      %v3059 = vld [vmem:[%s331 + $0x183] sm:$0xff]
      %v3060 = vld [vmem:[%s331 + $0x18b] sm:$0xff]
      %v3061 = vld [vmem:[%s331 + $0x193] sm:$0xff]
      %v3062 = vld [vmem:[%s331 + $0x1a3] sm:$0xff]
      %v3063 = vld [vmem:[%s331 + $0x1ab] sm:$0xff]
      %v3064 = vld [vmem:[%s331 + $0x1b3] sm:$0xff]
      %v3065 = vld [vmem:[%s331 + $0x1c3] sm:$0xff]
      %v3066 = vld [vmem:[%s331 + $0x1cb] sm:$0xff]
      %v3067 = vld [vmem:[%s331 + $0x1d3] sm:$0xff]
      %v3068 = vld [vmem:[%s331 + $0x1e3] sm:$0xff]
      %v3069 = vld [vmem:[%s331 + $0x1eb] sm:$0xff]
      %v3070 = vld [vmem:[%s331 + $0x1f3] sm:$0xff]
      %v3071 = vld [vmem:[%s331 + $0x203] sm:$0xff]
      %v3072 = vld [vmem:[%s331 + $0x20b] sm:$0xff]
      %v3073 = vld [vmem:[%s331 + $0x213] sm:$0xff]
      %v3074 = vld [vmem:[%s331 + $0x223] sm:$0xff]
      %v3075 = vld [vmem:[%s331 + $0x22b] sm:$0xff]
      %v3076 = vld [vmem:[%s331 + $0x233] sm:$0xff]
      %v3077 = vld [vmem:[%s331 + $0x243] sm:$0xff]
      %v3078 = vld [vmem:[%s331 + $0x24b] sm:$0xff]
      %v3079 = vld [vmem:[%s331 + $0x253] sm:$0xff]
      %v3080 = vld [vmem:[%s331 + $0x263] sm:$0xff]
      %v3081 = vld [vmem:[%s331 + $0x26b] sm:$0xff]
      %v3082 = vld [vmem:[%s331 + $0x273] sm:$0xff]
      %v3083 = vld [vmem:[%s331 + $0x283] sm:$0xff]
      %v3084 = vld [vmem:[%s331 + $0x28b] sm:$0xff]
      %v3085 = vld [vmem:[%s331 + $0x293] sm:$0xff]
      %v3086 = vld [vmem:[%s331 + $0x2a3] sm:$0xff]
      %v3087 = vld [vmem:[%s331 + $0x2ab] sm:$0xff]
      %v3088 = vld [vmem:[%s331 + $0x2b3] sm:$0xff]
      %v3089 = vld [vmem:[%s331 + $0x2c3] sm:$0xff]
      %v3090 = vld [vmem:[%s331 + $0x2cb] sm:$0xff]
      %v3091 = vld [vmem:[%s331 + $0x2d3] sm:$0xff]
      %v3092 = vld [vmem:[%s331 + $0x2e3] sm:$0xff]
      %v3093 = vld [vmem:[%s331 + $0x2eb] sm:$0xff]
      %v3094 = vld [vmem:[%s331 + $0x2f3] sm:$0xff]
      %v3095 = vld [vmem:[%s331 + $0x303] sm:$0xff]
      %v3096 = vld [vmem:[%s331 + $0x30b] sm:$0xff]
      %v3097 = vld [vmem:[%s331 + $0x313] sm:$0xff]
      %v3098 = vld [vmem:[%s331 + $0x323] sm:$0xff]
      %v3099 = vld [vmem:[%s331 + $0x32b] sm:$0xff]
      %v3100 = vld [vmem:[%s331 + $0x333] sm:$0xff]
      %v3101 = vld [vmem:[%s331 + $0x343] sm:$0xff]
      %v3102 = vld [vmem:[%s331 + $0x34b] sm:$0xff]
      %v3103 = vld [vmem:[%s331 + $0x353] sm:$0xff]
      %v3104 = vld [vmem:[%s331 + $0x363] sm:$0xff]
      %v3105 = vld [vmem:[%s331 + $0x36b] sm:$0xff]
      %v3106 = vld [vmem:[%s331 + $0x373] sm:$0xff]
      %v3107 = vld [vmem:[%s331 + $0x383] sm:$0xff]
      %v3108 = vld [vmem:[%s331 + $0x38b] sm:$0xff]
      %v3109 = vld [vmem:[%s331 + $0x393] sm:$0xff]
      %v3110 = vld [vmem:[%s331 + $0x3a3] sm:$0xff]
      %v3111 = vld [vmem:[%s331 + $0x3ab] sm:$0xff]
      %v3112 = vld [vmem:[%s331 + $0x3b3] sm:$0xff]
      %v3113 = vld [vmem:[%s331 + $0x3c3] sm:$0xff]
      %v3114 = vld [vmem:[%s331 + $0x3cb] sm:$0xff]
      %v3115 = vld [vmem:[%s331 + $0x3d3] sm:$0xff]
      %v3116 = vld [vmem:[%s331 + $0x3e3] sm:$0xff]
      %v3117 = vld [vmem:[%s331 + $0x3eb] sm:$0xff]
      %v3118 = vld [vmem:[%s331 + $0x3f3] sm:$0xff]
      %v3119 = vpack.c.bf16 %v3024, %v3023
      %v3120 = vpack.c.bf16 %v3026, %v3025
      %v3121 = vpack.c.bf16 %v3028, %v3027
      %v3122 = vpack.c.bf16 %v3030, %v3029
      %v3123 = vpack.c.bf16 %v3032, %v3031
      %v3124 = vpack.c.bf16 %v3034, %v3033
      %v3125 = vpack.c.bf16 %v3036, %v3035
      %v3126 = vpack.c.bf16 %v3038, %v3037
      %v3127 = vpack.c.bf16 %v3040, %v3039
      %v3128 = vpack.c.bf16 %v3042, %v3041
      %v3129 = vpack.c.bf16 %v3044, %v3043
      %v3130 = vpack.c.bf16 %v3046, %v3045
      %v3131 = vpack.c.bf16 %v3048, %v3047
      %v3132 = vpack.c.bf16 %v3050, %v3049
      %v3133 = vpack.c.bf16 %v3052, %v3051
      %v3134 = vpack.c.bf16 %v3054, %v3053
      %v3135 = vpack.c.bf16 %v3056, %v3055
      %v3136 = vpack.c.bf16 %v3058, %v3057
      %v3137 = vpack.c.bf16 %v3060, %v3059
      %v3138 = vpack.c.bf16 %v3062, %v3061
      %v3139 = vpack.c.bf16 %v3064, %v3063
      %v3140 = vpack.c.bf16 %v3066, %v3065
      %v3141 = vpack.c.bf16 %v3068, %v3067
      %v3142 = vpack.c.bf16 %v3070, %v3069
      %v3143 = vpack.c.bf16 %v3072, %v3071
      %v3144 = vpack.c.bf16 %v3074, %v3073
      %v3145 = vpack.c.bf16 %v3076, %v3075
      %v3146 = vpack.c.bf16 %v3078, %v3077
      %v3147 = vpack.c.bf16 %v3080, %v3079
      %v3148 = vpack.c.bf16 %v3082, %v3081
      %v3149 = vpack.c.bf16 %v3084, %v3083
      %v3150 = vpack.c.bf16 %v3086, %v3085
      %v3151 = vpack.c.bf16 %v3088, %v3087
      %v3152 = vpack.c.bf16 %v3090, %v3089
      %v3153 = vpack.c.bf16 %v3092, %v3091
      %v3154 = vpack.c.bf16 %v3094, %v3093
      %v3155 = vpack.c.bf16 %v3096, %v3095
      %v3156 = vpack.c.bf16 %v3098, %v3097
      %v3157 = vpack.c.bf16 %v3100, %v3099
      %v3158 = vpack.c.bf16 %v3102, %v3101
      %v3159 = vpack.c.bf16 %v3104, %v3103
      %v3160 = vpack.c.bf16 %v3106, %v3105
      %v3161 = vpack.c.bf16 %v3108, %v3107
      %v3162 = vpack.c.bf16 %v3110, %v3109
      %v3163 = vpack.c.bf16 %v3112, %v3111
      %v3164 = vpack.c.bf16 %v3114, %v3113
      %v3165 = vpack.c.bf16 %v3116, %v3115
      %v3166 = vpack.c.bf16 %v3118, %v3117
      %s3167 = scalar_lea.vmem %s1, 96
      %v3168 = vld [vmem:[%s3167] sm:$0xff]
      %v3169 = vld [vmem:[%s3167 + $0x8] sm:$0xff]
      %v3170 = vld [vmem:[%s3167 + $0x10] sm:$0xff]
      %v3171 = vld [vmem:[%s3167 + $0x18] sm:$0x33]
      %v3176 = vunpack.c.l.b16 %v3168
      %v3177 = vunpack.c.h.b16 %v3168
      %v3178 = vunpack.c.l.b16 %v3169
      %v3179 = vunpack.c.h.b16 %v3169
      %v3180 = vunpack.c.l.b16 %v3170
      %v3181 = vunpack.c.h.b16 %v3170
      %v3182 = vunpack.c.l.b16 %v3171
      %v3183 = vunpack.c.h.b16 %v3171
      %v3184 = vpack.c.b16 %v3178, %v3176
      %v3185 = vpack.c.b16 %v3179, %v3177
      %v3186 = vpack.c.b16 %v3182, %v3180
      %v3187 = vpack.c.b16 %v3183, %v3181
      %v3191 = vsel %vm655, %v3119, 0
      %v3194 = vsel %vm655, %v3120, 0
      %v3197 = vsel %vm655, %v3121, 0
      %v3200 = vsel %vm655, %v3122, 0
      %v3203 = vsel %vm655, %v3123, 0
      %v3206 = vsel %vm655, %v3124, 0
      %v3209 = vsel %vm655, %v3125, 0
      %v3212 = vsel %vm655, %v3126, 0
      %v3215 = vsel %vm655, %v3127, 0
      %v3218 = vsel %vm655, %v3128, 0
      %v3221 = vsel %vm655, %v3129, 0
      %v3224 = vsel %vm655, %v3130, 0
      %v3227 = vsel %vm655, %v3131, 0
      %v3230 = vsel %vm655, %v3132, 0
      %v3233 = vsel %vm655, %v3133, 0
      %v3236 = vsel %vm655, %v3134, 0
      %v3239 = vsel %vm655, %v3135, 0
      %v3242 = vsel %vm655, %v3136, 0
      %v3245 = vsel %vm655, %v3137, 0
      %v3248 = vsel %vm655, %v3138, 0
      %v3251 = vsel %vm655, %v3139, 0
      %v3254 = vsel %vm655, %v3140, 0
      %v3257 = vsel %vm655, %v3141, 0
      %v3260 = vsel %vm655, %v3142, 0
      %v3263 = vsel %vm655, %v3143, 0
      %v3266 = vsel %vm655, %v3144, 0
      %v3269 = vsel %vm655, %v3145, 0
      %v3272 = vsel %vm655, %v3146, 0
      %v3275 = vsel %vm655, %v3147, 0
      %v3278 = vsel %vm655, %v3148, 0
      %v3281 = vsel %vm655, %v3149, 0
      %v3284 = vsel %vm655, %v3150, 0
      %v3287 = vsel %vm655, %v3151, 0
      %v3290 = vsel %vm655, %v3152, 0
      %v3293 = vsel %vm655, %v3153, 0
      %v3296 = vsel %vm655, %v3154, 0
      %v3299 = vsel %vm655, %v3155, 0
      %v3302 = vsel %vm655, %v3156, 0
      %v3305 = vsel %vm655, %v3157, 0
      %v3308 = vsel %vm655, %v3158, 0
      %v3311 = vsel %vm655, %v3159, 0
      %v3314 = vsel %vm655, %v3160, 0
      %v3317 = vsel %vm655, %v3161, 0
      %v3320 = vsel %vm655, %v3162, 0
      %v3323 = vsel %vm655, %v3163, 0
      %v3326 = vsel %vm655, %v3164, 0
      %v3329 = vsel %vm655, %v3165, 0
      %v3332 = vsel %vm655, %v3166, 0
      %v3335 = vsel %vm800, %v3186, 0
      %v3338 = vsel %vm800, %v3187, 0
      %3340 = vmatprep.subr.bf16.mxu0 %v3185
      %3341 = vmatpush1.bf16.msra.mxu0 %v3184
      %3342 = vmatprep.subr.bf16.mxu0 %v3338
      %3343 = vmatpush1.bf16.msra.mxu0 %v3335
      %3344 = vmatprep.subr.bf16.mxu0 0
      %3345 = vmatpush1.bf16.msra.mxu0 0
      %3346 = vmatprep.subr.bf16.mxu0 0
      %3347 = vmatpush1.bf16.msra.mxu0 0
      %3348 = vmatprep.subr.bf16.mxu0 0
      %3349 = vmatpush1.bf16.msra.mxu0 0
      %3350 = vmatprep.subr.bf16.mxu0 0
      %3351 = vmatpush1.bf16.msra.mxu0 0
      %3352 = vmatprep.subr.bf16.mxu0 0
      %3353 = vmatpush1.bf16.msra.mxu0 0
      %3354 = vmatprep.subr.bf16.mxu0 0
      %3355 = vmatpush1.bf16.msra.mxu0 0
      %3356 = vmatprep.subr.bf16.mxu0 0
      %3357 = vmatpush1.bf16.msra.mxu0 0
      %3358 = vmatprep.subr.bf16.mxu0 0
      %3359 = vmatpush1.bf16.msra.mxu0 0
      %3360 = vmatprep.subr.bf16.mxu0 0
      %3361 = vmatpush1.bf16.msra.mxu0 0
      %3362 = vmatprep.subr.bf16.mxu0 0
      %3363 = vmatpush1.bf16.msra.mxu0 0
      %3364 = vmatprep.subr.bf16.mxu0 0
      %3365 = vmatpush1.bf16.msra.mxu0 0
      %3366 = vmatprep.subr.bf16.mxu0 0
      %3367 = vmatpush1.bf16.msra.mxu0 0
      %3368 = vmatprep.subr.bf16.mxu0 0
      %3369 = vmatpush1.bf16.msra.mxu0 0
      %3370 = vmatprep.subr.bf16.mxu0 0
      %3371 = vmatpush1.bf16.msra.mxu0 0
      %3372 = vmatprep.mubr.bf16.mxu0 0
      %3373 = vmatmul.mubr.bf16.gmra.mrb[0].mxu0 %v3191
      %v3374 = vpop.f32.mrb[0].mxu0
      %v3375 = vadd.f32 0.0, %v3374
      %v3376 = vpop.f32.mrb[0].mxu0
      %v3377 = vadd.f32 0.0, %v3376
      %v3378 = vpop.f32.mrb[0].mxu0
      %v3379 = vadd.f32 0.0, %v3378
      %v3380 = vpop.f32.mrb[0].mxu0
      %v3381 = vadd.f32 0.0, %v3380
      %3382 = vmatprep.mubr.bf16.mxu0 0
      %3383 = vmatmul.mubr.bf16.gmra.mrb[0].mxu0 %v3194
      %v3384 = vpop.f32.mrb[0].mxu0
      %v3385 = vadd.f32 0.0, %v3384
      %v3386 = vpop.f32.mrb[0].mxu0
      %v3387 = vadd.f32 0.0, %v3386
      %v3388 = vpop.f32.mrb[0].mxu0
      %v3389 = vadd.f32 0.0, %v3388
      %v3390 = vpop.f32.mrb[0].mxu0
      %v3391 = vadd.f32 0.0, %v3390
      %3392 = vmatprep.mubr.bf16.mxu0 0
      %3393 = vmatmul.mubr.bf16.gmra.mrb[0].mxu0 %v3197
      %v3394 = vpop.f32.mrb[0].mxu0
      %v3395 = vadd.f32 0.0, %v3394
      %v3396 = vpop.f32.mrb[0].mxu0
      %v3397 = vadd.f32 0.0, %v3396
      %v3398 = vpop.f32.mrb[0].mxu0
      %v3399 = vadd.f32 0.0, %v3398
      %v3400 = vpop.f32.mrb[0].mxu0
      %v3401 = vadd.f32 0.0, %v3400
      %3402 = vmatprep.mubr.bf16.mxu0 0
      %3403 = vmatmul.mubr.bf16.gmra.mrb[0].mxu0 %v3200
      %v3404 = vpop.f32.mrb[0].mxu0
      %v3405 = vadd.f32 0.0, %v3404
      %v3406 = vpop.f32.mrb[0].mxu0
      %v3407 = vadd.f32 0.0, %v3406
      %v3408 = vpop.f32.mrb[0].mxu0
      %v3409 = vadd.f32 0.0, %v3408
      %v3410 = vpop.f32.mrb[0].mxu0
      %v3411 = vadd.f32 0.0, %v3410
      %3412 = vmatprep.mubr.bf16.mxu0 0
      %3413 = vmatmul.mubr.bf16.gmra.mrb[0].mxu0 %v3203
      %v3414 = vpop.f32.mrb[0].mxu0
      %v3415 = vadd.f32 0.0, %v3414
      %v3416 = vpop.f32.mrb[0].mxu0
      %v3417 = vadd.f32 0.0, %v3416
      %v3418 = vpop.f32.mrb[0].mxu0
      %v3419 = vadd.f32 0.0, %v3418
      %v3420 = vpop.f32.mrb[0].mxu0
      %v3421 = vadd.f32 0.0, %v3420
      %3422 = vmatprep.mubr.bf16.mxu0 0
      %3423 = vmatmul.mubr.bf16.gmra.mrb[0].mxu0 %v3206
      %v3424 = vpop.f32.mrb[0].mxu0
      %v3425 = vadd.f32 0.0, %v3424
      %v3426 = vpop.f32.mrb[0].mxu0
      %v3427 = vadd.f32 0.0, %v3426
      %v3428 = vpop.f32.mrb[0].mxu0
      %v3429 = vadd.f32 0.0, %v3428
      %v3430 = vpop.f32.mrb[0].mxu0
      %v3431 = vadd.f32 0.0, %v3430
      %3432 = vmatprep.mubr.bf16.mxu0 0
      %3433 = vmatmul.mubr.bf16.gmra.mrb[0].mxu0 %v3209
      %v3434 = vpop.f32.mrb[0].mxu0
      %v3435 = vadd.f32 0.0, %v3434
      %v3436 = vpop.f32.mrb[0].mxu0
      %v3437 = vadd.f32 0.0, %v3436
      %v3438 = vpop.f32.mrb[0].mxu0
      %v3439 = vadd.f32 0.0, %v3438
      %v3440 = vpop.f32.mrb[0].mxu0
      %v3441 = vadd.f32 0.0, %v3440
      %3442 = vmatprep.mubr.bf16.mxu0 0
      %3443 = vmatmul.mubr.bf16.gmra.mrb[0].mxu0 %v3212
      %v3444 = vpop.f32.mrb[0].mxu0
      %v3445 = vadd.f32 0.0, %v3444
      %v3446 = vpop.f32.mrb[0].mxu0
      %v3447 = vadd.f32 0.0, %v3446
      %v3448 = vpop.f32.mrb[0].mxu0
      %v3449 = vadd.f32 0.0, %v3448
      %v3450 = vpop.f32.mrb[0].mxu0
      %v3451 = vadd.f32 0.0, %v3450
      %3452 = vmatprep.mubr.bf16.mxu0 0
      %3453 = vmatmul.mubr.bf16.gmra.mrb[0].mxu0 %v3215
      %v3454 = vpop.f32.mrb[0].mxu0
      %v3455 = vadd.f32 0.0, %v3454
      %v3456 = vpop.f32.mrb[0].mxu0
      %v3457 = vadd.f32 0.0, %v3456
      %v3458 = vpop.f32.mrb[0].mxu0
      %v3459 = vadd.f32 0.0, %v3458
      %v3460 = vpop.f32.mrb[0].mxu0
      %v3461 = vadd.f32 0.0, %v3460
      %3462 = vmatprep.mubr.bf16.mxu0 0
      %3463 = vmatmul.mubr.bf16.gmra.mrb[0].mxu0 %v3218
      %v3464 = vpop.f32.mrb[0].mxu0
      %v3465 = vadd.f32 0.0, %v3464
      %v3466 = vpop.f32.mrb[0].mxu0
      %v3467 = vadd.f32 0.0, %v3466
      %v3468 = vpop.f32.mrb[0].mxu0
      %v3469 = vadd.f32 0.0, %v3468
      %v3470 = vpop.f32.mrb[0].mxu0
      %v3471 = vadd.f32 0.0, %v3470
      %3472 = vmatprep.mubr.bf16.mxu0 0
      %3473 = vmatmul.mubr.bf16.gmra.mrb[0].mxu0 %v3221
      %v3474 = vpop.f32.mrb[0].mxu0
      %v3475 = vadd.f32 0.0, %v3474
      %v3476 = vpop.f32.mrb[0].mxu0
      %v3477 = vadd.f32 0.0, %v3476
      %v3478 = vpop.f32.mrb[0].mxu0
      %v3479 = vadd.f32 0.0, %v3478
      %v3480 = vpop.f32.mrb[0].mxu0
      %v3481 = vadd.f32 0.0, %v3480
      %3482 = vmatprep.mubr.bf16.mxu0 0
      %3483 = vmatmul.mubr.bf16.gmra.mrb[0].mxu0 %v3224
      %v3484 = vpop.f32.mrb[0].mxu0
      %v3485 = vadd.f32 0.0, %v3484
      %v3486 = vpop.f32.mrb[0].mxu0
      %v3487 = vadd.f32 0.0, %v3486
      %v3488 = vpop.f32.mrb[0].mxu0
      %v3489 = vadd.f32 0.0, %v3488
      %v3490 = vpop.f32.mrb[0].mxu0
      %v3491 = vadd.f32 0.0, %v3490
      %3492 = vmatprep.mubr.bf16.mxu0 0
      %3493 = vmatmul.mubr.bf16.gmra.mrb[0].mxu0 %v3227
      %v3494 = vpop.f32.mrb[0].mxu0
      %v3495 = vadd.f32 0.0, %v3494
      %v3496 = vpop.f32.mrb[0].mxu0
      %v3497 = vadd.f32 0.0, %v3496
      %v3498 = vpop.f32.mrb[0].mxu0
      %v3499 = vadd.f32 0.0, %v3498
      %v3500 = vpop.f32.mrb[0].mxu0
      %v3501 = vadd.f32 0.0, %v3500
      %3502 = vmatprep.mubr.bf16.mxu0 0
      %3503 = vmatmul.mubr.bf16.gmra.mrb[0].mxu0 %v3230
      %v3504 = vpop.f32.mrb[0].mxu0
      %v3505 = vadd.f32 0.0, %v3504
      %v3506 = vpop.f32.mrb[0].mxu0
      %v3507 = vadd.f32 0.0, %v3506
      %v3508 = vpop.f32.mrb[0].mxu0
      %v3509 = vadd.f32 0.0, %v3508
      %v3510 = vpop.f32.mrb[0].mxu0
      %v3511 = vadd.f32 0.0, %v3510
      %3512 = vmatprep.mubr.bf16.mxu0 0
      %3513 = vmatmul.mubr.bf16.gmra.mrb[0].mxu0 %v3233
      %v3514 = vpop.f32.mrb[0].mxu0
      %v3515 = vadd.f32 0.0, %v3514
      %v3516 = vpop.f32.mrb[0].mxu0
      %v3517 = vadd.f32 0.0, %v3516
      %v3518 = vpop.f32.mrb[0].mxu0
      %v3519 = vadd.f32 0.0, %v3518
      %v3520 = vpop.f32.mrb[0].mxu0
      %v3521 = vadd.f32 0.0, %v3520
      %3522 = vmatprep.mubr.bf16.mxu0 0
      %3523 = vmatmul.mubr.bf16.gmra.mrb[0].mxu0 %v3236
      %v3524 = vpop.f32.mrb[0].mxu0
      %v3525 = vadd.f32 0.0, %v3524
      %v3526 = vpop.f32.mrb[0].mxu0
      %v3527 = vadd.f32 0.0, %v3526
      %v3528 = vpop.f32.mrb[0].mxu0
      %v3529 = vadd.f32 0.0, %v3528
      %v3530 = vpop.f32.mrb[0].mxu0
      %v3531 = vadd.f32 0.0, %v3530
      %3532 = vmatprep.mubr.bf16.mxu0 0
      %3533 = vmatmul.mubr.bf16.gmra.mrb[0].mxu0 %v3239
      %v3534 = vpop.f32.mrb[0].mxu0
      %v3535 = vadd.f32 0.0, %v3534
      %v3536 = vpop.f32.mrb[0].mxu0
      %v3537 = vadd.f32 0.0, %v3536
      %v3538 = vpop.f32.mrb[0].mxu0
      %v3539 = vadd.f32 0.0, %v3538
      %v3540 = vpop.f32.mrb[0].mxu0
      %v3541 = vadd.f32 0.0, %v3540
      %3542 = vmatprep.mubr.bf16.mxu0 0
      %3543 = vmatmul.mubr.bf16.gmra.mrb[0].mxu0 %v3242
      %v3544 = vpop.f32.mrb[0].mxu0
      %v3545 = vadd.f32 0.0, %v3544
      %v3546 = vpop.f32.mrb[0].mxu0
      %v3547 = vadd.f32 0.0, %v3546
      %v3548 = vpop.f32.mrb[0].mxu0
      %v3549 = vadd.f32 0.0, %v3548
      %v3550 = vpop.f32.mrb[0].mxu0
      %v3551 = vadd.f32 0.0, %v3550
      %3552 = vmatprep.mubr.bf16.mxu0 0
      %3553 = vmatmul.mubr.bf16.gmra.mrb[0].mxu0 %v3245
      %v3554 = vpop.f32.mrb[0].mxu0
      %v3555 = vadd.f32 0.0, %v3554
      %v3556 = vpop.f32.mrb[0].mxu0
      %v3557 = vadd.f32 0.0, %v3556
      %v3558 = vpop.f32.mrb[0].mxu0
      %v3559 = vadd.f32 0.0, %v3558
      %v3560 = vpop.f32.mrb[0].mxu0
      %v3561 = vadd.f32 0.0, %v3560
      %3562 = vmatprep.mubr.bf16.mxu0 0
      %3563 = vmatmul.mubr.bf16.gmra.mrb[0].mxu0 %v3248
      %v3564 = vpop.f32.mrb[0].mxu0
      %v3565 = vadd.f32 0.0, %v3564
      %v3566 = vpop.f32.mrb[0].mxu0
      %v3567 = vadd.f32 0.0, %v3566
      %v3568 = vpop.f32.mrb[0].mxu0
      %v3569 = vadd.f32 0.0, %v3568
      %v3570 = vpop.f32.mrb[0].mxu0
      %v3571 = vadd.f32 0.0, %v3570
      %3572 = vmatprep.mubr.bf16.mxu0 0
      %3573 = vmatmul.mubr.bf16.gmra.mrb[0].mxu0 %v3251
      %v3574 = vpop.f32.mrb[0].mxu0
      %v3575 = vadd.f32 0.0, %v3574
      %v3576 = vpop.f32.mrb[0].mxu0
      %v3577 = vadd.f32 0.0, %v3576
      %v3578 = vpop.f32.mrb[0].mxu0
      %v3579 = vadd.f32 0.0, %v3578
      %v3580 = vpop.f32.mrb[0].mxu0
      %v3581 = vadd.f32 0.0, %v3580
      %3582 = vmatprep.mubr.bf16.mxu0 0
      %3583 = vmatmul.mubr.bf16.gmra.mrb[0].mxu0 %v3254
      %v3584 = vpop.f32.mrb[0].mxu0
      %v3585 = vadd.f32 0.0, %v3584
      %v3586 = vpop.f32.mrb[0].mxu0
      %v3587 = vadd.f32 0.0, %v3586
      %v3588 = vpop.f32.mrb[0].mxu0
      %v3589 = vadd.f32 0.0, %v3588
      %v3590 = vpop.f32.mrb[0].mxu0
      %v3591 = vadd.f32 0.0, %v3590
      %3592 = vmatprep.mubr.bf16.mxu0 0
      %3593 = vmatmul.mubr.bf16.gmra.mrb[0].mxu0 %v3257
      %v3594 = vpop.f32.mrb[0].mxu0
      %v3595 = vadd.f32 0.0, %v3594
      %v3596 = vpop.f32.mrb[0].mxu0
      %v3597 = vadd.f32 0.0, %v3596
      %v3598 = vpop.f32.mrb[0].mxu0
      %v3599 = vadd.f32 0.0, %v3598
      %v3600 = vpop.f32.mrb[0].mxu0
      %v3601 = vadd.f32 0.0, %v3600
      %3602 = vmatprep.mubr.bf16.mxu0 0
      %3603 = vmatmul.mubr.bf16.gmra.mrb[0].mxu0 %v3260
      %v3604 = vpop.f32.mrb[0].mxu0
      %v3605 = vadd.f32 0.0, %v3604
      %v3606 = vpop.f32.mrb[0].mxu0
      %v3607 = vadd.f32 0.0, %v3606
      %v3608 = vpop.f32.mrb[0].mxu0
      %v3609 = vadd.f32 0.0, %v3608
      %v3610 = vpop.f32.mrb[0].mxu0
      %v3611 = vadd.f32 0.0, %v3610
      %3612 = vmatprep.mubr.bf16.mxu0 0
      %3613 = vmatmul.mubr.bf16.gmra.mrb[0].mxu0 %v3263
      %v3614 = vpop.f32.mrb[0].mxu0
      %v3615 = vadd.f32 0.0, %v3614
      %v3616 = vpop.f32.mrb[0].mxu0
      %v3617 = vadd.f32 0.0, %v3616
      %v3618 = vpop.f32.mrb[0].mxu0
      %v3619 = vadd.f32 0.0, %v3618
      %v3620 = vpop.f32.mrb[0].mxu0
      %v3621 = vadd.f32 0.0, %v3620
      %3622 = vmatprep.mubr.bf16.mxu0 0
      %3623 = vmatmul.mubr.bf16.gmra.mrb[0].mxu0 %v3266
      %v3624 = vpop.f32.mrb[0].mxu0
      %v3625 = vadd.f32 0.0, %v3624
      %v3626 = vpop.f32.mrb[0].mxu0
      %v3627 = vadd.f32 0.0, %v3626
      %v3628 = vpop.f32.mrb[0].mxu0
      %v3629 = vadd.f32 0.0, %v3628
      %v3630 = vpop.f32.mrb[0].mxu0
      %v3631 = vadd.f32 0.0, %v3630
      %3632 = vmatprep.mubr.bf16.mxu0 0
      %3633 = vmatmul.mubr.bf16.gmra.mrb[0].mxu0 %v3269
      %v3634 = vpop.f32.mrb[0].mxu0
      %v3635 = vadd.f32 0.0, %v3634
      %v3636 = vpop.f32.mrb[0].mxu0
      %v3637 = vadd.f32 0.0, %v3636
      %v3638 = vpop.f32.mrb[0].mxu0
      %v3639 = vadd.f32 0.0, %v3638
      %v3640 = vpop.f32.mrb[0].mxu0
      %v3641 = vadd.f32 0.0, %v3640
      %3642 = vmatprep.mubr.bf16.mxu0 0
      %3643 = vmatmul.mubr.bf16.gmra.mrb[0].mxu0 %v3272
      %v3644 = vpop.f32.mrb[0].mxu0
      %v3645 = vadd.f32 0.0, %v3644
      %v3646 = vpop.f32.mrb[0].mxu0
      %v3647 = vadd.f32 0.0, %v3646
      %v3648 = vpop.f32.mrb[0].mxu0
      %v3649 = vadd.f32 0.0, %v3648
      %v3650 = vpop.f32.mrb[0].mxu0
      %v3651 = vadd.f32 0.0, %v3650
      %3652 = vmatprep.mubr.bf16.mxu0 0
      %3653 = vmatmul.mubr.bf16.gmra.mrb[0].mxu0 %v3275
      %v3654 = vpop.f32.mrb[0].mxu0
      %v3655 = vadd.f32 0.0, %v3654
      %v3656 = vpop.f32.mrb[0].mxu0
      %v3657 = vadd.f32 0.0, %v3656
      %v3658 = vpop.f32.mrb[0].mxu0
      %v3659 = vadd.f32 0.0, %v3658
      %v3660 = vpop.f32.mrb[0].mxu0
      %v3661 = vadd.f32 0.0, %v3660
      %3662 = vmatprep.mubr.bf16.mxu0 0
      %3663 = vmatmul.mubr.bf16.gmra.mrb[0].mxu0 %v3278
      %v3664 = vpop.f32.mrb[0].mxu0
      %v3665 = vadd.f32 0.0, %v3664
      %v3666 = vpop.f32.mrb[0].mxu0
      %v3667 = vadd.f32 0.0, %v3666
      %v3668 = vpop.f32.mrb[0].mxu0
      %v3669 = vadd.f32 0.0, %v3668
      %v3670 = vpop.f32.mrb[0].mxu0
      %v3671 = vadd.f32 0.0, %v3670
      %3672 = vmatprep.mubr.bf16.mxu0 0
      %3673 = vmatmul.mubr.bf16.gmra.mrb[0].mxu0 %v3281
      %v3674 = vpop.f32.mrb[0].mxu0
      %v3675 = vadd.f32 0.0, %v3674
      %v3676 = vpop.f32.mrb[0].mxu0
      %v3677 = vadd.f32 0.0, %v3676
      %v3678 = vpop.f32.mrb[0].mxu0
      %v3679 = vadd.f32 0.0, %v3678
      %v3680 = vpop.f32.mrb[0].mxu0
      %v3681 = vadd.f32 0.0, %v3680
      %3682 = vmatprep.mubr.bf16.mxu0 0
      %3683 = vmatmul.mubr.bf16.gmra.mrb[0].mxu0 %v3284
      %v3684 = vpop.f32.mrb[0].mxu0
      %v3685 = vadd.f32 0.0, %v3684
      %v3686 = vpop.f32.mrb[0].mxu0
      %v3687 = vadd.f32 0.0, %v3686
      %v3688 = vpop.f32.mrb[0].mxu0
      %v3689 = vadd.f32 0.0, %v3688
      %v3690 = vpop.f32.mrb[0].mxu0
      %v3691 = vadd.f32 0.0, %v3690
      %3692 = vmatprep.mubr.bf16.mxu0 0
      %3693 = vmatmul.mubr.bf16.gmra.mrb[0].mxu0 %v3287
      %v3694 = vpop.f32.mrb[0].mxu0
      %v3695 = vadd.f32 0.0, %v3694
      %v3696 = vpop.f32.mrb[0].mxu0
      %v3697 = vadd.f32 0.0, %v3696
      %v3698 = vpop.f32.mrb[0].mxu0
      %v3699 = vadd.f32 0.0, %v3698
      %v3700 = vpop.f32.mrb[0].mxu0
      %v3701 = vadd.f32 0.0, %v3700
      %3702 = vmatprep.mubr.bf16.mxu0 0
      %3703 = vmatmul.mubr.bf16.gmra.mrb[0].mxu0 %v3290
      %v3704 = vpop.f32.mrb[0].mxu0
      %v3705 = vadd.f32 0.0, %v3704
      %v3706 = vpop.f32.mrb[0].mxu0
      %v3707 = vadd.f32 0.0, %v3706
      %v3708 = vpop.f32.mrb[0].mxu0
      %v3709 = vadd.f32 0.0, %v3708
      %v3710 = vpop.f32.mrb[0].mxu0
      %v3711 = vadd.f32 0.0, %v3710
      %3712 = vmatprep.mubr.bf16.mxu0 0
      %3713 = vmatmul.mubr.bf16.gmra.mrb[0].mxu0 %v3293
      %v3714 = vpop.f32.mrb[0].mxu0
      %v3715 = vadd.f32 0.0, %v3714
      %v3716 = vpop.f32.mrb[0].mxu0
      %v3717 = vadd.f32 0.0, %v3716
      %v3718 = vpop.f32.mrb[0].mxu0
      %v3719 = vadd.f32 0.0, %v3718
      %v3720 = vpop.f32.mrb[0].mxu0
      %v3721 = vadd.f32 0.0, %v3720
      %3722 = vmatprep.mubr.bf16.mxu0 0
      %3723 = vmatmul.mubr.bf16.gmra.mrb[0].mxu0 %v3296
      %v3724 = vpop.f32.mrb[0].mxu0
      %v3725 = vadd.f32 0.0, %v3724
      %v3726 = vpop.f32.mrb[0].mxu0
      %v3727 = vadd.f32 0.0, %v3726
      %v3728 = vpop.f32.mrb[0].mxu0
      %v3729 = vadd.f32 0.0, %v3728
      %v3730 = vpop.f32.mrb[0].mxu0
      %v3731 = vadd.f32 0.0, %v3730
      %3732 = vmatprep.mubr.bf16.mxu0 0
      %3733 = vmatmul.mubr.bf16.gmra.mrb[0].mxu0 %v3299
      %v3734 = vpop.f32.mrb[0].mxu0
      %v3735 = vadd.f32 0.0, %v3734
      %v3736 = vpop.f32.mrb[0].mxu0
      %v3737 = vadd.f32 0.0, %v3736
      %v3738 = vpop.f32.mrb[0].mxu0
      %v3739 = vadd.f32 0.0, %v3738
      %v3740 = vpop.f32.mrb[0].mxu0
      %v3741 = vadd.f32 0.0, %v3740
      %3742 = vmatprep.mubr.bf16.mxu0 0
      %3743 = vmatmul.mubr.bf16.gmra.mrb[0].mxu0 %v3302
      %v3744 = vpop.f32.mrb[0].mxu0
      %v3745 = vadd.f32 0.0, %v3744
      %v3746 = vpop.f32.mrb[0].mxu0
      %v3747 = vadd.f32 0.0, %v3746
      %v3748 = vpop.f32.mrb[0].mxu0
      %v3749 = vadd.f32 0.0, %v3748
      %v3750 = vpop.f32.mrb[0].mxu0
      %v3751 = vadd.f32 0.0, %v3750
      %3752 = vmatprep.mubr.bf16.mxu0 0
      %3753 = vmatmul.mubr.bf16.gmra.mrb[0].mxu0 %v3305
      %v3754 = vpop.f32.mrb[0].mxu0
      %v3755 = vadd.f32 0.0, %v3754
      %v3756 = vpop.f32.mrb[0].mxu0
      %v3757 = vadd.f32 0.0, %v3756
      %v3758 = vpop.f32.mrb[0].mxu0
      %v3759 = vadd.f32 0.0, %v3758
      %v3760 = vpop.f32.mrb[0].mxu0
      %v3761 = vadd.f32 0.0, %v3760
      %3762 = vmatprep.mubr.bf16.mxu0 0
      %3763 = vmatmul.mubr.bf16.gmra.mrb[0].mxu0 %v3308
      %v3764 = vpop.f32.mrb[0].mxu0
      %v3765 = vadd.f32 0.0, %v3764
      %v3766 = vpop.f32.mrb[0].mxu0
      %v3767 = vadd.f32 0.0, %v3766
      %v3768 = vpop.f32.mrb[0].mxu0
      %v3769 = vadd.f32 0.0, %v3768
      %v3770 = vpop.f32.mrb[0].mxu0
      %v3771 = vadd.f32 0.0, %v3770
      %3772 = vmatprep.mubr.bf16.mxu0 0
      %3773 = vmatmul.mubr.bf16.gmra.mrb[0].mxu0 %v3311
      %v3774 = vpop.f32.mrb[0].mxu0
      %v3775 = vadd.f32 0.0, %v3774
      %v3776 = vpop.f32.mrb[0].mxu0
      %v3777 = vadd.f32 0.0, %v3776
      %v3778 = vpop.f32.mrb[0].mxu0
      %v3779 = vadd.f32 0.0, %v3778
      %v3780 = vpop.f32.mrb[0].mxu0
      %v3781 = vadd.f32 0.0, %v3780
      %3782 = vmatprep.mubr.bf16.mxu0 0
      %3783 = vmatmul.mubr.bf16.gmra.mrb[0].mxu0 %v3314
      %v3784 = vpop.f32.mrb[0].mxu0
      %v3785 = vadd.f32 0.0, %v3784
      %v3786 = vpop.f32.mrb[0].mxu0
      %v3787 = vadd.f32 0.0, %v3786
      %v3788 = vpop.f32.mrb[0].mxu0
      %v3789 = vadd.f32 0.0, %v3788
      %v3790 = vpop.f32.mrb[0].mxu0
      %v3791 = vadd.f32 0.0, %v3790
      %3792 = vmatprep.mubr.bf16.mxu0 0
      %3793 = vmatmul.mubr.bf16.gmra.mrb[0].mxu0 %v3317
      %v3794 = vpop.f32.mrb[0].mxu0
      %v3795 = vadd.f32 0.0, %v3794
      %v3796 = vpop.f32.mrb[0].mxu0
      %v3797 = vadd.f32 0.0, %v3796
      %v3798 = vpop.f32.mrb[0].mxu0
      %v3799 = vadd.f32 0.0, %v3798
      %v3800 = vpop.f32.mrb[0].mxu0
      %v3801 = vadd.f32 0.0, %v3800
      %3802 = vmatprep.mubr.bf16.mxu0 0
      %3803 = vmatmul.mubr.bf16.gmra.mrb[0].mxu0 %v3320
      %v3804 = vpop.f32.mrb[0].mxu0
      %v3805 = vadd.f32 0.0, %v3804
      %v3806 = vpop.f32.mrb[0].mxu0
      %v3807 = vadd.f32 0.0, %v3806
      %v3808 = vpop.f32.mrb[0].mxu0
      %v3809 = vadd.f32 0.0, %v3808
      %v3810 = vpop.f32.mrb[0].mxu0
      %v3811 = vadd.f32 0.0, %v3810
      %3812 = vmatprep.mubr.bf16.mxu0 0
      %3813 = vmatmul.mubr.bf16.gmra.mrb[0].mxu0 %v3323
      %v3814 = vpop.f32.mrb[0].mxu0
      %v3815 = vadd.f32 0.0, %v3814
      %v3816 = vpop.f32.mrb[0].mxu0
      %v3817 = vadd.f32 0.0, %v3816
      %v3818 = vpop.f32.mrb[0].mxu0
      %v3819 = vadd.f32 0.0, %v3818
      %v3820 = vpop.f32.mrb[0].mxu0
      %v3821 = vadd.f32 0.0, %v3820
      %3822 = vmatprep.mubr.bf16.mxu0 0
      %3823 = vmatmul.mubr.bf16.gmra.mrb[0].mxu0 %v3326
      %v3824 = vpop.f32.mrb[0].mxu0
      %v3825 = vadd.f32 0.0, %v3824
      %v3826 = vpop.f32.mrb[0].mxu0
      %v3827 = vadd.f32 0.0, %v3826
      %v3828 = vpop.f32.mrb[0].mxu0
      %v3829 = vadd.f32 0.0, %v3828
      %v3830 = vpop.f32.mrb[0].mxu0
      %v3831 = vadd.f32 0.0, %v3830
      %3832 = vmatprep.mubr.bf16.mxu0 0
      %3833 = vmatmul.mubr.bf16.gmra.mrb[0].mxu0 %v3329
      %v3834 = vpop.f32.mrb[0].mxu0
      %v3835 = vadd.f32 0.0, %v3834
      %v3836 = vpop.f32.mrb[0].mxu0
      %v3837 = vadd.f32 0.0, %v3836
      %v3838 = vpop.f32.mrb[0].mxu0
      %v3839 = vadd.f32 0.0, %v3838
      %v3840 = vpop.f32.mrb[0].mxu0
      %v3841 = vadd.f32 0.0, %v3840
      %3842 = vmatprep.mubr.bf16.mxu0 0
      %3843 = vmatmul.mubr.bf16.gmra.mrb[0].mxu0 %v3332
      %v3844 = vpop.f32.mrb[0].mxu0
      %v3845 = vadd.f32 0.0, %v3844
      %v3846 = vpop.f32.mrb[0].mxu0
      %v3847 = vadd.f32 0.0, %v3846
      %v3848 = vpop.f32.mrb[0].mxu0
      %v3849 = vadd.f32 0.0, %v3848
      %v3850 = vpop.f32.mrb[0].mxu0
      %v3851 = vadd.f32 0.0, %v3850
      %3852 = vdwg.mxu0
      %v3853 = vadd.f32 %v2831, %v3375
      %v3854 = vadd.f32 %v2832, %v3377
      %v3855 = vadd.f32 %v2833, %v3379
      %v3856 = vadd.f32 %v2834, %v3381
      %v3857 = vadd.f32 %v2835, %v3385
      %v3858 = vadd.f32 %v2836, %v3387
      %v3859 = vadd.f32 %v2837, %v3389
      %v3860 = vadd.f32 %v2838, %v3391
      %v3861 = vadd.f32 %v2839, %v3395
      %v3862 = vadd.f32 %v2840, %v3397
      %v3863 = vadd.f32 %v2841, %v3399
      %v3864 = vadd.f32 %v2842, %v3401
      %v3865 = vadd.f32 %v2843, %v3405
      %v3866 = vadd.f32 %v2844, %v3407
      %v3867 = vadd.f32 %v2845, %v3409
      %v3868 = vadd.f32 %v2846, %v3411
      %v3869 = vadd.f32 %v2847, %v3415
      %v3870 = vadd.f32 %v2848, %v3417
      %v3871 = vadd.f32 %v2849, %v3419
      %v3872 = vadd.f32 %v2850, %v3421
      %v3873 = vadd.f32 %v2851, %v3425
      %v3874 = vadd.f32 %v2852, %v3427
      %v3875 = vadd.f32 %v2853, %v3429
      %v3876 = vadd.f32 %v2854, %v3431
      %v3877 = vadd.f32 %v2855, %v3435
      %v3878 = vadd.f32 %v2856, %v3437
      %v3879 = vadd.f32 %v2857, %v3439
      %v3880 = vadd.f32 %v2858, %v3441
      %v3881 = vadd.f32 %v2859, %v3445
      %v3882 = vadd.f32 %v2860, %v3447
      %v3883 = vadd.f32 %v2861, %v3449
      %v3884 = vadd.f32 %v2862, %v3451
      %v3885 = vadd.f32 %v2863, %v3455
      %v3886 = vadd.f32 %v2864, %v3457
      %v3887 = vadd.f32 %v2865, %v3459
      %v3888 = vadd.f32 %v2866, %v3461
      %v3889 = vadd.f32 %v2867, %v3465
      %v3890 = vadd.f32 %v2868, %v3467
      %v3891 = vadd.f32 %v2869, %v3469
      %v3892 = vadd.f32 %v2870, %v3471
      %v3893 = vadd.f32 %v2871, %v3475
      %v3894 = vadd.f32 %v2872, %v3477
      %v3895 = vadd.f32 %v2873, %v3479
      %v3896 = vadd.f32 %v2874, %v3481
      %v3897 = vadd.f32 %v2875, %v3485
      %v3898 = vadd.f32 %v2876, %v3487
      %v3899 = vadd.f32 %v2877, %v3489
      %v3900 = vadd.f32 %v2878, %v3491
      %v3901 = vadd.f32 %v2879, %v3495
      %v3902 = vadd.f32 %v2880, %v3497
      %v3903 = vadd.f32 %v2881, %v3499
      %v3904 = vadd.f32 %v2882, %v3501
      %v3905 = vadd.f32 %v2883, %v3505
      %v3906 = vadd.f32 %v2884, %v3507
      %v3907 = vadd.f32 %v2885, %v3509
      %v3908 = vadd.f32 %v2886, %v3511
      %v3909 = vadd.f32 %v2887, %v3515
      %v3910 = vadd.f32 %v2888, %v3517
      %v3911 = vadd.f32 %v2889, %v3519
      %v3912 = vadd.f32 %v2890, %v3521
      %v3913 = vadd.f32 %v2891, %v3525
      %v3914 = vadd.f32 %v2892, %v3527
      %v3915 = vadd.f32 %v2893, %v3529
      %v3916 = vadd.f32 %v2894, %v3531
      %v3917 = vadd.f32 %v2895, %v3535
      %v3918 = vadd.f32 %v2896, %v3537
      %v3919 = vadd.f32 %v2897, %v3539
      %v3920 = vadd.f32 %v2898, %v3541
      %v3921 = vadd.f32 %v2899, %v3545
      %v3922 = vadd.f32 %v2900, %v3547
      %v3923 = vadd.f32 %v2901, %v3549
      %v3924 = vadd.f32 %v2902, %v3551
      %v3925 = vadd.f32 %v2903, %v3555
      %v3926 = vadd.f32 %v2904, %v3557
      %v3927 = vadd.f32 %v2905, %v3559
      %v3928 = vadd.f32 %v2906, %v3561
      %v3929 = vadd.f32 %v2907, %v3565
      %v3930 = vadd.f32 %v2908, %v3567
      %v3931 = vadd.f32 %v2909, %v3569
      %v3932 = vadd.f32 %v2910, %v3571
      %v3933 = vadd.f32 %v2911, %v3575
      %v3934 = vadd.f32 %v2912, %v3577
      %v3935 = vadd.f32 %v2913, %v3579
      %v3936 = vadd.f32 %v2914, %v3581
      %v3937 = vadd.f32 %v2915, %v3585
      %v3938 = vadd.f32 %v2916, %v3587
      %v3939 = vadd.f32 %v2917, %v3589
      %v3940 = vadd.f32 %v2918, %v3591
      %v3941 = vadd.f32 %v2919, %v3595
      %v3942 = vadd.f32 %v2920, %v3597
      %v3943 = vadd.f32 %v2921, %v3599
      %v3944 = vadd.f32 %v2922, %v3601
      %v3945 = vadd.f32 %v2923, %v3605
      %v3946 = vadd.f32 %v2924, %v3607
      %v3947 = vadd.f32 %v2925, %v3609
      %v3948 = vadd.f32 %v2926, %v3611
      %v3949 = vadd.f32 %v2927, %v3615
      %v3950 = vadd.f32 %v2928, %v3617
      %v3951 = vadd.f32 %v2929, %v3619
      %v3952 = vadd.f32 %v2930, %v3621
      %v3953 = vadd.f32 %v2931, %v3625
      %v3954 = vadd.f32 %v2932, %v3627
      %v3955 = vadd.f32 %v2933, %v3629
      %v3956 = vadd.f32 %v2934, %v3631
      %v3957 = vadd.f32 %v2935, %v3635
      %v3958 = vadd.f32 %v2936, %v3637
      %v3959 = vadd.f32 %v2937, %v3639
      %v3960 = vadd.f32 %v2938, %v3641
      %v3961 = vadd.f32 %v2939, %v3645
      %v3962 = vadd.f32 %v2940, %v3647
      %v3963 = vadd.f32 %v2941, %v3649
      %v3964 = vadd.f32 %v2942, %v3651
      %v3965 = vadd.f32 %v2943, %v3655
      %v3966 = vadd.f32 %v2944, %v3657
      %v3967 = vadd.f32 %v2945, %v3659
      %v3968 = vadd.f32 %v2946, %v3661
      %v3969 = vadd.f32 %v2947, %v3665
      %v3970 = vadd.f32 %v2948, %v3667
      %v3971 = vadd.f32 %v2949, %v3669
      %v3972 = vadd.f32 %v2950, %v3671
      %v3973 = vadd.f32 %v2951, %v3675
      %v3974 = vadd.f32 %v2952, %v3677
      %v3975 = vadd.f32 %v2953, %v3679
      %v3976 = vadd.f32 %v2954, %v3681
      %v3977 = vadd.f32 %v2955, %v3685
      %v3978 = vadd.f32 %v2956, %v3687
      %v3979 = vadd.f32 %v2957, %v3689
      %v3980 = vadd.f32 %v2958, %v3691
      %v3981 = vadd.f32 %v2959, %v3695
      %v3982 = vadd.f32 %v2960, %v3697
      %v3983 = vadd.f32 %v2961, %v3699
      %v3984 = vadd.f32 %v2962, %v3701
      %v3985 = vadd.f32 %v2963, %v3705
      %v3986 = vadd.f32 %v2964, %v3707
      %v3987 = vadd.f32 %v2965, %v3709
      %v3988 = vadd.f32 %v2966, %v3711
      %v3989 = vadd.f32 %v2967, %v3715
      %v3990 = vadd.f32 %v2968, %v3717
      %v3991 = vadd.f32 %v2969, %v3719
      %v3992 = vadd.f32 %v2970, %v3721
      %v3993 = vadd.f32 %v2971, %v3725
      %v3994 = vadd.f32 %v2972, %v3727
      %v3995 = vadd.f32 %v2973, %v3729
      %v3996 = vadd.f32 %v2974, %v3731
      %v3997 = vadd.f32 %v2975, %v3735
      %v3998 = vadd.f32 %v2976, %v3737
      %v3999 = vadd.f32 %v2977, %v3739
      %v4000 = vadd.f32 %v2978, %v3741
      %v4001 = vadd.f32 %v2979, %v3745
      %v4002 = vadd.f32 %v2980, %v3747
      %v4003 = vadd.f32 %v2981, %v3749
      %v4004 = vadd.f32 %v2982, %v3751
      %v4005 = vadd.f32 %v2983, %v3755
      %v4006 = vadd.f32 %v2984, %v3757
      %v4007 = vadd.f32 %v2985, %v3759
      %v4008 = vadd.f32 %v2986, %v3761
      %v4009 = vadd.f32 %v2987, %v3765
      %v4010 = vadd.f32 %v2988, %v3767
      %v4011 = vadd.f32 %v2989, %v3769
      %v4012 = vadd.f32 %v2990, %v3771
      %v4013 = vadd.f32 %v2991, %v3775
      %v4014 = vadd.f32 %v2992, %v3777
      %v4015 = vadd.f32 %v2993, %v3779
      %v4016 = vadd.f32 %v2994, %v3781
      %v4017 = vadd.f32 %v2995, %v3785
      %v4018 = vadd.f32 %v2996, %v3787
      %v4019 = vadd.f32 %v2997, %v3789
      %v4020 = vadd.f32 %v2998, %v3791
      %v4021 = vadd.f32 %v2999, %v3795
      %v4022 = vadd.f32 %v3000, %v3797
      %v4023 = vadd.f32 %v3001, %v3799
      %v4024 = vadd.f32 %v3002, %v3801
      %v4025 = vadd.f32 %v3003, %v3805
      %v4026 = vadd.f32 %v3004, %v3807
      %v4027 = vadd.f32 %v3005, %v3809
      %v4028 = vadd.f32 %v3006, %v3811
      %v4029 = vadd.f32 %v3007, %v3815
      %v4030 = vadd.f32 %v3008, %v3817
      %v4031 = vadd.f32 %v3009, %v3819
      %v4032 = vadd.f32 %v3010, %v3821
      %v4033 = vadd.f32 %v3011, %v3825
      %v4034 = vadd.f32 %v3012, %v3827
      %v4035 = vadd.f32 %v3013, %v3829
      %v4036 = vadd.f32 %v3014, %v3831
      %v4037 = vadd.f32 %v3015, %v3835
      %v4038 = vadd.f32 %v3016, %v3837
      %v4039 = vadd.f32 %v3017, %v3839
      %v4040 = vadd.f32 %v3018, %v3841
      %v4041 = vadd.f32 %v3019, %v3845
      %v4042 = vadd.f32 %v3020, %v3847
      %v4043 = vadd.f32 %v3021, %v3849
      %v4044 = vadd.f32 %v3022, %v3851
      %v4045 = vld [vmem:[%s331 + $0x4] sm:$0xff]
      %v4046 = vld [vmem:[%s331 + $0xc] sm:$0xff]
      %v4047 = vld [vmem:[%s331 + $0x14] sm:$0xff]
      %v4048 = vld [vmem:[%s331 + $0x24] sm:$0xff]
      %v4049 = vld [vmem:[%s331 + $0x2c] sm:$0xff]
      %v4050 = vld [vmem:[%s331 + $0x34] sm:$0xff]
      %v4051 = vld [vmem:[%s331 + $0x44] sm:$0xff]
      %v4052 = vld [vmem:[%s331 + $0x4c] sm:$0xff]
      %v4053 = vld [vmem:[%s331 + $0x54] sm:$0xff]
      %v4054 = vld [vmem:[%s331 + $0x64] sm:$0xff]
      %v4055 = vld [vmem:[%s331 + $0x6c] sm:$0xff]
      %v4056 = vld [vmem:[%s331 + $0x74] sm:$0xff]
      %v4057 = vld [vmem:[%s331 + $0x84] sm:$0xff]
      %v4058 = vld [vmem:[%s331 + $0x8c] sm:$0xff]
      %v4059 = vld [vmem:[%s331 + $0x94] sm:$0xff]
      %v4060 = vld [vmem:[%s331 + $0xa4] sm:$0xff]
      %v4061 = vld [vmem:[%s331 + $0xac] sm:$0xff]
      %v4062 = vld [vmem:[%s331 + $0xb4] sm:$0xff]
      %v4063 = vld [vmem:[%s331 + $0xc4] sm:$0xff]
      %v4064 = vld [vmem:[%s331 + $0xcc] sm:$0xff]
      %v4065 = vld [vmem:[%s331 + $0xd4] sm:$0xff]
      %v4066 = vld [vmem:[%s331 + $0xe4] sm:$0xff]
      %v4067 = vld [vmem:[%s331 + $0xec] sm:$0xff]
      %v4068 = vld [vmem:[%s331 + $0xf4] sm:$0xff]
      %v4069 = vld [vmem:[%s331 + $0x104] sm:$0xff]
      %v4070 = vld [vmem:[%s331 + $0x10c] sm:$0xff]
      %v4071 = vld [vmem:[%s331 + $0x114] sm:$0xff]
      %v4072 = vld [vmem:[%s331 + $0x124] sm:$0xff]
      %v4073 = vld [vmem:[%s331 + $0x12c] sm:$0xff]
      %v4074 = vld [vmem:[%s331 + $0x134] sm:$0xff]
      %v4075 = vld [vmem:[%s331 + $0x144] sm:$0xff]
      %v4076 = vld [vmem:[%s331 + $0x14c] sm:$0xff]
      %v4077 = vld [vmem:[%s331 + $0x154] sm:$0xff]
      %v4078 = vld [vmem:[%s331 + $0x164] sm:$0xff]
      %v4079 = vld [vmem:[%s331 + $0x16c] sm:$0xff]
      %v4080 = vld [vmem:[%s331 + $0x174] sm:$0xff]
      %v4081 = vld [vmem:[%s331 + $0x184] sm:$0xff]
      %v4082 = vld [vmem:[%s331 + $0x18c] sm:$0xff]
      %v4083 = vld [vmem:[%s331 + $0x194] sm:$0xff]
      %v4084 = vld [vmem:[%s331 + $0x1a4] sm:$0xff]
      %v4085 = vld [vmem:[%s331 + $0x1ac] sm:$0xff]
      %v4086 = vld [vmem:[%s331 + $0x1b4] sm:$0xff]
      %v4087 = vld [vmem:[%s331 + $0x1c4] sm:$0xff]
      %v4088 = vld [vmem:[%s331 + $0x1cc] sm:$0xff]
      %v4089 = vld [vmem:[%s331 + $0x1d4] sm:$0xff]
      %v4090 = vld [vmem:[%s331 + $0x1e4] sm:$0xff]
      %v4091 = vld [vmem:[%s331 + $0x1ec] sm:$0xff]
      %v4092 = vld [vmem:[%s331 + $0x1f4] sm:$0xff]
      %v4093 = vld [vmem:[%s331 + $0x204] sm:$0xff]
      %v4094 = vld [vmem:[%s331 + $0x20c] sm:$0xff]
      %v4095 = vld [vmem:[%s331 + $0x214] sm:$0xff]
      %v4096 = vld [vmem:[%s331 + $0x224] sm:$0xff]
      %v4097 = vld [vmem:[%s331 + $0x22c] sm:$0xff]
      %v4098 = vld [vmem:[%s331 + $0x234] sm:$0xff]
      %v4099 = vld [vmem:[%s331 + $0x244] sm:$0xff]
      %v4100 = vld [vmem:[%s331 + $0x24c] sm:$0xff]
      %v4101 = vld [vmem:[%s331 + $0x254] sm:$0xff]
      %v4102 = vld [vmem:[%s331 + $0x264] sm:$0xff]
      %v4103 = vld [vmem:[%s331 + $0x26c] sm:$0xff]
      %v4104 = vld [vmem:[%s331 + $0x274] sm:$0xff]
      %v4105 = vld [vmem:[%s331 + $0x284] sm:$0xff]
      %v4106 = vld [vmem:[%s331 + $0x28c] sm:$0xff]
      %v4107 = vld [vmem:[%s331 + $0x294] sm:$0xff]
      %v4108 = vld [vmem:[%s331 + $0x2a4] sm:$0xff]
      %v4109 = vld [vmem:[%s331 + $0x2ac] sm:$0xff]
      %v4110 = vld [vmem:[%s331 + $0x2b4] sm:$0xff]
      %v4111 = vld [vmem:[%s331 + $0x2c4] sm:$0xff]
      %v4112 = vld [vmem:[%s331 + $0x2cc] sm:$0xff]
      %v4113 = vld [vmem:[%s331 + $0x2d4] sm:$0xff]
      %v4114 = vld [vmem:[%s331 + $0x2e4] sm:$0xff]
      %v4115 = vld [vmem:[%s331 + $0x2ec] sm:$0xff]
      %v4116 = vld [vmem:[%s331 + $0x2f4] sm:$0xff]
      %v4117 = vld [vmem:[%s331 + $0x304] sm:$0xff]
      %v4118 = vld [vmem:[%s331 + $0x30c] sm:$0xff]
      %v4119 = vld [vmem:[%s331 + $0x314] sm:$0xff]
      %v4120 = vld [vmem:[%s331 + $0x324] sm:$0xff]
      %v4121 = vld [vmem:[%s331 + $0x32c] sm:$0xff]
      %v4122 = vld [vmem:[%s331 + $0x334] sm:$0xff]
      %v4123 = vld [vmem:[%s331 + $0x344] sm:$0xff]
      %v4124 = vld [vmem:[%s331 + $0x34c] sm:$0xff]
      %v4125 = vld [vmem:[%s331 + $0x354] sm:$0xff]
      %v4126 = vld [vmem:[%s331 + $0x364] sm:$0xff]
      %v4127 = vld [vmem:[%s331 + $0x36c] sm:$0xff]
      %v4128 = vld [vmem:[%s331 + $0x374] sm:$0xff]
      %v4129 = vld [vmem:[%s331 + $0x384] sm:$0xff]
      %v4130 = vld [vmem:[%s331 + $0x38c] sm:$0xff]
      %v4131 = vld [vmem:[%s331 + $0x394] sm:$0xff]
      %v4132 = vld [vmem:[%s331 + $0x3a4] sm:$0xff]
      %v4133 = vld [vmem:[%s331 + $0x3ac] sm:$0xff]
      %v4134 = vld [vmem:[%s331 + $0x3b4] sm:$0xff]
      %v4135 = vld [vmem:[%s331 + $0x3c4] sm:$0xff]
      %v4136 = vld [vmem:[%s331 + $0x3cc] sm:$0xff]
      %v4137 = vld [vmem:[%s331 + $0x3d4] sm:$0xff]
      %v4138 = vld [vmem:[%s331 + $0x3e4] sm:$0xff]
      %v4139 = vld [vmem:[%s331 + $0x3ec] sm:$0xff]
      %v4140 = vld [vmem:[%s331 + $0x3f4] sm:$0xff]
      %v4141 = vpack.c.bf16 %v4046, %v4045
      %v4142 = vpack.c.bf16 %v4048, %v4047
      %v4143 = vpack.c.bf16 %v4050, %v4049
      %v4144 = vpack.c.bf16 %v4052, %v4051
      %v4145 = vpack.c.bf16 %v4054, %v4053
      %v4146 = vpack.c.bf16 %v4056, %v4055
      %v4147 = vpack.c.bf16 %v4058, %v4057
      %v4148 = vpack.c.bf16 %v4060, %v4059
      %v4149 = vpack.c.bf16 %v4062, %v4061
      %v4150 = vpack.c.bf16 %v4064, %v4063
      %v4151 = vpack.c.bf16 %v4066, %v4065
      %v4152 = vpack.c.bf16 %v4068, %v4067
      %v4153 = vpack.c.bf16 %v4070, %v4069
      %v4154 = vpack.c.bf16 %v4072, %v4071
      %v4155 = vpack.c.bf16 %v4074, %v4073
      %v4156 = vpack.c.bf16 %v4076, %v4075
      %v4157 = vpack.c.bf16 %v4078, %v4077
      %v4158 = vpack.c.bf16 %v4080, %v4079
      %v4159 = vpack.c.bf16 %v4082, %v4081
      %v4160 = vpack.c.bf16 %v4084, %v4083
      %v4161 = vpack.c.bf16 %v4086, %v4085
      %v4162 = vpack.c.bf16 %v4088, %v4087
      %v4163 = vpack.c.bf16 %v4090, %v4089
      %v4164 = vpack.c.bf16 %v4092, %v4091
      %v4165 = vpack.c.bf16 %v4094, %v4093
      %v4166 = vpack.c.bf16 %v4096, %v4095
      %v4167 = vpack.c.bf16 %v4098, %v4097
      %v4168 = vpack.c.bf16 %v4100, %v4099
      %v4169 = vpack.c.bf16 %v4102, %v4101
      %v4170 = vpack.c.bf16 %v4104, %v4103
      %v4171 = vpack.c.bf16 %v4106, %v4105
      %v4172 = vpack.c.bf16 %v4108, %v4107
      %v4173 = vpack.c.bf16 %v4110, %v4109
      %v4174 = vpack.c.bf16 %v4112, %v4111
      %v4175 = vpack.c.bf16 %v4114, %v4113
      %v4176 = vpack.c.bf16 %v4116, %v4115
      %v4177 = vpack.c.bf16 %v4118, %v4117
      %v4178 = vpack.c.bf16 %v4120, %v4119
      %v4179 = vpack.c.bf16 %v4122, %v4121
      %v4180 = vpack.c.bf16 %v4124, %v4123
      %v4181 = vpack.c.bf16 %v4126, %v4125
      %v4182 = vpack.c.bf16 %v4128, %v4127
      %v4183 = vpack.c.bf16 %v4130, %v4129
      %v4184 = vpack.c.bf16 %v4132, %v4131
      %v4185 = vpack.c.bf16 %v4134, %v4133
      %v4186 = vpack.c.bf16 %v4136, %v4135
      %v4187 = vpack.c.bf16 %v4138, %v4137
      %v4188 = vpack.c.bf16 %v4140, %v4139
      %s4189 = scalar_lea.vmem %s1, 128
      %v4190 = vld [vmem:[%s4189] sm:$0xff]
      %v4191 = vld [vmem:[%s4189 + $0x8] sm:$0xff]
      %v4192 = vld [vmem:[%s4189 + $0x10] sm:$0xff]
      %v4193 = vld [vmem:[%s4189 + $0x18] sm:$0x33]
      %v4198 = vunpack.c.l.b16 %v4190
      %v4199 = vunpack.c.h.b16 %v4190
      %v4200 = vunpack.c.l.b16 %v4191
      %v4201 = vunpack.c.h.b16 %v4191
      %v4202 = vunpack.c.l.b16 %v4192
      %v4203 = vunpack.c.h.b16 %v4192
      %v4204 = vunpack.c.l.b16 %v4193
      %v4205 = vunpack.c.h.b16 %v4193
      %v4206 = vpack.c.b16 %v4200, %v4198
      %v4207 = vpack.c.b16 %v4201, %v4199
      %v4208 = vpack.c.b16 %v4204, %v4202
      %v4209 = vpack.c.b16 %v4205, %v4203
      %v4213 = vsel %vm655, %v4141, 0
      %v4216 = vsel %vm655, %v4142, 0
      %v4219 = vsel %vm655, %v4143, 0
      %v4222 = vsel %vm655, %v4144, 0
      %v4225 = vsel %vm655, %v4145, 0
      %v4228 = vsel %vm655, %v4146, 0
      %v4231 = vsel %vm655, %v4147, 0
      %v4234 = vsel %vm655, %v4148, 0
      %v4237 = vsel %vm655, %v4149, 0
      %v4240 = vsel %vm655, %v4150, 0
      %v4243 = vsel %vm655, %v4151, 0
      %v4246 = vsel %vm655, %v4152, 0
      %v4249 = vsel %vm655, %v4153, 0
      %v4252 = vsel %vm655, %v4154, 0
      %v4255 = vsel %vm655, %v4155, 0
      %v4258 = vsel %vm655, %v4156, 0
      %v4261 = vsel %vm655, %v4157, 0
      %v4264 = vsel %vm655, %v4158, 0
      %v4267 = vsel %vm655, %v4159, 0
      %v4270 = vsel %vm655, %v4160, 0
      %v4273 = vsel %vm655, %v4161, 0
      %v4276 = vsel %vm655, %v4162, 0
      %v4279 = vsel %vm655, %v4163, 0
      %v4282 = vsel %vm655, %v4164, 0
      %v4285 = vsel %vm655, %v4165, 0
      %v4288 = vsel %vm655, %v4166, 0
      %v4291 = vsel %vm655, %v4167, 0
      %v4294 = vsel %vm655, %v4168, 0
      %v4297 = vsel %vm655, %v4169, 0
      %v4300 = vsel %vm655, %v4170, 0
      %v4303 = vsel %vm655, %v4171, 0
      %v4306 = vsel %vm655, %v4172, 0
      %v4309 = vsel %vm655, %v4173, 0
      %v4312 = vsel %vm655, %v4174, 0
      %v4315 = vsel %vm655, %v4175, 0
      %v4318 = vsel %vm655, %v4176, 0
      %v4321 = vsel %vm655, %v4177, 0
      %v4324 = vsel %vm655, %v4178, 0
      %v4327 = vsel %vm655, %v4179, 0
      %v4330 = vsel %vm655, %v4180, 0
      %v4333 = vsel %vm655, %v4181, 0
      %v4336 = vsel %vm655, %v4182, 0
      %v4339 = vsel %vm655, %v4183, 0
      %v4342 = vsel %vm655, %v4184, 0
      %v4345 = vsel %vm655, %v4185, 0
      %v4348 = vsel %vm655, %v4186, 0
      %v4351 = vsel %vm655, %v4187, 0
      %v4354 = vsel %vm655, %v4188, 0
      %v4357 = vsel %vm800, %v4208, 0
      %v4360 = vsel %vm800, %v4209, 0
      %4362 = vmatprep.subr.bf16.mxu0 %v4207
      %4363 = vmatpush1.bf16.msra.mxu0 %v4206
      %4364 = vmatprep.subr.bf16.mxu0 %v4360
      %4365 = vmatpush1.bf16.msra.mxu0 %v4357
      %4366 = vmatprep.subr.bf16.mxu0 0
      %4367 = vmatpush1.bf16.msra.mxu0 0
      %4368 = vmatprep.subr.bf16.mxu0 0
      %4369 = vmatpush1.bf16.msra.mxu0 0
      %4370 = vmatprep.subr.bf16.mxu0 0
      %4371 = vmatpush1.bf16.msra.mxu0 0
      %4372 = vmatprep.subr.bf16.mxu0 0
      %4373 = vmatpush1.bf16.msra.mxu0 0
      %4374 = vmatprep.subr.bf16.mxu0 0
      %4375 = vmatpush1.bf16.msra.mxu0 0
      %4376 = vmatprep.subr.bf16.mxu0 0
      %4377 = vmatpush1.bf16.msra.mxu0 0
      %4378 = vmatprep.subr.bf16.mxu0 0
      %4379 = vmatpush1.bf16.msra.mxu0 0
      %4380 = vmatprep.subr.bf16.mxu0 0
      %4381 = vmatpush1.bf16.msra.mxu0 0
      %4382 = vmatprep.subr.bf16.mxu0 0
      %4383 = vmatpush1.bf16.msra.mxu0 0
      %4384 = vmatprep.subr.bf16.mxu0 0
      %4385 = vmatpush1.bf16.msra.mxu0 0
      %4386 = vmatprep.subr.bf16.mxu0 0
      %4387 = vmatpush1.bf16.msra.mxu0 0
      %4388 = vmatprep.subr.bf16.mxu0 0
      %4389 = vmatpush1.bf16.msra.mxu0 0
      %4390 = vmatprep.subr.bf16.mxu0 0
      %4391 = vmatpush1.bf16.msra.mxu0 0
      %4392 = vmatprep.subr.bf16.mxu0 0
      %4393 = vmatpush1.bf16.msra.mxu0 0
      %4394 = vmatprep.mubr.bf16.mxu0 0
      %4395 = vmatmul.mubr.bf16.gmra.mrb[0].mxu0 %v4213
      %v4396 = vpop.f32.mrb[0].mxu0
      %v4397 = vadd.f32 0.0, %v4396
      %v4398 = vpop.f32.mrb[0].mxu0
      %v4399 = vadd.f32 0.0, %v4398
      %v4400 = vpop.f32.mrb[0].mxu0
      %v4401 = vadd.f32 0.0, %v4400
      %v4402 = vpop.f32.mrb[0].mxu0
      %v4403 = vadd.f32 0.0, %v4402
      %4404 = vmatprep.mubr.bf16.mxu0 0
      %4405 = vmatmul.mubr.bf16.gmra.mrb[0].mxu0 %v4216
      %v4406 = vpop.f32.mrb[0].mxu0
      %v4407 = vadd.f32 0.0, %v4406
      %v4408 = vpop.f32.mrb[0].mxu0
      %v4409 = vadd.f32 0.0, %v4408
      %v4410 = vpop.f32.mrb[0].mxu0
      %v4411 = vadd.f32 0.0, %v4410
      %v4412 = vpop.f32.mrb[0].mxu0
      %v4413 = vadd.f32 0.0, %v4412
      %4414 = vmatprep.mubr.bf16.mxu0 0
      %4415 = vmatmul.mubr.bf16.gmra.mrb[0].mxu0 %v4219
      %v4416 = vpop.f32.mrb[0].mxu0
      %v4417 = vadd.f32 0.0, %v4416
      %v4418 = vpop.f32.mrb[0].mxu0
      %v4419 = vadd.f32 0.0, %v4418
      %v4420 = vpop.f32.mrb[0].mxu0
      %v4421 = vadd.f32 0.0, %v4420
      %v4422 = vpop.f32.mrb[0].mxu0
      %v4423 = vadd.f32 0.0, %v4422
      %4424 = vmatprep.mubr.bf16.mxu0 0
      %4425 = vmatmul.mubr.bf16.gmra.mrb[0].mxu0 %v4222
      %v4426 = vpop.f32.mrb[0].mxu0
      %v4427 = vadd.f32 0.0, %v4426
      %v4428 = vpop.f32.mrb[0].mxu0
      %v4429 = vadd.f32 0.0, %v4428
      %v4430 = vpop.f32.mrb[0].mxu0
      %v4431 = vadd.f32 0.0, %v4430
      %v4432 = vpop.f32.mrb[0].mxu0
      %v4433 = vadd.f32 0.0, %v4432
      %4434 = vmatprep.mubr.bf16.mxu0 0
      %4435 = vmatmul.mubr.bf16.gmra.mrb[0].mxu0 %v4225
      %v4436 = vpop.f32.mrb[0].mxu0
      %v4437 = vadd.f32 0.0, %v4436
      %v4438 = vpop.f32.mrb[0].mxu0
      %v4439 = vadd.f32 0.0, %v4438
      %v4440 = vpop.f32.mrb[0].mxu0
      %v4441 = vadd.f32 0.0, %v4440
      %v4442 = vpop.f32.mrb[0].mxu0
      %v4443 = vadd.f32 0.0, %v4442
      %4444 = vmatprep.mubr.bf16.mxu0 0
      %4445 = vmatmul.mubr.bf16.gmra.mrb[0].mxu0 %v4228
      %v4446 = vpop.f32.mrb[0].mxu0
      %v4447 = vadd.f32 0.0, %v4446
      %v4448 = vpop.f32.mrb[0].mxu0
      %v4449 = vadd.f32 0.0, %v4448
      %v4450 = vpop.f32.mrb[0].mxu0
      %v4451 = vadd.f32 0.0, %v4450
      %v4452 = vpop.f32.mrb[0].mxu0
      %v4453 = vadd.f32 0.0, %v4452
      %4454 = vmatprep.mubr.bf16.mxu0 0
      %4455 = vmatmul.mubr.bf16.gmra.mrb[0].mxu0 %v4231
      %v4456 = vpop.f32.mrb[0].mxu0
      %v4457 = vadd.f32 0.0, %v4456
      %v4458 = vpop.f32.mrb[0].mxu0
      %v4459 = vadd.f32 0.0, %v4458
      %v4460 = vpop.f32.mrb[0].mxu0
      %v4461 = vadd.f32 0.0, %v4460
      %v4462 = vpop.f32.mrb[0].mxu0
      %v4463 = vadd.f32 0.0, %v4462
      %4464 = vmatprep.mubr.bf16.mxu0 0
      %4465 = vmatmul.mubr.bf16.gmra.mrb[0].mxu0 %v4234
      %v4466 = vpop.f32.mrb[0].mxu0
      %v4467 = vadd.f32 0.0, %v4466
      %v4468 = vpop.f32.mrb[0].mxu0
      %v4469 = vadd.f32 0.0, %v4468
      %v4470 = vpop.f32.mrb[0].mxu0
      %v4471 = vadd.f32 0.0, %v4470
      %v4472 = vpop.f32.mrb[0].mxu0
      %v4473 = vadd.f32 0.0, %v4472
      %4474 = vmatprep.mubr.bf16.mxu0 0
      %4475 = vmatmul.mubr.bf16.gmra.mrb[0].mxu0 %v4237
      %v4476 = vpop.f32.mrb[0].mxu0
      %v4477 = vadd.f32 0.0, %v4476
      %v4478 = vpop.f32.mrb[0].mxu0
      %v4479 = vadd.f32 0.0, %v4478
      %v4480 = vpop.f32.mrb[0].mxu0
      %v4481 = vadd.f32 0.0, %v4480
      %v4482 = vpop.f32.mrb[0].mxu0
      %v4483 = vadd.f32 0.0, %v4482
      %4484 = vmatprep.mubr.bf16.mxu0 0
      %4485 = vmatmul.mubr.bf16.gmra.mrb[0].mxu0 %v4240
      %v4486 = vpop.f32.mrb[0].mxu0
      %v4487 = vadd.f32 0.0, %v4486
      %v4488 = vpop.f32.mrb[0].mxu0
      %v4489 = vadd.f32 0.0, %v4488
      %v4490 = vpop.f32.mrb[0].mxu0
      %v4491 = vadd.f32 0.0, %v4490
      %v4492 = vpop.f32.mrb[0].mxu0
      %v4493 = vadd.f32 0.0, %v4492
      %4494 = vmatprep.mubr.bf16.mxu0 0
      %4495 = vmatmul.mubr.bf16.gmra.mrb[0].mxu0 %v4243
      %v4496 = vpop.f32.mrb[0].mxu0
      %v4497 = vadd.f32 0.0, %v4496
      %v4498 = vpop.f32.mrb[0].mxu0
      %v4499 = vadd.f32 0.0, %v4498
      %v4500 = vpop.f32.mrb[0].mxu0
      %v4501 = vadd.f32 0.0, %v4500
      %v4502 = vpop.f32.mrb[0].mxu0
      %v4503 = vadd.f32 0.0, %v4502
      %4504 = vmatprep.mubr.bf16.mxu0 0
      %4505 = vmatmul.mubr.bf16.gmra.mrb[0].mxu0 %v4246
      %v4506 = vpop.f32.mrb[0].mxu0
      %v4507 = vadd.f32 0.0, %v4506
      %v4508 = vpop.f32.mrb[0].mxu0
      %v4509 = vadd.f32 0.0, %v4508
      %v4510 = vpop.f32.mrb[0].mxu0
      %v4511 = vadd.f32 0.0, %v4510
      %v4512 = vpop.f32.mrb[0].mxu0
      %v4513 = vadd.f32 0.0, %v4512
      %4514 = vmatprep.mubr.bf16.mxu0 0
      %4515 = vmatmul.mubr.bf16.gmra.mrb[0].mxu0 %v4249
      %v4516 = vpop.f32.mrb[0].mxu0
      %v4517 = vadd.f32 0.0, %v4516
      %v4518 = vpop.f32.mrb[0].mxu0
      %v4519 = vadd.f32 0.0, %v4518
      %v4520 = vpop.f32.mrb[0].mxu0
      %v4521 = vadd.f32 0.0, %v4520
      %v4522 = vpop.f32.mrb[0].mxu0
      %v4523 = vadd.f32 0.0, %v4522
      %4524 = vmatprep.mubr.bf16.mxu0 0
      %4525 = vmatmul.mubr.bf16.gmra.mrb[0].mxu0 %v4252
      %v4526 = vpop.f32.mrb[0].mxu0
      %v4527 = vadd.f32 0.0, %v4526
      %v4528 = vpop.f32.mrb[0].mxu0
      %v4529 = vadd.f32 0.0, %v4528
      %v4530 = vpop.f32.mrb[0].mxu0
      %v4531 = vadd.f32 0.0, %v4530
      %v4532 = vpop.f32.mrb[0].mxu0
      %v4533 = vadd.f32 0.0, %v4532
      %4534 = vmatprep.mubr.bf16.mxu0 0
      %4535 = vmatmul.mubr.bf16.gmra.mrb[0].mxu0 %v4255
      %v4536 = vpop.f32.mrb[0].mxu0
      %v4537 = vadd.f32 0.0, %v4536
      %v4538 = vpop.f32.mrb[0].mxu0
      %v4539 = vadd.f32 0.0, %v4538
      %v4540 = vpop.f32.mrb[0].mxu0
      %v4541 = vadd.f32 0.0, %v4540
      %v4542 = vpop.f32.mrb[0].mxu0
      %v4543 = vadd.f32 0.0, %v4542
      %4544 = vmatprep.mubr.bf16.mxu0 0
      %4545 = vmatmul.mubr.bf16.gmra.mrb[0].mxu0 %v4258
      %v4546 = vpop.f32.mrb[0].mxu0
      %v4547 = vadd.f32 0.0, %v4546
      %v4548 = vpop.f32.mrb[0].mxu0
      %v4549 = vadd.f32 0.0, %v4548
      %v4550 = vpop.f32.mrb[0].mxu0
      %v4551 = vadd.f32 0.0, %v4550
      %v4552 = vpop.f32.mrb[0].mxu0
      %v4553 = vadd.f32 0.0, %v4552
      %4554 = vmatprep.mubr.bf16.mxu0 0
      %4555 = vmatmul.mubr.bf16.gmra.mrb[0].mxu0 %v4261
      %v4556 = vpop.f32.mrb[0].mxu0
      %v4557 = vadd.f32 0.0, %v4556
      %v4558 = vpop.f32.mrb[0].mxu0
      %v4559 = vadd.f32 0.0, %v4558
      %v4560 = vpop.f32.mrb[0].mxu0
      %v4561 = vadd.f32 0.0, %v4560
      %v4562 = vpop.f32.mrb[0].mxu0
      %v4563 = vadd.f32 0.0, %v4562
      %4564 = vmatprep.mubr.bf16.mxu0 0
      %4565 = vmatmul.mubr.bf16.gmra.mrb[0].mxu0 %v4264
      %v4566 = vpop.f32.mrb[0].mxu0
      %v4567 = vadd.f32 0.0, %v4566
      %v4568 = vpop.f32.mrb[0].mxu0
      %v4569 = vadd.f32 0.0, %v4568
      %v4570 = vpop.f32.mrb[0].mxu0
      %v4571 = vadd.f32 0.0, %v4570
      %v4572 = vpop.f32.mrb[0].mxu0
      %v4573 = vadd.f32 0.0, %v4572
      %4574 = vmatprep.mubr.bf16.mxu0 0
      %4575 = vmatmul.mubr.bf16.gmra.mrb[0].mxu0 %v4267
      %v4576 = vpop.f32.mrb[0].mxu0
      %v4577 = vadd.f32 0.0, %v4576
      %v4578 = vpop.f32.mrb[0].mxu0
      %v4579 = vadd.f32 0.0, %v4578
      %v4580 = vpop.f32.mrb[0].mxu0
      %v4581 = vadd.f32 0.0, %v4580
      %v4582 = vpop.f32.mrb[0].mxu0
      %v4583 = vadd.f32 0.0, %v4582
      %4584 = vmatprep.mubr.bf16.mxu0 0
      %4585 = vmatmul.mubr.bf16.gmra.mrb[0].mxu0 %v4270
      %v4586 = vpop.f32.mrb[0].mxu0
      %v4587 = vadd.f32 0.0, %v4586
      %v4588 = vpop.f32.mrb[0].mxu0
      %v4589 = vadd.f32 0.0, %v4588
      %v4590 = vpop.f32.mrb[0].mxu0
      %v4591 = vadd.f32 0.0, %v4590
      %v4592 = vpop.f32.mrb[0].mxu0
      %v4593 = vadd.f32 0.0, %v4592
      %4594 = vmatprep.mubr.bf16.mxu0 0
      %4595 = vmatmul.mubr.bf16.gmra.mrb[0].mxu0 %v4273
      %v4596 = vpop.f32.mrb[0].mxu0
      %v4597 = vadd.f32 0.0, %v4596
      %v4598 = vpop.f32.mrb[0].mxu0
      %v4599 = vadd.f32 0.0, %v4598
      %v4600 = vpop.f32.mrb[0].mxu0
      %v4601 = vadd.f32 0.0, %v4600
      %v4602 = vpop.f32.mrb[0].mxu0
      %v4603 = vadd.f32 0.0, %v4602
      %4604 = vmatprep.mubr.bf16.mxu0 0
      %4605 = vmatmul.mubr.bf16.gmra.mrb[0].mxu0 %v4276
      %v4606 = vpop.f32.mrb[0].mxu0
      %v4607 = vadd.f32 0.0, %v4606
      %v4608 = vpop.f32.mrb[0].mxu0
      %v4609 = vadd.f32 0.0, %v4608
      %v4610 = vpop.f32.mrb[0].mxu0
      %v4611 = vadd.f32 0.0, %v4610
      %v4612 = vpop.f32.mrb[0].mxu0
      %v4613 = vadd.f32 0.0, %v4612
      %4614 = vmatprep.mubr.bf16.mxu0 0
      %4615 = vmatmul.mubr.bf16.gmra.mrb[0].mxu0 %v4279
      %v4616 = vpop.f32.mrb[0].mxu0
      %v4617 = vadd.f32 0.0, %v4616
      %v4618 = vpop.f32.mrb[0].mxu0
      %v4619 = vadd.f32 0.0, %v4618
      %v4620 = vpop.f32.mrb[0].mxu0
      %v4621 = vadd.f32 0.0, %v4620
      %v4622 = vpop.f32.mrb[0].mxu0
      %v4623 = vadd.f32 0.0, %v4622
      %4624 = vmatprep.mubr.bf16.mxu0 0
      %4625 = vmatmul.mubr.bf16.gmra.mrb[0].mxu0 %v4282
      %v4626 = vpop.f32.mrb[0].mxu0
      %v4627 = vadd.f32 0.0, %v4626
      %v4628 = vpop.f32.mrb[0].mxu0
      %v4629 = vadd.f32 0.0, %v4628
      %v4630 = vpop.f32.mrb[0].mxu0
      %v4631 = vadd.f32 0.0, %v4630
      %v4632 = vpop.f32.mrb[0].mxu0
      %v4633 = vadd.f32 0.0, %v4632
      %4634 = vmatprep.mubr.bf16.mxu0 0
      %4635 = vmatmul.mubr.bf16.gmra.mrb[0].mxu0 %v4285
      %v4636 = vpop.f32.mrb[0].mxu0
      %v4637 = vadd.f32 0.0, %v4636
      %v4638 = vpop.f32.mrb[0].mxu0
      %v4639 = vadd.f32 0.0, %v4638
      %v4640 = vpop.f32.mrb[0].mxu0
      %v4641 = vadd.f32 0.0, %v4640
      %v4642 = vpop.f32.mrb[0].mxu0
      %v4643 = vadd.f32 0.0, %v4642
      %4644 = vmatprep.mubr.bf16.mxu0 0
      %4645 = vmatmul.mubr.bf16.gmra.mrb[0].mxu0 %v4288
      %v4646 = vpop.f32.mrb[0].mxu0
      %v4647 = vadd.f32 0.0, %v4646
      %v4648 = vpop.f32.mrb[0].mxu0
      %v4649 = vadd.f32 0.0, %v4648
      %v4650 = vpop.f32.mrb[0].mxu0
      %v4651 = vadd.f32 0.0, %v4650
      %v4652 = vpop.f32.mrb[0].mxu0
      %v4653 = vadd.f32 0.0, %v4652
      %4654 = vmatprep.mubr.bf16.mxu0 0
      %4655 = vmatmul.mubr.bf16.gmra.mrb[0].mxu0 %v4291
      %v4656 = vpop.f32.mrb[0].mxu0
      %v4657 = vadd.f32 0.0, %v4656
      %v4658 = vpop.f32.mrb[0].mxu0
      %v4659 = vadd.f32 0.0, %v4658
      %v4660 = vpop.f32.mrb[0].mxu0
      %v4661 = vadd.f32 0.0, %v4660
      %v4662 = vpop.f32.mrb[0].mxu0
      %v4663 = vadd.f32 0.0, %v4662
      %4664 = vmatprep.mubr.bf16.mxu0 0
      %4665 = vmatmul.mubr.bf16.gmra.mrb[0].mxu0 %v4294
      %v4666 = vpop.f32.mrb[0].mxu0
      %v4667 = vadd.f32 0.0, %v4666
      %v4668 = vpop.f32.mrb[0].mxu0
      %v4669 = vadd.f32 0.0, %v4668
      %v4670 = vpop.f32.mrb[0].mxu0
      %v4671 = vadd.f32 0.0, %v4670
      %v4672 = vpop.f32.mrb[0].mxu0
      %v4673 = vadd.f32 0.0, %v4672
      %4674 = vmatprep.mubr.bf16.mxu0 0
      %4675 = vmatmul.mubr.bf16.gmra.mrb[0].mxu0 %v4297
      %v4676 = vpop.f32.mrb[0].mxu0
      %v4677 = vadd.f32 0.0, %v4676
      %v4678 = vpop.f32.mrb[0].mxu0
      %v4679 = vadd.f32 0.0, %v4678
      %v4680 = vpop.f32.mrb[0].mxu0
      %v4681 = vadd.f32 0.0, %v4680
      %v4682 = vpop.f32.mrb[0].mxu0
      %v4683 = vadd.f32 0.0, %v4682
      %4684 = vmatprep.mubr.bf16.mxu0 0
      %4685 = vmatmul.mubr.bf16.gmra.mrb[0].mxu0 %v4300
      %v4686 = vpop.f32.mrb[0].mxu0
      %v4687 = vadd.f32 0.0, %v4686
      %v4688 = vpop.f32.mrb[0].mxu0
      %v4689 = vadd.f32 0.0, %v4688
      %v4690 = vpop.f32.mrb[0].mxu0
      %v4691 = vadd.f32 0.0, %v4690
      %v4692 = vpop.f32.mrb[0].mxu0
      %v4693 = vadd.f32 0.0, %v4692
      %4694 = vmatprep.mubr.bf16.mxu0 0
      %4695 = vmatmul.mubr.bf16.gmra.mrb[0].mxu0 %v4303
      %v4696 = vpop.f32.mrb[0].mxu0
      %v4697 = vadd.f32 0.0, %v4696
      %v4698 = vpop.f32.mrb[0].mxu0
      %v4699 = vadd.f32 0.0, %v4698
      %v4700 = vpop.f32.mrb[0].mxu0
      %v4701 = vadd.f32 0.0, %v4700
      %v4702 = vpop.f32.mrb[0].mxu0
      %v4703 = vadd.f32 0.0, %v4702
      %4704 = vmatprep.mubr.bf16.mxu0 0
      %4705 = vmatmul.mubr.bf16.gmra.mrb[0].mxu0 %v4306
      %v4706 = vpop.f32.mrb[0].mxu0
      %v4707 = vadd.f32 0.0, %v4706
      %v4708 = vpop.f32.mrb[0].mxu0
      %v4709 = vadd.f32 0.0, %v4708
      %v4710 = vpop.f32.mrb[0].mxu0
      %v4711 = vadd.f32 0.0, %v4710
      %v4712 = vpop.f32.mrb[0].mxu0
      %v4713 = vadd.f32 0.0, %v4712
      %4714 = vmatprep.mubr.bf16.mxu0 0
      %4715 = vmatmul.mubr.bf16.gmra.mrb[0].mxu0 %v4309
      %v4716 = vpop.f32.mrb[0].mxu0
      %v4717 = vadd.f32 0.0, %v4716
      %v4718 = vpop.f32.mrb[0].mxu0
      %v4719 = vadd.f32 0.0, %v4718
      %v4720 = vpop.f32.mrb[0].mxu0
      %v4721 = vadd.f32 0.0, %v4720
      %v4722 = vpop.f32.mrb[0].mxu0
      %v4723 = vadd.f32 0.0, %v4722
      %4724 = vmatprep.mubr.bf16.mxu0 0
      %4725 = vmatmul.mubr.bf16.gmra.mrb[0].mxu0 %v4312
      %v4726 = vpop.f32.mrb[0].mxu0
      %v4727 = vadd.f32 0.0, %v4726
      %v4728 = vpop.f32.mrb[0].mxu0
      %v4729 = vadd.f32 0.0, %v4728
      %v4730 = vpop.f32.mrb[0].mxu0
      %v4731 = vadd.f32 0.0, %v4730
      %v4732 = vpop.f32.mrb[0].mxu0
      %v4733 = vadd.f32 0.0, %v4732
      %4734 = vmatprep.mubr.bf16.mxu0 0
      %4735 = vmatmul.mubr.bf16.gmra.mrb[0].mxu0 %v4315
      %v4736 = vpop.f32.mrb[0].mxu0
      %v4737 = vadd.f32 0.0, %v4736
      %v4738 = vpop.f32.mrb[0].mxu0
      %v4739 = vadd.f32 0.0, %v4738
      %v4740 = vpop.f32.mrb[0].mxu0
      %v4741 = vadd.f32 0.0, %v4740
      %v4742 = vpop.f32.mrb[0].mxu0
      %v4743 = vadd.f32 0.0, %v4742
      %4744 = vmatprep.mubr.bf16.mxu0 0
      %4745 = vmatmul.mubr.bf16.gmra.mrb[0].mxu0 %v4318
      %v4746 = vpop.f32.mrb[0].mxu0
      %v4747 = vadd.f32 0.0, %v4746
      %v4748 = vpop.f32.mrb[0].mxu0
      %v4749 = vadd.f32 0.0, %v4748
      %v4750 = vpop.f32.mrb[0].mxu0
      %v4751 = vadd.f32 0.0, %v4750
      %v4752 = vpop.f32.mrb[0].mxu0
      %v4753 = vadd.f32 0.0, %v4752
      %4754 = vmatprep.mubr.bf16.mxu0 0
      %4755 = vmatmul.mubr.bf16.gmra.mrb[0].mxu0 %v4321
      %v4756 = vpop.f32.mrb[0].mxu0
      %v4757 = vadd.f32 0.0, %v4756
      %v4758 = vpop.f32.mrb[0].mxu0
      %v4759 = vadd.f32 0.0, %v4758
      %v4760 = vpop.f32.mrb[0].mxu0
      %v4761 = vadd.f32 0.0, %v4760
      %v4762 = vpop.f32.mrb[0].mxu0
      %v4763 = vadd.f32 0.0, %v4762
      %4764 = vmatprep.mubr.bf16.mxu0 0
      %4765 = vmatmul.mubr.bf16.gmra.mrb[0].mxu0 %v4324
      %v4766 = vpop.f32.mrb[0].mxu0
      %v4767 = vadd.f32 0.0, %v4766
      %v4768 = vpop.f32.mrb[0].mxu0
      %v4769 = vadd.f32 0.0, %v4768
      %v4770 = vpop.f32.mrb[0].mxu0
      %v4771 = vadd.f32 0.0, %v4770
      %v4772 = vpop.f32.mrb[0].mxu0
      %v4773 = vadd.f32 0.0, %v4772
      %4774 = vmatprep.mubr.bf16.mxu0 0
      %4775 = vmatmul.mubr.bf16.gmra.mrb[0].mxu0 %v4327
      %v4776 = vpop.f32.mrb[0].mxu0
      %v4777 = vadd.f32 0.0, %v4776
      %v4778 = vpop.f32.mrb[0].mxu0
      %v4779 = vadd.f32 0.0, %v4778
      %v4780 = vpop.f32.mrb[0].mxu0
      %v4781 = vadd.f32 0.0, %v4780
      %v4782 = vpop.f32.mrb[0].mxu0
      %v4783 = vadd.f32 0.0, %v4782
      %4784 = vmatprep.mubr.bf16.mxu0 0
      %4785 = vmatmul.mubr.bf16.gmra.mrb[0].mxu0 %v4330
      %v4786 = vpop.f32.mrb[0].mxu0
      %v4787 = vadd.f32 0.0, %v4786
      %v4788 = vpop.f32.mrb[0].mxu0
      %v4789 = vadd.f32 0.0, %v4788
      %v4790 = vpop.f32.mrb[0].mxu0
      %v4791 = vadd.f32 0.0, %v4790
      %v4792 = vpop.f32.mrb[0].mxu0
      %v4793 = vadd.f32 0.0, %v4792
      %4794 = vmatprep.mubr.bf16.mxu0 0
      %4795 = vmatmul.mubr.bf16.gmra.mrb[0].mxu0 %v4333
      %v4796 = vpop.f32.mrb[0].mxu0
      %v4797 = vadd.f32 0.0, %v4796
      %v4798 = vpop.f32.mrb[0].mxu0
      %v4799 = vadd.f32 0.0, %v4798
      %v4800 = vpop.f32.mrb[0].mxu0
      %v4801 = vadd.f32 0.0, %v4800
      %v4802 = vpop.f32.mrb[0].mxu0
      %v4803 = vadd.f32 0.0, %v4802
      %4804 = vmatprep.mubr.bf16.mxu0 0
      %4805 = vmatmul.mubr.bf16.gmra.mrb[0].mxu0 %v4336
      %v4806 = vpop.f32.mrb[0].mxu0
      %v4807 = vadd.f32 0.0, %v4806
      %v4808 = vpop.f32.mrb[0].mxu0
      %v4809 = vadd.f32 0.0, %v4808
      %v4810 = vpop.f32.mrb[0].mxu0
      %v4811 = vadd.f32 0.0, %v4810
      %v4812 = vpop.f32.mrb[0].mxu0
      %v4813 = vadd.f32 0.0, %v4812
      %4814 = vmatprep.mubr.bf16.mxu0 0
      %4815 = vmatmul.mubr.bf16.gmra.mrb[0].mxu0 %v4339
      %v4816 = vpop.f32.mrb[0].mxu0
      %v4817 = vadd.f32 0.0, %v4816
      %v4818 = vpop.f32.mrb[0].mxu0
      %v4819 = vadd.f32 0.0, %v4818
      %v4820 = vpop.f32.mrb[0].mxu0
      %v4821 = vadd.f32 0.0, %v4820
      %v4822 = vpop.f32.mrb[0].mxu0
      %v4823 = vadd.f32 0.0, %v4822
      %4824 = vmatprep.mubr.bf16.mxu0 0
      %4825 = vmatmul.mubr.bf16.gmra.mrb[0].mxu0 %v4342
      %v4826 = vpop.f32.mrb[0].mxu0
      %v4827 = vadd.f32 0.0, %v4826
      %v4828 = vpop.f32.mrb[0].mxu0
      %v4829 = vadd.f32 0.0, %v4828
      %v4830 = vpop.f32.mrb[0].mxu0
      %v4831 = vadd.f32 0.0, %v4830
      %v4832 = vpop.f32.mrb[0].mxu0
      %v4833 = vadd.f32 0.0, %v4832
      %4834 = vmatprep.mubr.bf16.mxu0 0
      %4835 = vmatmul.mubr.bf16.gmra.mrb[0].mxu0 %v4345
      %v4836 = vpop.f32.mrb[0].mxu0
      %v4837 = vadd.f32 0.0, %v4836
      %v4838 = vpop.f32.mrb[0].mxu0
      %v4839 = vadd.f32 0.0, %v4838
      %v4840 = vpop.f32.mrb[0].mxu0
      %v4841 = vadd.f32 0.0, %v4840
      %v4842 = vpop.f32.mrb[0].mxu0
      %v4843 = vadd.f32 0.0, %v4842
      %4844 = vmatprep.mubr.bf16.mxu0 0
      %4845 = vmatmul.mubr.bf16.gmra.mrb[0].mxu0 %v4348
      %v4846 = vpop.f32.mrb[0].mxu0
      %v4847 = vadd.f32 0.0, %v4846
      %v4848 = vpop.f32.mrb[0].mxu0
      %v4849 = vadd.f32 0.0, %v4848
      %v4850 = vpop.f32.mrb[0].mxu0
      %v4851 = vadd.f32 0.0, %v4850
      %v4852 = vpop.f32.mrb[0].mxu0
      %v4853 = vadd.f32 0.0, %v4852
      %4854 = vmatprep.mubr.bf16.mxu0 0
      %4855 = vmatmul.mubr.bf16.gmra.mrb[0].mxu0 %v4351
      %v4856 = vpop.f32.mrb[0].mxu0
      %v4857 = vadd.f32 0.0, %v4856
      %v4858 = vpop.f32.mrb[0].mxu0
      %v4859 = vadd.f32 0.0, %v4858
      %v4860 = vpop.f32.mrb[0].mxu0
      %v4861 = vadd.f32 0.0, %v4860
      %v4862 = vpop.f32.mrb[0].mxu0
      %v4863 = vadd.f32 0.0, %v4862
      %4864 = vmatprep.mubr.bf16.mxu0 0
      %4865 = vmatmul.mubr.bf16.gmra.mrb[0].mxu0 %v4354
      %v4866 = vpop.f32.mrb[0].mxu0
      %v4867 = vadd.f32 0.0, %v4866
      %v4868 = vpop.f32.mrb[0].mxu0
      %v4869 = vadd.f32 0.0, %v4868
      %v4870 = vpop.f32.mrb[0].mxu0
      %v4871 = vadd.f32 0.0, %v4870
      %v4872 = vpop.f32.mrb[0].mxu0
      %v4873 = vadd.f32 0.0, %v4872
      %4874 = vdwg.mxu0
      %v4875 = vadd.f32 %v3853, %v4397
      %v4876 = vadd.f32 %v3854, %v4399
      %v4877 = vadd.f32 %v3855, %v4401
      %v4878 = vadd.f32 %v3856, %v4403
      %v4879 = vadd.f32 %v3857, %v4407
      %v4880 = vadd.f32 %v3858, %v4409
      %v4881 = vadd.f32 %v3859, %v4411
      %v4882 = vadd.f32 %v3860, %v4413
      %v4883 = vadd.f32 %v3861, %v4417
      %v4884 = vadd.f32 %v3862, %v4419
      %v4885 = vadd.f32 %v3863, %v4421
      %v4886 = vadd.f32 %v3864, %v4423
      %v4887 = vadd.f32 %v3865, %v4427
      %v4888 = vadd.f32 %v3866, %v4429
      %v4889 = vadd.f32 %v3867, %v4431
      %v4890 = vadd.f32 %v3868, %v4433
      %v4891 = vadd.f32 %v3869, %v4437
      %v4892 = vadd.f32 %v3870, %v4439
      %v4893 = vadd.f32 %v3871, %v4441
      %v4894 = vadd.f32 %v3872, %v4443
      %v4895 = vadd.f32 %v3873, %v4447
      %v4896 = vadd.f32 %v3874, %v4449
      %v4897 = vadd.f32 %v3875, %v4451
      %v4898 = vadd.f32 %v3876, %v4453
      %v4899 = vadd.f32 %v3877, %v4457
      %v4900 = vadd.f32 %v3878, %v4459
      %v4901 = vadd.f32 %v3879, %v4461
      %v4902 = vadd.f32 %v3880, %v4463
      %v4903 = vadd.f32 %v3881, %v4467
      %v4904 = vadd.f32 %v3882, %v4469
      %v4905 = vadd.f32 %v3883, %v4471
      %v4906 = vadd.f32 %v3884, %v4473
      %v4907 = vadd.f32 %v3885, %v4477
      %v4908 = vadd.f32 %v3886, %v4479
      %v4909 = vadd.f32 %v3887, %v4481
      %v4910 = vadd.f32 %v3888, %v4483
      %v4911 = vadd.f32 %v3889, %v4487
      %v4912 = vadd.f32 %v3890, %v4489
      %v4913 = vadd.f32 %v3891, %v4491
      %v4914 = vadd.f32 %v3892, %v4493
      %v4915 = vadd.f32 %v3893, %v4497
      %v4916 = vadd.f32 %v3894, %v4499
      %v4917 = vadd.f32 %v3895, %v4501
      %v4918 = vadd.f32 %v3896, %v4503
      %v4919 = vadd.f32 %v3897, %v4507
      %v4920 = vadd.f32 %v3898, %v4509
      %v4921 = vadd.f32 %v3899, %v4511
      %v4922 = vadd.f32 %v3900, %v4513
      %v4923 = vadd.f32 %v3901, %v4517
      %v4924 = vadd.f32 %v3902, %v4519
      %v4925 = vadd.f32 %v3903, %v4521
      %v4926 = vadd.f32 %v3904, %v4523
      %v4927 = vadd.f32 %v3905, %v4527
      %v4928 = vadd.f32 %v3906, %v4529
      %v4929 = vadd.f32 %v3907, %v4531
      %v4930 = vadd.f32 %v3908, %v4533
      %v4931 = vadd.f32 %v3909, %v4537
      %v4932 = vadd.f32 %v3910, %v4539
      %v4933 = vadd.f32 %v3911, %v4541
      %v4934 = vadd.f32 %v3912, %v4543
      %v4935 = vadd.f32 %v3913, %v4547
      %v4936 = vadd.f32 %v3914, %v4549
      %v4937 = vadd.f32 %v3915, %v4551
      %v4938 = vadd.f32 %v3916, %v4553
      %v4939 = vadd.f32 %v3917, %v4557
      %v4940 = vadd.f32 %v3918, %v4559
      %v4941 = vadd.f32 %v3919, %v4561
      %v4942 = vadd.f32 %v3920, %v4563
      %v4943 = vadd.f32 %v3921, %v4567
      %v4944 = vadd.f32 %v3922, %v4569
      %v4945 = vadd.f32 %v3923, %v4571
      %v4946 = vadd.f32 %v3924, %v4573
      %v4947 = vadd.f32 %v3925, %v4577
      %v4948 = vadd.f32 %v3926, %v4579
      %v4949 = vadd.f32 %v3927, %v4581
      %v4950 = vadd.f32 %v3928, %v4583
      %v4951 = vadd.f32 %v3929, %v4587
      %v4952 = vadd.f32 %v3930, %v4589
      %v4953 = vadd.f32 %v3931, %v4591
      %v4954 = vadd.f32 %v3932, %v4593
      %v4955 = vadd.f32 %v3933, %v4597
      %v4956 = vadd.f32 %v3934, %v4599
      %v4957 = vadd.f32 %v3935, %v4601
      %v4958 = vadd.f32 %v3936, %v4603
      %v4959 = vadd.f32 %v3937, %v4607
      %v4960 = vadd.f32 %v3938, %v4609
      %v4961 = vadd.f32 %v3939, %v4611
      %v4962 = vadd.f32 %v3940, %v4613
      %v4963 = vadd.f32 %v3941, %v4617
      %v4964 = vadd.f32 %v3942, %v4619
      %v4965 = vadd.f32 %v3943, %v4621
      %v4966 = vadd.f32 %v3944, %v4623
      %v4967 = vadd.f32 %v3945, %v4627
      %v4968 = vadd.f32 %v3946, %v4629
      %v4969 = vadd.f32 %v3947, %v4631
      %v4970 = vadd.f32 %v3948, %v4633
      %v4971 = vadd.f32 %v3949, %v4637
      %v4972 = vadd.f32 %v3950, %v4639
      %v4973 = vadd.f32 %v3951, %v4641
      %v4974 = vadd.f32 %v3952, %v4643
      %v4975 = vadd.f32 %v3953, %v4647
      %v4976 = vadd.f32 %v3954, %v4649
      %v4977 = vadd.f32 %v3955, %v4651
      %v4978 = vadd.f32 %v3956, %v4653
      %v4979 = vadd.f32 %v3957, %v4657
      %v4980 = vadd.f32 %v3958, %v4659
      %v4981 = vadd.f32 %v3959, %v4661
      %v4982 = vadd.f32 %v3960, %v4663
      %v4983 = vadd.f32 %v3961, %v4667
      %v4984 = vadd.f32 %v3962, %v4669
      %v4985 = vadd.f32 %v3963, %v4671
      %v4986 = vadd.f32 %v3964, %v4673
      %v4987 = vadd.f32 %v3965, %v4677
      %v4988 = vadd.f32 %v3966, %v4679
      %v4989 = vadd.f32 %v3967, %v4681
      %v4990 = vadd.f32 %v3968, %v4683
      %v4991 = vadd.f32 %v3969, %v4687
      %v4992 = vadd.f32 %v3970, %v4689
      %v4993 = vadd.f32 %v3971, %v4691
      %v4994 = vadd.f32 %v3972, %v4693
      %v4995 = vadd.f32 %v3973, %v4697
      %v4996 = vadd.f32 %v3974, %v4699
      %v4997 = vadd.f32 %v3975, %v4701
      %v4998 = vadd.f32 %v3976, %v4703
      %v4999 = vadd.f32 %v3977, %v4707
      %v5000 = vadd.f32 %v3978, %v4709
      %v5001 = vadd.f32 %v3979, %v4711
      %v5002 = vadd.f32 %v3980, %v4713
      %v5003 = vadd.f32 %v3981, %v4717
      %v5004 = vadd.f32 %v3982, %v4719
      %v5005 = vadd.f32 %v3983, %v4721
      %v5006 = vadd.f32 %v3984, %v4723
      %v5007 = vadd.f32 %v3985, %v4727
      %v5008 = vadd.f32 %v3986, %v4729
      %v5009 = vadd.f32 %v3987, %v4731
      %v5010 = vadd.f32 %v3988, %v4733
      %v5011 = vadd.f32 %v3989, %v4737
      %v5012 = vadd.f32 %v3990, %v4739
      %v5013 = vadd.f32 %v3991, %v4741
      %v5014 = vadd.f32 %v3992, %v4743
      %v5015 = vadd.f32 %v3993, %v4747
      %v5016 = vadd.f32 %v3994, %v4749
      %v5017 = vadd.f32 %v3995, %v4751
      %v5018 = vadd.f32 %v3996, %v4753
      %v5019 = vadd.f32 %v3997, %v4757
      %v5020 = vadd.f32 %v3998, %v4759
      %v5021 = vadd.f32 %v3999, %v4761
      %v5022 = vadd.f32 %v4000, %v4763
      %v5023 = vadd.f32 %v4001, %v4767
      %v5024 = vadd.f32 %v4002, %v4769
      %v5025 = vadd.f32 %v4003, %v4771
      %v5026 = vadd.f32 %v4004, %v4773
      %v5027 = vadd.f32 %v4005, %v4777
      %v5028 = vadd.f32 %v4006, %v4779
      %v5029 = vadd.f32 %v4007, %v4781
      %v5030 = vadd.f32 %v4008, %v4783
      %v5031 = vadd.f32 %v4009, %v4787
      %v5032 = vadd.f32 %v4010, %v4789
      %v5033 = vadd.f32 %v4011, %v4791
      %v5034 = vadd.f32 %v4012, %v4793
      %v5035 = vadd.f32 %v4013, %v4797
      %v5036 = vadd.f32 %v4014, %v4799
      %v5037 = vadd.f32 %v4015, %v4801
      %v5038 = vadd.f32 %v4016, %v4803
      %v5039 = vadd.f32 %v4017, %v4807
      %v5040 = vadd.f32 %v4018, %v4809
      %v5041 = vadd.f32 %v4019, %v4811
      %v5042 = vadd.f32 %v4020, %v4813
      %v5043 = vadd.f32 %v4021, %v4817
      %v5044 = vadd.f32 %v4022, %v4819
      %v5045 = vadd.f32 %v4023, %v4821
      %v5046 = vadd.f32 %v4024, %v4823
      %v5047 = vadd.f32 %v4025, %v4827
      %v5048 = vadd.f32 %v4026, %v4829
      %v5049 = vadd.f32 %v4027, %v4831
      %v5050 = vadd.f32 %v4028, %v4833
      %v5051 = vadd.f32 %v4029, %v4837
      %v5052 = vadd.f32 %v4030, %v4839
      %v5053 = vadd.f32 %v4031, %v4841
      %v5054 = vadd.f32 %v4032, %v4843
      %v5055 = vadd.f32 %v4033, %v4847
      %v5056 = vadd.f32 %v4034, %v4849
      %v5057 = vadd.f32 %v4035, %v4851
      %v5058 = vadd.f32 %v4036, %v4853
      %v5059 = vadd.f32 %v4037, %v4857
      %v5060 = vadd.f32 %v4038, %v4859
      %v5061 = vadd.f32 %v4039, %v4861
      %v5062 = vadd.f32 %v4040, %v4863
      %v5063 = vadd.f32 %v4041, %v4867
      %v5064 = vadd.f32 %v4042, %v4869
      %v5065 = vadd.f32 %v4043, %v4871
      %v5066 = vadd.f32 %v4044, %v4873
      %v5067 = vmax.f32 %v4875, %v4876
      %v5068 = vmax.f32 %v4877, %v4878
      %v5069 = vmax.f32 %v4879, %v4880
      %v5070 = vmax.f32 %v4881, %v4882
      %v5071 = vmax.f32 %v4883, %v4884
      %v5072 = vmax.f32 %v4885, %v4886
      %v5073 = vmax.f32 %v4887, %v4888
      %v5074 = vmax.f32 %v4889, %v4890
      %v5075 = vmax.f32 %v4891, %v4892
      %v5076 = vmax.f32 %v4893, %v4894
      %v5077 = vmax.f32 %v4895, %v4896
      %v5078 = vmax.f32 %v4897, %v4898
      %v5079 = vmax.f32 %v4899, %v4900
      %v5080 = vmax.f32 %v4901, %v4902
      %v5081 = vmax.f32 %v4903, %v4904
      %v5082 = vmax.f32 %v4905, %v4906
      %v5083 = vmax.f32 %v4907, %v4908
      %v5084 = vmax.f32 %v4909, %v4910
      %v5085 = vmax.f32 %v4911, %v4912
      %v5086 = vmax.f32 %v4913, %v4914
      %v5087 = vmax.f32 %v4915, %v4916
      %v5088 = vmax.f32 %v4917, %v4918
      %v5089 = vmax.f32 %v4919, %v4920
      %v5090 = vmax.f32 %v4921, %v4922
      %v5091 = vmax.f32 %v4923, %v4924
      %v5092 = vmax.f32 %v4925, %v4926
      %v5093 = vmax.f32 %v4927, %v4928
      %v5094 = vmax.f32 %v4929, %v4930
      %v5095 = vmax.f32 %v4931, %v4932
      %v5096 = vmax.f32 %v4933, %v4934
      %v5097 = vmax.f32 %v4935, %v4936
      %v5098 = vmax.f32 %v4937, %v4938
      %v5099 = vmax.f32 %v4939, %v4940
      %v5100 = vmax.f32 %v4941, %v4942
      %v5101 = vmax.f32 %v4943, %v4944
      %v5102 = vmax.f32 %v4945, %v4946
      %v5103 = vmax.f32 %v4947, %v4948
      %v5104 = vmax.f32 %v4949, %v4950
      %v5105 = vmax.f32 %v4951, %v4952
      %v5106 = vmax.f32 %v4953, %v4954
      %v5107 = vmax.f32 %v4955, %v4956
      %v5108 = vmax.f32 %v4957, %v4958
      %v5109 = vmax.f32 %v4959, %v4960
      %v5110 = vmax.f32 %v4961, %v4962
      %v5111 = vmax.f32 %v4963, %v4964
      %v5112 = vmax.f32 %v4965, %v4966
      %v5113 = vmax.f32 %v4967, %v4968
      %v5114 = vmax.f32 %v4969, %v4970
      %v5115 = vmax.f32 %v4971, %v4972
      %v5116 = vmax.f32 %v4973, %v4974
      %v5117 = vmax.f32 %v4975, %v4976
      %v5118 = vmax.f32 %v4977, %v4978
      %v5119 = vmax.f32 %v4979, %v4980
      %v5120 = vmax.f32 %v4981, %v4982
      %v5121 = vmax.f32 %v4983, %v4984
      %v5122 = vmax.f32 %v4985, %v4986
      %v5123 = vmax.f32 %v4987, %v4988
      %v5124 = vmax.f32 %v4989, %v4990
      %v5125 = vmax.f32 %v4991, %v4992
      %v5126 = vmax.f32 %v4993, %v4994
      %v5127 = vmax.f32 %v4995, %v4996
      %v5128 = vmax.f32 %v4997, %v4998
      %v5129 = vmax.f32 %v4999, %v5000
      %v5130 = vmax.f32 %v5001, %v5002
      %v5131 = vmax.f32 %v5003, %v5004
      %v5132 = vmax.f32 %v5005, %v5006
      %v5133 = vmax.f32 %v5007, %v5008
      %v5134 = vmax.f32 %v5009, %v5010
      %v5135 = vmax.f32 %v5011, %v5012
      %v5136 = vmax.f32 %v5013, %v5014
      %v5137 = vmax.f32 %v5015, %v5016
      %v5138 = vmax.f32 %v5017, %v5018
      %v5139 = vmax.f32 %v5019, %v5020
      %v5140 = vmax.f32 %v5021, %v5022
      %v5141 = vmax.f32 %v5023, %v5024
      %v5142 = vmax.f32 %v5025, %v5026
      %v5143 = vmax.f32 %v5027, %v5028
      %v5144 = vmax.f32 %v5029, %v5030
      %v5145 = vmax.f32 %v5031, %v5032
      %v5146 = vmax.f32 %v5033, %v5034
      %v5147 = vmax.f32 %v5035, %v5036
      %v5148 = vmax.f32 %v5037, %v5038
      %v5149 = vmax.f32 %v5039, %v5040
      %v5150 = vmax.f32 %v5041, %v5042
      %v5151 = vmax.f32 %v5043, %v5044
      %v5152 = vmax.f32 %v5045, %v5046
      %v5153 = vmax.f32 %v5047, %v5048
      %v5154 = vmax.f32 %v5049, %v5050
      %v5155 = vmax.f32 %v5051, %v5052
      %v5156 = vmax.f32 %v5053, %v5054
      %v5157 = vmax.f32 %v5055, %v5056
      %v5158 = vmax.f32 %v5057, %v5058
      %v5159 = vmax.f32 %v5059, %v5060
      %v5160 = vmax.f32 %v5061, %v5062
      %v5161 = vmax.f32 %v5063, %v5064
      %v5162 = vmax.f32 %v5065, %v5066
      %5163 = vst [vmem:[#allocation2] sm:$0xff] %v5067
      %5164 = vst [vmem:[#allocation2 + $0x8] sm:$0xff] %v5068
      %5165 = vst [vmem:[#allocation2 + $0x10] sm:$0xff] %v5069
      %5166 = vst [vmem:[#allocation2 + $0x18] sm:$0xff] %v5070
      %5167 = vst [vmem:[#allocation2 + $0x20] sm:$0xff] %v5071
      %5168 = vst [vmem:[#allocation2 + $0x28] sm:$0xff] %v5072
      %5169 = vst [vmem:[#allocation2 + $0x30] sm:$0xff] %v5073
      %5170 = vst [vmem:[#allocation2 + $0x38] sm:$0xff] %v5074
      %5171 = vst [vmem:[#allocation2 + $0x40] sm:$0xff] %v5075
      %5172 = vst [vmem:[#allocation2 + $0x48] sm:$0xff] %v5076
      %5173 = vst [vmem:[#allocation2 + $0x50] sm:$0xff] %v5077
      %5174 = vst [vmem:[#allocation2 + $0x58] sm:$0xff] %v5078
      %5175 = vst [vmem:[#allocation2 + $0x60] sm:$0xff] %v5079
      %5176 = vst [vmem:[#allocation2 + $0x68] sm:$0xff] %v5080
      %5177 = vst [vmem:[#allocation2 + $0x70] sm:$0xff] %v5081
      %5178 = vst [vmem:[#allocation2 + $0x78] sm:$0xff] %v5082
      %5179 = vst [vmem:[#allocation2 + $0x80] sm:$0xff] %v5083
      %5180 = vst [vmem:[#allocation2 + $0x88] sm:$0xff] %v5084
      %5181 = vst [vmem:[#allocation2 + $0x90] sm:$0xff] %v5085
      %5182 = vst [vmem:[#allocation2 + $0x98] sm:$0xff] %v5086
      %5183 = vst [vmem:[#allocation2 + $0xa0] sm:$0xff] %v5087
      %5184 = vst [vmem:[#allocation2 + $0xa8] sm:$0xff] %v5088
      %5185 = vst [vmem:[#allocation2 + $0xb0] sm:$0xff] %v5089
      %5186 = vst [vmem:[#allocation2 + $0xb8] sm:$0xff] %v5090
      %5187 = vst [vmem:[#allocation2 + $0xc0] sm:$0xff] %v5091
      %5188 = vst [vmem:[#allocation2 + $0xc8] sm:$0xff] %v5092
      %5189 = vst [vmem:[#allocation2 + $0xd0] sm:$0xff] %v5093
      %5190 = vst [vmem:[#allocation2 + $0xd8] sm:$0xff] %v5094
      %5191 = vst [vmem:[#allocation2 + $0xe0] sm:$0xff] %v5095
      %5192 = vst [vmem:[#allocation2 + $0xe8] sm:$0xff] %v5096
      %5193 = vst [vmem:[#allocation2 + $0xf0] sm:$0xff] %v5097
      %5194 = vst [vmem:[#allocation2 + $0xf8] sm:$0xff] %v5098
      %5195 = vst [vmem:[#allocation2 + $0x100] sm:$0xff] %v5099
      %5196 = vst [vmem:[#allocation2 + $0x108] sm:$0xff] %v5100
      %5197 = vst [vmem:[#allocation2 + $0x110] sm:$0xff] %v5101
      %5198 = vst [vmem:[#allocation2 + $0x118] sm:$0xff] %v5102
      %5199 = vst [vmem:[#allocation2 + $0x120] sm:$0xff] %v5103
      %5200 = vst [vmem:[#allocation2 + $0x128] sm:$0xff] %v5104
      %5201 = vst [vmem:[#allocation2 + $0x130] sm:$0xff] %v5105
      %5202 = vst [vmem:[#allocation2 + $0x138] sm:$0xff] %v5106
      %5203 = vst [vmem:[#allocation2 + $0x140] sm:$0xff] %v5107
      %5204 = vst [vmem:[#allocation2 + $0x148] sm:$0xff] %v5108
      %5205 = vst [vmem:[#allocation2 + $0x150] sm:$0xff] %v5109
      %5206 = vst [vmem:[#allocation2 + $0x158] sm:$0xff] %v5110
      %5207 = vst [vmem:[#allocation2 + $0x160] sm:$0xff] %v5111
      %5208 = vst [vmem:[#allocation2 + $0x168] sm:$0xff] %v5112
      %5209 = vst [vmem:[#allocation2 + $0x170] sm:$0xff] %v5113
      %5210 = vst [vmem:[#allocation2 + $0x178] sm:$0xff] %v5114
      %5211 = vst [vmem:[#allocation2 + $0x180] sm:$0xff] %v5115
      %5212 = vst [vmem:[#allocation2 + $0x188] sm:$0xff] %v5116
      %5213 = vst [vmem:[#allocation2 + $0x190] sm:$0xff] %v5117
      %5214 = vst [vmem:[#allocation2 + $0x198] sm:$0xff] %v5118
      %5215 = vst [vmem:[#allocation2 + $0x1a0] sm:$0xff] %v5119
      %5216 = vst [vmem:[#allocation2 + $0x1a8] sm:$0xff] %v5120
      %5217 = vst [vmem:[#allocation2 + $0x1b0] sm:$0xff] %v5121
      %5218 = vst [vmem:[#allocation2 + $0x1b8] sm:$0xff] %v5122
      %5219 = vst [vmem:[#allocation2 + $0x1c0] sm:$0xff] %v5123
      %5220 = vst [vmem:[#allocation2 + $0x1c8] sm:$0xff] %v5124
      %5221 = vst [vmem:[#allocation2 + $0x1d0] sm:$0xff] %v5125
      %5222 = vst [vmem:[#allocation2 + $0x1d8] sm:$0xff] %v5126
      %5223 = vst [vmem:[#allocation2 + $0x1e0] sm:$0xff] %v5127
      %5224 = vst [vmem:[#allocation2 + $0x1e8] sm:$0xff] %v5128
      %5225 = vst [vmem:[#allocation2 + $0x1f0] sm:$0xff] %v5129
      %5226 = vst [vmem:[#allocation2 + $0x1f8] sm:$0xff] %v5130
      %5227 = vst [vmem:[#allocation2 + $0x200] sm:$0xff] %v5131
      %5228 = vst [vmem:[#allocation2 + $0x208] sm:$0xff] %v5132
      %5229 = vst [vmem:[#allocation2 + $0x210] sm:$0xff] %v5133
      %5230 = vst [vmem:[#allocation2 + $0x218] sm:$0xff] %v5134
      %5231 = vst [vmem:[#allocation2 + $0x220] sm:$0xff] %v5135
      %5232 = vst [vmem:[#allocation2 + $0x228] sm:$0xff] %v5136
      %5233 = vst [vmem:[#allocation2 + $0x230] sm:$0xff] %v5137
      %5234 = vst [vmem:[#allocation2 + $0x238] sm:$0xff] %v5138
      %5235 = vst [vmem:[#allocation2 + $0x240] sm:$0xff] %v5139
      %5236 = vst [vmem:[#allocation2 + $0x248] sm:$0xff] %v5140
      %5237 = vst [vmem:[#allocation2 + $0x250] sm:$0xff] %v5141
      %5238 = vst [vmem:[#allocation2 + $0x258] sm:$0xff] %v5142
      %5239 = vst [vmem:[#allocation2 + $0x260] sm:$0xff] %v5143
      %5240 = vst [vmem:[#allocation2 + $0x268] sm:$0xff] %v5144
      %5241 = vst [vmem:[#allocation2 + $0x270] sm:$0xff] %v5145
      %5242 = vst [vmem:[#allocation2 + $0x278] sm:$0xff] %v5146
      %5243 = vst [vmem:[#allocation2 + $0x280] sm:$0xff] %v5147
      %5244 = vst [vmem:[#allocation2 + $0x288] sm:$0xff] %v5148
      %5245 = vst [vmem:[#allocation2 + $0x290] sm:$0xff] %v5149
      %5246 = vst [vmem:[#allocation2 + $0x298] sm:$0xff] %v5150
      %5247 = vst [vmem:[#allocation2 + $0x2a0] sm:$0xff] %v5151
      %5248 = vst [vmem:[#allocation2 + $0x2a8] sm:$0xff] %v5152
      %5249 = vst [vmem:[#allocation2 + $0x2b0] sm:$0xff] %v5153
      %5250 = vst [vmem:[#allocation2 + $0x2b8] sm:$0xff] %v5154
      %5251 = vst [vmem:[#allocation2 + $0x2c0] sm:$0xff] %v5155
      %5252 = vst [vmem:[#allocation2 + $0x2c8] sm:$0xff] %v5156
      %5253 = vst [vmem:[#allocation2 + $0x2d0] sm:$0xff] %v5157
      %5254 = vst [vmem:[#allocation2 + $0x2d8] sm:$0xff] %v5158
      %5255 = vst [vmem:[#allocation2 + $0x2e0] sm:$0xff] %v5159
      %5256 = vst [vmem:[#allocation2 + $0x2e8] sm:$0xff] %v5160
      %5257 = vst [vmem:[#allocation2 + $0x2f0] sm:$0xff] %v5161
      %5258 = vst [vmem:[#allocation2 + $0x2f8] sm:$0xff] %v5162
      %v5259 = vld [vmem:[#allocation2] ss:$2 sm:$0xff]
      %s5260 = scalar_lea.vmem [#allocation2], 16
      %v5261 = vld [vmem:[%s5260] ss:$2 sm:$0xf]
      %s5262 = scalar_lea.vmem [#allocation2], 24
      %v5263 = vld [vmem:[%s5262] ss:$2 sm:$0xff]
      %s5264 = scalar_lea.vmem [#allocation2], 40
      %v5265 = vld [vmem:[%s5264] ss:$2 sm:$0xf]
      %s5266 = scalar_lea.vmem [#allocation2], 48
      %v5267 = vld [vmem:[%s5266] ss:$2 sm:$0xff]
      %s5268 = scalar_lea.vmem [#allocation2], 64
      %v5269 = vld [vmem:[%s5268] ss:$2 sm:$0xf]
      %s5270 = scalar_lea.vmem [#allocation2], 72
      %v5271 = vld [vmem:[%s5270] ss:$2 sm:$0xff]
      %s5272 = scalar_lea.vmem [#allocation2], 88
      %v5273 = vld [vmem:[%s5272] ss:$2 sm:$0xf]
      %s5274 = scalar_lea.vmem [#allocation2], 96
      %v5275 = vld [vmem:[%s5274] ss:$2 sm:$0xff]
      %s5276 = scalar_lea.vmem [#allocation2], 112
      %v5277 = vld [vmem:[%s5276] ss:$2 sm:$0xf]
      %s5278 = scalar_lea.vmem [#allocation2], 120
      %v5279 = vld [vmem:[%s5278] ss:$2 sm:$0xff]
      %s5280 = scalar_lea.vmem [#allocation2], 136
      %v5281 = vld [vmem:[%s5280] ss:$2 sm:$0xf]
      %s5282 = scalar_lea.vmem [#allocation2], 144
      %v5283 = vld [vmem:[%s5282] ss:$2 sm:$0xff]
      %s5284 = scalar_lea.vmem [#allocation2], 160
      %v5285 = vld [vmem:[%s5284] ss:$2 sm:$0xf]
      %s5286 = scalar_lea.vmem [#allocation2], 168
      %v5287 = vld [vmem:[%s5286] ss:$2 sm:$0xff]
      %s5288 = scalar_lea.vmem [#allocation2], 184
      %v5289 = vld [vmem:[%s5288] ss:$2 sm:$0xf]
      %s5290 = scalar_lea.vmem [#allocation2], 192
      %v5291 = vld [vmem:[%s5290] ss:$2 sm:$0xff]
      %s5292 = scalar_lea.vmem [#allocation2], 208
      %v5293 = vld [vmem:[%s5292] ss:$2 sm:$0xf]
      %s5294 = scalar_lea.vmem [#allocation2], 216
      %v5295 = vld [vmem:[%s5294] ss:$2 sm:$0xff]
      %s5296 = scalar_lea.vmem [#allocation2], 232
      %v5297 = vld [vmem:[%s5296] ss:$2 sm:$0xf]
      %s5298 = scalar_lea.vmem [#allocation2], 240
      %v5299 = vld [vmem:[%s5298] ss:$2 sm:$0xff]
      %s5300 = scalar_lea.vmem [#allocation2], 256
      %v5301 = vld [vmem:[%s5300] ss:$2 sm:$0xf]
      %s5302 = scalar_lea.vmem [#allocation2], 264
      %v5303 = vld [vmem:[%s5302] ss:$2 sm:$0xff]
      %s5304 = scalar_lea.vmem [#allocation2], 280
      %v5305 = vld [vmem:[%s5304] ss:$2 sm:$0xf]
      %s5306 = scalar_lea.vmem [#allocation2], 288
      %v5307 = vld [vmem:[%s5306] ss:$2 sm:$0xff]
      %s5308 = scalar_lea.vmem [#allocation2], 304
      %v5309 = vld [vmem:[%s5308] ss:$2 sm:$0xf]
      %s5310 = scalar_lea.vmem [#allocation2], 312
      %v5311 = vld [vmem:[%s5310] ss:$2 sm:$0xff]
      %s5312 = scalar_lea.vmem [#allocation2], 328
      %v5313 = vld [vmem:[%s5312] ss:$2 sm:$0xf]
      %s5314 = scalar_lea.vmem [#allocation2], 336
      %v5315 = vld [vmem:[%s5314] ss:$2 sm:$0xff]
      %s5316 = scalar_lea.vmem [#allocation2], 352
      %v5317 = vld [vmem:[%s5316] ss:$2 sm:$0xf]
      %s5318 = scalar_lea.vmem [#allocation2], 360
      %v5319 = vld [vmem:[%s5318] ss:$2 sm:$0xff]
      %s5320 = scalar_lea.vmem [#allocation2], 376
      %v5321 = vld [vmem:[%s5320] ss:$2 sm:$0xf]
      %s5322 = scalar_lea.vmem [#allocation2], 384
      %v5323 = vld [vmem:[%s5322] ss:$2 sm:$0xff]
      %s5324 = scalar_lea.vmem [#allocation2], 400
      %v5325 = vld [vmem:[%s5324] ss:$2 sm:$0xf]
      %s5326 = scalar_lea.vmem [#allocation2], 408
      %v5327 = vld [vmem:[%s5326] ss:$2 sm:$0xff]
      %s5328 = scalar_lea.vmem [#allocation2], 424
      %v5329 = vld [vmem:[%s5328] ss:$2 sm:$0xf]
      %s5330 = scalar_lea.vmem [#allocation2], 432
      %v5331 = vld [vmem:[%s5330] ss:$2 sm:$0xff]
      %s5332 = scalar_lea.vmem [#allocation2], 448
      %v5333 = vld [vmem:[%s5332] ss:$2 sm:$0xf]
      %s5334 = scalar_lea.vmem [#allocation2], 456
      %v5335 = vld [vmem:[%s5334] ss:$2 sm:$0xff]
      %s5336 = scalar_lea.vmem [#allocation2], 472
      %v5337 = vld [vmem:[%s5336] ss:$2 sm:$0xf]
      %s5338 = scalar_lea.vmem [#allocation2], 480
      %v5339 = vld [vmem:[%s5338] ss:$2 sm:$0xff]
      %s5340 = scalar_lea.vmem [#allocation2], 496
      %v5341 = vld [vmem:[%s5340] ss:$2 sm:$0xf]
      %s5342 = scalar_lea.vmem [#allocation2], 504
      %v5343 = vld [vmem:[%s5342] ss:$2 sm:$0xff]
      %s5344 = scalar_lea.vmem [#allocation2], 520
      %v5345 = vld [vmem:[%s5344] ss:$2 sm:$0xf]
      %s5346 = scalar_lea.vmem [#allocation2], 528
      %v5347 = vld [vmem:[%s5346] ss:$2 sm:$0xff]
      %s5348 = scalar_lea.vmem [#allocation2], 544
      %v5349 = vld [vmem:[%s5348] ss:$2 sm:$0xf]
      %s5350 = scalar_lea.vmem [#allocation2], 552
      %v5351 = vld [vmem:[%s5350] ss:$2 sm:$0xff]
      %s5352 = scalar_lea.vmem [#allocation2], 568
      %v5353 = vld [vmem:[%s5352] ss:$2 sm:$0xf]
      %s5354 = scalar_lea.vmem [#allocation2], 576
      %v5355 = vld [vmem:[%s5354] ss:$2 sm:$0xff]
      %s5356 = scalar_lea.vmem [#allocation2], 592
      %v5357 = vld [vmem:[%s5356] ss:$2 sm:$0xf]
      %s5358 = scalar_lea.vmem [#allocation2], 600
      %v5359 = vld [vmem:[%s5358] ss:$2 sm:$0xff]
      %s5360 = scalar_lea.vmem [#allocation2], 616
      %v5361 = vld [vmem:[%s5360] ss:$2 sm:$0xf]
      %s5362 = scalar_lea.vmem [#allocation2], 624
      %v5363 = vld [vmem:[%s5362] ss:$2 sm:$0xff]
      %s5364 = scalar_lea.vmem [#allocation2], 640
      %v5365 = vld [vmem:[%s5364] ss:$2 sm:$0xf]
      %s5366 = scalar_lea.vmem [#allocation2], 648
      %v5367 = vld [vmem:[%s5366] ss:$2 sm:$0xff]
      %s5368 = scalar_lea.vmem [#allocation2], 664
      %v5369 = vld [vmem:[%s5368] ss:$2 sm:$0xf]
      %s5370 = scalar_lea.vmem [#allocation2], 672
      %v5371 = vld [vmem:[%s5370] ss:$2 sm:$0xff]
      %s5372 = scalar_lea.vmem [#allocation2], 688
      %v5373 = vld [vmem:[%s5372] ss:$2 sm:$0xf]
      %s5374 = scalar_lea.vmem [#allocation2], 696
      %v5375 = vld [vmem:[%s5374] ss:$2 sm:$0xff]
      %s5376 = scalar_lea.vmem [#allocation2], 712
      %v5377 = vld [vmem:[%s5376] ss:$2 sm:$0xf]
      %s5378 = scalar_lea.vmem [#allocation2], 720
      %v5379 = vld [vmem:[%s5378] ss:$2 sm:$0xff]
      %s5380 = scalar_lea.vmem [#allocation2], 736
      %v5381 = vld [vmem:[%s5380] ss:$2 sm:$0xf]
      %s5382 = scalar_lea.vmem [#allocation2], 744
      %v5383 = vld [vmem:[%s5382] ss:$2 sm:$0xff]
      %s5384 = scalar_lea.vmem [#allocation2], 760
      %v5385 = vld [vmem:[%s5384] ss:$2 sm:$0xf]
      %s5386 = scalar_lea.vmem [#allocation2], 1
      %v5387 = vld [vmem:[%s5386] ss:$2 sm:$0xff]
      %s5388 = scalar_lea.vmem [#allocation2], 17
      %v5389 = vld [vmem:[%s5388] ss:$2 sm:$0xf]
      %s5390 = scalar_lea.vmem [#allocation2], 25
      %v5391 = vld [vmem:[%s5390] ss:$2 sm:$0xff]
      %s5392 = scalar_lea.vmem [#allocation2], 41
      %v5393 = vld [vmem:[%s5392] ss:$2 sm:$0xf]
      %s5394 = scalar_lea.vmem [#allocation2], 49
      %v5395 = vld [vmem:[%s5394] ss:$2 sm:$0xff]
      %s5396 = scalar_lea.vmem [#allocation2], 65
      %v5397 = vld [vmem:[%s5396] ss:$2 sm:$0xf]
      %s5398 = scalar_lea.vmem [#allocation2], 73
      %v5399 = vld [vmem:[%s5398] ss:$2 sm:$0xff]
      %s5400 = scalar_lea.vmem [#allocation2], 89
      %v5401 = vld [vmem:[%s5400] ss:$2 sm:$0xf]
      %s5402 = scalar_lea.vmem [#allocation2], 97
      %v5403 = vld [vmem:[%s5402] ss:$2 sm:$0xff]
      %s5404 = scalar_lea.vmem [#allocation2], 113
      %v5405 = vld [vmem:[%s5404] ss:$2 sm:$0xf]
      %s5406 = scalar_lea.vmem [#allocation2], 121
      %v5407 = vld [vmem:[%s5406] ss:$2 sm:$0xff]
      %s5408 = scalar_lea.vmem [#allocation2], 137
      %v5409 = vld [vmem:[%s5408] ss:$2 sm:$0xf]
      %s5410 = scalar_lea.vmem [#allocation2], 145
      %v5411 = vld [vmem:[%s5410] ss:$2 sm:$0xff]
      %s5412 = scalar_lea.vmem [#allocation2], 161
      %v5413 = vld [vmem:[%s5412] ss:$2 sm:$0xf]
      %s5414 = scalar_lea.vmem [#allocation2], 169
      %v5415 = vld [vmem:[%s5414] ss:$2 sm:$0xff]
      %s5416 = scalar_lea.vmem [#allocation2], 185
      %v5417 = vld [vmem:[%s5416] ss:$2 sm:$0xf]
      %s5418 = scalar_lea.vmem [#allocation2], 193
      %v5419 = vld [vmem:[%s5418] ss:$2 sm:$0xff]
      %s5420 = scalar_lea.vmem [#allocation2], 209
      %v5421 = vld [vmem:[%s5420] ss:$2 sm:$0xf]
      %s5422 = scalar_lea.vmem [#allocation2], 217
      %v5423 = vld [vmem:[%s5422] ss:$2 sm:$0xff]
      %s5424 = scalar_lea.vmem [#allocation2], 233
      %v5425 = vld [vmem:[%s5424] ss:$2 sm:$0xf]
      %s5426 = scalar_lea.vmem [#allocation2], 241
      %v5427 = vld [vmem:[%s5426] ss:$2 sm:$0xff]
      %s5428 = scalar_lea.vmem [#allocation2], 257
      %v5429 = vld [vmem:[%s5428] ss:$2 sm:$0xf]
      %s5430 = scalar_lea.vmem [#allocation2], 265
      %v5431 = vld [vmem:[%s5430] ss:$2 sm:$0xff]
      %s5432 = scalar_lea.vmem [#allocation2], 281
      %v5433 = vld [vmem:[%s5432] ss:$2 sm:$0xf]
      %s5434 = scalar_lea.vmem [#allocation2], 289
      %v5435 = vld [vmem:[%s5434] ss:$2 sm:$0xff]
      %s5436 = scalar_lea.vmem [#allocation2], 305
      %v5437 = vld [vmem:[%s5436] ss:$2 sm:$0xf]
      %s5438 = scalar_lea.vmem [#allocation2], 313
      %v5439 = vld [vmem:[%s5438] ss:$2 sm:$0xff]
      %s5440 = scalar_lea.vmem [#allocation2], 329
      %v5441 = vld [vmem:[%s5440] ss:$2 sm:$0xf]
      %s5442 = scalar_lea.vmem [#allocation2], 337
      %v5443 = vld [vmem:[%s5442] ss:$2 sm:$0xff]
      %s5444 = scalar_lea.vmem [#allocation2], 353
      %v5445 = vld [vmem:[%s5444] ss:$2 sm:$0xf]
      %s5446 = scalar_lea.vmem [#allocation2], 361
      %v5447 = vld [vmem:[%s5446] ss:$2 sm:$0xff]
      %s5448 = scalar_lea.vmem [#allocation2], 377
      %v5449 = vld [vmem:[%s5448] ss:$2 sm:$0xf]
      %s5450 = scalar_lea.vmem [#allocation2], 385
      %v5451 = vld [vmem:[%s5450] ss:$2 sm:$0xff]
      %s5452 = scalar_lea.vmem [#allocation2], 401
      %v5453 = vld [vmem:[%s5452] ss:$2 sm:$0xf]
      %s5454 = scalar_lea.vmem [#allocation2], 409
      %v5455 = vld [vmem:[%s5454] ss:$2 sm:$0xff]
      %s5456 = scalar_lea.vmem [#allocation2], 425
      %v5457 = vld [vmem:[%s5456] ss:$2 sm:$0xf]
      %s5458 = scalar_lea.vmem [#allocation2], 433
      %v5459 = vld [vmem:[%s5458] ss:$2 sm:$0xff]
      %s5460 = scalar_lea.vmem [#allocation2], 449
      %v5461 = vld [vmem:[%s5460] ss:$2 sm:$0xf]
      %s5462 = scalar_lea.vmem [#allocation2], 457
      %v5463 = vld [vmem:[%s5462] ss:$2 sm:$0xff]
      %s5464 = scalar_lea.vmem [#allocation2], 473
      %v5465 = vld [vmem:[%s5464] ss:$2 sm:$0xf]
      %s5466 = scalar_lea.vmem [#allocation2], 481
      %v5467 = vld [vmem:[%s5466] ss:$2 sm:$0xff]
      %s5468 = scalar_lea.vmem [#allocation2], 497
      %v5469 = vld [vmem:[%s5468] ss:$2 sm:$0xf]
      %s5470 = scalar_lea.vmem [#allocation2], 505
      %v5471 = vld [vmem:[%s5470] ss:$2 sm:$0xff]
      %s5472 = scalar_lea.vmem [#allocation2], 521
      %v5473 = vld [vmem:[%s5472] ss:$2 sm:$0xf]
      %s5474 = scalar_lea.vmem [#allocation2], 529
      %v5475 = vld [vmem:[%s5474] ss:$2 sm:$0xff]
      %s5476 = scalar_lea.vmem [#allocation2], 545
      %v5477 = vld [vmem:[%s5476] ss:$2 sm:$0xf]
      %s5478 = scalar_lea.vmem [#allocation2], 553
      %v5479 = vld [vmem:[%s5478] ss:$2 sm:$0xff]
      %s5480 = scalar_lea.vmem [#allocation2], 569
      %v5481 = vld [vmem:[%s5480] ss:$2 sm:$0xf]
      %s5482 = scalar_lea.vmem [#allocation2], 577
      %v5483 = vld [vmem:[%s5482] ss:$2 sm:$0xff]
      %s5484 = scalar_lea.vmem [#allocation2], 593
      %v5485 = vld [vmem:[%s5484] ss:$2 sm:$0xf]
      %s5486 = scalar_lea.vmem [#allocation2], 601
      %v5487 = vld [vmem:[%s5486] ss:$2 sm:$0xff]
      %s5488 = scalar_lea.vmem [#allocation2], 617
      %v5489 = vld [vmem:[%s5488] ss:$2 sm:$0xf]
      %s5490 = scalar_lea.vmem [#allocation2], 625
      %v5491 = vld [vmem:[%s5490] ss:$2 sm:$0xff]
      %s5492 = scalar_lea.vmem [#allocation2], 641
      %v5493 = vld [vmem:[%s5492] ss:$2 sm:$0xf]
      %s5494 = scalar_lea.vmem [#allocation2], 649
      %v5495 = vld [vmem:[%s5494] ss:$2 sm:$0xff]
      %s5496 = scalar_lea.vmem [#allocation2], 665
      %v5497 = vld [vmem:[%s5496] ss:$2 sm:$0xf]
      %s5498 = scalar_lea.vmem [#allocation2], 673
      %v5499 = vld [vmem:[%s5498] ss:$2 sm:$0xff]
      %s5500 = scalar_lea.vmem [#allocation2], 689
      %v5501 = vld [vmem:[%s5500] ss:$2 sm:$0xf]
      %s5502 = scalar_lea.vmem [#allocation2], 697
      %v5503 = vld [vmem:[%s5502] ss:$2 sm:$0xff]
      %s5504 = scalar_lea.vmem [#allocation2], 713
      %v5505 = vld [vmem:[%s5504] ss:$2 sm:$0xf]
      %s5506 = scalar_lea.vmem [#allocation2], 721
      %v5507 = vld [vmem:[%s5506] ss:$2 sm:$0xff]
      %s5508 = scalar_lea.vmem [#allocation2], 737
      %v5509 = vld [vmem:[%s5508] ss:$2 sm:$0xf]
      %s5510 = scalar_lea.vmem [#allocation2], 745
      %v5511 = vld [vmem:[%s5510] ss:$2 sm:$0xff]
      %s5512 = scalar_lea.vmem [#allocation2], 761
      %v5513 = vld [vmem:[%s5512] ss:$2 sm:$0xf]
      %v5514 = vmax.f32 %v5259, %v5387
      %v5515 = vmax.f32 %v5261, %v5389
      %v5516 = vmax.f32 %v5263, %v5391
      %v5517 = vmax.f32 %v5265, %v5393
      %v5518 = vmax.f32 %v5267, %v5395
      %v5519 = vmax.f32 %v5269, %v5397
      %v5520 = vmax.f32 %v5271, %v5399
      %v5521 = vmax.f32 %v5273, %v5401
      %v5522 = vmax.f32 %v5275, %v5403
      %v5523 = vmax.f32 %v5277, %v5405
      %v5524 = vmax.f32 %v5279, %v5407
      %v5525 = vmax.f32 %v5281, %v5409
      %v5526 = vmax.f32 %v5283, %v5411
      %v5527 = vmax.f32 %v5285, %v5413
      %v5528 = vmax.f32 %v5287, %v5415
      %v5529 = vmax.f32 %v5289, %v5417
      %v5530 = vmax.f32 %v5291, %v5419
      %v5531 = vmax.f32 %v5293, %v5421
      %v5532 = vmax.f32 %v5295, %v5423
      %v5533 = vmax.f32 %v5297, %v5425
      %v5534 = vmax.f32 %v5299, %v5427
      %v5535 = vmax.f32 %v5301, %v5429
      %v5536 = vmax.f32 %v5303, %v5431
      %v5537 = vmax.f32 %v5305, %v5433
      %v5538 = vmax.f32 %v5307, %v5435
      %v5539 = vmax.f32 %v5309, %v5437
      %v5540 = vmax.f32 %v5311, %v5439
      %v5541 = vmax.f32 %v5313, %v5441
      %v5542 = vmax.f32 %v5315, %v5443
      %v5543 = vmax.f32 %v5317, %v5445
      %v5544 = vmax.f32 %v5319, %v5447
      %v5545 = vmax.f32 %v5321, %v5449
      %v5546 = vmax.f32 %v5323, %v5451
      %v5547 = vmax.f32 %v5325, %v5453
      %v5548 = vmax.f32 %v5327, %v5455
      %v5549 = vmax.f32 %v5329, %v5457
      %v5550 = vmax.f32 %v5331, %v5459
      %v5551 = vmax.f32 %v5333, %v5461
      %v5552 = vmax.f32 %v5335, %v5463
      %v5553 = vmax.f32 %v5337, %v5465
      %v5554 = vmax.f32 %v5339, %v5467
      %v5555 = vmax.f32 %v5341, %v5469
      %v5556 = vmax.f32 %v5343, %v5471
      %v5557 = vmax.f32 %v5345, %v5473
      %v5558 = vmax.f32 %v5347, %v5475
      %v5559 = vmax.f32 %v5349, %v5477
      %v5560 = vmax.f32 %v5351, %v5479
      %v5561 = vmax.f32 %v5353, %v5481
      %v5562 = vmax.f32 %v5355, %v5483
      %v5563 = vmax.f32 %v5357, %v5485
      %v5564 = vmax.f32 %v5359, %v5487
      %v5565 = vmax.f32 %v5361, %v5489
      %v5566 = vmax.f32 %v5363, %v5491
      %v5567 = vmax.f32 %v5365, %v5493
      %v5568 = vmax.f32 %v5367, %v5495
      %v5569 = vmax.f32 %v5369, %v5497
      %v5570 = vmax.f32 %v5371, %v5499
      %v5571 = vmax.f32 %v5373, %v5501
      %v5572 = vmax.f32 %v5375, %v5503
      %v5573 = vmax.f32 %v5377, %v5505
      %v5574 = vmax.f32 %v5379, %v5507
      %v5575 = vmax.f32 %v5381, %v5509
      %v5576 = vmax.f32 %v5383, %v5511
      %v5577 = vmax.f32 %v5385, %v5513
      %v5578 = vld [vmem:[%s2] sm:$0x1]
      %v5580 = vlaneseq
      %v5581 = vshrl.u32 %v5580, 7
      %v5582 = vsub.s32 0, %v5581
      %v5583 = vrot.slane %v5578, %v5582
      %v5585 = vadd.f32 %v5514, %v5583
      %v5586 = vadd.f32 %v5515, %v5583
      %v5587 = vadd.f32 %v5516, %v5583
      %v5588 = vadd.f32 %v5517, %v5583
      %v5589 = vadd.f32 %v5518, %v5583
      %v5590 = vadd.f32 %v5519, %v5583
      %v5591 = vadd.f32 %v5520, %v5583
      %v5592 = vadd.f32 %v5521, %v5583
      %v5593 = vadd.f32 %v5522, %v5583
      %v5594 = vadd.f32 %v5523, %v5583
      %v5595 = vadd.f32 %v5524, %v5583
      %v5596 = vadd.f32 %v5525, %v5583
      %v5597 = vadd.f32 %v5526, %v5583
      %v5598 = vadd.f32 %v5527, %v5583
      %v5599 = vadd.f32 %v5528, %v5583
      %v5600 = vadd.f32 %v5529, %v5583
      %v5601 = vadd.f32 %v5530, %v5583
      %v5602 = vadd.f32 %v5531, %v5583
      %v5603 = vadd.f32 %v5532, %v5583
      %v5604 = vadd.f32 %v5533, %v5583
      %v5605 = vadd.f32 %v5534, %v5583
      %v5606 = vadd.f32 %v5535, %v5583
      %v5607 = vadd.f32 %v5536, %v5583
      %v5608 = vadd.f32 %v5537, %v5583
      %v5609 = vadd.f32 %v5538, %v5583
      %v5610 = vadd.f32 %v5539, %v5583
      %v5611 = vadd.f32 %v5540, %v5583
      %v5612 = vadd.f32 %v5541, %v5583
      %v5613 = vadd.f32 %v5542, %v5583
      %v5614 = vadd.f32 %v5543, %v5583
      %v5615 = vadd.f32 %v5544, %v5583
      %v5616 = vadd.f32 %v5545, %v5583
      %v5617 = vadd.f32 %v5546, %v5583
      %v5618 = vadd.f32 %v5547, %v5583
      %v5619 = vadd.f32 %v5548, %v5583
      %v5620 = vadd.f32 %v5549, %v5583
      %v5621 = vadd.f32 %v5550, %v5583
      %v5622 = vadd.f32 %v5551, %v5583
      %v5623 = vadd.f32 %v5552, %v5583
      %v5624 = vadd.f32 %v5553, %v5583
      %v5625 = vadd.f32 %v5554, %v5583
      %v5626 = vadd.f32 %v5555, %v5583
      %v5627 = vadd.f32 %v5556, %v5583
      %v5628 = vadd.f32 %v5557, %v5583
      %v5629 = vadd.f32 %v5558, %v5583
      %v5630 = vadd.f32 %v5559, %v5583
      %v5631 = vadd.f32 %v5560, %v5583
      %v5632 = vadd.f32 %v5561, %v5583
      %v5633 = vadd.f32 %v5562, %v5583
      %v5634 = vadd.f32 %v5563, %v5583
      %v5635 = vadd.f32 %v5564, %v5583
      %v5636 = vadd.f32 %v5565, %v5583
      %v5637 = vadd.f32 %v5566, %v5583
      %v5638 = vadd.f32 %v5567, %v5583
      %v5639 = vadd.f32 %v5568, %v5583
      %v5640 = vadd.f32 %v5569, %v5583
      %v5641 = vadd.f32 %v5570, %v5583
      %v5642 = vadd.f32 %v5571, %v5583
      %v5643 = vadd.f32 %v5572, %v5583
      %v5644 = vadd.f32 %v5573, %v5583
      %v5645 = vadd.f32 %v5574, %v5583
      %v5646 = vadd.f32 %v5575, %v5583
      %v5647 = vadd.f32 %v5576, %v5583
      %v5648 = vadd.f32 %v5577, %v5583
      %v5649 = vmax.f32 %v5585, 0.0
      %v5650 = vmax.f32 %v5586, 0.0
      %v5651 = vmax.f32 %v5587, 0.0
      %v5652 = vmax.f32 %v5588, 0.0
      %v5653 = vmax.f32 %v5589, 0.0
      %v5654 = vmax.f32 %v5590, 0.0
      %v5655 = vmax.f32 %v5591, 0.0
      %v5656 = vmax.f32 %v5592, 0.0
      %v5657 = vmax.f32 %v5593, 0.0
      %v5658 = vmax.f32 %v5594, 0.0
      %v5659 = vmax.f32 %v5595, 0.0
      %v5660 = vmax.f32 %v5596, 0.0
      %v5661 = vmax.f32 %v5597, 0.0
      %v5662 = vmax.f32 %v5598, 0.0
      %v5663 = vmax.f32 %v5599, 0.0
      %v5664 = vmax.f32 %v5600, 0.0
      %v5665 = vmax.f32 %v5601, 0.0
      %v5666 = vmax.f32 %v5602, 0.0
      %v5667 = vmax.f32 %v5603, 0.0
      %v5668 = vmax.f32 %v5604, 0.0
      %v5669 = vmax.f32 %v5605, 0.0
      %v5670 = vmax.f32 %v5606, 0.0
      %v5671 = vmax.f32 %v5607, 0.0
      %v5672 = vmax.f32 %v5608, 0.0
      %v5673 = vmax.f32 %v5609, 0.0
      %v5674 = vmax.f32 %v5610, 0.0
      %v5675 = vmax.f32 %v5611, 0.0
      %v5676 = vmax.f32 %v5612, 0.0
      %v5677 = vmax.f32 %v5613, 0.0
      %v5678 = vmax.f32 %v5614, 0.0
      %v5679 = vmax.f32 %v5615, 0.0
      %v5680 = vmax.f32 %v5616, 0.0
      %v5681 = vmax.f32 %v5617, 0.0
      %v5682 = vmax.f32 %v5618, 0.0
      %v5683 = vmax.f32 %v5619, 0.0
      %v5684 = vmax.f32 %v5620, 0.0
      %v5685 = vmax.f32 %v5621, 0.0
      %v5686 = vmax.f32 %v5622, 0.0
      %v5687 = vmax.f32 %v5623, 0.0
      %v5688 = vmax.f32 %v5624, 0.0
      %v5689 = vmax.f32 %v5625, 0.0
      %v5690 = vmax.f32 %v5626, 0.0
      %v5691 = vmax.f32 %v5627, 0.0
      %v5692 = vmax.f32 %v5628, 0.0
      %v5693 = vmax.f32 %v5629, 0.0
      %v5694 = vmax.f32 %v5630, 0.0
      %v5695 = vmax.f32 %v5631, 0.0
      %v5696 = vmax.f32 %v5632, 0.0
      %v5697 = vmax.f32 %v5633, 0.0
      %v5698 = vmax.f32 %v5634, 0.0
      %v5699 = vmax.f32 %v5635, 0.0
      %v5700 = vmax.f32 %v5636, 0.0
      %v5701 = vmax.f32 %v5637, 0.0
      %v5702 = vmax.f32 %v5638, 0.0
      %v5703 = vmax.f32 %v5639, 0.0
      %v5704 = vmax.f32 %v5640, 0.0
      %v5705 = vmax.f32 %v5641, 0.0
      %v5706 = vmax.f32 %v5642, 0.0
      %v5707 = vmax.f32 %v5643, 0.0
      %v5708 = vmax.f32 %v5644, 0.0
      %v5709 = vmax.f32 %v5645, 0.0
      %v5710 = vmax.f32 %v5646, 0.0
      %v5711 = vmax.f32 %v5647, 0.0
      %v5712 = vmax.f32 %v5648, 0.0
      %5713 = vst [vmem:[#allocation3] sm:$0xff] %v5649
      %5714 = vst [vmem:[#allocation3 + $0x8] sm:$0xf] %v5650
      %5715 = vst [vmem:[#allocation3 + $0x10] sm:$0xff] %v5651
      %5716 = vst [vmem:[#allocation3 + $0x18] sm:$0xf] %v5652
      %5717 = vst [vmem:[#allocation3 + $0x20] sm:$0xff] %v5653
      %5718 = vst [vmem:[#allocation3 + $0x28] sm:$0xf] %v5654
      %5719 = vst [vmem:[#allocation3 + $0x30] sm:$0xff] %v5655
      %5720 = vst [vmem:[#allocation3 + $0x38] sm:$0xf] %v5656
      %5721 = vst [vmem:[#allocation3 + $0x40] sm:$0xff] %v5657
      %5722 = vst [vmem:[#allocation3 + $0x48] sm:$0xf] %v5658
      %5723 = vst [vmem:[#allocation3 + $0x50] sm:$0xff] %v5659
      %5724 = vst [vmem:[#allocation3 + $0x58] sm:$0xf] %v5660
      %5725 = vst [vmem:[#allocation3 + $0x60] sm:$0xff] %v5661
      %5726 = vst [vmem:[#allocation3 + $0x68] sm:$0xf] %v5662
      %5727 = vst [vmem:[#allocation3 + $0x70] sm:$0xff] %v5663
      %5728 = vst [vmem:[#allocation3 + $0x78] sm:$0xf] %v5664
      %5729 = vst [vmem:[#allocation3 + $0x80] sm:$0xff] %v5665
      %5730 = vst [vmem:[#allocation3 + $0x88] sm:$0xf] %v5666
      %5731 = vst [vmem:[#allocation3 + $0x90] sm:$0xff] %v5667
      %5732 = vst [vmem:[#allocation3 + $0x98] sm:$0xf] %v5668
      %5733 = vst [vmem:[#allocation3 + $0xa0] sm:$0xff] %v5669
      %5734 = vst [vmem:[#allocation3 + $0xa8] sm:$0xf] %v5670
      %5735 = vst [vmem:[#allocation3 + $0xb0] sm:$0xff] %v5671
      %5736 = vst [vmem:[#allocation3 + $0xb8] sm:$0xf] %v5672
      %5737 = vst [vmem:[#allocation3 + $0xc0] sm:$0xff] %v5673
      %5738 = vst [vmem:[#allocation3 + $0xc8] sm:$0xf] %v5674
      %5739 = vst [vmem:[#allocation3 + $0xd0] sm:$0xff] %v5675
      %5740 = vst [vmem:[#allocation3 + $0xd8] sm:$0xf] %v5676
      %5741 = vst [vmem:[#allocation3 + $0xe0] sm:$0xff] %v5677
      %5742 = vst [vmem:[#allocation3 + $0xe8] sm:$0xf] %v5678
      %5743 = vst [vmem:[#allocation3 + $0xf0] sm:$0xff] %v5679
      %5744 = vst [vmem:[#allocation3 + $0xf8] sm:$0xf] %v5680
      %5745 = vst [vmem:[#allocation3 + $0x100] sm:$0xff] %v5681
      %5746 = vst [vmem:[#allocation3 + $0x108] sm:$0xf] %v5682
      %5747 = vst [vmem:[#allocation3 + $0x110] sm:$0xff] %v5683
      %5748 = vst [vmem:[#allocation3 + $0x118] sm:$0xf] %v5684
      %5749 = vst [vmem:[#allocation3 + $0x120] sm:$0xff] %v5685
      %5750 = vst [vmem:[#allocation3 + $0x128] sm:$0xf] %v5686
      %5751 = vst [vmem:[#allocation3 + $0x130] sm:$0xff] %v5687
      %5752 = vst [vmem:[#allocation3 + $0x138] sm:$0xf] %v5688
      %5753 = vst [vmem:[#allocation3 + $0x140] sm:$0xff] %v5689
      %5754 = vst [vmem:[#allocation3 + $0x148] sm:$0xf] %v5690
      %5755 = vst [vmem:[#allocation3 + $0x150] sm:$0xff] %v5691
      %5756 = vst [vmem:[#allocation3 + $0x158] sm:$0xf] %v5692
      %5757 = vst [vmem:[#allocation3 + $0x160] sm:$0xff] %v5693
      %5758 = vst [vmem:[#allocation3 + $0x168] sm:$0xf] %v5694
      %5759 = vst [vmem:[#allocation3 + $0x170] sm:$0xff] %v5695
      %5760 = vst [vmem:[#allocation3 + $0x178] sm:$0xf] %v5696
      %5761 = vst [vmem:[#allocation3 + $0x180] sm:$0xff] %v5697
      %5762 = vst [vmem:[#allocation3 + $0x188] sm:$0xf] %v5698
      %5763 = vst [vmem:[#allocation3 + $0x190] sm:$0xff] %v5699
      %5764 = vst [vmem:[#allocation3 + $0x198] sm:$0xf] %v5700
      %5765 = vst [vmem:[#allocation3 + $0x1a0] sm:$0xff] %v5701
      %5766 = vst [vmem:[#allocation3 + $0x1a8] sm:$0xf] %v5702
      %5767 = vst [vmem:[#allocation3 + $0x1b0] sm:$0xff] %v5703
      %5768 = vst [vmem:[#allocation3 + $0x1b8] sm:$0xf] %v5704
      %5769 = vst [vmem:[#allocation3 + $0x1c0] sm:$0xff] %v5705
      %5770 = vst [vmem:[#allocation3 + $0x1c8] sm:$0xf] %v5706
      %5771 = vst [vmem:[#allocation3 + $0x1d0] sm:$0xff] %v5707
      %5772 = vst [vmem:[#allocation3 + $0x1d8] sm:$0xf] %v5708
      %5773 = vst [vmem:[#allocation3 + $0x1e0] sm:$0xff] %v5709
      %5774 = vst [vmem:[#allocation3 + $0x1e8] sm:$0xf] %v5710
      %5775 = vst [vmem:[#allocation3 + $0x1f0] sm:$0xff] %v5711
      %5776 = vst [vmem:[#allocation3 + $0x1f8] sm:$0xf] %v5712
      %v5777 = vld [vmem:[#allocation3] sm:$0xff]
      %v5778 = vld [vmem:[#allocation3 + $0x10] sm:$0xff]
      %v5779 = vld [vmem:[#allocation3 + $0x20] sm:$0xff]
      %v5780 = vld [vmem:[#allocation3 + $0x30] sm:$0xff]
      %v5781 = vld [vmem:[#allocation3 + $0x40] sm:$0xff]
      %v5782 = vld [vmem:[#allocation3 + $0x50] sm:$0xff]
      %v5783 = vld [vmem:[#allocation3 + $0x60] sm:$0xff]
      %v5784 = vld [vmem:[#allocation3 + $0x70] sm:$0xff]
      %v5785 = vld [vmem:[#allocation3 + $0x80] sm:$0xff]
      %v5786 = vld [vmem:[#allocation3 + $0x90] sm:$0xff]
      %v5787 = vld [vmem:[#allocation3 + $0xa0] sm:$0xff]
      %v5788 = vld [vmem:[#allocation3 + $0xb0] sm:$0xff]
      %v5789 = vld [vmem:[#allocation3 + $0xc0] sm:$0xff]
      %v5790 = vld [vmem:[#allocation3 + $0xd0] sm:$0xff]
      %v5791 = vld [vmem:[#allocation3 + $0xe0] sm:$0xff]
      %v5792 = vld [vmem:[#allocation3 + $0xf0] sm:$0xff]
      %v5793 = vld [vmem:[#allocation3 + $0x100] sm:$0xff]
      %v5794 = vld [vmem:[#allocation3 + $0x110] sm:$0xff]
      %v5795 = vld [vmem:[#allocation3 + $0x120] sm:$0xff]
      %v5796 = vld [vmem:[#allocation3 + $0x130] sm:$0xff]
      %v5797 = vld [vmem:[#allocation3 + $0x140] sm:$0xff]
      %v5798 = vld [vmem:[#allocation3 + $0x150] sm:$0xff]
      %v5799 = vld [vmem:[#allocation3 + $0x160] sm:$0xff]
      %v5800 = vld [vmem:[#allocation3 + $0x170] sm:$0xff]
      %v5801 = vld [vmem:[#allocation3 + $0x180] sm:$0xff]
      %v5802 = vld [vmem:[#allocation3 + $0x190] sm:$0xff]
      %v5803 = vld [vmem:[#allocation3 + $0x1a0] sm:$0xff]
      %v5804 = vld [vmem:[#allocation3 + $0x1b0] sm:$0xff]
      %v5805 = vld [vmem:[#allocation3 + $0x1c0] sm:$0xff]
      %v5806 = vld [vmem:[#allocation3 + $0x1d0] sm:$0xff]
      %v5807 = vld [vmem:[#allocation3 + $0x1e0] sm:$0xff]
      %v5808 = vld [vmem:[#allocation3 + $0x1f0] sm:$0xff]
      %v5809 = vpack.c.bf16 %v5778, %v5777
      %v5810 = vpack.c.bf16 %v5780, %v5779
      %v5811 = vpack.c.bf16 %v5782, %v5781
      %v5812 = vpack.c.bf16 %v5784, %v5783
      %v5813 = vpack.c.bf16 %v5786, %v5785
      %v5814 = vpack.c.bf16 %v5788, %v5787
      %v5815 = vpack.c.bf16 %v5790, %v5789
      %v5816 = vpack.c.bf16 %v5792, %v5791
      %v5817 = vpack.c.bf16 %v5794, %v5793
      %v5818 = vpack.c.bf16 %v5796, %v5795
      %v5819 = vpack.c.bf16 %v5798, %v5797
      %v5820 = vpack.c.bf16 %v5800, %v5799
      %v5821 = vpack.c.bf16 %v5802, %v5801
      %v5822 = vpack.c.bf16 %v5804, %v5803
      %v5823 = vpack.c.bf16 %v5806, %v5805
      %v5824 = vpack.c.bf16 %v5808, %v5807
      %v5825 = vld [vmem:[%s3] sm:$0xff]
      %v5826 = vld [vmem:[%s3 + $0x8] sm:$0xff]
      %v5827 = vld [vmem:[%s3 + $0x10] sm:$0xff]
      %v5828 = vld [vmem:[%s3 + $0x18] sm:$0xff]
      %v5829 = vld [vmem:[%s3 + $0x20] sm:$0xff]
      %v5830 = vld [vmem:[%s3 + $0x28] sm:$0xff]
      %v5831 = vld [vmem:[%s3 + $0x30] sm:$0xff]
      %v5832 = vld [vmem:[%s3 + $0x38] sm:$0xff]
      %v5833 = vld [vmem:[%s3 + $0x40] sm:$0xff]
      %v5834 = vld [vmem:[%s3 + $0x48] sm:$0xff]
      %v5835 = vld [vmem:[%s3 + $0x50] sm:$0xff]
      %v5836 = vld [vmem:[%s3 + $0x58] sm:$0xff]
      %v5837 = vld [vmem:[%s3 + $0x60] sm:$0xff]
      %v5838 = vld [vmem:[%s3 + $0x68] sm:$0xff]
      %v5839 = vld [vmem:[%s3 + $0x70] sm:$0xff]
      %v5840 = vld [vmem:[%s3 + $0x78] sm:$0xff]
      %v5841 = vld [vmem:[#allocation3 + $0x1] sm:$0xff]
      %v5842 = vld [vmem:[#allocation3 + $0x11] sm:$0xff]
      %v5843 = vld [vmem:[#allocation3 + $0x21] sm:$0xff]
      %v5844 = vld [vmem:[#allocation3 + $0x31] sm:$0xff]
      %v5845 = vld [vmem:[#allocation3 + $0x41] sm:$0xff]
      %v5846 = vld [vmem:[#allocation3 + $0x51] sm:$0xff]
      %v5847 = vld [vmem:[#allocation3 + $0x61] sm:$0xff]
      %v5848 = vld [vmem:[#allocation3 + $0x71] sm:$0xff]
      %v5849 = vld [vmem:[#allocation3 + $0x81] sm:$0xff]
      %v5850 = vld [vmem:[#allocation3 + $0x91] sm:$0xff]
      %v5851 = vld [vmem:[#allocation3 + $0xa1] sm:$0xff]
      %v5852 = vld [vmem:[#allocation3 + $0xb1] sm:$0xff]
      %v5853 = vld [vmem:[#allocation3 + $0xc1] sm:$0xff]
      %v5854 = vld [vmem:[#allocation3 + $0xd1] sm:$0xff]
      %v5855 = vld [vmem:[#allocation3 + $0xe1] sm:$0xff]
      %v5856 = vld [vmem:[#allocation3 + $0xf1] sm:$0xff]
      %v5857 = vld [vmem:[#allocation3 + $0x101] sm:$0xff]
      %v5858 = vld [vmem:[#allocation3 + $0x111] sm:$0xff]
      %v5859 = vld [vmem:[#allocation3 + $0x121] sm:$0xff]
      %v5860 = vld [vmem:[#allocation3 + $0x131] sm:$0xff]
      %v5861 = vld [vmem:[#allocation3 + $0x141] sm:$0xff]
      %v5862 = vld [vmem:[#allocation3 + $0x151] sm:$0xff]
      %v5863 = vld [vmem:[#allocation3 + $0x161] sm:$0xff]
      %v5864 = vld [vmem:[#allocation3 + $0x171] sm:$0xff]
      %v5865 = vld [vmem:[#allocation3 + $0x181] sm:$0xff]
      %v5866 = vld [vmem:[#allocation3 + $0x191] sm:$0xff]
      %v5867 = vld [vmem:[#allocation3 + $0x1a1] sm:$0xff]
      %v5868 = vld [vmem:[#allocation3 + $0x1b1] sm:$0xff]
      %v5869 = vld [vmem:[#allocation3 + $0x1c1] sm:$0xff]
      %v5870 = vld [vmem:[#allocation3 + $0x1d1] sm:$0xff]
      %v5871 = vld [vmem:[#allocation3 + $0x1e1] sm:$0xff]
      %v5872 = vld [vmem:[#allocation3 + $0x1f1] sm:$0xff]
      %v5873 = vpack.c.bf16 %v5842, %v5841
      %v5874 = vpack.c.bf16 %v5844, %v5843
      %v5875 = vpack.c.bf16 %v5846, %v5845
      %v5876 = vpack.c.bf16 %v5848, %v5847
      %v5877 = vpack.c.bf16 %v5850, %v5849
      %v5878 = vpack.c.bf16 %v5852, %v5851
      %v5879 = vpack.c.bf16 %v5854, %v5853
      %v5880 = vpack.c.bf16 %v5856, %v5855
      %v5881 = vpack.c.bf16 %v5858, %v5857
      %v5882 = vpack.c.bf16 %v5860, %v5859
      %v5883 = vpack.c.bf16 %v5862, %v5861
      %v5884 = vpack.c.bf16 %v5864, %v5863
      %v5885 = vpack.c.bf16 %v5866, %v5865
      %v5886 = vpack.c.bf16 %v5868, %v5867
      %v5887 = vpack.c.bf16 %v5870, %v5869
      %v5888 = vpack.c.bf16 %v5872, %v5871
      %s5889 = scalar_lea.vmem %s3, 128
      %v5890 = vld [vmem:[%s5889] sm:$0xff]
      %v5891 = vld [vmem:[%s5889 + $0x8] sm:$0xff]
      %v5892 = vld [vmem:[%s5889 + $0x10] sm:$0xff]
      %v5893 = vld [vmem:[%s5889 + $0x18] sm:$0xff]
      %v5894 = vld [vmem:[%s5889 + $0x20] sm:$0xff]
      %v5895 = vld [vmem:[%s5889 + $0x28] sm:$0xff]
      %v5896 = vld [vmem:[%s5889 + $0x30] sm:$0xff]
      %v5897 = vld [vmem:[%s5889 + $0x38] sm:$0xff]
      %v5898 = vld [vmem:[%s5889 + $0x40] sm:$0xff]
      %v5899 = vld [vmem:[%s5889 + $0x48] sm:$0xff]
      %v5900 = vld [vmem:[%s5889 + $0x50] sm:$0xff]
      %v5901 = vld [vmem:[%s5889 + $0x58] sm:$0xff]
      %v5902 = vld [vmem:[%s5889 + $0x60] sm:$0xff]
      %v5903 = vld [vmem:[%s5889 + $0x68] sm:$0xff]
      %v5904 = vld [vmem:[%s5889 + $0x70] sm:$0xff]
      %v5905 = vld [vmem:[%s5889 + $0x78] sm:$0xff]
      %v5922 = vunpack.c.l.b16 %v5890
      %v5923 = vunpack.c.h.b16 %v5890
      %v5924 = vunpack.c.l.b16 %v5891
      %v5925 = vunpack.c.h.b16 %v5891
      %v5926 = vunpack.c.l.b16 %v5892
      %v5927 = vunpack.c.h.b16 %v5892
      %v5928 = vunpack.c.l.b16 %v5893
      %v5929 = vunpack.c.h.b16 %v5893
      %v5930 = vunpack.c.l.b16 %v5894
      %v5931 = vunpack.c.h.b16 %v5894
      %v5932 = vunpack.c.l.b16 %v5895
      %v5933 = vunpack.c.h.b16 %v5895
      %v5934 = vunpack.c.l.b16 %v5896
      %v5935 = vunpack.c.h.b16 %v5896
      %v5936 = vunpack.c.l.b16 %v5897
      %v5937 = vunpack.c.h.b16 %v5897
      %v5938 = vunpack.c.l.b16 %v5898
      %v5939 = vunpack.c.h.b16 %v5898
      %v5940 = vunpack.c.l.b16 %v5899
      %v5941 = vunpack.c.h.b16 %v5899
      %v5942 = vunpack.c.l.b16 %v5900
      %v5943 = vunpack.c.h.b16 %v5900
      %v5944 = vunpack.c.l.b16 %v5901
      %v5945 = vunpack.c.h.b16 %v5901
      %v5946 = vunpack.c.l.b16 %v5902
      %v5947 = vunpack.c.h.b16 %v5902
      %v5948 = vunpack.c.l.b16 %v5903
      %v5949 = vunpack.c.h.b16 %v5903
      %v5950 = vunpack.c.l.b16 %v5904
      %v5951 = vunpack.c.h.b16 %v5904
      %v5952 = vunpack.c.l.b16 %v5905
      %v5953 = vunpack.c.h.b16 %v5905
      %v5954 = vpack.c.b16 %v5924, %v5922
      %v5955 = vpack.c.b16 %v5925, %v5923
      %v5956 = vpack.c.b16 %v5928, %v5926
      %v5957 = vpack.c.b16 %v5929, %v5927
      %v5958 = vpack.c.b16 %v5932, %v5930
      %v5959 = vpack.c.b16 %v5933, %v5931
      %v5960 = vpack.c.b16 %v5936, %v5934
      %v5961 = vpack.c.b16 %v5937, %v5935
      %v5962 = vpack.c.b16 %v5940, %v5938
      %v5963 = vpack.c.b16 %v5941, %v5939
      %v5964 = vpack.c.b16 %v5944, %v5942
      %v5965 = vpack.c.b16 %v5945, %v5943
      %v5966 = vpack.c.b16 %v5948, %v5946
      %v5967 = vpack.c.b16 %v5949, %v5947
      %v5968 = vpack.c.b16 %v5952, %v5950
      %v5969 = vpack.c.b16 %v5953, %v5951
      %5986 = vmatprep.subr.bf16.mxu0 %v5955
      %5987 = vmatpush1.bf16.msra.mxu0 %v5954
      %5988 = vmatprep.subr.bf16.mxu0 %v5957
      %5989 = vmatpush1.bf16.msra.mxu0 %v5956
      %5990 = vmatprep.subr.bf16.mxu0 %v5959
      %5991 = vmatpush1.bf16.msra.mxu0 %v5958
      %5992 = vmatprep.subr.bf16.mxu0 %v5961
      %5993 = vmatpush1.bf16.msra.mxu0 %v5960
      %5994 = vmatprep.subr.bf16.mxu0 %v5963
      %5995 = vmatpush1.bf16.msra.mxu0 %v5962
      %5996 = vmatprep.subr.bf16.mxu0 %v5965
      %5997 = vmatpush1.bf16.msra.mxu0 %v5964
      %5998 = vmatprep.subr.bf16.mxu0 %v5967
      %5999 = vmatpush1.bf16.msra.mxu0 %v5966
      %6000 = vmatprep.subr.bf16.mxu0 %v5969
      %6001 = vmatpush1.bf16.msra.mxu0 %v5968
      %6002 = vmatprep.subr.bf16.mxu0 0
      %6003 = vmatpush1.bf16.msra.mxu0 0
      %6004 = vmatprep.subr.bf16.mxu0 0
      %6005 = vmatpush1.bf16.msra.mxu0 0
      %6006 = vmatprep.subr.bf16.mxu0 0
      %6007 = vmatpush1.bf16.msra.mxu0 0
      %6008 = vmatprep.subr.bf16.mxu0 0
      %6009 = vmatpush1.bf16.msra.mxu0 0
      %6010 = vmatprep.subr.bf16.mxu0 0
      %6011 = vmatpush1.bf16.msra.mxu0 0
      %6012 = vmatprep.subr.bf16.mxu0 0
      %6013 = vmatpush1.bf16.msra.mxu0 0
      %6014 = vmatprep.subr.bf16.mxu0 0
      %6015 = vmatpush1.bf16.msra.mxu0 0
      %6016 = vmatprep.subr.bf16.mxu0 0
      %6017 = vmatpush1.bf16.msra.mxu0 0
      %6018 = vmatprep.mubr.bf16.mxu0 0
      %6019 = vmatmul.mubr.bf16.gmra.mrb[0].mxu0 %v5873
      %v6020 = vpop.f32.mrb[0].mxu0
      %v6021 = vadd.f32 0.0, %v6020
      %v6022 = vpop.f32.mrb[0].mxu0
      %v6023 = vadd.f32 0.0, %v6022
      %v6024 = vpop.f32.mrb[0].mxu0
      %v6025 = vadd.f32 0.0, %v6024
      %v6026 = vpop.f32.mrb[0].mxu0
      %v6027 = vadd.f32 0.0, %v6026
      %6028 = vmatprep.mubr.bf16.mxu0 0
      %6029 = vmatmul.mubr.bf16.gmra.mrb[0].mxu0 %v5874
      %v6030 = vpop.f32.mrb[0].mxu0
      %v6031 = vadd.f32 0.0, %v6030
      %v6032 = vpop.f32.mrb[0].mxu0
      %v6033 = vadd.f32 0.0, %v6032
      %v6034 = vpop.f32.mrb[0].mxu0
      %v6035 = vadd.f32 0.0, %v6034
      %v6036 = vpop.f32.mrb[0].mxu0
      %v6037 = vadd.f32 0.0, %v6036
      %6038 = vmatprep.mubr.bf16.mxu0 0
      %6039 = vmatmul.mubr.bf16.gmra.mrb[0].mxu0 %v5875
      %v6040 = vpop.f32.mrb[0].mxu0
      %v6041 = vadd.f32 0.0, %v6040
      %v6042 = vpop.f32.mrb[0].mxu0
      %v6043 = vadd.f32 0.0, %v6042
      %v6044 = vpop.f32.mrb[0].mxu0
      %v6045 = vadd.f32 0.0, %v6044
      %v6046 = vpop.f32.mrb[0].mxu0
      %v6047 = vadd.f32 0.0, %v6046
      %6048 = vmatprep.mubr.bf16.mxu0 0
      %6049 = vmatmul.mubr.bf16.gmra.mrb[0].mxu0 %v5876
      %v6050 = vpop.f32.mrb[0].mxu0
      %v6051 = vadd.f32 0.0, %v6050
      %v6052 = vpop.f32.mrb[0].mxu0
      %v6053 = vadd.f32 0.0, %v6052
      %v6054 = vpop.f32.mrb[0].mxu0
      %v6055 = vadd.f32 0.0, %v6054
      %v6056 = vpop.f32.mrb[0].mxu0
      %v6057 = vadd.f32 0.0, %v6056
      %6058 = vmatprep.mubr.bf16.mxu0 0
      %6059 = vmatmul.mubr.bf16.gmra.mrb[0].mxu0 %v5877
      %v6060 = vpop.f32.mrb[0].mxu0
      %v6061 = vadd.f32 0.0, %v6060
      %v6062 = vpop.f32.mrb[0].mxu0
      %v6063 = vadd.f32 0.0, %v6062
      %v6064 = vpop.f32.mrb[0].mxu0
      %v6065 = vadd.f32 0.0, %v6064
      %v6066 = vpop.f32.mrb[0].mxu0
      %v6067 = vadd.f32 0.0, %v6066
      %6068 = vmatprep.mubr.bf16.mxu0 0
      %6069 = vmatmul.mubr.bf16.gmra.mrb[0].mxu0 %v5878
      %v6070 = vpop.f32.mrb[0].mxu0
      %v6071 = vadd.f32 0.0, %v6070
      %v6072 = vpop.f32.mrb[0].mxu0
      %v6073 = vadd.f32 0.0, %v6072
      %v6074 = vpop.f32.mrb[0].mxu0
      %v6075 = vadd.f32 0.0, %v6074
      %v6076 = vpop.f32.mrb[0].mxu0
      %v6077 = vadd.f32 0.0, %v6076
      %6078 = vmatprep.mubr.bf16.mxu0 0
      %6079 = vmatmul.mubr.bf16.gmra.mrb[0].mxu0 %v5879
      %v6080 = vpop.f32.mrb[0].mxu0
      %v6081 = vadd.f32 0.0, %v6080
      %v6082 = vpop.f32.mrb[0].mxu0
      %v6083 = vadd.f32 0.0, %v6082
      %v6084 = vpop.f32.mrb[0].mxu0
      %v6085 = vadd.f32 0.0, %v6084
      %v6086 = vpop.f32.mrb[0].mxu0
      %v6087 = vadd.f32 0.0, %v6086
      %6088 = vmatprep.mubr.bf16.mxu0 0
      %6089 = vmatmul.mubr.bf16.gmra.mrb[0].mxu0 %v5880
      %v6090 = vpop.f32.mrb[0].mxu0
      %v6091 = vadd.f32 0.0, %v6090
      %v6092 = vpop.f32.mrb[0].mxu0
      %v6093 = vadd.f32 0.0, %v6092
      %v6094 = vpop.f32.mrb[0].mxu0
      %v6095 = vadd.f32 0.0, %v6094
      %v6096 = vpop.f32.mrb[0].mxu0
      %v6097 = vadd.f32 0.0, %v6096
      %6098 = vmatprep.mubr.bf16.mxu0 0
      %6099 = vmatmul.mubr.bf16.gmra.mrb[0].mxu0 %v5881
      %v6100 = vpop.f32.mrb[0].mxu0
      %v6101 = vadd.f32 0.0, %v6100
      %v6102 = vpop.f32.mrb[0].mxu0
      %v6103 = vadd.f32 0.0, %v6102
      %v6104 = vpop.f32.mrb[0].mxu0
      %v6105 = vadd.f32 0.0, %v6104
      %v6106 = vpop.f32.mrb[0].mxu0
      %v6107 = vadd.f32 0.0, %v6106
      %6108 = vmatprep.mubr.bf16.mxu0 0
      %6109 = vmatmul.mubr.bf16.gmra.mrb[0].mxu0 %v5882
      %v6110 = vpop.f32.mrb[0].mxu0
      %v6111 = vadd.f32 0.0, %v6110
      %v6112 = vpop.f32.mrb[0].mxu0
      %v6113 = vadd.f32 0.0, %v6112
      %v6114 = vpop.f32.mrb[0].mxu0
      %v6115 = vadd.f32 0.0, %v6114
      %v6116 = vpop.f32.mrb[0].mxu0
      %v6117 = vadd.f32 0.0, %v6116
      %6118 = vmatprep.mubr.bf16.mxu0 0
      %6119 = vmatmul.mubr.bf16.gmra.mrb[0].mxu0 %v5883
      %v6120 = vpop.f32.mrb[0].mxu0
      %v6121 = vadd.f32 0.0, %v6120
      %v6122 = vpop.f32.mrb[0].mxu0
      %v6123 = vadd.f32 0.0, %v6122
      %v6124 = vpop.f32.mrb[0].mxu0
      %v6125 = vadd.f32 0.0, %v6124
      %v6126 = vpop.f32.mrb[0].mxu0
      %v6127 = vadd.f32 0.0, %v6126
      %6128 = vmatprep.mubr.bf16.mxu0 0
      %6129 = vmatmul.mubr.bf16.gmra.mrb[0].mxu0 %v5884
      %v6130 = vpop.f32.mrb[0].mxu0
      %v6131 = vadd.f32 0.0, %v6130
      %v6132 = vpop.f32.mrb[0].mxu0
      %v6133 = vadd.f32 0.0, %v6132
      %v6134 = vpop.f32.mrb[0].mxu0
      %v6135 = vadd.f32 0.0, %v6134
      %v6136 = vpop.f32.mrb[0].mxu0
      %v6137 = vadd.f32 0.0, %v6136
      %6138 = vmatprep.mubr.bf16.mxu0 0
      %6139 = vmatmul.mubr.bf16.gmra.mrb[0].mxu0 %v5885
      %v6140 = vpop.f32.mrb[0].mxu0
      %v6141 = vadd.f32 0.0, %v6140
      %v6142 = vpop.f32.mrb[0].mxu0
      %v6143 = vadd.f32 0.0, %v6142
      %v6144 = vpop.f32.mrb[0].mxu0
      %v6145 = vadd.f32 0.0, %v6144
      %v6146 = vpop.f32.mrb[0].mxu0
      %v6147 = vadd.f32 0.0, %v6146
      %6148 = vmatprep.mubr.bf16.mxu0 0
      %6149 = vmatmul.mubr.bf16.gmra.mrb[0].mxu0 %v5886
      %v6150 = vpop.f32.mrb[0].mxu0
      %v6151 = vadd.f32 0.0, %v6150
      %v6152 = vpop.f32.mrb[0].mxu0
      %v6153 = vadd.f32 0.0, %v6152
      %v6154 = vpop.f32.mrb[0].mxu0
      %v6155 = vadd.f32 0.0, %v6154
      %v6156 = vpop.f32.mrb[0].mxu0
      %v6157 = vadd.f32 0.0, %v6156
      %6158 = vmatprep.mubr.bf16.mxu0 0
      %6159 = vmatmul.mubr.bf16.gmra.mrb[0].mxu0 %v5887
      %v6160 = vpop.f32.mrb[0].mxu0
      %v6161 = vadd.f32 0.0, %v6160
      %v6162 = vpop.f32.mrb[0].mxu0
      %v6163 = vadd.f32 0.0, %v6162
      %v6164 = vpop.f32.mrb[0].mxu0
      %v6165 = vadd.f32 0.0, %v6164
      %v6166 = vpop.f32.mrb[0].mxu0
      %v6167 = vadd.f32 0.0, %v6166
      %6168 = vmatprep.mubr.bf16.mxu0 0
      %6169 = vmatmul.mubr.bf16.gmra.mrb[0].mxu0 %v5888
      %v6170 = vpop.f32.mrb[0].mxu0
      %v6171 = vadd.f32 0.0, %v6170
      %v6172 = vpop.f32.mrb[0].mxu0
      %v6173 = vadd.f32 0.0, %v6172
      %v6174 = vpop.f32.mrb[0].mxu0
      %v6175 = vadd.f32 0.0, %v6174
      %v6176 = vpop.f32.mrb[0].mxu0
      %v6177 = vadd.f32 0.0, %v6176
      %6178 = vdwg.mxu0
      %v6195 = vunpack.c.l.b16 %v5825
      %v6196 = vunpack.c.h.b16 %v5825
      %v6197 = vunpack.c.l.b16 %v5826
      %v6198 = vunpack.c.h.b16 %v5826
      %v6199 = vunpack.c.l.b16 %v5827
      %v6200 = vunpack.c.h.b16 %v5827
      %v6201 = vunpack.c.l.b16 %v5828
      %v6202 = vunpack.c.h.b16 %v5828
      %v6203 = vunpack.c.l.b16 %v5829
      %v6204 = vunpack.c.h.b16 %v5829
      %v6205 = vunpack.c.l.b16 %v5830
      %v6206 = vunpack.c.h.b16 %v5830
      %v6207 = vunpack.c.l.b16 %v5831
      %v6208 = vunpack.c.h.b16 %v5831
      %v6209 = vunpack.c.l.b16 %v5832
      %v6210 = vunpack.c.h.b16 %v5832
      %v6211 = vunpack.c.l.b16 %v5833
      %v6212 = vunpack.c.h.b16 %v5833
      %v6213 = vunpack.c.l.b16 %v5834
      %v6214 = vunpack.c.h.b16 %v5834
      %v6215 = vunpack.c.l.b16 %v5835
      %v6216 = vunpack.c.h.b16 %v5835
      %v6217 = vunpack.c.l.b16 %v5836
      %v6218 = vunpack.c.h.b16 %v5836
      %v6219 = vunpack.c.l.b16 %v5837
      %v6220 = vunpack.c.h.b16 %v5837
      %v6221 = vunpack.c.l.b16 %v5838
      %v6222 = vunpack.c.h.b16 %v5838
      %v6223 = vunpack.c.l.b16 %v5839
      %v6224 = vunpack.c.h.b16 %v5839
      %v6225 = vunpack.c.l.b16 %v5840
      %v6226 = vunpack.c.h.b16 %v5840
      %v6227 = vpack.c.b16 %v6197, %v6195
      %v6228 = vpack.c.b16 %v6198, %v6196
      %v6229 = vpack.c.b16 %v6201, %v6199
      %v6230 = vpack.c.b16 %v6202, %v6200
      %v6231 = vpack.c.b16 %v6205, %v6203
      %v6232 = vpack.c.b16 %v6206, %v6204
      %v6233 = vpack.c.b16 %v6209, %v6207
      %v6234 = vpack.c.b16 %v6210, %v6208
      %v6235 = vpack.c.b16 %v6213, %v6211
      %v6236 = vpack.c.b16 %v6214, %v6212
      %v6237 = vpack.c.b16 %v6217, %v6215
      %v6238 = vpack.c.b16 %v6218, %v6216
      %v6239 = vpack.c.b16 %v6221, %v6219
      %v6240 = vpack.c.b16 %v6222, %v6220
      %v6241 = vpack.c.b16 %v6225, %v6223
      %v6242 = vpack.c.b16 %v6226, %v6224
      %6259 = vmatprep.subr.bf16.mxu0 %v6228
      %6260 = vmatpush1.bf16.msra.mxu0 %v6227
      %6261 = vmatprep.subr.bf16.mxu0 %v6230
      %6262 = vmatpush1.bf16.msra.mxu0 %v6229
      %6263 = vmatprep.subr.bf16.mxu0 %v6232
      %6264 = vmatpush1.bf16.msra.mxu0 %v6231
      %6265 = vmatprep.subr.bf16.mxu0 %v6234
      %6266 = vmatpush1.bf16.msra.mxu0 %v6233
      %6267 = vmatprep.subr.bf16.mxu0 %v6236
      %6268 = vmatpush1.bf16.msra.mxu0 %v6235
      %6269 = vmatprep.subr.bf16.mxu0 %v6238
      %6270 = vmatpush1.bf16.msra.mxu0 %v6237
      %6271 = vmatprep.subr.bf16.mxu0 %v6240
      %6272 = vmatpush1.bf16.msra.mxu0 %v6239
      %6273 = vmatprep.subr.bf16.mxu0 %v6242
      %6274 = vmatpush1.bf16.msra.mxu0 %v6241
      %6275 = vmatprep.subr.bf16.mxu0 0
      %6276 = vmatpush1.bf16.msra.mxu0 0
      %6277 = vmatprep.subr.bf16.mxu0 0
      %6278 = vmatpush1.bf16.msra.mxu0 0
      %6279 = vmatprep.subr.bf16.mxu0 0
      %6280 = vmatpush1.bf16.msra.mxu0 0
      %6281 = vmatprep.subr.bf16.mxu0 0
      %6282 = vmatpush1.bf16.msra.mxu0 0
      %6283 = vmatprep.subr.bf16.mxu0 0
      %6284 = vmatpush1.bf16.msra.mxu0 0
      %6285 = vmatprep.subr.bf16.mxu0 0
      %6286 = vmatpush1.bf16.msra.mxu0 0
      %6287 = vmatprep.subr.bf16.mxu0 0
      %6288 = vmatpush1.bf16.msra.mxu0 0
      %6289 = vmatprep.subr.bf16.mxu0 0
      %6290 = vmatpush1.bf16.msra.mxu0 0
      %6291 = vmatprep.mubr.bf16.mxu0 0
      %6292 = vmatmul.mubr.bf16.gmra.mrb[0].mxu0 %v5809
      %v6293 = vpop.f32.mrb[0].mxu0
      %v6294 = vadd.f32 %v6021, %v6293
      %v6295 = vpop.f32.mrb[0].mxu0
      %v6296 = vadd.f32 %v6023, %v6295
      %v6297 = vpop.f32.mrb[0].mxu0
      %v6298 = vadd.f32 %v6025, %v6297
      %v6299 = vpop.f32.mrb[0].mxu0
      %v6300 = vadd.f32 %v6027, %v6299
      %6301 = vmatprep.mubr.bf16.mxu0 0
      %6302 = vmatmul.mubr.bf16.gmra.mrb[0].mxu0 %v5810
      %v6303 = vpop.f32.mrb[0].mxu0
      %v6304 = vadd.f32 %v6031, %v6303
      %v6305 = vpop.f32.mrb[0].mxu0
      %v6306 = vadd.f32 %v6033, %v6305
      %v6307 = vpop.f32.mrb[0].mxu0
      %v6308 = vadd.f32 %v6035, %v6307
      %v6309 = vpop.f32.mrb[0].mxu0
      %v6310 = vadd.f32 %v6037, %v6309
      %6311 = vmatprep.mubr.bf16.mxu0 0
      %6312 = vmatmul.mubr.bf16.gmra.mrb[0].mxu0 %v5811
      %v6313 = vpop.f32.mrb[0].mxu0
      %v6314 = vadd.f32 %v6041, %v6313
      %v6315 = vpop.f32.mrb[0].mxu0
      %v6316 = vadd.f32 %v6043, %v6315
      %v6317 = vpop.f32.mrb[0].mxu0
      %v6318 = vadd.f32 %v6045, %v6317
      %v6319 = vpop.f32.mrb[0].mxu0
      %v6320 = vadd.f32 %v6047, %v6319
      %6321 = vmatprep.mubr.bf16.mxu0 0
      %6322 = vmatmul.mubr.bf16.gmra.mrb[0].mxu0 %v5812
      %v6323 = vpop.f32.mrb[0].mxu0
      %v6324 = vadd.f32 %v6051, %v6323
      %v6325 = vpop.f32.mrb[0].mxu0
      %v6326 = vadd.f32 %v6053, %v6325
      %v6327 = vpop.f32.mrb[0].mxu0
      %v6328 = vadd.f32 %v6055, %v6327
      %v6329 = vpop.f32.mrb[0].mxu0
      %v6330 = vadd.f32 %v6057, %v6329
      %6331 = vmatprep.mubr.bf16.mxu0 0
      %6332 = vmatmul.mubr.bf16.gmra.mrb[0].mxu0 %v5813
      %v6333 = vpop.f32.mrb[0].mxu0
      %v6334 = vadd.f32 %v6061, %v6333
      %v6335 = vpop.f32.mrb[0].mxu0
      %v6336 = vadd.f32 %v6063, %v6335
      %v6337 = vpop.f32.mrb[0].mxu0
      %v6338 = vadd.f32 %v6065, %v6337
      %v6339 = vpop.f32.mrb[0].mxu0
      %v6340 = vadd.f32 %v6067, %v6339
      %6341 = vmatprep.mubr.bf16.mxu0 0
      %6342 = vmatmul.mubr.bf16.gmra.mrb[0].mxu0 %v5814
      %v6343 = vpop.f32.mrb[0].mxu0
      %v6344 = vadd.f32 %v6071, %v6343
      %v6345 = vpop.f32.mrb[0].mxu0
      %v6346 = vadd.f32 %v6073, %v6345
      %v6347 = vpop.f32.mrb[0].mxu0
      %v6348 = vadd.f32 %v6075, %v6347
      %v6349 = vpop.f32.mrb[0].mxu0
      %v6350 = vadd.f32 %v6077, %v6349
      %6351 = vmatprep.mubr.bf16.mxu0 0
      %6352 = vmatmul.mubr.bf16.gmra.mrb[0].mxu0 %v5815
      %v6353 = vpop.f32.mrb[0].mxu0
      %v6354 = vadd.f32 %v6081, %v6353
      %v6355 = vpop.f32.mrb[0].mxu0
      %v6356 = vadd.f32 %v6083, %v6355
      %v6357 = vpop.f32.mrb[0].mxu0
      %v6358 = vadd.f32 %v6085, %v6357
      %v6359 = vpop.f32.mrb[0].mxu0
      %v6360 = vadd.f32 %v6087, %v6359
      %6361 = vmatprep.mubr.bf16.mxu0 0
      %6362 = vmatmul.mubr.bf16.gmra.mrb[0].mxu0 %v5816
      %v6363 = vpop.f32.mrb[0].mxu0
      %v6364 = vadd.f32 %v6091, %v6363
      %v6365 = vpop.f32.mrb[0].mxu0
      %v6366 = vadd.f32 %v6093, %v6365
      %v6367 = vpop.f32.mrb[0].mxu0
      %v6368 = vadd.f32 %v6095, %v6367
      %v6369 = vpop.f32.mrb[0].mxu0
      %v6370 = vadd.f32 %v6097, %v6369
      %6371 = vmatprep.mubr.bf16.mxu0 0
      %6372 = vmatmul.mubr.bf16.gmra.mrb[0].mxu0 %v5817
      %v6373 = vpop.f32.mrb[0].mxu0
      %v6374 = vadd.f32 %v6101, %v6373
      %v6375 = vpop.f32.mrb[0].mxu0
      %v6376 = vadd.f32 %v6103, %v6375
      %v6377 = vpop.f32.mrb[0].mxu0
      %v6378 = vadd.f32 %v6105, %v6377
      %v6379 = vpop.f32.mrb[0].mxu0
      %v6380 = vadd.f32 %v6107, %v6379
      %6381 = vmatprep.mubr.bf16.mxu0 0
      %6382 = vmatmul.mubr.bf16.gmra.mrb[0].mxu0 %v5818
      %v6383 = vpop.f32.mrb[0].mxu0
      %v6384 = vadd.f32 %v6111, %v6383
      %v6385 = vpop.f32.mrb[0].mxu0
      %v6386 = vadd.f32 %v6113, %v6385
      %v6387 = vpop.f32.mrb[0].mxu0
      %v6388 = vadd.f32 %v6115, %v6387
      %v6389 = vpop.f32.mrb[0].mxu0
      %v6390 = vadd.f32 %v6117, %v6389
      %6391 = vmatprep.mubr.bf16.mxu0 0
      %6392 = vmatmul.mubr.bf16.gmra.mrb[0].mxu0 %v5819
      %v6393 = vpop.f32.mrb[0].mxu0
      %v6394 = vadd.f32 %v6121, %v6393
      %v6395 = vpop.f32.mrb[0].mxu0
      %v6396 = vadd.f32 %v6123, %v6395
      %v6397 = vpop.f32.mrb[0].mxu0
      %v6398 = vadd.f32 %v6125, %v6397
      %v6399 = vpop.f32.mrb[0].mxu0
      %v6400 = vadd.f32 %v6127, %v6399
      %6401 = vmatprep.mubr.bf16.mxu0 0
      %6402 = vmatmul.mubr.bf16.gmra.mrb[0].mxu0 %v5820
      %v6403 = vpop.f32.mrb[0].mxu0
      %v6404 = vadd.f32 %v6131, %v6403
      %v6405 = vpop.f32.mrb[0].mxu0
      %v6406 = vadd.f32 %v6133, %v6405
      %v6407 = vpop.f32.mrb[0].mxu0
      %v6408 = vadd.f32 %v6135, %v6407
      %v6409 = vpop.f32.mrb[0].mxu0
      %v6410 = vadd.f32 %v6137, %v6409
      %6411 = vmatprep.mubr.bf16.mxu0 0
      %6412 = vmatmul.mubr.bf16.gmra.mrb[0].mxu0 %v5821
      %v6413 = vpop.f32.mrb[0].mxu0
      %v6414 = vadd.f32 %v6141, %v6413
      %v6415 = vpop.f32.mrb[0].mxu0
      %v6416 = vadd.f32 %v6143, %v6415
      %v6417 = vpop.f32.mrb[0].mxu0
      %v6418 = vadd.f32 %v6145, %v6417
      %v6419 = vpop.f32.mrb[0].mxu0
      %v6420 = vadd.f32 %v6147, %v6419
      %6421 = vmatprep.mubr.bf16.mxu0 0
      %6422 = vmatmul.mubr.bf16.gmra.mrb[0].mxu0 %v5822
      %v6423 = vpop.f32.mrb[0].mxu0
      %v6424 = vadd.f32 %v6151, %v6423
      %v6425 = vpop.f32.mrb[0].mxu0
      %v6426 = vadd.f32 %v6153, %v6425
      %v6427 = vpop.f32.mrb[0].mxu0
      %v6428 = vadd.f32 %v6155, %v6427
      %v6429 = vpop.f32.mrb[0].mxu0
      %v6430 = vadd.f32 %v6157, %v6429
      %6431 = vmatprep.mubr.bf16.mxu0 0
      %6432 = vmatmul.mubr.bf16.gmra.mrb[0].mxu0 %v5823
      %v6433 = vpop.f32.mrb[0].mxu0
      %v6434 = vadd.f32 %v6161, %v6433
      %v6435 = vpop.f32.mrb[0].mxu0
      %v6436 = vadd.f32 %v6163, %v6435
      %v6437 = vpop.f32.mrb[0].mxu0
      %v6438 = vadd.f32 %v6165, %v6437
      %v6439 = vpop.f32.mrb[0].mxu0
      %v6440 = vadd.f32 %v6167, %v6439
      %6441 = vmatprep.mubr.bf16.mxu0 0
      %6442 = vmatmul.mubr.bf16.gmra.mrb[0].mxu0 %v5824
      %v6443 = vpop.f32.mrb[0].mxu0
      %v6444 = vadd.f32 %v6171, %v6443
      %v6445 = vpop.f32.mrb[0].mxu0
      %v6446 = vadd.f32 %v6173, %v6445
      %v6447 = vpop.f32.mrb[0].mxu0
      %v6448 = vadd.f32 %v6175, %v6447
      %v6449 = vpop.f32.mrb[0].mxu0
      %v6450 = vadd.f32 %v6177, %v6449
      %6451 = vdwg.mxu0
      %v6452 = vld [vmem:[#allocation3 + $0x2] sm:$0xff]
      %v6453 = vld [vmem:[#allocation3 + $0x12] sm:$0xff]
      %v6454 = vld [vmem:[#allocation3 + $0x22] sm:$0xff]
      %v6455 = vld [vmem:[#allocation3 + $0x32] sm:$0xff]
      %v6456 = vld [vmem:[#allocation3 + $0x42] sm:$0xff]
      %v6457 = vld [vmem:[#allocation3 + $0x52] sm:$0xff]
      %v6458 = vld [vmem:[#allocation3 + $0x62] sm:$0xff]
      %v6459 = vld [vmem:[#allocation3 + $0x72] sm:$0xff]
      %v6460 = vld [vmem:[#allocation3 + $0x82] sm:$0xff]
      %v6461 = vld [vmem:[#allocation3 + $0x92] sm:$0xff]
      %v6462 = vld [vmem:[#allocation3 + $0xa2] sm:$0xff]
      %v6463 = vld [vmem:[#allocation3 + $0xb2] sm:$0xff]
      %v6464 = vld [vmem:[#allocation3 + $0xc2] sm:$0xff]
      %v6465 = vld [vmem:[#allocation3 + $0xd2] sm:$0xff]
      %v6466 = vld [vmem:[#allocation3 + $0xe2] sm:$0xff]
      %v6467 = vld [vmem:[#allocation3 + $0xf2] sm:$0xff]
      %v6468 = vld [vmem:[#allocation3 + $0x102] sm:$0xff]
      %v6469 = vld [vmem:[#allocation3 + $0x112] sm:$0xff]
      %v6470 = vld [vmem:[#allocation3 + $0x122] sm:$0xff]
      %v6471 = vld [vmem:[#allocation3 + $0x132] sm:$0xff]
      %v6472 = vld [vmem:[#allocation3 + $0x142] sm:$0xff]
      %v6473 = vld [vmem:[#allocation3 + $0x152] sm:$0xff]
      %v6474 = vld [vmem:[#allocation3 + $0x162] sm:$0xff]
      %v6475 = vld [vmem:[#allocation3 + $0x172] sm:$0xff]
      %v6476 = vld [vmem:[#allocation3 + $0x182] sm:$0xff]
      %v6477 = vld [vmem:[#allocation3 + $0x192] sm:$0xff]
      %v6478 = vld [vmem:[#allocation3 + $0x1a2] sm:$0xff]
      %v6479 = vld [vmem:[#allocation3 + $0x1b2] sm:$0xff]
      %v6480 = vld [vmem:[#allocation3 + $0x1c2] sm:$0xff]
      %v6481 = vld [vmem:[#allocation3 + $0x1d2] sm:$0xff]
      %v6482 = vld [vmem:[#allocation3 + $0x1e2] sm:$0xff]
      %v6483 = vld [vmem:[#allocation3 + $0x1f2] sm:$0xff]
      %v6484 = vpack.c.bf16 %v6453, %v6452
      %v6485 = vpack.c.bf16 %v6455, %v6454
      %v6486 = vpack.c.bf16 %v6457, %v6456
      %v6487 = vpack.c.bf16 %v6459, %v6458
      %v6488 = vpack.c.bf16 %v6461, %v6460
      %v6489 = vpack.c.bf16 %v6463, %v6462
      %v6490 = vpack.c.bf16 %v6465, %v6464
      %v6491 = vpack.c.bf16 %v6467, %v6466
      %v6492 = vpack.c.bf16 %v6469, %v6468
      %v6493 = vpack.c.bf16 %v6471, %v6470
      %v6494 = vpack.c.bf16 %v6473, %v6472
      %v6495 = vpack.c.bf16 %v6475, %v6474
      %v6496 = vpack.c.bf16 %v6477, %v6476
      %v6497 = vpack.c.bf16 %v6479, %v6478
      %v6498 = vpack.c.bf16 %v6481, %v6480
      %v6499 = vpack.c.bf16 %v6483, %v6482
      %s6500 = scalar_lea.vmem %s3, 256
      %v6501 = vld [vmem:[%s6500] sm:$0xff]
      %v6502 = vld [vmem:[%s6500 + $0x8] sm:$0xff]
      %v6503 = vld [vmem:[%s6500 + $0x10] sm:$0xff]
      %v6504 = vld [vmem:[%s6500 + $0x18] sm:$0xff]
      %v6505 = vld [vmem:[%s6500 + $0x20] sm:$0xff]
      %v6506 = vld [vmem:[%s6500 + $0x28] sm:$0xff]
      %v6507 = vld [vmem:[%s6500 + $0x30] sm:$0xff]
      %v6508 = vld [vmem:[%s6500 + $0x38] sm:$0xff]
      %v6509 = vld [vmem:[%s6500 + $0x40] sm:$0xff]
      %v6510 = vld [vmem:[%s6500 + $0x48] sm:$0xff]
      %v6511 = vld [vmem:[%s6500 + $0x50] sm:$0xff]
      %v6512 = vld [vmem:[%s6500 + $0x58] sm:$0xff]
      %v6513 = vld [vmem:[%s6500 + $0x60] sm:$0xff]
      %v6514 = vld [vmem:[%s6500 + $0x68] sm:$0xff]
      %v6515 = vld [vmem:[%s6500 + $0x70] sm:$0xff]
      %v6516 = vld [vmem:[%s6500 + $0x78] sm:$0xff]
      %v6533 = vunpack.c.l.b16 %v6501
      %v6534 = vunpack.c.h.b16 %v6501
      %v6535 = vunpack.c.l.b16 %v6502
      %v6536 = vunpack.c.h.b16 %v6502
      %v6537 = vunpack.c.l.b16 %v6503
      %v6538 = vunpack.c.h.b16 %v6503
      %v6539 = vunpack.c.l.b16 %v6504
      %v6540 = vunpack.c.h.b16 %v6504
      %v6541 = vunpack.c.l.b16 %v6505
      %v6542 = vunpack.c.h.b16 %v6505
      %v6543 = vunpack.c.l.b16 %v6506
      %v6544 = vunpack.c.h.b16 %v6506
      %v6545 = vunpack.c.l.b16 %v6507
      %v6546 = vunpack.c.h.b16 %v6507
      %v6547 = vunpack.c.l.b16 %v6508
      %v6548 = vunpack.c.h.b16 %v6508
      %v6549 = vunpack.c.l.b16 %v6509
      %v6550 = vunpack.c.h.b16 %v6509
      %v6551 = vunpack.c.l.b16 %v6510
      %v6552 = vunpack.c.h.b16 %v6510
      %v6553 = vunpack.c.l.b16 %v6511
      %v6554 = vunpack.c.h.b16 %v6511
      %v6555 = vunpack.c.l.b16 %v6512
      %v6556 = vunpack.c.h.b16 %v6512
      %v6557 = vunpack.c.l.b16 %v6513
      %v6558 = vunpack.c.h.b16 %v6513
      %v6559 = vunpack.c.l.b16 %v6514
      %v6560 = vunpack.c.h.b16 %v6514
      %v6561 = vunpack.c.l.b16 %v6515
      %v6562 = vunpack.c.h.b16 %v6515
      %v6563 = vunpack.c.l.b16 %v6516
      %v6564 = vunpack.c.h.b16 %v6516
      %v6565 = vpack.c.b16 %v6535, %v6533
      %v6566 = vpack.c.b16 %v6536, %v6534
      %v6567 = vpack.c.b16 %v6539, %v6537
      %v6568 = vpack.c.b16 %v6540, %v6538
      %v6569 = vpack.c.b16 %v6543, %v6541
      %v6570 = vpack.c.b16 %v6544, %v6542
      %v6571 = vpack.c.b16 %v6547, %v6545
      %v6572 = vpack.c.b16 %v6548, %v6546
      %v6573 = vpack.c.b16 %v6551, %v6549
      %v6574 = vpack.c.b16 %v6552, %v6550
      %v6575 = vpack.c.b16 %v6555, %v6553
      %v6576 = vpack.c.b16 %v6556, %v6554
      %v6577 = vpack.c.b16 %v6559, %v6557
      %v6578 = vpack.c.b16 %v6560, %v6558
      %v6579 = vpack.c.b16 %v6563, %v6561
      %v6580 = vpack.c.b16 %v6564, %v6562
      %6597 = vmatprep.subr.bf16.mxu0 %v6566
      %6598 = vmatpush1.bf16.msra.mxu0 %v6565
      %6599 = vmatprep.subr.bf16.mxu0 %v6568
      %6600 = vmatpush1.bf16.msra.mxu0 %v6567
      %6601 = vmatprep.subr.bf16.mxu0 %v6570
      %6602 = vmatpush1.bf16.msra.mxu0 %v6569
      %6603 = vmatprep.subr.bf16.mxu0 %v6572
      %6604 = vmatpush1.bf16.msra.mxu0 %v6571
      %6605 = vmatprep.subr.bf16.mxu0 %v6574
      %6606 = vmatpush1.bf16.msra.mxu0 %v6573
      %6607 = vmatprep.subr.bf16.mxu0 %v6576
      %6608 = vmatpush1.bf16.msra.mxu0 %v6575
      %6609 = vmatprep.subr.bf16.mxu0 %v6578
      %6610 = vmatpush1.bf16.msra.mxu0 %v6577
      %6611 = vmatprep.subr.bf16.mxu0 %v6580
      %6612 = vmatpush1.bf16.msra.mxu0 %v6579
      %6613 = vmatprep.subr.bf16.mxu0 0
      %6614 = vmatpush1.bf16.msra.mxu0 0
      %6615 = vmatprep.subr.bf16.mxu0 0
      %6616 = vmatpush1.bf16.msra.mxu0 0
      %6617 = vmatprep.subr.bf16.mxu0 0
      %6618 = vmatpush1.bf16.msra.mxu0 0
      %6619 = vmatprep.subr.bf16.mxu0 0
      %6620 = vmatpush1.bf16.msra.mxu0 0
      %6621 = vmatprep.subr.bf16.mxu0 0
      %6622 = vmatpush1.bf16.msra.mxu0 0
      %6623 = vmatprep.subr.bf16.mxu0 0
      %6624 = vmatpush1.bf16.msra.mxu0 0
      %6625 = vmatprep.subr.bf16.mxu0 0
      %6626 = vmatpush1.bf16.msra.mxu0 0
      %6627 = vmatprep.subr.bf16.mxu0 0
      %6628 = vmatpush1.bf16.msra.mxu0 0
      %6629 = vmatprep.mubr.bf16.mxu0 0
      %6630 = vmatmul.mubr.bf16.gmra.mrb[0].mxu0 %v6484
      %v6631 = vpop.f32.mrb[0].mxu0
      %v6632 = vadd.f32 0.0, %v6631
      %v6633 = vpop.f32.mrb[0].mxu0
      %v6634 = vadd.f32 0.0, %v6633
      %v6635 = vpop.f32.mrb[0].mxu0
      %v6636 = vadd.f32 0.0, %v6635
      %v6637 = vpop.f32.mrb[0].mxu0
      %v6638 = vadd.f32 0.0, %v6637
      %6639 = vmatprep.mubr.bf16.mxu0 0
      %6640 = vmatmul.mubr.bf16.gmra.mrb[0].mxu0 %v6485
      %v6641 = vpop.f32.mrb[0].mxu0
      %v6642 = vadd.f32 0.0, %v6641
      %v6643 = vpop.f32.mrb[0].mxu0
      %v6644 = vadd.f32 0.0, %v6643
      %v6645 = vpop.f32.mrb[0].mxu0
      %v6646 = vadd.f32 0.0, %v6645
      %v6647 = vpop.f32.mrb[0].mxu0
      %v6648 = vadd.f32 0.0, %v6647
      %6649 = vmatprep.mubr.bf16.mxu0 0
      %6650 = vmatmul.mubr.bf16.gmra.mrb[0].mxu0 %v6486
      %v6651 = vpop.f32.mrb[0].mxu0
      %v6652 = vadd.f32 0.0, %v6651
      %v6653 = vpop.f32.mrb[0].mxu0
      %v6654 = vadd.f32 0.0, %v6653
      %v6655 = vpop.f32.mrb[0].mxu0
      %v6656 = vadd.f32 0.0, %v6655
      %v6657 = vpop.f32.mrb[0].mxu0
      %v6658 = vadd.f32 0.0, %v6657
      %6659 = vmatprep.mubr.bf16.mxu0 0
      %6660 = vmatmul.mubr.bf16.gmra.mrb[0].mxu0 %v6487
      %v6661 = vpop.f32.mrb[0].mxu0
      %v6662 = vadd.f32 0.0, %v6661
      %v6663 = vpop.f32.mrb[0].mxu0
      %v6664 = vadd.f32 0.0, %v6663
      %v6665 = vpop.f32.mrb[0].mxu0
      %v6666 = vadd.f32 0.0, %v6665
      %v6667 = vpop.f32.mrb[0].mxu0
      %v6668 = vadd.f32 0.0, %v6667
      %6669 = vmatprep.mubr.bf16.mxu0 0
      %6670 = vmatmul.mubr.bf16.gmra.mrb[0].mxu0 %v6488
      %v6671 = vpop.f32.mrb[0].mxu0
      %v6672 = vadd.f32 0.0, %v6671
      %v6673 = vpop.f32.mrb[0].mxu0
      %v6674 = vadd.f32 0.0, %v6673
      %v6675 = vpop.f32.mrb[0].mxu0
      %v6676 = vadd.f32 0.0, %v6675
      %v6677 = vpop.f32.mrb[0].mxu0
      %v6678 = vadd.f32 0.0, %v6677
      %6679 = vmatprep.mubr.bf16.mxu0 0
      %6680 = vmatmul.mubr.bf16.gmra.mrb[0].mxu0 %v6489
      %v6681 = vpop.f32.mrb[0].mxu0
      %v6682 = vadd.f32 0.0, %v6681
      %v6683 = vpop.f32.mrb[0].mxu0
      %v6684 = vadd.f32 0.0, %v6683
      %v6685 = vpop.f32.mrb[0].mxu0
      %v6686 = vadd.f32 0.0, %v6685
      %v6687 = vpop.f32.mrb[0].mxu0
      %v6688 = vadd.f32 0.0, %v6687
      %6689 = vmatprep.mubr.bf16.mxu0 0
      %6690 = vmatmul.mubr.bf16.gmra.mrb[0].mxu0 %v6490
      %v6691 = vpop.f32.mrb[0].mxu0
      %v6692 = vadd.f32 0.0, %v6691
      %v6693 = vpop.f32.mrb[0].mxu0
      %v6694 = vadd.f32 0.0, %v6693
      %v6695 = vpop.f32.mrb[0].mxu0
      %v6696 = vadd.f32 0.0, %v6695
      %v6697 = vpop.f32.mrb[0].mxu0
      %v6698 = vadd.f32 0.0, %v6697
      %6699 = vmatprep.mubr.bf16.mxu0 0
      %6700 = vmatmul.mubr.bf16.gmra.mrb[0].mxu0 %v6491
      %v6701 = vpop.f32.mrb[0].mxu0
      %v6702 = vadd.f32 0.0, %v6701
      %v6703 = vpop.f32.mrb[0].mxu0
      %v6704 = vadd.f32 0.0, %v6703
      %v6705 = vpop.f32.mrb[0].mxu0
      %v6706 = vadd.f32 0.0, %v6705
      %v6707 = vpop.f32.mrb[0].mxu0
      %v6708 = vadd.f32 0.0, %v6707
      %6709 = vmatprep.mubr.bf16.mxu0 0
      %6710 = vmatmul.mubr.bf16.gmra.mrb[0].mxu0 %v6492
      %v6711 = vpop.f32.mrb[0].mxu0
      %v6712 = vadd.f32 0.0, %v6711
      %v6713 = vpop.f32.mrb[0].mxu0
      %v6714 = vadd.f32 0.0, %v6713
      %v6715 = vpop.f32.mrb[0].mxu0
      %v6716 = vadd.f32 0.0, %v6715
      %v6717 = vpop.f32.mrb[0].mxu0
      %v6718 = vadd.f32 0.0, %v6717
      %6719 = vmatprep.mubr.bf16.mxu0 0
      %6720 = vmatmul.mubr.bf16.gmra.mrb[0].mxu0 %v6493
      %v6721 = vpop.f32.mrb[0].mxu0
      %v6722 = vadd.f32 0.0, %v6721
      %v6723 = vpop.f32.mrb[0].mxu0
      %v6724 = vadd.f32 0.0, %v6723
      %v6725 = vpop.f32.mrb[0].mxu0
      %v6726 = vadd.f32 0.0, %v6725
      %v6727 = vpop.f32.mrb[0].mxu0
      %v6728 = vadd.f32 0.0, %v6727
      %6729 = vmatprep.mubr.bf16.mxu0 0
      %6730 = vmatmul.mubr.bf16.gmra.mrb[0].mxu0 %v6494
      %v6731 = vpop.f32.mrb[0].mxu0
      %v6732 = vadd.f32 0.0, %v6731
      %v6733 = vpop.f32.mrb[0].mxu0
      %v6734 = vadd.f32 0.0, %v6733
      %v6735 = vpop.f32.mrb[0].mxu0
      %v6736 = vadd.f32 0.0, %v6735
      %v6737 = vpop.f32.mrb[0].mxu0
      %v6738 = vadd.f32 0.0, %v6737
      %6739 = vmatprep.mubr.bf16.mxu0 0
      %6740 = vmatmul.mubr.bf16.gmra.mrb[0].mxu0 %v6495
      %v6741 = vpop.f32.mrb[0].mxu0
      %v6742 = vadd.f32 0.0, %v6741
      %v6743 = vpop.f32.mrb[0].mxu0
      %v6744 = vadd.f32 0.0, %v6743
      %v6745 = vpop.f32.mrb[0].mxu0
      %v6746 = vadd.f32 0.0, %v6745
      %v6747 = vpop.f32.mrb[0].mxu0
      %v6748 = vadd.f32 0.0, %v6747
      %6749 = vmatprep.mubr.bf16.mxu0 0
      %6750 = vmatmul.mubr.bf16.gmra.mrb[0].mxu0 %v6496
      %v6751 = vpop.f32.mrb[0].mxu0
      %v6752 = vadd.f32 0.0, %v6751
      %v6753 = vpop.f32.mrb[0].mxu0
      %v6754 = vadd.f32 0.0, %v6753
      %v6755 = vpop.f32.mrb[0].mxu0
      %v6756 = vadd.f32 0.0, %v6755
      %v6757 = vpop.f32.mrb[0].mxu0
      %v6758 = vadd.f32 0.0, %v6757
      %6759 = vmatprep.mubr.bf16.mxu0 0
      %6760 = vmatmul.mubr.bf16.gmra.mrb[0].mxu0 %v6497
      %v6761 = vpop.f32.mrb[0].mxu0
      %v6762 = vadd.f32 0.0, %v6761
      %v6763 = vpop.f32.mrb[0].mxu0
      %v6764 = vadd.f32 0.0, %v6763
      %v6765 = vpop.f32.mrb[0].mxu0
      %v6766 = vadd.f32 0.0, %v6765
      %v6767 = vpop.f32.mrb[0].mxu0
      %v6768 = vadd.f32 0.0, %v6767
      %6769 = vmatprep.mubr.bf16.mxu0 0
      %6770 = vmatmul.mubr.bf16.gmra.mrb[0].mxu0 %v6498
      %v6771 = vpop.f32.mrb[0].mxu0
      %v6772 = vadd.f32 0.0, %v6771
      %v6773 = vpop.f32.mrb[0].mxu0
      %v6774 = vadd.f32 0.0, %v6773
      %v6775 = vpop.f32.mrb[0].mxu0
      %v6776 = vadd.f32 0.0, %v6775
      %v6777 = vpop.f32.mrb[0].mxu0
      %v6778 = vadd.f32 0.0, %v6777
      %6779 = vmatprep.mubr.bf16.mxu0 0
      %6780 = vmatmul.mubr.bf16.gmra.mrb[0].mxu0 %v6499
      %v6781 = vpop.f32.mrb[0].mxu0
      %v6782 = vadd.f32 0.0, %v6781
      %v6783 = vpop.f32.mrb[0].mxu0
      %v6784 = vadd.f32 0.0, %v6783
      %v6785 = vpop.f32.mrb[0].mxu0
      %v6786 = vadd.f32 0.0, %v6785
      %v6787 = vpop.f32.mrb[0].mxu0
      %v6788 = vadd.f32 0.0, %v6787
      %6789 = vdwg.mxu0
      %v6790 = vadd.f32 %v6294, %v6632
      %v6791 = vadd.f32 %v6296, %v6634
      %v6792 = vadd.f32 %v6298, %v6636
      %v6793 = vadd.f32 %v6300, %v6638
      %v6794 = vadd.f32 %v6304, %v6642
      %v6795 = vadd.f32 %v6306, %v6644
      %v6796 = vadd.f32 %v6308, %v6646
      %v6797 = vadd.f32 %v6310, %v6648
      %v6798 = vadd.f32 %v6314, %v6652
      %v6799 = vadd.f32 %v6316, %v6654
      %v6800 = vadd.f32 %v6318, %v6656
      %v6801 = vadd.f32 %v6320, %v6658
      %v6802 = vadd.f32 %v6324, %v6662
      %v6803 = vadd.f32 %v6326, %v6664
      %v6804 = vadd.f32 %v6328, %v6666
      %v6805 = vadd.f32 %v6330, %v6668
      %v6806 = vadd.f32 %v6334, %v6672
      %v6807 = vadd.f32 %v6336, %v6674
      %v6808 = vadd.f32 %v6338, %v6676
      %v6809 = vadd.f32 %v6340, %v6678
      %v6810 = vadd.f32 %v6344, %v6682
      %v6811 = vadd.f32 %v6346, %v6684
      %v6812 = vadd.f32 %v6348, %v6686
      %v6813 = vadd.f32 %v6350, %v6688
      %v6814 = vadd.f32 %v6354, %v6692
      %v6815 = vadd.f32 %v6356, %v6694
      %v6816 = vadd.f32 %v6358, %v6696
      %v6817 = vadd.f32 %v6360, %v6698
      %v6818 = vadd.f32 %v6364, %v6702
      %v6819 = vadd.f32 %v6366, %v6704
      %v6820 = vadd.f32 %v6368, %v6706
      %v6821 = vadd.f32 %v6370, %v6708
      %v6822 = vadd.f32 %v6374, %v6712
      %v6823 = vadd.f32 %v6376, %v6714
      %v6824 = vadd.f32 %v6378, %v6716
      %v6825 = vadd.f32 %v6380, %v6718
      %v6826 = vadd.f32 %v6384, %v6722
      %v6827 = vadd.f32 %v6386, %v6724
      %v6828 = vadd.f32 %v6388, %v6726
      %v6829 = vadd.f32 %v6390, %v6728
      %v6830 = vadd.f32 %v6394, %v6732
      %v6831 = vadd.f32 %v6396, %v6734
      %v6832 = vadd.f32 %v6398, %v6736
      %v6833 = vadd.f32 %v6400, %v6738
      %v6834 = vadd.f32 %v6404, %v6742
      %v6835 = vadd.f32 %v6406, %v6744
      %v6836 = vadd.f32 %v6408, %v6746
      %v6837 = vadd.f32 %v6410, %v6748
      %v6838 = vadd.f32 %v6414, %v6752
      %v6839 = vadd.f32 %v6416, %v6754
      %v6840 = vadd.f32 %v6418, %v6756
      %v6841 = vadd.f32 %v6420, %v6758
      %v6842 = vadd.f32 %v6424, %v6762
      %v6843 = vadd.f32 %v6426, %v6764
      %v6844 = vadd.f32 %v6428, %v6766
      %v6845 = vadd.f32 %v6430, %v6768
      %v6846 = vadd.f32 %v6434, %v6772
      %v6847 = vadd.f32 %v6436, %v6774
      %v6848 = vadd.f32 %v6438, %v6776
      %v6849 = vadd.f32 %v6440, %v6778
      %v6850 = vadd.f32 %v6444, %v6782
      %v6851 = vadd.f32 %v6446, %v6784
      %v6852 = vadd.f32 %v6448, %v6786
      %v6853 = vadd.f32 %v6450, %v6788
      %v6854 = vld [vmem:[#allocation3 + $0x3] sm:$0xff]
      %v6855 = vld [vmem:[#allocation3 + $0x13] sm:$0xff]
      %v6856 = vld [vmem:[#allocation3 + $0x23] sm:$0xff]
      %v6857 = vld [vmem:[#allocation3 + $0x33] sm:$0xff]
      %v6858 = vld [vmem:[#allocation3 + $0x43] sm:$0xff]
      %v6859 = vld [vmem:[#allocation3 + $0x53] sm:$0xff]
      %v6860 = vld [vmem:[#allocation3 + $0x63] sm:$0xff]
      %v6861 = vld [vmem:[#allocation3 + $0x73] sm:$0xff]
      %v6862 = vld [vmem:[#allocation3 + $0x83] sm:$0xff]
      %v6863 = vld [vmem:[#allocation3 + $0x93] sm:$0xff]
      %v6864 = vld [vmem:[#allocation3 + $0xa3] sm:$0xff]
      %v6865 = vld [vmem:[#allocation3 + $0xb3] sm:$0xff]
      %v6866 = vld [vmem:[#allocation3 + $0xc3] sm:$0xff]
      %v6867 = vld [vmem:[#allocation3 + $0xd3] sm:$0xff]
      %v6868 = vld [vmem:[#allocation3 + $0xe3] sm:$0xff]
      %v6869 = vld [vmem:[#allocation3 + $0xf3] sm:$0xff]
      %v6870 = vld [vmem:[#allocation3 + $0x103] sm:$0xff]
      %v6871 = vld [vmem:[#allocation3 + $0x113] sm:$0xff]
      %v6872 = vld [vmem:[#allocation3 + $0x123] sm:$0xff]
      %v6873 = vld [vmem:[#allocation3 + $0x133] sm:$0xff]
      %v6874 = vld [vmem:[#allocation3 + $0x143] sm:$0xff]
      %v6875 = vld [vmem:[#allocation3 + $0x153] sm:$0xff]
      %v6876 = vld [vmem:[#allocation3 + $0x163] sm:$0xff]
      %v6877 = vld [vmem:[#allocation3 + $0x173] sm:$0xff]
      %v6878 = vld [vmem:[#allocation3 + $0x183] sm:$0xff]
      %v6879 = vld [vmem:[#allocation3 + $0x193] sm:$0xff]
      %v6880 = vld [vmem:[#allocation3 + $0x1a3] sm:$0xff]
      %v6881 = vld [vmem:[#allocation3 + $0x1b3] sm:$0xff]
      %v6882 = vld [vmem:[#allocation3 + $0x1c3] sm:$0xff]
      %v6883 = vld [vmem:[#allocation3 + $0x1d3] sm:$0xff]
      %v6884 = vld [vmem:[#allocation3 + $0x1e3] sm:$0xff]
      %v6885 = vld [vmem:[#allocation3 + $0x1f3] sm:$0xff]
      %v6886 = vpack.c.bf16 %v6855, %v6854
      %v6887 = vpack.c.bf16 %v6857, %v6856
      %v6888 = vpack.c.bf16 %v6859, %v6858
      %v6889 = vpack.c.bf16 %v6861, %v6860
      %v6890 = vpack.c.bf16 %v6863, %v6862
      %v6891 = vpack.c.bf16 %v6865, %v6864
      %v6892 = vpack.c.bf16 %v6867, %v6866
      %v6893 = vpack.c.bf16 %v6869, %v6868
      %v6894 = vpack.c.bf16 %v6871, %v6870
      %v6895 = vpack.c.bf16 %v6873, %v6872
      %v6896 = vpack.c.bf16 %v6875, %v6874
      %v6897 = vpack.c.bf16 %v6877, %v6876
      %v6898 = vpack.c.bf16 %v6879, %v6878
      %v6899 = vpack.c.bf16 %v6881, %v6880
      %v6900 = vpack.c.bf16 %v6883, %v6882
      %v6901 = vpack.c.bf16 %v6885, %v6884
      %s6902 = scalar_lea.vmem %s3, 384
      %v6903 = vld [vmem:[%s6902] sm:$0xff]
      %v6904 = vld [vmem:[%s6902 + $0x8] sm:$0xff]
      %v6905 = vld [vmem:[%s6902 + $0x10] sm:$0xff]
      %v6906 = vld [vmem:[%s6902 + $0x18] sm:$0xff]
      %v6907 = vld [vmem:[%s6902 + $0x20] sm:$0xff]
      %v6908 = vld [vmem:[%s6902 + $0x28] sm:$0xff]
      %v6909 = vld [vmem:[%s6902 + $0x30] sm:$0xff]
      %v6910 = vld [vmem:[%s6902 + $0x38] sm:$0xff]
      %v6911 = vld [vmem:[%s6902 + $0x40] sm:$0xff]
      %v6912 = vld [vmem:[%s6902 + $0x48] sm:$0xff]
      %v6913 = vld [vmem:[%s6902 + $0x50] sm:$0xff]
      %v6914 = vld [vmem:[%s6902 + $0x58] sm:$0xff]
      %v6915 = vld [vmem:[%s6902 + $0x60] sm:$0xff]
      %v6916 = vld [vmem:[%s6902 + $0x68] sm:$0xff]
      %v6917 = vld [vmem:[%s6902 + $0x70] sm:$0xff]
      %v6918 = vld [vmem:[%s6902 + $0x78] sm:$0xff]
      %v6935 = vunpack.c.l.b16 %v6903
      %v6936 = vunpack.c.h.b16 %v6903
      %v6937 = vunpack.c.l.b16 %v6904
      %v6938 = vunpack.c.h.b16 %v6904
      %v6939 = vunpack.c.l.b16 %v6905
      %v6940 = vunpack.c.h.b16 %v6905
      %v6941 = vunpack.c.l.b16 %v6906
      %v6942 = vunpack.c.h.b16 %v6906
      %v6943 = vunpack.c.l.b16 %v6907
      %v6944 = vunpack.c.h.b16 %v6907
      %v6945 = vunpack.c.l.b16 %v6908
      %v6946 = vunpack.c.h.b16 %v6908
      %v6947 = vunpack.c.l.b16 %v6909
      %v6948 = vunpack.c.h.b16 %v6909
      %v6949 = vunpack.c.l.b16 %v6910
      %v6950 = vunpack.c.h.b16 %v6910
      %v6951 = vunpack.c.l.b16 %v6911
      %v6952 = vunpack.c.h.b16 %v6911
      %v6953 = vunpack.c.l.b16 %v6912
      %v6954 = vunpack.c.h.b16 %v6912
      %v6955 = vunpack.c.l.b16 %v6913
      %v6956 = vunpack.c.h.b16 %v6913
      %v6957 = vunpack.c.l.b16 %v6914
      %v6958 = vunpack.c.h.b16 %v6914
      %v6959 = vunpack.c.l.b16 %v6915
      %v6960 = vunpack.c.h.b16 %v6915
      %v6961 = vunpack.c.l.b16 %v6916
      %v6962 = vunpack.c.h.b16 %v6916
      %v6963 = vunpack.c.l.b16 %v6917
      %v6964 = vunpack.c.h.b16 %v6917
      %v6965 = vunpack.c.l.b16 %v6918
      %v6966 = vunpack.c.h.b16 %v6918
      %v6967 = vpack.c.b16 %v6937, %v6935
      %v6968 = vpack.c.b16 %v6938, %v6936
      %v6969 = vpack.c.b16 %v6941, %v6939
      %v6970 = vpack.c.b16 %v6942, %v6940
      %v6971 = vpack.c.b16 %v6945, %v6943
      %v6972 = vpack.c.b16 %v6946, %v6944
      %v6973 = vpack.c.b16 %v6949, %v6947
      %v6974 = vpack.c.b16 %v6950, %v6948
      %v6975 = vpack.c.b16 %v6953, %v6951
      %v6976 = vpack.c.b16 %v6954, %v6952
      %v6977 = vpack.c.b16 %v6957, %v6955
      %v6978 = vpack.c.b16 %v6958, %v6956
      %v6979 = vpack.c.b16 %v6961, %v6959
      %v6980 = vpack.c.b16 %v6962, %v6960
      %v6981 = vpack.c.b16 %v6965, %v6963
      %v6982 = vpack.c.b16 %v6966, %v6964
      %6999 = vmatprep.subr.bf16.mxu0 %v6968
      %7000 = vmatpush1.bf16.msra.mxu0 %v6967
      %7001 = vmatprep.subr.bf16.mxu0 %v6970
      %7002 = vmatpush1.bf16.msra.mxu0 %v6969
      %7003 = vmatprep.subr.bf16.mxu0 %v6972
      %7004 = vmatpush1.bf16.msra.mxu0 %v6971
      %7005 = vmatprep.subr.bf16.mxu0 %v6974
      %7006 = vmatpush1.bf16.msra.mxu0 %v6973
      %7007 = vmatprep.subr.bf16.mxu0 %v6976
      %7008 = vmatpush1.bf16.msra.mxu0 %v6975
      %7009 = vmatprep.subr.bf16.mxu0 %v6978
      %7010 = vmatpush1.bf16.msra.mxu0 %v6977
      %7011 = vmatprep.subr.bf16.mxu0 %v6980
      %7012 = vmatpush1.bf16.msra.mxu0 %v6979
      %7013 = vmatprep.subr.bf16.mxu0 %v6982
      %7014 = vmatpush1.bf16.msra.mxu0 %v6981
      %7015 = vmatprep.subr.bf16.mxu0 0
      %7016 = vmatpush1.bf16.msra.mxu0 0
      %7017 = vmatprep.subr.bf16.mxu0 0
      %7018 = vmatpush1.bf16.msra.mxu0 0
      %7019 = vmatprep.subr.bf16.mxu0 0
      %7020 = vmatpush1.bf16.msra.mxu0 0
      %7021 = vmatprep.subr.bf16.mxu0 0
      %7022 = vmatpush1.bf16.msra.mxu0 0
      %7023 = vmatprep.subr.bf16.mxu0 0
      %7024 = vmatpush1.bf16.msra.mxu0 0
      %7025 = vmatprep.subr.bf16.mxu0 0
      %7026 = vmatpush1.bf16.msra.mxu0 0
      %7027 = vmatprep.subr.bf16.mxu0 0
      %7028 = vmatpush1.bf16.msra.mxu0 0
      %7029 = vmatprep.subr.bf16.mxu0 0
      %7030 = vmatpush1.bf16.msra.mxu0 0
      %7031 = vmatprep.mubr.bf16.mxu0 0
      %7032 = vmatmul.mubr.bf16.gmra.mrb[0].mxu0 %v6886
      %v7033 = vpop.f32.mrb[0].mxu0
      %v7034 = vadd.f32 0.0, %v7033
      %v7035 = vpop.f32.mrb[0].mxu0
      %v7036 = vadd.f32 0.0, %v7035
      %v7037 = vpop.f32.mrb[0].mxu0
      %v7038 = vadd.f32 0.0, %v7037
      %v7039 = vpop.f32.mrb[0].mxu0
      %v7040 = vadd.f32 0.0, %v7039
      %7041 = vmatprep.mubr.bf16.mxu0 0
      %7042 = vmatmul.mubr.bf16.gmra.mrb[0].mxu0 %v6887
      %v7043 = vpop.f32.mrb[0].mxu0
      %v7044 = vadd.f32 0.0, %v7043
      %v7045 = vpop.f32.mrb[0].mxu0
      %v7046 = vadd.f32 0.0, %v7045
      %v7047 = vpop.f32.mrb[0].mxu0
      %v7048 = vadd.f32 0.0, %v7047
      %v7049 = vpop.f32.mrb[0].mxu0
      %v7050 = vadd.f32 0.0, %v7049
      %7051 = vmatprep.mubr.bf16.mxu0 0
      %7052 = vmatmul.mubr.bf16.gmra.mrb[0].mxu0 %v6888
      %v7053 = vpop.f32.mrb[0].mxu0
      %v7054 = vadd.f32 0.0, %v7053
      %v7055 = vpop.f32.mrb[0].mxu0
      %v7056 = vadd.f32 0.0, %v7055
      %v7057 = vpop.f32.mrb[0].mxu0
      %v7058 = vadd.f32 0.0, %v7057
      %v7059 = vpop.f32.mrb[0].mxu0
      %v7060 = vadd.f32 0.0, %v7059
      %7061 = vmatprep.mubr.bf16.mxu0 0
      %7062 = vmatmul.mubr.bf16.gmra.mrb[0].mxu0 %v6889
      %v7063 = vpop.f32.mrb[0].mxu0
      %v7064 = vadd.f32 0.0, %v7063
      %v7065 = vpop.f32.mrb[0].mxu0
      %v7066 = vadd.f32 0.0, %v7065
      %v7067 = vpop.f32.mrb[0].mxu0
      %v7068 = vadd.f32 0.0, %v7067
      %v7069 = vpop.f32.mrb[0].mxu0
      %v7070 = vadd.f32 0.0, %v7069
      %7071 = vmatprep.mubr.bf16.mxu0 0
      %7072 = vmatmul.mubr.bf16.gmra.mrb[0].mxu0 %v6890
      %v7073 = vpop.f32.mrb[0].mxu0
      %v7074 = vadd.f32 0.0, %v7073
      %v7075 = vpop.f32.mrb[0].mxu0
      %v7076 = vadd.f32 0.0, %v7075
      %v7077 = vpop.f32.mrb[0].mxu0
      %v7078 = vadd.f32 0.0, %v7077
      %v7079 = vpop.f32.mrb[0].mxu0
      %v7080 = vadd.f32 0.0, %v7079
      %7081 = vmatprep.mubr.bf16.mxu0 0
      %7082 = vmatmul.mubr.bf16.gmra.mrb[0].mxu0 %v6891
      %v7083 = vpop.f32.mrb[0].mxu0
      %v7084 = vadd.f32 0.0, %v7083
      %v7085 = vpop.f32.mrb[0].mxu0
      %v7086 = vadd.f32 0.0, %v7085
      %v7087 = vpop.f32.mrb[0].mxu0
      %v7088 = vadd.f32 0.0, %v7087
      %v7089 = vpop.f32.mrb[0].mxu0
      %v7090 = vadd.f32 0.0, %v7089
      %7091 = vmatprep.mubr.bf16.mxu0 0
      %7092 = vmatmul.mubr.bf16.gmra.mrb[0].mxu0 %v6892
      %v7093 = vpop.f32.mrb[0].mxu0
      %v7094 = vadd.f32 0.0, %v7093
      %v7095 = vpop.f32.mrb[0].mxu0
      %v7096 = vadd.f32 0.0, %v7095
      %v7097 = vpop.f32.mrb[0].mxu0
      %v7098 = vadd.f32 0.0, %v7097
      %v7099 = vpop.f32.mrb[0].mxu0
      %v7100 = vadd.f32 0.0, %v7099
      %7101 = vmatprep.mubr.bf16.mxu0 0
      %7102 = vmatmul.mubr.bf16.gmra.mrb[0].mxu0 %v6893
      %v7103 = vpop.f32.mrb[0].mxu0
      %v7104 = vadd.f32 0.0, %v7103
      %v7105 = vpop.f32.mrb[0].mxu0
      %v7106 = vadd.f32 0.0, %v7105
      %v7107 = vpop.f32.mrb[0].mxu0
      %v7108 = vadd.f32 0.0, %v7107
      %v7109 = vpop.f32.mrb[0].mxu0
      %v7110 = vadd.f32 0.0, %v7109
      %7111 = vmatprep.mubr.bf16.mxu0 0
      %7112 = vmatmul.mubr.bf16.gmra.mrb[0].mxu0 %v6894
      %v7113 = vpop.f32.mrb[0].mxu0
      %v7114 = vadd.f32 0.0, %v7113
      %v7115 = vpop.f32.mrb[0].mxu0
      %v7116 = vadd.f32 0.0, %v7115
      %v7117 = vpop.f32.mrb[0].mxu0
      %v7118 = vadd.f32 0.0, %v7117
      %v7119 = vpop.f32.mrb[0].mxu0
      %v7120 = vadd.f32 0.0, %v7119
      %7121 = vmatprep.mubr.bf16.mxu0 0
      %7122 = vmatmul.mubr.bf16.gmra.mrb[0].mxu0 %v6895
      %v7123 = vpop.f32.mrb[0].mxu0
      %v7124 = vadd.f32 0.0, %v7123
      %v7125 = vpop.f32.mrb[0].mxu0
      %v7126 = vadd.f32 0.0, %v7125
      %v7127 = vpop.f32.mrb[0].mxu0
      %v7128 = vadd.f32 0.0, %v7127
      %v7129 = vpop.f32.mrb[0].mxu0
      %v7130 = vadd.f32 0.0, %v7129
      %7131 = vmatprep.mubr.bf16.mxu0 0
      %7132 = vmatmul.mubr.bf16.gmra.mrb[0].mxu0 %v6896
      %v7133 = vpop.f32.mrb[0].mxu0
      %v7134 = vadd.f32 0.0, %v7133
      %v7135 = vpop.f32.mrb[0].mxu0
      %v7136 = vadd.f32 0.0, %v7135
      %v7137 = vpop.f32.mrb[0].mxu0
      %v7138 = vadd.f32 0.0, %v7137
      %v7139 = vpop.f32.mrb[0].mxu0
      %v7140 = vadd.f32 0.0, %v7139
      %7141 = vmatprep.mubr.bf16.mxu0 0
      %7142 = vmatmul.mubr.bf16.gmra.mrb[0].mxu0 %v6897
      %v7143 = vpop.f32.mrb[0].mxu0
      %v7144 = vadd.f32 0.0, %v7143
      %v7145 = vpop.f32.mrb[0].mxu0
      %v7146 = vadd.f32 0.0, %v7145
      %v7147 = vpop.f32.mrb[0].mxu0
      %v7148 = vadd.f32 0.0, %v7147
      %v7149 = vpop.f32.mrb[0].mxu0
      %v7150 = vadd.f32 0.0, %v7149
      %7151 = vmatprep.mubr.bf16.mxu0 0
      %7152 = vmatmul.mubr.bf16.gmra.mrb[0].mxu0 %v6898
      %v7153 = vpop.f32.mrb[0].mxu0
      %v7154 = vadd.f32 0.0, %v7153
      %v7155 = vpop.f32.mrb[0].mxu0
      %v7156 = vadd.f32 0.0, %v7155
      %v7157 = vpop.f32.mrb[0].mxu0
      %v7158 = vadd.f32 0.0, %v7157
      %v7159 = vpop.f32.mrb[0].mxu0
      %v7160 = vadd.f32 0.0, %v7159
      %7161 = vmatprep.mubr.bf16.mxu0 0
      %7162 = vmatmul.mubr.bf16.gmra.mrb[0].mxu0 %v6899
      %v7163 = vpop.f32.mrb[0].mxu0
      %v7164 = vadd.f32 0.0, %v7163
      %v7165 = vpop.f32.mrb[0].mxu0
      %v7166 = vadd.f32 0.0, %v7165
      %v7167 = vpop.f32.mrb[0].mxu0
      %v7168 = vadd.f32 0.0, %v7167
      %v7169 = vpop.f32.mrb[0].mxu0
      %v7170 = vadd.f32 0.0, %v7169
      %7171 = vmatprep.mubr.bf16.mxu0 0
      %7172 = vmatmul.mubr.bf16.gmra.mrb[0].mxu0 %v6900
      %v7173 = vpop.f32.mrb[0].mxu0
      %v7174 = vadd.f32 0.0, %v7173
      %v7175 = vpop.f32.mrb[0].mxu0
      %v7176 = vadd.f32 0.0, %v7175
      %v7177 = vpop.f32.mrb[0].mxu0
      %v7178 = vadd.f32 0.0, %v7177
      %v7179 = vpop.f32.mrb[0].mxu0
      %v7180 = vadd.f32 0.0, %v7179
      %7181 = vmatprep.mubr.bf16.mxu0 0
      %7182 = vmatmul.mubr.bf16.gmra.mrb[0].mxu0 %v6901
      %v7183 = vpop.f32.mrb[0].mxu0
      %v7184 = vadd.f32 0.0, %v7183
      %v7185 = vpop.f32.mrb[0].mxu0
      %v7186 = vadd.f32 0.0, %v7185
      %v7187 = vpop.f32.mrb[0].mxu0
      %v7188 = vadd.f32 0.0, %v7187
      %v7189 = vpop.f32.mrb[0].mxu0
      %v7190 = vadd.f32 0.0, %v7189
      %7191 = vdwg.mxu0
      %v7192 = vadd.f32 %v6790, %v7034
      %v7193 = vadd.f32 %v6791, %v7036
      %v7194 = vadd.f32 %v6792, %v7038
      %v7195 = vadd.f32 %v6793, %v7040
      %v7196 = vadd.f32 %v6794, %v7044
      %v7197 = vadd.f32 %v6795, %v7046
      %v7198 = vadd.f32 %v6796, %v7048
      %v7199 = vadd.f32 %v6797, %v7050
      %v7200 = vadd.f32 %v6798, %v7054
      %v7201 = vadd.f32 %v6799, %v7056
      %v7202 = vadd.f32 %v6800, %v7058
      %v7203 = vadd.f32 %v6801, %v7060
      %v7204 = vadd.f32 %v6802, %v7064
      %v7205 = vadd.f32 %v6803, %v7066
      %v7206 = vadd.f32 %v6804, %v7068
      %v7207 = vadd.f32 %v6805, %v7070
      %v7208 = vadd.f32 %v6806, %v7074
      %v7209 = vadd.f32 %v6807, %v7076
      %v7210 = vadd.f32 %v6808, %v7078
      %v7211 = vadd.f32 %v6809, %v7080
      %v7212 = vadd.f32 %v6810, %v7084
      %v7213 = vadd.f32 %v6811, %v7086
      %v7214 = vadd.f32 %v6812, %v7088
      %v7215 = vadd.f32 %v6813, %v7090
      %v7216 = vadd.f32 %v6814, %v7094
      %v7217 = vadd.f32 %v6815, %v7096
      %v7218 = vadd.f32 %v6816, %v7098
      %v7219 = vadd.f32 %v6817, %v7100
      %v7220 = vadd.f32 %v6818, %v7104
      %v7221 = vadd.f32 %v6819, %v7106
      %v7222 = vadd.f32 %v6820, %v7108
      %v7223 = vadd.f32 %v6821, %v7110
      %v7224 = vadd.f32 %v6822, %v7114
      %v7225 = vadd.f32 %v6823, %v7116
      %v7226 = vadd.f32 %v6824, %v7118
      %v7227 = vadd.f32 %v6825, %v7120
      %v7228 = vadd.f32 %v6826, %v7124
      %v7229 = vadd.f32 %v6827, %v7126
      %v7230 = vadd.f32 %v6828, %v7128
      %v7231 = vadd.f32 %v6829, %v7130
      %v7232 = vadd.f32 %v6830, %v7134
      %v7233 = vadd.f32 %v6831, %v7136
      %v7234 = vadd.f32 %v6832, %v7138
      %v7235 = vadd.f32 %v6833, %v7140
      %v7236 = vadd.f32 %v6834, %v7144
      %v7237 = vadd.f32 %v6835, %v7146
      %v7238 = vadd.f32 %v6836, %v7148
      %v7239 = vadd.f32 %v6837, %v7150
      %v7240 = vadd.f32 %v6838, %v7154
      %v7241 = vadd.f32 %v6839, %v7156
      %v7242 = vadd.f32 %v6840, %v7158
      %v7243 = vadd.f32 %v6841, %v7160
      %v7244 = vadd.f32 %v6842, %v7164
      %v7245 = vadd.f32 %v6843, %v7166
      %v7246 = vadd.f32 %v6844, %v7168
      %v7247 = vadd.f32 %v6845, %v7170
      %v7248 = vadd.f32 %v6846, %v7174
      %v7249 = vadd.f32 %v6847, %v7176
      %v7250 = vadd.f32 %v6848, %v7178
      %v7251 = vadd.f32 %v6849, %v7180
      %v7252 = vadd.f32 %v6850, %v7184
      %v7253 = vadd.f32 %v6851, %v7186
      %v7254 = vadd.f32 %v6852, %v7188
      %v7255 = vadd.f32 %v6853, %v7190
      %v7256 = vld [vmem:[#allocation3 + $0x4] sm:$0xff]
      %v7257 = vld [vmem:[#allocation3 + $0x14] sm:$0xff]
      %v7258 = vld [vmem:[#allocation3 + $0x24] sm:$0xff]
      %v7259 = vld [vmem:[#allocation3 + $0x34] sm:$0xff]
      %v7260 = vld [vmem:[#allocation3 + $0x44] sm:$0xff]
      %v7261 = vld [vmem:[#allocation3 + $0x54] sm:$0xff]
      %v7262 = vld [vmem:[#allocation3 + $0x64] sm:$0xff]
      %v7263 = vld [vmem:[#allocation3 + $0x74] sm:$0xff]
      %v7264 = vld [vmem:[#allocation3 + $0x84] sm:$0xff]
      %v7265 = vld [vmem:[#allocation3 + $0x94] sm:$0xff]
      %v7266 = vld [vmem:[#allocation3 + $0xa4] sm:$0xff]
      %v7267 = vld [vmem:[#allocation3 + $0xb4] sm:$0xff]
      %v7268 = vld [vmem:[#allocation3 + $0xc4] sm:$0xff]
      %v7269 = vld [vmem:[#allocation3 + $0xd4] sm:$0xff]
      %v7270 = vld [vmem:[#allocation3 + $0xe4] sm:$0xff]
      %v7271 = vld [vmem:[#allocation3 + $0xf4] sm:$0xff]
      %v7272 = vld [vmem:[#allocation3 + $0x104] sm:$0xff]
      %v7273 = vld [vmem:[#allocation3 + $0x114] sm:$0xff]
      %v7274 = vld [vmem:[#allocation3 + $0x124] sm:$0xff]
      %v7275 = vld [vmem:[#allocation3 + $0x134] sm:$0xff]
      %v7276 = vld [vmem:[#allocation3 + $0x144] sm:$0xff]
      %v7277 = vld [vmem:[#allocation3 + $0x154] sm:$0xff]
      %v7278 = vld [vmem:[#allocation3 + $0x164] sm:$0xff]
      %v7279 = vld [vmem:[#allocation3 + $0x174] sm:$0xff]
      %v7280 = vld [vmem:[#allocation3 + $0x184] sm:$0xff]
      %v7281 = vld [vmem:[#allocation3 + $0x194] sm:$0xff]
      %v7282 = vld [vmem:[#allocation3 + $0x1a4] sm:$0xff]
      %v7283 = vld [vmem:[#allocation3 + $0x1b4] sm:$0xff]
      %v7284 = vld [vmem:[#allocation3 + $0x1c4] sm:$0xff]
      %v7285 = vld [vmem:[#allocation3 + $0x1d4] sm:$0xff]
      %v7286 = vld [vmem:[#allocation3 + $0x1e4] sm:$0xff]
      %v7287 = vld [vmem:[#allocation3 + $0x1f4] sm:$0xff]
      %v7288 = vpack.c.bf16 %v7257, %v7256
      %v7289 = vpack.c.bf16 %v7259, %v7258
      %v7290 = vpack.c.bf16 %v7261, %v7260
      %v7291 = vpack.c.bf16 %v7263, %v7262
      %v7292 = vpack.c.bf16 %v7265, %v7264
      %v7293 = vpack.c.bf16 %v7267, %v7266
      %v7294 = vpack.c.bf16 %v7269, %v7268
      %v7295 = vpack.c.bf16 %v7271, %v7270
      %v7296 = vpack.c.bf16 %v7273, %v7272
      %v7297 = vpack.c.bf16 %v7275, %v7274
      %v7298 = vpack.c.bf16 %v7277, %v7276
      %v7299 = vpack.c.bf16 %v7279, %v7278
      %v7300 = vpack.c.bf16 %v7281, %v7280
      %v7301 = vpack.c.bf16 %v7283, %v7282
      %v7302 = vpack.c.bf16 %v7285, %v7284
      %v7303 = vpack.c.bf16 %v7287, %v7286
      %s7304 = scalar_lea.vmem %s3, 512
      %v7305 = vld [vmem:[%s7304] sm:$0xff]
      %v7306 = vld [vmem:[%s7304 + $0x8] sm:$0xff]
      %v7307 = vld [vmem:[%s7304 + $0x10] sm:$0xff]
      %v7308 = vld [vmem:[%s7304 + $0x18] sm:$0xff]
      %v7309 = vld [vmem:[%s7304 + $0x20] sm:$0xff]
      %v7310 = vld [vmem:[%s7304 + $0x28] sm:$0xff]
      %v7311 = vld [vmem:[%s7304 + $0x30] sm:$0xff]
      %v7312 = vld [vmem:[%s7304 + $0x38] sm:$0xff]
      %v7313 = vld [vmem:[%s7304 + $0x40] sm:$0xff]
      %v7314 = vld [vmem:[%s7304 + $0x48] sm:$0xff]
      %v7315 = vld [vmem:[%s7304 + $0x50] sm:$0xff]
      %v7316 = vld [vmem:[%s7304 + $0x58] sm:$0xff]
      %v7317 = vld [vmem:[%s7304 + $0x60] sm:$0xff]
      %v7318 = vld [vmem:[%s7304 + $0x68] sm:$0xff]
      %v7319 = vld [vmem:[%s7304 + $0x70] sm:$0xff]
      %v7320 = vld [vmem:[%s7304 + $0x78] sm:$0xff]
      %v7337 = vunpack.c.l.b16 %v7305
      %v7338 = vunpack.c.h.b16 %v7305
      %v7339 = vunpack.c.l.b16 %v7306
      %v7340 = vunpack.c.h.b16 %v7306
      %v7341 = vunpack.c.l.b16 %v7307
      %v7342 = vunpack.c.h.b16 %v7307
      %v7343 = vunpack.c.l.b16 %v7308
      %v7344 = vunpack.c.h.b16 %v7308
      %v7345 = vunpack.c.l.b16 %v7309
      %v7346 = vunpack.c.h.b16 %v7309
      %v7347 = vunpack.c.l.b16 %v7310
      %v7348 = vunpack.c.h.b16 %v7310
      %v7349 = vunpack.c.l.b16 %v7311
      %v7350 = vunpack.c.h.b16 %v7311
      %v7351 = vunpack.c.l.b16 %v7312
      %v7352 = vunpack.c.h.b16 %v7312
      %v7353 = vunpack.c.l.b16 %v7313
      %v7354 = vunpack.c.h.b16 %v7313
      %v7355 = vunpack.c.l.b16 %v7314
      %v7356 = vunpack.c.h.b16 %v7314
      %v7357 = vunpack.c.l.b16 %v7315
      %v7358 = vunpack.c.h.b16 %v7315
      %v7359 = vunpack.c.l.b16 %v7316
      %v7360 = vunpack.c.h.b16 %v7316
      %v7361 = vunpack.c.l.b16 %v7317
      %v7362 = vunpack.c.h.b16 %v7317
      %v7363 = vunpack.c.l.b16 %v7318
      %v7364 = vunpack.c.h.b16 %v7318
      %v7365 = vunpack.c.l.b16 %v7319
      %v7366 = vunpack.c.h.b16 %v7319
      %v7367 = vunpack.c.l.b16 %v7320
      %v7368 = vunpack.c.h.b16 %v7320
      %v7369 = vpack.c.b16 %v7339, %v7337
      %v7370 = vpack.c.b16 %v7340, %v7338
      %v7371 = vpack.c.b16 %v7343, %v7341
      %v7372 = vpack.c.b16 %v7344, %v7342
      %v7373 = vpack.c.b16 %v7347, %v7345
      %v7374 = vpack.c.b16 %v7348, %v7346
      %v7375 = vpack.c.b16 %v7351, %v7349
      %v7376 = vpack.c.b16 %v7352, %v7350
      %v7377 = vpack.c.b16 %v7355, %v7353
      %v7378 = vpack.c.b16 %v7356, %v7354
      %v7379 = vpack.c.b16 %v7359, %v7357
      %v7380 = vpack.c.b16 %v7360, %v7358
      %v7381 = vpack.c.b16 %v7363, %v7361
      %v7382 = vpack.c.b16 %v7364, %v7362
      %v7383 = vpack.c.b16 %v7367, %v7365
      %v7384 = vpack.c.b16 %v7368, %v7366
      %7401 = vmatprep.subr.bf16.mxu0 %v7370
      %7402 = vmatpush1.bf16.msra.mxu0 %v7369
      %7403 = vmatprep.subr.bf16.mxu0 %v7372
      %7404 = vmatpush1.bf16.msra.mxu0 %v7371
      %7405 = vmatprep.subr.bf16.mxu0 %v7374
      %7406 = vmatpush1.bf16.msra.mxu0 %v7373
      %7407 = vmatprep.subr.bf16.mxu0 %v7376
      %7408 = vmatpush1.bf16.msra.mxu0 %v7375
      %7409 = vmatprep.subr.bf16.mxu0 %v7378
      %7410 = vmatpush1.bf16.msra.mxu0 %v7377
      %7411 = vmatprep.subr.bf16.mxu0 %v7380
      %7412 = vmatpush1.bf16.msra.mxu0 %v7379
      %7413 = vmatprep.subr.bf16.mxu0 %v7382
      %7414 = vmatpush1.bf16.msra.mxu0 %v7381
      %7415 = vmatprep.subr.bf16.mxu0 %v7384
      %7416 = vmatpush1.bf16.msra.mxu0 %v7383
      %7417 = vmatprep.subr.bf16.mxu0 0
      %7418 = vmatpush1.bf16.msra.mxu0 0
      %7419 = vmatprep.subr.bf16.mxu0 0
      %7420 = vmatpush1.bf16.msra.mxu0 0
      %7421 = vmatprep.subr.bf16.mxu0 0
      %7422 = vmatpush1.bf16.msra.mxu0 0
      %7423 = vmatprep.subr.bf16.mxu0 0
      %7424 = vmatpush1.bf16.msra.mxu0 0
      %7425 = vmatprep.subr.bf16.mxu0 0
      %7426 = vmatpush1.bf16.msra.mxu0 0
      %7427 = vmatprep.subr.bf16.mxu0 0
      %7428 = vmatpush1.bf16.msra.mxu0 0
      %7429 = vmatprep.subr.bf16.mxu0 0
      %7430 = vmatpush1.bf16.msra.mxu0 0
      %7431 = vmatprep.subr.bf16.mxu0 0
      %7432 = vmatpush1.bf16.msra.mxu0 0
      %7433 = vmatprep.mubr.bf16.mxu0 0
      %7434 = vmatmul.mubr.bf16.gmra.mrb[0].mxu0 %v7288
      %v7435 = vpop.f32.mrb[0].mxu0
      %v7436 = vadd.f32 0.0, %v7435
      %v7437 = vpop.f32.mrb[0].mxu0
      %v7438 = vadd.f32 0.0, %v7437
      %v7439 = vpop.f32.mrb[0].mxu0
      %v7440 = vadd.f32 0.0, %v7439
      %v7441 = vpop.f32.mrb[0].mxu0
      %v7442 = vadd.f32 0.0, %v7441
      %7443 = vmatprep.mubr.bf16.mxu0 0
      %7444 = vmatmul.mubr.bf16.gmra.mrb[0].mxu0 %v7289
      %v7445 = vpop.f32.mrb[0].mxu0
      %v7446 = vadd.f32 0.0, %v7445
      %v7447 = vpop.f32.mrb[0].mxu0
      %v7448 = vadd.f32 0.0, %v7447
      %v7449 = vpop.f32.mrb[0].mxu0
      %v7450 = vadd.f32 0.0, %v7449
      %v7451 = vpop.f32.mrb[0].mxu0
      %v7452 = vadd.f32 0.0, %v7451
      %7453 = vmatprep.mubr.bf16.mxu0 0
      %7454 = vmatmul.mubr.bf16.gmra.mrb[0].mxu0 %v7290
      %v7455 = vpop.f32.mrb[0].mxu0
      %v7456 = vadd.f32 0.0, %v7455
      %v7457 = vpop.f32.mrb[0].mxu0
      %v7458 = vadd.f32 0.0, %v7457
      %v7459 = vpop.f32.mrb[0].mxu0
      %v7460 = vadd.f32 0.0, %v7459
      %v7461 = vpop.f32.mrb[0].mxu0
      %v7462 = vadd.f32 0.0, %v7461
      %7463 = vmatprep.mubr.bf16.mxu0 0
      %7464 = vmatmul.mubr.bf16.gmra.mrb[0].mxu0 %v7291
      %v7465 = vpop.f32.mrb[0].mxu0
      %v7466 = vadd.f32 0.0, %v7465
      %v7467 = vpop.f32.mrb[0].mxu0
      %v7468 = vadd.f32 0.0, %v7467
      %v7469 = vpop.f32.mrb[0].mxu0
      %v7470 = vadd.f32 0.0, %v7469
      %v7471 = vpop.f32.mrb[0].mxu0
      %v7472 = vadd.f32 0.0, %v7471
      %7473 = vmatprep.mubr.bf16.mxu0 0
      %7474 = vmatmul.mubr.bf16.gmra.mrb[0].mxu0 %v7292
      %v7475 = vpop.f32.mrb[0].mxu0
      %v7476 = vadd.f32 0.0, %v7475
      %v7477 = vpop.f32.mrb[0].mxu0
      %v7478 = vadd.f32 0.0, %v7477
      %v7479 = vpop.f32.mrb[0].mxu0
      %v7480 = vadd.f32 0.0, %v7479
      %v7481 = vpop.f32.mrb[0].mxu0
      %v7482 = vadd.f32 0.0, %v7481
      %7483 = vmatprep.mubr.bf16.mxu0 0
      %7484 = vmatmul.mubr.bf16.gmra.mrb[0].mxu0 %v7293
      %v7485 = vpop.f32.mrb[0].mxu0
      %v7486 = vadd.f32 0.0, %v7485
      %v7487 = vpop.f32.mrb[0].mxu0
      %v7488 = vadd.f32 0.0, %v7487
      %v7489 = vpop.f32.mrb[0].mxu0
      %v7490 = vadd.f32 0.0, %v7489
      %v7491 = vpop.f32.mrb[0].mxu0
      %v7492 = vadd.f32 0.0, %v7491
      %7493 = vmatprep.mubr.bf16.mxu0 0
      %7494 = vmatmul.mubr.bf16.gmra.mrb[0].mxu0 %v7294
      %v7495 = vpop.f32.mrb[0].mxu0
      %v7496 = vadd.f32 0.0, %v7495
      %v7497 = vpop.f32.mrb[0].mxu0
      %v7498 = vadd.f32 0.0, %v7497
      %v7499 = vpop.f32.mrb[0].mxu0
      %v7500 = vadd.f32 0.0, %v7499
      %v7501 = vpop.f32.mrb[0].mxu0
      %v7502 = vadd.f32 0.0, %v7501
      %7503 = vmatprep.mubr.bf16.mxu0 0
      %7504 = vmatmul.mubr.bf16.gmra.mrb[0].mxu0 %v7295
      %v7505 = vpop.f32.mrb[0].mxu0
      %v7506 = vadd.f32 0.0, %v7505
      %v7507 = vpop.f32.mrb[0].mxu0
      %v7508 = vadd.f32 0.0, %v7507
      %v7509 = vpop.f32.mrb[0].mxu0
      %v7510 = vadd.f32 0.0, %v7509
      %v7511 = vpop.f32.mrb[0].mxu0
      %v7512 = vadd.f32 0.0, %v7511
      %7513 = vmatprep.mubr.bf16.mxu0 0
      %7514 = vmatmul.mubr.bf16.gmra.mrb[0].mxu0 %v7296
      %v7515 = vpop.f32.mrb[0].mxu0
      %v7516 = vadd.f32 0.0, %v7515
      %v7517 = vpop.f32.mrb[0].mxu0
      %v7518 = vadd.f32 0.0, %v7517
      %v7519 = vpop.f32.mrb[0].mxu0
      %v7520 = vadd.f32 0.0, %v7519
      %v7521 = vpop.f32.mrb[0].mxu0
      %v7522 = vadd.f32 0.0, %v7521
      %7523 = vmatprep.mubr.bf16.mxu0 0
      %7524 = vmatmul.mubr.bf16.gmra.mrb[0].mxu0 %v7297
      %v7525 = vpop.f32.mrb[0].mxu0
      %v7526 = vadd.f32 0.0, %v7525
      %v7527 = vpop.f32.mrb[0].mxu0
      %v7528 = vadd.f32 0.0, %v7527
      %v7529 = vpop.f32.mrb[0].mxu0
      %v7530 = vadd.f32 0.0, %v7529
      %v7531 = vpop.f32.mrb[0].mxu0
      %v7532 = vadd.f32 0.0, %v7531
      %7533 = vmatprep.mubr.bf16.mxu0 0
      %7534 = vmatmul.mubr.bf16.gmra.mrb[0].mxu0 %v7298
      %v7535 = vpop.f32.mrb[0].mxu0
      %v7536 = vadd.f32 0.0, %v7535
      %v7537 = vpop.f32.mrb[0].mxu0
      %v7538 = vadd.f32 0.0, %v7537
      %v7539 = vpop.f32.mrb[0].mxu0
      %v7540 = vadd.f32 0.0, %v7539
      %v7541 = vpop.f32.mrb[0].mxu0
      %v7542 = vadd.f32 0.0, %v7541
      %7543 = vmatprep.mubr.bf16.mxu0 0
      %7544 = vmatmul.mubr.bf16.gmra.mrb[0].mxu0 %v7299
      %v7545 = vpop.f32.mrb[0].mxu0
      %v7546 = vadd.f32 0.0, %v7545
      %v7547 = vpop.f32.mrb[0].mxu0
      %v7548 = vadd.f32 0.0, %v7547
      %v7549 = vpop.f32.mrb[0].mxu0
      %v7550 = vadd.f32 0.0, %v7549
      %v7551 = vpop.f32.mrb[0].mxu0
      %v7552 = vadd.f32 0.0, %v7551
      %7553 = vmatprep.mubr.bf16.mxu0 0
      %7554 = vmatmul.mubr.bf16.gmra.mrb[0].mxu0 %v7300
      %v7555 = vpop.f32.mrb[0].mxu0
      %v7556 = vadd.f32 0.0, %v7555
      %v7557 = vpop.f32.mrb[0].mxu0
      %v7558 = vadd.f32 0.0, %v7557
      %v7559 = vpop.f32.mrb[0].mxu0
      %v7560 = vadd.f32 0.0, %v7559
      %v7561 = vpop.f32.mrb[0].mxu0
      %v7562 = vadd.f32 0.0, %v7561
      %7563 = vmatprep.mubr.bf16.mxu0 0
      %7564 = vmatmul.mubr.bf16.gmra.mrb[0].mxu0 %v7301
      %v7565 = vpop.f32.mrb[0].mxu0
      %v7566 = vadd.f32 0.0, %v7565
      %v7567 = vpop.f32.mrb[0].mxu0
      %v7568 = vadd.f32 0.0, %v7567
      %v7569 = vpop.f32.mrb[0].mxu0
      %v7570 = vadd.f32 0.0, %v7569
      %v7571 = vpop.f32.mrb[0].mxu0
      %v7572 = vadd.f32 0.0, %v7571
      %7573 = vmatprep.mubr.bf16.mxu0 0
      %7574 = vmatmul.mubr.bf16.gmra.mrb[0].mxu0 %v7302
      %v7575 = vpop.f32.mrb[0].mxu0
      %v7576 = vadd.f32 0.0, %v7575
      %v7577 = vpop.f32.mrb[0].mxu0
      %v7578 = vadd.f32 0.0, %v7577
      %v7579 = vpop.f32.mrb[0].mxu0
      %v7580 = vadd.f32 0.0, %v7579
      %v7581 = vpop.f32.mrb[0].mxu0
      %v7582 = vadd.f32 0.0, %v7581
      %7583 = vmatprep.mubr.bf16.mxu0 0
      %7584 = vmatmul.mubr.bf16.gmra.mrb[0].mxu0 %v7303
      %v7585 = vpop.f32.mrb[0].mxu0
      %v7586 = vadd.f32 0.0, %v7585
      %v7587 = vpop.f32.mrb[0].mxu0
      %v7588 = vadd.f32 0.0, %v7587
      %v7589 = vpop.f32.mrb[0].mxu0
      %v7590 = vadd.f32 0.0, %v7589
      %v7591 = vpop.f32.mrb[0].mxu0
      %v7592 = vadd.f32 0.0, %v7591
      %7593 = vdwg.mxu0
      %v7594 = vadd.f32 %v7192, %v7436
      %v7595 = vadd.f32 %v7193, %v7438
      %v7596 = vadd.f32 %v7194, %v7440
      %v7597 = vadd.f32 %v7195, %v7442
      %v7598 = vadd.f32 %v7196, %v7446
      %v7599 = vadd.f32 %v7197, %v7448
      %v7600 = vadd.f32 %v7198, %v7450
      %v7601 = vadd.f32 %v7199, %v7452
      %v7602 = vadd.f32 %v7200, %v7456
      %v7603 = vadd.f32 %v7201, %v7458
      %v7604 = vadd.f32 %v7202, %v7460
      %v7605 = vadd.f32 %v7203, %v7462
      %v7606 = vadd.f32 %v7204, %v7466
      %v7607 = vadd.f32 %v7205, %v7468
      %v7608 = vadd.f32 %v7206, %v7470
      %v7609 = vadd.f32 %v7207, %v7472
      %v7610 = vadd.f32 %v7208, %v7476
      %v7611 = vadd.f32 %v7209, %v7478
      %v7612 = vadd.f32 %v7210, %v7480
      %v7613 = vadd.f32 %v7211, %v7482
      %v7614 = vadd.f32 %v7212, %v7486
      %v7615 = vadd.f32 %v7213, %v7488
      %v7616 = vadd.f32 %v7214, %v7490
      %v7617 = vadd.f32 %v7215, %v7492
      %v7618 = vadd.f32 %v7216, %v7496
      %v7619 = vadd.f32 %v7217, %v7498
      %v7620 = vadd.f32 %v7218, %v7500
      %v7621 = vadd.f32 %v7219, %v7502
      %v7622 = vadd.f32 %v7220, %v7506
      %v7623 = vadd.f32 %v7221, %v7508
      %v7624 = vadd.f32 %v7222, %v7510
      %v7625 = vadd.f32 %v7223, %v7512
      %v7626 = vadd.f32 %v7224, %v7516
      %v7627 = vadd.f32 %v7225, %v7518
      %v7628 = vadd.f32 %v7226, %v7520
      %v7629 = vadd.f32 %v7227, %v7522
      %v7630 = vadd.f32 %v7228, %v7526
      %v7631 = vadd.f32 %v7229, %v7528
      %v7632 = vadd.f32 %v7230, %v7530
      %v7633 = vadd.f32 %v7231, %v7532
      %v7634 = vadd.f32 %v7232, %v7536
      %v7635 = vadd.f32 %v7233, %v7538
      %v7636 = vadd.f32 %v7234, %v7540
      %v7637 = vadd.f32 %v7235, %v7542
      %v7638 = vadd.f32 %v7236, %v7546
      %v7639 = vadd.f32 %v7237, %v7548
      %v7640 = vadd.f32 %v7238, %v7550
      %v7641 = vadd.f32 %v7239, %v7552
      %v7642 = vadd.f32 %v7240, %v7556
      %v7643 = vadd.f32 %v7241, %v7558
      %v7644 = vadd.f32 %v7242, %v7560
      %v7645 = vadd.f32 %v7243, %v7562
      %v7646 = vadd.f32 %v7244, %v7566
      %v7647 = vadd.f32 %v7245, %v7568
      %v7648 = vadd.f32 %v7246, %v7570
      %v7649 = vadd.f32 %v7247, %v7572
      %v7650 = vadd.f32 %v7248, %v7576
      %v7651 = vadd.f32 %v7249, %v7578
      %v7652 = vadd.f32 %v7250, %v7580
      %v7653 = vadd.f32 %v7251, %v7582
      %v7654 = vadd.f32 %v7252, %v7586
      %v7655 = vadd.f32 %v7253, %v7588
      %v7656 = vadd.f32 %v7254, %v7590
      %v7657 = vadd.f32 %v7255, %v7592
      %v7658 = vmax.f32 %v7594, %v7595
      %v7659 = vmax.f32 %v7596, %v7597
      %v7660 = vmax.f32 %v7598, %v7599
      %v7661 = vmax.f32 %v7600, %v7601
      %v7662 = vmax.f32 %v7602, %v7603
      %v7663 = vmax.f32 %v7604, %v7605
      %v7664 = vmax.f32 %v7606, %v7607
      %v7665 = vmax.f32 %v7608, %v7609
      %v7666 = vmax.f32 %v7610, %v7611
      %v7667 = vmax.f32 %v7612, %v7613
      %v7668 = vmax.f32 %v7614, %v7615
      %v7669 = vmax.f32 %v7616, %v7617
      %v7670 = vmax.f32 %v7618, %v7619
      %v7671 = vmax.f32 %v7620, %v7621
      %v7672 = vmax.f32 %v7622, %v7623
      %v7673 = vmax.f32 %v7624, %v7625
      %v7674 = vmax.f32 %v7626, %v7627
      %v7675 = vmax.f32 %v7628, %v7629
      %v7676 = vmax.f32 %v7630, %v7631
      %v7677 = vmax.f32 %v7632, %v7633
      %v7678 = vmax.f32 %v7634, %v7635
      %v7679 = vmax.f32 %v7636, %v7637
      %v7680 = vmax.f32 %v7638, %v7639
      %v7681 = vmax.f32 %v7640, %v7641
      %v7682 = vmax.f32 %v7642, %v7643
      %v7683 = vmax.f32 %v7644, %v7645
      %v7684 = vmax.f32 %v7646, %v7647
      %v7685 = vmax.f32 %v7648, %v7649
      %v7686 = vmax.f32 %v7650, %v7651
      %v7687 = vmax.f32 %v7652, %v7653
      %v7688 = vmax.f32 %v7654, %v7655
      %v7689 = vmax.f32 %v7656, %v7657
      %7690 = vst [vmem:[#allocation4] sm:$0xff] %v7658
      %7691 = vst [vmem:[#allocation4 + $0x8] sm:$0xff] %v7659
      %7692 = vst [vmem:[#allocation4 + $0x10] sm:$0xff] %v7660
      %7693 = vst [vmem:[#allocation4 + $0x18] sm:$0xff] %v7661
      %7694 = vst [vmem:[#allocation4 + $0x20] sm:$0xff] %v7662
      %7695 = vst [vmem:[#allocation4 + $0x28] sm:$0xff] %v7663
      %7696 = vst [vmem:[#allocation4 + $0x30] sm:$0xff] %v7664
      %7697 = vst [vmem:[#allocation4 + $0x38] sm:$0xff] %v7665
      %7698 = vst [vmem:[#allocation4 + $0x40] sm:$0xff] %v7666
      %7699 = vst [vmem:[#allocation4 + $0x48] sm:$0xff] %v7667
      %7700 = vst [vmem:[#allocation4 + $0x50] sm:$0xff] %v7668
      %7701 = vst [vmem:[#allocation4 + $0x58] sm:$0xff] %v7669
      %7702 = vst [vmem:[#allocation4 + $0x60] sm:$0xff] %v7670
      %7703 = vst [vmem:[#allocation4 + $0x68] sm:$0xff] %v7671
      %7704 = vst [vmem:[#allocation4 + $0x70] sm:$0xff] %v7672
      %7705 = vst [vmem:[#allocation4 + $0x78] sm:$0xff] %v7673
      %7706 = vst [vmem:[#allocation4 + $0x80] sm:$0xff] %v7674
      %7707 = vst [vmem:[#allocation4 + $0x88] sm:$0xff] %v7675
      %7708 = vst [vmem:[#allocation4 + $0x90] sm:$0xff] %v7676
      %7709 = vst [vmem:[#allocation4 + $0x98] sm:$0xff] %v7677
      %7710 = vst [vmem:[#allocation4 + $0xa0] sm:$0xff] %v7678
      %7711 = vst [vmem:[#allocation4 + $0xa8] sm:$0xff] %v7679
      %7712 = vst [vmem:[#allocation4 + $0xb0] sm:$0xff] %v7680
      %7713 = vst [vmem:[#allocation4 + $0xb8] sm:$0xff] %v7681
      %7714 = vst [vmem:[#allocation4 + $0xc0] sm:$0xff] %v7682
      %7715 = vst [vmem:[#allocation4 + $0xc8] sm:$0xff] %v7683
      %7716 = vst [vmem:[#allocation4 + $0xd0] sm:$0xff] %v7684
      %7717 = vst [vmem:[#allocation4 + $0xd8] sm:$0xff] %v7685
      %7718 = vst [vmem:[#allocation4 + $0xe0] sm:$0xff] %v7686
      %7719 = vst [vmem:[#allocation4 + $0xe8] sm:$0xff] %v7687
      %7720 = vst [vmem:[#allocation4 + $0xf0] sm:$0xff] %v7688
      %7721 = vst [vmem:[#allocation4 + $0xf8] sm:$0xff] %v7689
      %v7722 = vld [vmem:[#allocation4] ss:$2 sm:$0xf]
      %s7723 = scalar_lea.vmem [#allocation4], 8
      %v7724 = vld [vmem:[%s7723] ss:$2 sm:$0xf]
      %s7725 = scalar_lea.vmem [#allocation4], 16
      %v7726 = vld [vmem:[%s7725] ss:$2 sm:$0xf]
      %s7727 = scalar_lea.vmem [#allocation4], 24
      %v7728 = vld [vmem:[%s7727] ss:$2 sm:$0xf]
      %s7729 = scalar_lea.vmem [#allocation4], 32
      %v7730 = vld [vmem:[%s7729] ss:$2 sm:$0xf]
      %s7731 = scalar_lea.vmem [#allocation4], 40
      %v7732 = vld [vmem:[%s7731] ss:$2 sm:$0xf]
      %s7733 = scalar_lea.vmem [#allocation4], 48
      %v7734 = vld [vmem:[%s7733] ss:$2 sm:$0xf]
      %s7735 = scalar_lea.vmem [#allocation4], 56
      %v7736 = vld [vmem:[%s7735] ss:$2 sm:$0xf]
      %s7737 = scalar_lea.vmem [#allocation4], 64
      %v7738 = vld [vmem:[%s7737] ss:$2 sm:$0xf]
      %s7739 = scalar_lea.vmem [#allocation4], 72
      %v7740 = vld [vmem:[%s7739] ss:$2 sm:$0xf]
      %s7741 = scalar_lea.vmem [#allocation4], 80
      %v7742 = vld [vmem:[%s7741] ss:$2 sm:$0xf]
      %s7743 = scalar_lea.vmem [#allocation4], 88
      %v7744 = vld [vmem:[%s7743] ss:$2 sm:$0xf]
      %s7745 = scalar_lea.vmem [#allocation4], 96
      %v7746 = vld [vmem:[%s7745] ss:$2 sm:$0xf]
      %s7747 = scalar_lea.vmem [#allocation4], 104
      %v7748 = vld [vmem:[%s7747] ss:$2 sm:$0xf]
      %s7749 = scalar_lea.vmem [#allocation4], 112
      %v7750 = vld [vmem:[%s7749] ss:$2 sm:$0xf]
      %s7751 = scalar_lea.vmem [#allocation4], 120
      %v7752 = vld [vmem:[%s7751] ss:$2 sm:$0xf]
      %s7753 = scalar_lea.vmem [#allocation4], 128
      %v7754 = vld [vmem:[%s7753] ss:$2 sm:$0xf]
      %s7755 = scalar_lea.vmem [#allocation4], 136
      %v7756 = vld [vmem:[%s7755] ss:$2 sm:$0xf]
      %s7757 = scalar_lea.vmem [#allocation4], 144
      %v7758 = vld [vmem:[%s7757] ss:$2 sm:$0xf]
      %s7759 = scalar_lea.vmem [#allocation4], 152
      %v7760 = vld [vmem:[%s7759] ss:$2 sm:$0xf]
      %s7761 = scalar_lea.vmem [#allocation4], 160
      %v7762 = vld [vmem:[%s7761] ss:$2 sm:$0xf]
      %s7763 = scalar_lea.vmem [#allocation4], 168
      %v7764 = vld [vmem:[%s7763] ss:$2 sm:$0xf]
      %s7765 = scalar_lea.vmem [#allocation4], 176
      %v7766 = vld [vmem:[%s7765] ss:$2 sm:$0xf]
      %s7767 = scalar_lea.vmem [#allocation4], 184
      %v7768 = vld [vmem:[%s7767] ss:$2 sm:$0xf]
      %s7769 = scalar_lea.vmem [#allocation4], 192
      %v7770 = vld [vmem:[%s7769] ss:$2 sm:$0xf]
      %s7771 = scalar_lea.vmem [#allocation4], 200
      %v7772 = vld [vmem:[%s7771] ss:$2 sm:$0xf]
      %s7773 = scalar_lea.vmem [#allocation4], 208
      %v7774 = vld [vmem:[%s7773] ss:$2 sm:$0xf]
      %s7775 = scalar_lea.vmem [#allocation4], 216
      %v7776 = vld [vmem:[%s7775] ss:$2 sm:$0xf]
      %s7777 = scalar_lea.vmem [#allocation4], 224
      %v7778 = vld [vmem:[%s7777] ss:$2 sm:$0xf]
      %s7779 = scalar_lea.vmem [#allocation4], 232
      %v7780 = vld [vmem:[%s7779] ss:$2 sm:$0xf]
      %s7781 = scalar_lea.vmem [#allocation4], 240
      %v7782 = vld [vmem:[%s7781] ss:$2 sm:$0xf]
      %s7783 = scalar_lea.vmem [#allocation4], 248
      %v7784 = vld [vmem:[%s7783] ss:$2 sm:$0xf]
      %s7785 = scalar_lea.vmem [#allocation4], 1
      %v7786 = vld [vmem:[%s7785] ss:$2 sm:$0xf]
      %s7787 = scalar_lea.vmem [#allocation4], 9
      %v7788 = vld [vmem:[%s7787] ss:$2 sm:$0xf]
      %s7789 = scalar_lea.vmem [#allocation4], 17
      %v7790 = vld [vmem:[%s7789] ss:$2 sm:$0xf]
      %s7791 = scalar_lea.vmem [#allocation4], 25
      %v7792 = vld [vmem:[%s7791] ss:$2 sm:$0xf]
      %s7793 = scalar_lea.vmem [#allocation4], 33
      %v7794 = vld [vmem:[%s7793] ss:$2 sm:$0xf]
      %s7795 = scalar_lea.vmem [#allocation4], 41
      %v7796 = vld [vmem:[%s7795] ss:$2 sm:$0xf]
      %s7797 = scalar_lea.vmem [#allocation4], 49
      %v7798 = vld [vmem:[%s7797] ss:$2 sm:$0xf]
      %s7799 = scalar_lea.vmem [#allocation4], 57
      %v7800 = vld [vmem:[%s7799] ss:$2 sm:$0xf]
      %s7801 = scalar_lea.vmem [#allocation4], 65
      %v7802 = vld [vmem:[%s7801] ss:$2 sm:$0xf]
      %s7803 = scalar_lea.vmem [#allocation4], 73
      %v7804 = vld [vmem:[%s7803] ss:$2 sm:$0xf]
      %s7805 = scalar_lea.vmem [#allocation4], 81
      %v7806 = vld [vmem:[%s7805] ss:$2 sm:$0xf]
      %s7807 = scalar_lea.vmem [#allocation4], 89
      %v7808 = vld [vmem:[%s7807] ss:$2 sm:$0xf]
      %s7809 = scalar_lea.vmem [#allocation4], 97
      %v7810 = vld [vmem:[%s7809] ss:$2 sm:$0xf]
      %s7811 = scalar_lea.vmem [#allocation4], 105
      %v7812 = vld [vmem:[%s7811] ss:$2 sm:$0xf]
      %s7813 = scalar_lea.vmem [#allocation4], 113
      %v7814 = vld [vmem:[%s7813] ss:$2 sm:$0xf]
      %s7815 = scalar_lea.vmem [#allocation4], 121
      %v7816 = vld [vmem:[%s7815] ss:$2 sm:$0xf]
      %s7817 = scalar_lea.vmem [#allocation4], 129
      %v7818 = vld [vmem:[%s7817] ss:$2 sm:$0xf]
      %s7819 = scalar_lea.vmem [#allocation4], 137
      %v7820 = vld [vmem:[%s7819] ss:$2 sm:$0xf]
      %s7821 = scalar_lea.vmem [#allocation4], 145
      %v7822 = vld [vmem:[%s7821] ss:$2 sm:$0xf]
      %s7823 = scalar_lea.vmem [#allocation4], 153
      %v7824 = vld [vmem:[%s7823] ss:$2 sm:$0xf]
      %s7825 = scalar_lea.vmem [#allocation4], 161
      %v7826 = vld [vmem:[%s7825] ss:$2 sm:$0xf]
      %s7827 = scalar_lea.vmem [#allocation4], 169
      %v7828 = vld [vmem:[%s7827] ss:$2 sm:$0xf]
      %s7829 = scalar_lea.vmem [#allocation4], 177
      %v7830 = vld [vmem:[%s7829] ss:$2 sm:$0xf]
      %s7831 = scalar_lea.vmem [#allocation4], 185
      %v7832 = vld [vmem:[%s7831] ss:$2 sm:$0xf]
      %s7833 = scalar_lea.vmem [#allocation4], 193
      %v7834 = vld [vmem:[%s7833] ss:$2 sm:$0xf]
      %s7835 = scalar_lea.vmem [#allocation4], 201
      %v7836 = vld [vmem:[%s7835] ss:$2 sm:$0xf]
      %s7837 = scalar_lea.vmem [#allocation4], 209
      %v7838 = vld [vmem:[%s7837] ss:$2 sm:$0xf]
      %s7839 = scalar_lea.vmem [#allocation4], 217
      %v7840 = vld [vmem:[%s7839] ss:$2 sm:$0xf]
      %s7841 = scalar_lea.vmem [#allocation4], 225
      %v7842 = vld [vmem:[%s7841] ss:$2 sm:$0xf]
      %s7843 = scalar_lea.vmem [#allocation4], 233
      %v7844 = vld [vmem:[%s7843] ss:$2 sm:$0xf]
      %s7845 = scalar_lea.vmem [#allocation4], 241
      %v7846 = vld [vmem:[%s7845] ss:$2 sm:$0xf]
      %s7847 = scalar_lea.vmem [#allocation4], 249
      %v7848 = vld [vmem:[%s7847] ss:$2 sm:$0xf]
      %v7849 = vmax.f32 %v7722, %v7786
      %v7850 = vmax.f32 %v7724, %v7788
      %v7851 = vmax.f32 %v7726, %v7790
      %v7852 = vmax.f32 %v7728, %v7792
      %v7853 = vmax.f32 %v7730, %v7794
      %v7854 = vmax.f32 %v7732, %v7796
      %v7855 = vmax.f32 %v7734, %v7798
      %v7856 = vmax.f32 %v7736, %v7800
      %v7857 = vmax.f32 %v7738, %v7802
      %v7858 = vmax.f32 %v7740, %v7804
      %v7859 = vmax.f32 %v7742, %v7806
      %v7860 = vmax.f32 %v7744, %v7808
      %v7861 = vmax.f32 %v7746, %v7810
      %v7862 = vmax.f32 %v7748, %v7812
      %v7863 = vmax.f32 %v7750, %v7814
      %v7864 = vmax.f32 %v7752, %v7816
      %v7865 = vmax.f32 %v7754, %v7818
      %v7866 = vmax.f32 %v7756, %v7820
      %v7867 = vmax.f32 %v7758, %v7822
      %v7868 = vmax.f32 %v7760, %v7824
      %v7869 = vmax.f32 %v7762, %v7826
      %v7870 = vmax.f32 %v7764, %v7828
      %v7871 = vmax.f32 %v7766, %v7830
      %v7872 = vmax.f32 %v7768, %v7832
      %v7873 = vmax.f32 %v7770, %v7834
      %v7874 = vmax.f32 %v7772, %v7836
      %v7875 = vmax.f32 %v7774, %v7838
      %v7876 = vmax.f32 %v7776, %v7840
      %v7877 = vmax.f32 %v7778, %v7842
      %v7878 = vmax.f32 %v7780, %v7844
      %v7879 = vmax.f32 %v7782, %v7846
      %v7880 = vmax.f32 %v7784, %v7848
      %v7881 = vld [vmem:[%s4] sm:$0x1]
      %v7883 = vlaneseq
      %v7884 = vshrl.u32 %v7883, 7
      %v7885 = vsub.s32 0, %v7884
      %v7886 = vrot.slane %v7881, %v7885
      %v7888 = vadd.f32 %v7849, %v7886
      %v7889 = vadd.f32 %v7850, %v7886
      %v7890 = vadd.f32 %v7851, %v7886
      %v7891 = vadd.f32 %v7852, %v7886
      %v7892 = vadd.f32 %v7853, %v7886
      %v7893 = vadd.f32 %v7854, %v7886
      %v7894 = vadd.f32 %v7855, %v7886
      %v7895 = vadd.f32 %v7856, %v7886
      %v7896 = vadd.f32 %v7857, %v7886
      %v7897 = vadd.f32 %v7858, %v7886
      %v7898 = vadd.f32 %v7859, %v7886
      %v7899 = vadd.f32 %v7860, %v7886
      %v7900 = vadd.f32 %v7861, %v7886
      %v7901 = vadd.f32 %v7862, %v7886
      %v7902 = vadd.f32 %v7863, %v7886
      %v7903 = vadd.f32 %v7864, %v7886
      %v7904 = vadd.f32 %v7865, %v7886
      %v7905 = vadd.f32 %v7866, %v7886
      %v7906 = vadd.f32 %v7867, %v7886
      %v7907 = vadd.f32 %v7868, %v7886
      %v7908 = vadd.f32 %v7869, %v7886
      %v7909 = vadd.f32 %v7870, %v7886
      %v7910 = vadd.f32 %v7871, %v7886
      %v7911 = vadd.f32 %v7872, %v7886
      %v7912 = vadd.f32 %v7873, %v7886
      %v7913 = vadd.f32 %v7874, %v7886
      %v7914 = vadd.f32 %v7875, %v7886
      %v7915 = vadd.f32 %v7876, %v7886
      %v7916 = vadd.f32 %v7877, %v7886
      %v7917 = vadd.f32 %v7878, %v7886
      %v7918 = vadd.f32 %v7879, %v7886
      %v7919 = vadd.f32 %v7880, %v7886
      %v7920 = vmax.f32 %v7888, 0.0
      %v7921 = vmax.f32 %v7889, 0.0
      %v7922 = vmax.f32 %v7890, 0.0
      %v7923 = vmax.f32 %v7891, 0.0
      %v7924 = vmax.f32 %v7892, 0.0
      %v7925 = vmax.f32 %v7893, 0.0
      %v7926 = vmax.f32 %v7894, 0.0
      %v7927 = vmax.f32 %v7895, 0.0
      %v7928 = vmax.f32 %v7896, 0.0
      %v7929 = vmax.f32 %v7897, 0.0
      %v7930 = vmax.f32 %v7898, 0.0
      %v7931 = vmax.f32 %v7899, 0.0
      %v7932 = vmax.f32 %v7900, 0.0
      %v7933 = vmax.f32 %v7901, 0.0
      %v7934 = vmax.f32 %v7902, 0.0
      %v7935 = vmax.f32 %v7903, 0.0
      %v7936 = vmax.f32 %v7904, 0.0
      %v7937 = vmax.f32 %v7905, 0.0
      %v7938 = vmax.f32 %v7906, 0.0
      %v7939 = vmax.f32 %v7907, 0.0
      %v7940 = vmax.f32 %v7908, 0.0
      %v7941 = vmax.f32 %v7909, 0.0
      %v7942 = vmax.f32 %v7910, 0.0
      %v7943 = vmax.f32 %v7911, 0.0
      %v7944 = vmax.f32 %v7912, 0.0
      %v7945 = vmax.f32 %v7913, 0.0
      %v7946 = vmax.f32 %v7914, 0.0
      %v7947 = vmax.f32 %v7915, 0.0
      %v7948 = vmax.f32 %v7916, 0.0
      %v7949 = vmax.f32 %v7917, 0.0
      %v7950 = vmax.f32 %v7918, 0.0
      %v7951 = vmax.f32 %v7919, 0.0
      %7952 = vst [vmem:[#allocation5] sm:$0xf] %v7920
      %7953 = vst [vmem:[#allocation5 + $0x4] sm:$0xf] %v7921
      %7954 = vst [vmem:[#allocation5 + $0x8] sm:$0xf] %v7922
      %7955 = vst [vmem:[#allocation5 + $0xc] sm:$0xf] %v7923
      %7956 = vst [vmem:[#allocation5 + $0x10] sm:$0xf] %v7924
      %7957 = vst [vmem:[#allocation5 + $0x14] sm:$0xf] %v7925
      %7958 = vst [vmem:[#allocation5 + $0x18] sm:$0xf] %v7926
      %7959 = vst [vmem:[#allocation5 + $0x1c] sm:$0xf] %v7927
      %7960 = vst [vmem:[#allocation5 + $0x20] sm:$0xf] %v7928
      %7961 = vst [vmem:[#allocation5 + $0x24] sm:$0xf] %v7929
      %7962 = vst [vmem:[#allocation5 + $0x28] sm:$0xf] %v7930
      %7963 = vst [vmem:[#allocation5 + $0x2c] sm:$0xf] %v7931
      %7964 = vst [vmem:[#allocation5 + $0x30] sm:$0xf] %v7932
      %7965 = vst [vmem:[#allocation5 + $0x34] sm:$0xf] %v7933
      %7966 = vst [vmem:[#allocation5 + $0x38] sm:$0xf] %v7934
      %7967 = vst [vmem:[#allocation5 + $0x3c] sm:$0xf] %v7935
      %7968 = vst [vmem:[#allocation5 + $0x40] sm:$0xf] %v7936
      %7969 = vst [vmem:[#allocation5 + $0x44] sm:$0xf] %v7937
      %7970 = vst [vmem:[#allocation5 + $0x48] sm:$0xf] %v7938
      %7971 = vst [vmem:[#allocation5 + $0x4c] sm:$0xf] %v7939
      %7972 = vst [vmem:[#allocation5 + $0x50] sm:$0xf] %v7940
      %7973 = vst [vmem:[#allocation5 + $0x54] sm:$0xf] %v7941
      %7974 = vst [vmem:[#allocation5 + $0x58] sm:$0xf] %v7942
      %7975 = vst [vmem:[#allocation5 + $0x5c] sm:$0xf] %v7943
      %7976 = vst [vmem:[#allocation5 + $0x60] sm:$0xf] %v7944
      %7977 = vst [vmem:[#allocation5 + $0x64] sm:$0xf] %v7945
      %7978 = vst [vmem:[#allocation5 + $0x68] sm:$0xf] %v7946
      %7979 = vst [vmem:[#allocation5 + $0x6c] sm:$0xf] %v7947
      %7980 = vst [vmem:[#allocation5 + $0x70] sm:$0xf] %v7948
      %7981 = vst [vmem:[#allocation5 + $0x74] sm:$0xf] %v7949
      %7982 = vst [vmem:[#allocation5 + $0x78] sm:$0xf] %v7950
      %7983 = vst [vmem:[#allocation5 + $0x7c] sm:$0xf] %v7951
      %v7984 = vld [vmem:[#allocation5] sm:$0x1]
      %v7985 = vld [vmem:[#allocation5 + $0x4] sm:$0x1]
      %v7986 = vld [vmem:[#allocation5 + $0x8] sm:$0x1]
      %v7987 = vld [vmem:[#allocation5 + $0xc] sm:$0x1]
      %v7988 = vld [vmem:[#allocation5 + $0x10] sm:$0x1]
      %v7989 = vld [vmem:[#allocation5 + $0x14] sm:$0x1]
      %v7990 = vld [vmem:[#allocation5 + $0x18] sm:$0x1]
      %v7991 = vld [vmem:[#allocation5 + $0x1c] sm:$0x1]
      %v7992 = vld [vmem:[#allocation5 + $0x20] sm:$0x1]
      %v7993 = vld [vmem:[#allocation5 + $0x24] sm:$0x1]
      %v7994 = vld [vmem:[#allocation5 + $0x28] sm:$0x1]
      %v7995 = vld [vmem:[#allocation5 + $0x2c] sm:$0x1]
      %v7996 = vld [vmem:[#allocation5 + $0x30] sm:$0x1]
      %v7997 = vld [vmem:[#allocation5 + $0x34] sm:$0x1]
      %v7998 = vld [vmem:[#allocation5 + $0x38] sm:$0x1]
      %v7999 = vld [vmem:[#allocation5 + $0x3c] sm:$0x1]
      %v8000 = vld [vmem:[#allocation5 + $0x40] sm:$0x1]
      %v8001 = vld [vmem:[#allocation5 + $0x44] sm:$0x1]
      %v8002 = vld [vmem:[#allocation5 + $0x48] sm:$0x1]
      %v8003 = vld [vmem:[#allocation5 + $0x4c] sm:$0x1]
      %v8004 = vld [vmem:[#allocation5 + $0x50] sm:$0x1]
      %v8005 = vld [vmem:[#allocation5 + $0x54] sm:$0x1]
      %v8006 = vld [vmem:[#allocation5 + $0x58] sm:$0x1]
      %v8007 = vld [vmem:[#allocation5 + $0x5c] sm:$0x1]
      %v8008 = vld [vmem:[#allocation5 + $0x60] sm:$0x1]
      %v8009 = vld [vmem:[#allocation5 + $0x64] sm:$0x1]
      %v8010 = vld [vmem:[#allocation5 + $0x68] sm:$0x1]
      %v8011 = vld [vmem:[#allocation5 + $0x6c] sm:$0x1]
      %v8012 = vld [vmem:[#allocation5 + $0x70] sm:$0x1]
      %v8013 = vld [vmem:[#allocation5 + $0x74] sm:$0x1]
      %v8014 = vld [vmem:[#allocation5 + $0x78] sm:$0x1]
      %v8015 = vld [vmem:[#allocation5 + $0x7c] sm:$0x1]
      %v8016 = vpack.c.bf16 %v7984, %v7984
      %v8017 = vpack.c.bf16 %v7985, %v7985
      %v8018 = vpack.c.bf16 %v7986, %v7986
      %v8019 = vpack.c.bf16 %v7987, %v7987
      %v8020 = vpack.c.bf16 %v7988, %v7988
      %v8021 = vpack.c.bf16 %v7989, %v7989
      %v8022 = vpack.c.bf16 %v7990, %v7990
      %v8023 = vpack.c.bf16 %v7991, %v7991
      %v8024 = vpack.c.bf16 %v7992, %v7992
      %v8025 = vpack.c.bf16 %v7993, %v7993
      %v8026 = vpack.c.bf16 %v7994, %v7994
      %v8027 = vpack.c.bf16 %v7995, %v7995
      %v8028 = vpack.c.bf16 %v7996, %v7996
      %v8029 = vpack.c.bf16 %v7997, %v7997
      %v8030 = vpack.c.bf16 %v7998, %v7998
      %v8031 = vpack.c.bf16 %v7999, %v7999
      %v8032 = vpack.c.bf16 %v8000, %v8000
      %v8033 = vpack.c.bf16 %v8001, %v8001
      %v8034 = vpack.c.bf16 %v8002, %v8002
      %v8035 = vpack.c.bf16 %v8003, %v8003
      %v8036 = vpack.c.bf16 %v8004, %v8004
      %v8037 = vpack.c.bf16 %v8005, %v8005
      %v8038 = vpack.c.bf16 %v8006, %v8006
      %v8039 = vpack.c.bf16 %v8007, %v8007
      %v8040 = vpack.c.bf16 %v8008, %v8008
      %v8041 = vpack.c.bf16 %v8009, %v8009
      %v8042 = vpack.c.bf16 %v8010, %v8010
      %v8043 = vpack.c.bf16 %v8011, %v8011
      %v8044 = vpack.c.bf16 %v8012, %v8012
      %v8045 = vpack.c.bf16 %v8013, %v8013
      %v8046 = vpack.c.bf16 %v8014, %v8014
      %v8047 = vpack.c.bf16 %v8015, %v8015
      %v8048 = vld [vmem:[%s5] sm:$0xf]
      %v8049 = vld [vmem:[%s5 + $0x4] sm:$0xf]
      %v8050 = vld [vmem:[%s5 + $0x8] sm:$0xf]
      %v8051 = vld [vmem:[%s5 + $0xc] sm:$0xf]
      %v8052 = vld [vmem:[%s5 + $0x10] sm:$0xf]
      %v8053 = vld [vmem:[%s5 + $0x14] sm:$0xf]
      %v8054 = vld [vmem:[%s5 + $0x18] sm:$0xf]
      %v8055 = vld [vmem:[%s5 + $0x1c] sm:$0xf]
      %v8056 = vld [vmem:[%s5 + $0x20] sm:$0xf]
      %v8057 = vld [vmem:[%s5 + $0x24] sm:$0xf]
      %v8058 = vld [vmem:[%s5 + $0x28] sm:$0xf]
      %v8059 = vld [vmem:[%s5 + $0x2c] sm:$0xf]
      %v8060 = vld [vmem:[%s5 + $0x30] sm:$0xf]
      %v8061 = vld [vmem:[%s5 + $0x34] sm:$0xf]
      %v8062 = vld [vmem:[%s5 + $0x38] sm:$0xf]
      %v8063 = vld [vmem:[%s5 + $0x3c] sm:$0xf]
      %v8064 = vld [vmem:[#allocation5 + $0x1] sm:$0x1]
      %v8065 = vld [vmem:[#allocation5 + $0x5] sm:$0x1]
      %v8066 = vld [vmem:[#allocation5 + $0x9] sm:$0x1]
      %v8067 = vld [vmem:[#allocation5 + $0xd] sm:$0x1]
      %v8068 = vld [vmem:[#allocation5 + $0x11] sm:$0x1]
      %v8069 = vld [vmem:[#allocation5 + $0x15] sm:$0x1]
      %v8070 = vld [vmem:[#allocation5 + $0x19] sm:$0x1]
      %v8071 = vld [vmem:[#allocation5 + $0x1d] sm:$0x1]
      %v8072 = vld [vmem:[#allocation5 + $0x21] sm:$0x1]
      %v8073 = vld [vmem:[#allocation5 + $0x25] sm:$0x1]
      %v8074 = vld [vmem:[#allocation5 + $0x29] sm:$0x1]
      %v8075 = vld [vmem:[#allocation5 + $0x2d] sm:$0x1]
      %v8076 = vld [vmem:[#allocation5 + $0x31] sm:$0x1]
      %v8077 = vld [vmem:[#allocation5 + $0x35] sm:$0x1]
      %v8078 = vld [vmem:[#allocation5 + $0x39] sm:$0x1]
      %v8079 = vld [vmem:[#allocation5 + $0x3d] sm:$0x1]
      %v8080 = vld [vmem:[#allocation5 + $0x41] sm:$0x1]
      %v8081 = vld [vmem:[#allocation5 + $0x45] sm:$0x1]
      %v8082 = vld [vmem:[#allocation5 + $0x49] sm:$0x1]
      %v8083 = vld [vmem:[#allocation5 + $0x4d] sm:$0x1]
      %v8084 = vld [vmem:[#allocation5 + $0x51] sm:$0x1]
      %v8085 = vld [vmem:[#allocation5 + $0x55] sm:$0x1]
      %v8086 = vld [vmem:[#allocation5 + $0x59] sm:$0x1]
      %v8087 = vld [vmem:[#allocation5 + $0x5d] sm:$0x1]
      %v8088 = vld [vmem:[#allocation5 + $0x61] sm:$0x1]
      %v8089 = vld [vmem:[#allocation5 + $0x65] sm:$0x1]
      %v8090 = vld [vmem:[#allocation5 + $0x69] sm:$0x1]
      %v8091 = vld [vmem:[#allocation5 + $0x6d] sm:$0x1]
      %v8092 = vld [vmem:[#allocation5 + $0x71] sm:$0x1]
      %v8093 = vld [vmem:[#allocation5 + $0x75] sm:$0x1]
      %v8094 = vld [vmem:[#allocation5 + $0x79] sm:$0x1]
      %v8095 = vld [vmem:[#allocation5 + $0x7d] sm:$0x1]
      %v8096 = vpack.c.bf16 %v8064, %v8064
      %v8097 = vpack.c.bf16 %v8065, %v8065
      %v8098 = vpack.c.bf16 %v8066, %v8066
      %v8099 = vpack.c.bf16 %v8067, %v8067
      %v8100 = vpack.c.bf16 %v8068, %v8068
      %v8101 = vpack.c.bf16 %v8069, %v8069
      %v8102 = vpack.c.bf16 %v8070, %v8070
      %v8103 = vpack.c.bf16 %v8071, %v8071
      %v8104 = vpack.c.bf16 %v8072, %v8072
      %v8105 = vpack.c.bf16 %v8073, %v8073
      %v8106 = vpack.c.bf16 %v8074, %v8074
      %v8107 = vpack.c.bf16 %v8075, %v8075
      %v8108 = vpack.c.bf16 %v8076, %v8076
      %v8109 = vpack.c.bf16 %v8077, %v8077
      %v8110 = vpack.c.bf16 %v8078, %v8078
      %v8111 = vpack.c.bf16 %v8079, %v8079
      %v8112 = vpack.c.bf16 %v8080, %v8080
      %v8113 = vpack.c.bf16 %v8081, %v8081
      %v8114 = vpack.c.bf16 %v8082, %v8082
      %v8115 = vpack.c.bf16 %v8083, %v8083
      %v8116 = vpack.c.bf16 %v8084, %v8084
      %v8117 = vpack.c.bf16 %v8085, %v8085
      %v8118 = vpack.c.bf16 %v8086, %v8086
      %v8119 = vpack.c.bf16 %v8087, %v8087
      %v8120 = vpack.c.bf16 %v8088, %v8088
      %v8121 = vpack.c.bf16 %v8089, %v8089
      %v8122 = vpack.c.bf16 %v8090, %v8090
      %v8123 = vpack.c.bf16 %v8091, %v8091
      %v8124 = vpack.c.bf16 %v8092, %v8092
      %v8125 = vpack.c.bf16 %v8093, %v8093
      %v8126 = vpack.c.bf16 %v8094, %v8094
      %v8127 = vpack.c.bf16 %v8095, %v8095
      %s8128 = scalar_lea.vmem %s5, 64
      %v8129 = vld [vmem:[%s8128] sm:$0xf]
      %v8130 = vld [vmem:[%s8128 + $0x4] sm:$0xf]
      %v8131 = vld [vmem:[%s8128 + $0x8] sm:$0xf]
      %v8132 = vld [vmem:[%s8128 + $0xc] sm:$0xf]
      %v8133 = vld [vmem:[%s8128 + $0x10] sm:$0xf]
      %v8134 = vld [vmem:[%s8128 + $0x14] sm:$0xf]
      %v8135 = vld [vmem:[%s8128 + $0x18] sm:$0xf]
      %v8136 = vld [vmem:[%s8128 + $0x1c] sm:$0xf]
      %v8137 = vld [vmem:[%s8128 + $0x20] sm:$0xf]
      %v8138 = vld [vmem:[%s8128 + $0x24] sm:$0xf]
      %v8139 = vld [vmem:[%s8128 + $0x28] sm:$0xf]
      %v8140 = vld [vmem:[%s8128 + $0x2c] sm:$0xf]
      %v8141 = vld [vmem:[%s8128 + $0x30] sm:$0xf]
      %v8142 = vld [vmem:[%s8128 + $0x34] sm:$0xf]
      %v8143 = vld [vmem:[%s8128 + $0x38] sm:$0xf]
      %v8144 = vld [vmem:[%s8128 + $0x3c] sm:$0xf]
      %v8177 = vunpack.c.l.b16 %v8096
      %v8178 = vunpack.c.l.b16 %v8097
      %v8179 = vunpack.c.l.b16 %v8098
      %v8180 = vunpack.c.l.b16 %v8099
      %v8181 = vunpack.c.l.b16 %v8100
      %v8182 = vunpack.c.l.b16 %v8101
      %v8183 = vunpack.c.l.b16 %v8102
      %v8184 = vunpack.c.l.b16 %v8103
      %v8185 = vunpack.c.l.b16 %v8104
      %v8186 = vunpack.c.l.b16 %v8105
      %v8187 = vunpack.c.l.b16 %v8106
      %v8188 = vunpack.c.l.b16 %v8107
      %v8189 = vunpack.c.l.b16 %v8108
      %v8190 = vunpack.c.l.b16 %v8109
      %v8191 = vunpack.c.l.b16 %v8110
      %v8192 = vunpack.c.l.b16 %v8111
      %v8193 = vunpack.c.l.b16 %v8112
      %v8194 = vunpack.c.l.b16 %v8113
      %v8195 = vunpack.c.l.b16 %v8114
      %v8196 = vunpack.c.l.b16 %v8115
      %v8197 = vunpack.c.l.b16 %v8116
      %v8198 = vunpack.c.l.b16 %v8117
      %v8199 = vunpack.c.l.b16 %v8118
      %v8200 = vunpack.c.l.b16 %v8119
      %v8201 = vunpack.c.l.b16 %v8120
      %v8202 = vunpack.c.l.b16 %v8121
      %v8203 = vunpack.c.l.b16 %v8122
      %v8204 = vunpack.c.l.b16 %v8123
      %v8205 = vunpack.c.l.b16 %v8124
      %v8206 = vunpack.c.l.b16 %v8125
      %v8207 = vunpack.c.l.b16 %v8126
      %v8208 = vunpack.c.l.b16 %v8127
      %v8209 = vrot.slane %v8178, 7
      %vm8210 = vcmask 1041409
      %v8211 = vsel %vm8210, %v8209, %v8177
      %v8212 = vrot.slane %v8179, 6
      %vm8213 = vcmask 1042434
      %v8214 = vsel %vm8213, %v8212, %v8211
      %v8215 = vrot.slane %v8180, 5
      %vm8216 = vcmask 1043459
      %v8217 = vsel %vm8216, %v8215, %v8214
      %v8218 = vrot.slane %v8181, 4
      %vm8219 = vcmask 1044484
      %v8220 = vsel %vm8219, %v8218, %v8217
      %v8221 = vrot.slane %v8182, 3
      %vm8222 = vcmask 1045509
      %v8223 = vsel %vm8222, %v8221, %v8220
      %v8224 = vrot.slane %v8183, 2
      %vm8225 = vcmask 1046534
      %v8226 = vsel %vm8225, %v8224, %v8223
      %v8227 = vrot.slane %v8184, 1
      %vm8228 = vcmask 1047559
      %v8229 = vsel %vm8228, %v8227, %v8226
      %v8230 = vrot.slane %v8186, 7
      %v8231 = vsel %vm8210, %v8230, %v8185
      %v8232 = vrot.slane %v8187, 6
      %v8233 = vsel %vm8213, %v8232, %v8231
      %v8234 = vrot.slane %v8188, 5
      %v8235 = vsel %vm8216, %v8234, %v8233
      %v8236 = vrot.slane %v8189, 4
      %v8237 = vsel %vm8219, %v8236, %v8235
      %v8238 = vrot.slane %v8190, 3
      %v8239 = vsel %vm8222, %v8238, %v8237
      %v8240 = vrot.slane %v8191, 2
      %v8241 = vsel %vm8225, %v8240, %v8239
      %v8242 = vrot.slane %v8192, 1
      %v8243 = vsel %vm8228, %v8242, %v8241
      %v8244 = vrot.slane %v8194, 7
      %v8245 = vsel %vm8210, %v8244, %v8193
      %v8246 = vrot.slane %v8195, 6
      %v8247 = vsel %vm8213, %v8246, %v8245
      %v8248 = vrot.slane %v8196, 5
      %v8249 = vsel %vm8216, %v8248, %v8247
      %v8250 = vrot.slane %v8197, 4
      %v8251 = vsel %vm8219, %v8250, %v8249
      %v8252 = vrot.slane %v8198, 3
      %v8253 = vsel %vm8222, %v8252, %v8251
      %v8254 = vrot.slane %v8199, 2
      %v8255 = vsel %vm8225, %v8254, %v8253
      %v8256 = vrot.slane %v8200, 1
      %v8257 = vsel %vm8228, %v8256, %v8255
      %v8258 = vrot.slane %v8202, 7
      %v8259 = vsel %vm8210, %v8258, %v8201
      %v8260 = vrot.slane %v8203, 6
      %v8261 = vsel %vm8213, %v8260, %v8259
      %v8262 = vrot.slane %v8204, 5
      %v8263 = vsel %vm8216, %v8262, %v8261
      %v8264 = vrot.slane %v8205, 4
      %v8265 = vsel %vm8219, %v8264, %v8263
      %v8266 = vrot.slane %v8206, 3
      %v8267 = vsel %vm8222, %v8266, %v8265
      %v8268 = vrot.slane %v8207, 2
      %v8269 = vsel %vm8225, %v8268, %v8267
      %v8270 = vrot.slane %v8208, 1
      %v8271 = vsel %vm8228, %v8270, %v8269
      %v8272 = vpack.c.b16 %v8243, %v8229
      %v8273 = vpack.c.b16 %v8271, %v8257
      %v8292 = vunpack.c.l.b16 %v8129
      %v8293 = vunpack.c.l.b16 %v8130
      %v8294 = vunpack.c.l.b16 %v8131
      %v8295 = vunpack.c.l.b16 %v8132
      %v8296 = vunpack.c.l.b16 %v8133
      %v8297 = vunpack.c.l.b16 %v8134
      %v8298 = vunpack.c.l.b16 %v8135
      %v8299 = vunpack.c.l.b16 %v8136
      %v8300 = vunpack.c.l.b16 %v8137
      %v8301 = vunpack.c.l.b16 %v8138
      %v8302 = vunpack.c.l.b16 %v8139
      %v8303 = vunpack.c.l.b16 %v8140
      %v8304 = vunpack.c.l.b16 %v8141
      %v8305 = vunpack.c.l.b16 %v8142
      %v8306 = vunpack.c.l.b16 %v8143
      %v8307 = vunpack.c.l.b16 %v8144
      %v8308 = vpack.c.b16 %v8293, %v8292
      %v8309 = vpack.c.b16 %v8295, %v8294
      %v8310 = vpack.c.b16 %v8297, %v8296
      %v8311 = vpack.c.b16 %v8299, %v8298
      %v8312 = vpack.c.b16 %v8301, %v8300
      %v8313 = vpack.c.b16 %v8303, %v8302
      %v8314 = vpack.c.b16 %v8305, %v8304
      %v8315 = vpack.c.b16 %v8307, %v8306
      %8324 = vmatprep.subr.bf16.mxu0 0
      %8325 = vmatpush1.bf16.msra.mxu0 %v8308
      %8326 = vmatprep.subr.bf16.mxu0 0
      %8327 = vmatpush1.bf16.msra.mxu0 %v8309
      %8328 = vmatprep.subr.bf16.mxu0 0
      %8329 = vmatpush1.bf16.msra.mxu0 %v8310
      %8330 = vmatprep.subr.bf16.mxu0 0
      %8331 = vmatpush1.bf16.msra.mxu0 %v8311
      %8332 = vmatprep.subr.bf16.mxu0 0
      %8333 = vmatpush1.bf16.msra.mxu0 %v8312
      %8334 = vmatprep.subr.bf16.mxu0 0
      %8335 = vmatpush1.bf16.msra.mxu0 %v8313
      %8336 = vmatprep.subr.bf16.mxu0 0
      %8337 = vmatpush1.bf16.msra.mxu0 %v8314
      %8338 = vmatprep.subr.bf16.mxu0 0
      %8339 = vmatpush1.bf16.msra.mxu0 %v8315
      %8340 = vmatprep.subr.bf16.mxu0 0
      %8341 = vmatpush1.bf16.msra.mxu0 0
      %8342 = vmatprep.subr.bf16.mxu0 0
      %8343 = vmatpush1.bf16.msra.mxu0 0
      %8344 = vmatprep.subr.bf16.mxu0 0
      %8345 = vmatpush1.bf16.msra.mxu0 0
      %8346 = vmatprep.subr.bf16.mxu0 0
      %8347 = vmatpush1.bf16.msra.mxu0 0
      %8348 = vmatprep.subr.bf16.mxu0 0
      %8349 = vmatpush1.bf16.msra.mxu0 0
      %8350 = vmatprep.subr.bf16.mxu0 0
      %8351 = vmatpush1.bf16.msra.mxu0 0
      %8352 = vmatprep.subr.bf16.mxu0 0
      %8353 = vmatpush1.bf16.msra.mxu0 0
      %8354 = vmatprep.subr.bf16.mxu0 0
      %8355 = vmatpush1.bf16.msra.mxu0 0
      %8356 = vmatprep.mubr.bf16.mxu0 0
      %8357 = vmatmul.mubr.bf16.gmra.mrb[0].mxu0 %v8272
      %v8358 = vpop.f32.mrb[0].mxu0
      %v8359 = vadd.f32 0.0, %v8358
      %v8360 = vpop.f32.mrb[0].mxu0
      %v8361 = vpop.f32.mrb[0].mxu0
      %v8362 = vadd.f32 0.0, %v8361
      %v8363 = vpop.f32.mrb[0].mxu0
      %8364 = vmatprep.mubr.bf16.mxu0 0
      %8365 = vmatmul.mubr.bf16.gmra.mrb[0].mxu0 %v8273
      %v8366 = vpop.f32.mrb[0].mxu0
      %v8367 = vadd.f32 0.0, %v8366
      %v8368 = vpop.f32.mrb[0].mxu0
      %v8369 = vpop.f32.mrb[0].mxu0
      %v8370 = vadd.f32 0.0, %v8369
      %v8371 = vpop.f32.mrb[0].mxu0
      %8372 = vdwg.mxu0
      %v8405 = vunpack.c.l.b16 %v8016
      %v8406 = vunpack.c.l.b16 %v8017
      %v8407 = vunpack.c.l.b16 %v8018
      %v8408 = vunpack.c.l.b16 %v8019
      %v8409 = vunpack.c.l.b16 %v8020
      %v8410 = vunpack.c.l.b16 %v8021
      %v8411 = vunpack.c.l.b16 %v8022
      %v8412 = vunpack.c.l.b16 %v8023
      %v8413 = vunpack.c.l.b16 %v8024
      %v8414 = vunpack.c.l.b16 %v8025
      %v8415 = vunpack.c.l.b16 %v8026
      %v8416 = vunpack.c.l.b16 %v8027
      %v8417 = vunpack.c.l.b16 %v8028
      %v8418 = vunpack.c.l.b16 %v8029
      %v8419 = vunpack.c.l.b16 %v8030
      %v8420 = vunpack.c.l.b16 %v8031
      %v8421 = vunpack.c.l.b16 %v8032
      %v8422 = vunpack.c.l.b16 %v8033
      %v8423 = vunpack.c.l.b16 %v8034
      %v8424 = vunpack.c.l.b16 %v8035
      %v8425 = vunpack.c.l.b16 %v8036
      %v8426 = vunpack.c.l.b16 %v8037
      %v8427 = vunpack.c.l.b16 %v8038
      %v8428 = vunpack.c.l.b16 %v8039
      %v8429 = vunpack.c.l.b16 %v8040
      %v8430 = vunpack.c.l.b16 %v8041
      %v8431 = vunpack.c.l.b16 %v8042
      %v8432 = vunpack.c.l.b16 %v8043
      %v8433 = vunpack.c.l.b16 %v8044
      %v8434 = vunpack.c.l.b16 %v8045
      %v8435 = vunpack.c.l.b16 %v8046
      %v8436 = vunpack.c.l.b16 %v8047
      %v8437 = vrot.slane %v8406, 7
      %v8438 = vsel %vm8210, %v8437, %v8405
      %v8439 = vrot.slane %v8407, 6
      %v8440 = vsel %vm8213, %v8439, %v8438
      %v8441 = vrot.slane %v8408, 5
      %v8442 = vsel %vm8216, %v8441, %v8440
      %v8443 = vrot.slane %v8409, 4
      %v8444 = vsel %vm8219, %v8443, %v8442
      %v8445 = vrot.slane %v8410, 3
      %v8446 = vsel %vm8222, %v8445, %v8444
      %v8447 = vrot.slane %v8411, 2
      %v8448 = vsel %vm8225, %v8447, %v8446
      %v8449 = vrot.slane %v8412, 1
      %v8450 = vsel %vm8228, %v8449, %v8448
      %v8451 = vrot.slane %v8414, 7
      %v8452 = vsel %vm8210, %v8451, %v8413
      %v8453 = vrot.slane %v8415, 6
      %v8454 = vsel %vm8213, %v8453, %v8452
      %v8455 = vrot.slane %v8416, 5
      %v8456 = vsel %vm8216, %v8455, %v8454
      %v8457 = vrot.slane %v8417, 4
      %v8458 = vsel %vm8219, %v8457, %v8456
      %v8459 = vrot.slane %v8418, 3
      %v8460 = vsel %vm8222, %v8459, %v8458
      %v8461 = vrot.slane %v8419, 2
      %v8462 = vsel %vm8225, %v8461, %v8460
      %v8463 = vrot.slane %v8420, 1
      %v8464 = vsel %vm8228, %v8463, %v8462
      %v8465 = vrot.slane %v8422, 7
      %v8466 = vsel %vm8210, %v8465, %v8421
      %v8467 = vrot.slane %v8423, 6
      %v8468 = vsel %vm8213, %v8467, %v8466
      %v8469 = vrot.slane %v8424, 5
      %v8470 = vsel %vm8216, %v8469, %v8468
      %v8471 = vrot.slane %v8425, 4
      %v8472 = vsel %vm8219, %v8471, %v8470
      %v8473 = vrot.slane %v8426, 3
      %v8474 = vsel %vm8222, %v8473, %v8472
      %v8475 = vrot.slane %v8427, 2
      %v8476 = vsel %vm8225, %v8475, %v8474
      %v8477 = vrot.slane %v8428, 1
      %v8478 = vsel %vm8228, %v8477, %v8476
      %v8479 = vrot.slane %v8430, 7
      %v8480 = vsel %vm8210, %v8479, %v8429
      %v8481 = vrot.slane %v8431, 6
      %v8482 = vsel %vm8213, %v8481, %v8480
      %v8483 = vrot.slane %v8432, 5
      %v8484 = vsel %vm8216, %v8483, %v8482
      %v8485 = vrot.slane %v8433, 4
      %v8486 = vsel %vm8219, %v8485, %v8484
      %v8487 = vrot.slane %v8434, 3
      %v8488 = vsel %vm8222, %v8487, %v8486
      %v8489 = vrot.slane %v8435, 2
      %v8490 = vsel %vm8225, %v8489, %v8488
      %v8491 = vrot.slane %v8436, 1
      %v8492 = vsel %vm8228, %v8491, %v8490
      %v8493 = vpack.c.b16 %v8464, %v8450
      %v8494 = vpack.c.b16 %v8492, %v8478
      %v8513 = vunpack.c.l.b16 %v8048
      %v8514 = vunpack.c.l.b16 %v8049
      %v8515 = vunpack.c.l.b16 %v8050
      %v8516 = vunpack.c.l.b16 %v8051
      %v8517 = vunpack.c.l.b16 %v8052
      %v8518 = vunpack.c.l.b16 %v8053
      %v8519 = vunpack.c.l.b16 %v8054
      %v8520 = vunpack.c.l.b16 %v8055
      %v8521 = vunpack.c.l.b16 %v8056
      %v8522 = vunpack.c.l.b16 %v8057
      %v8523 = vunpack.c.l.b16 %v8058
      %v8524 = vunpack.c.l.b16 %v8059
      %v8525 = vunpack.c.l.b16 %v8060
      %v8526 = vunpack.c.l.b16 %v8061
      %v8527 = vunpack.c.l.b16 %v8062
      %v8528 = vunpack.c.l.b16 %v8063
      %v8529 = vpack.c.b16 %v8514, %v8513
      %v8530 = vpack.c.b16 %v8516, %v8515
      %v8531 = vpack.c.b16 %v8518, %v8517
      %v8532 = vpack.c.b16 %v8520, %v8519
      %v8533 = vpack.c.b16 %v8522, %v8521
      %v8534 = vpack.c.b16 %v8524, %v8523
      %v8535 = vpack.c.b16 %v8526, %v8525
      %v8536 = vpack.c.b16 %v8528, %v8527
      %8545 = vmatprep.subr.bf16.mxu0 0
      %8546 = vmatpush1.bf16.msra.mxu0 %v8529
      %8547 = vmatprep.subr.bf16.mxu0 0
      %8548 = vmatpush1.bf16.msra.mxu0 %v8530
      %8549 = vmatprep.subr.bf16.mxu0 0
      %8550 = vmatpush1.bf16.msra.mxu0 %v8531
      %8551 = vmatprep.subr.bf16.mxu0 0
      %8552 = vmatpush1.bf16.msra.mxu0 %v8532
      %8553 = vmatprep.subr.bf16.mxu0 0
      %8554 = vmatpush1.bf16.msra.mxu0 %v8533
      %8555 = vmatprep.subr.bf16.mxu0 0
      %8556 = vmatpush1.bf16.msra.mxu0 %v8534
      %8557 = vmatprep.subr.bf16.mxu0 0
      %8558 = vmatpush1.bf16.msra.mxu0 %v8535
      %8559 = vmatprep.subr.bf16.mxu0 0
      %8560 = vmatpush1.bf16.msra.mxu0 %v8536
      %8561 = vmatprep.subr.bf16.mxu0 0
      %8562 = vmatpush1.bf16.msra.mxu0 0
      %8563 = vmatprep.subr.bf16.mxu0 0
      %8564 = vmatpush1.bf16.msra.mxu0 0
      %8565 = vmatprep.subr.bf16.mxu0 0
      %8566 = vmatpush1.bf16.msra.mxu0 0
      %8567 = vmatprep.subr.bf16.mxu0 0
      %8568 = vmatpush1.bf16.msra.mxu0 0
      %8569 = vmatprep.subr.bf16.mxu0 0
      %8570 = vmatpush1.bf16.msra.mxu0 0
      %8571 = vmatprep.subr.bf16.mxu0 0
      %8572 = vmatpush1.bf16.msra.mxu0 0
      %8573 = vmatprep.subr.bf16.mxu0 0
      %8574 = vmatpush1.bf16.msra.mxu0 0
      %8575 = vmatprep.subr.bf16.mxu0 0
      %8576 = vmatpush1.bf16.msra.mxu0 0
      %8577 = vmatprep.mubr.bf16.mxu0 0
      %8578 = vmatmul.mubr.bf16.gmra.mrb[0].mxu0 %v8493
      %v8579 = vpop.f32.mrb[0].mxu0
      %v8580 = vadd.f32 %v8359, %v8579
      %v8581 = vpop.f32.mrb[0].mxu0
      %v8582 = vpop.f32.mrb[0].mxu0
      %v8583 = vadd.f32 %v8362, %v8582
      %v8584 = vpop.f32.mrb[0].mxu0
      %8585 = vmatprep.mubr.bf16.mxu0 0
      %8586 = vmatmul.mubr.bf16.gmra.mrb[0].mxu0 %v8494
      %v8587 = vpop.f32.mrb[0].mxu0
      %v8588 = vadd.f32 %v8367, %v8587
      %v8589 = vpop.f32.mrb[0].mxu0
      %v8590 = vpop.f32.mrb[0].mxu0
      %v8591 = vadd.f32 %v8370, %v8590
      %v8592 = vpop.f32.mrb[0].mxu0
      %8593 = vdwg.mxu0
      %v8594 = vld [vmem:[#allocation5 + $0x2] sm:$0x1]
      %v8595 = vld [vmem:[#allocation5 + $0x6] sm:$0x1]
      %v8596 = vld [vmem:[#allocation5 + $0xa] sm:$0x1]
      %v8597 = vld [vmem:[#allocation5 + $0xe] sm:$0x1]
      %v8598 = vld [vmem:[#allocation5 + $0x12] sm:$0x1]
      %v8599 = vld [vmem:[#allocation5 + $0x16] sm:$0x1]
      %v8600 = vld [vmem:[#allocation5 + $0x1a] sm:$0x1]
      %v8601 = vld [vmem:[#allocation5 + $0x1e] sm:$0x1]
      %v8602 = vld [vmem:[#allocation5 + $0x22] sm:$0x1]
      %v8603 = vld [vmem:[#allocation5 + $0x26] sm:$0x1]
      %v8604 = vld [vmem:[#allocation5 + $0x2a] sm:$0x1]
      %v8605 = vld [vmem:[#allocation5 + $0x2e] sm:$0x1]
      %v8606 = vld [vmem:[#allocation5 + $0x32] sm:$0x1]
      %v8607 = vld [vmem:[#allocation5 + $0x36] sm:$0x1]
      %v8608 = vld [vmem:[#allocation5 + $0x3a] sm:$0x1]
      %v8609 = vld [vmem:[#allocation5 + $0x3e] sm:$0x1]
      %v8610 = vld [vmem:[#allocation5 + $0x42] sm:$0x1]
      %v8611 = vld [vmem:[#allocation5 + $0x46] sm:$0x1]
      %v8612 = vld [vmem:[#allocation5 + $0x4a] sm:$0x1]
      %v8613 = vld [vmem:[#allocation5 + $0x4e] sm:$0x1]
      %v8614 = vld [vmem:[#allocation5 + $0x52] sm:$0x1]
      %v8615 = vld [vmem:[#allocation5 + $0x56] sm:$0x1]
      %v8616 = vld [vmem:[#allocation5 + $0x5a] sm:$0x1]
      %v8617 = vld [vmem:[#allocation5 + $0x5e] sm:$0x1]
      %v8618 = vld [vmem:[#allocation5 + $0x62] sm:$0x1]
      %v8619 = vld [vmem:[#allocation5 + $0x66] sm:$0x1]
      %v8620 = vld [vmem:[#allocation5 + $0x6a] sm:$0x1]
      %v8621 = vld [vmem:[#allocation5 + $0x6e] sm:$0x1]
      %v8622 = vld [vmem:[#allocation5 + $0x72] sm:$0x1]
      %v8623 = vld [vmem:[#allocation5 + $0x76] sm:$0x1]
      %v8624 = vld [vmem:[#allocation5 + $0x7a] sm:$0x1]
      %v8625 = vld [vmem:[#allocation5 + $0x7e] sm:$0x1]
      %v8626 = vpack.c.bf16 %v8594, %v8594
      %v8627 = vpack.c.bf16 %v8595, %v8595
      %v8628 = vpack.c.bf16 %v8596, %v8596
      %v8629 = vpack.c.bf16 %v8597, %v8597
      %v8630 = vpack.c.bf16 %v8598, %v8598
      %v8631 = vpack.c.bf16 %v8599, %v8599
      %v8632 = vpack.c.bf16 %v8600, %v8600
      %v8633 = vpack.c.bf16 %v8601, %v8601
      %v8634 = vpack.c.bf16 %v8602, %v8602
      %v8635 = vpack.c.bf16 %v8603, %v8603
      %v8636 = vpack.c.bf16 %v8604, %v8604
      %v8637 = vpack.c.bf16 %v8605, %v8605
      %v8638 = vpack.c.bf16 %v8606, %v8606
      %v8639 = vpack.c.bf16 %v8607, %v8607
      %v8640 = vpack.c.bf16 %v8608, %v8608
      %v8641 = vpack.c.bf16 %v8609, %v8609
      %v8642 = vpack.c.bf16 %v8610, %v8610
      %v8643 = vpack.c.bf16 %v8611, %v8611
      %v8644 = vpack.c.bf16 %v8612, %v8612
      %v8645 = vpack.c.bf16 %v8613, %v8613
      %v8646 = vpack.c.bf16 %v8614, %v8614
      %v8647 = vpack.c.bf16 %v8615, %v8615
      %v8648 = vpack.c.bf16 %v8616, %v8616
      %v8649 = vpack.c.bf16 %v8617, %v8617
      %v8650 = vpack.c.bf16 %v8618, %v8618
      %v8651 = vpack.c.bf16 %v8619, %v8619
      %v8652 = vpack.c.bf16 %v8620, %v8620
      %v8653 = vpack.c.bf16 %v8621, %v8621
      %v8654 = vpack.c.bf16 %v8622, %v8622
      %v8655 = vpack.c.bf16 %v8623, %v8623
      %v8656 = vpack.c.bf16 %v8624, %v8624
      %v8657 = vpack.c.bf16 %v8625, %v8625
      %s8658 = scalar_lea.vmem %s5, 128
      %v8659 = vld [vmem:[%s8658] sm:$0xf]
      %v8660 = vld [vmem:[%s8658 + $0x4] sm:$0xf]
      %v8661 = vld [vmem:[%s8658 + $0x8] sm:$0xf]
      %v8662 = vld [vmem:[%s8658 + $0xc] sm:$0xf]
      %v8663 = vld [vmem:[%s8658 + $0x10] sm:$0xf]
      %v8664 = vld [vmem:[%s8658 + $0x14] sm:$0xf]
      %v8665 = vld [vmem:[%s8658 + $0x18] sm:$0xf]
      %v8666 = vld [vmem:[%s8658 + $0x1c] sm:$0xf]
      %v8667 = vld [vmem:[%s8658 + $0x20] sm:$0xf]
      %v8668 = vld [vmem:[%s8658 + $0x24] sm:$0xf]
      %v8669 = vld [vmem:[%s8658 + $0x28] sm:$0xf]
      %v8670 = vld [vmem:[%s8658 + $0x2c] sm:$0xf]
      %v8671 = vld [vmem:[%s8658 + $0x30] sm:$0xf]
      %v8672 = vld [vmem:[%s8658 + $0x34] sm:$0xf]
      %v8673 = vld [vmem:[%s8658 + $0x38] sm:$0xf]
      %v8674 = vld [vmem:[%s8658 + $0x3c] sm:$0xf]
      %v8707 = vunpack.c.l.b16 %v8626
      %v8708 = vunpack.c.l.b16 %v8627
      %v8709 = vunpack.c.l.b16 %v8628
      %v8710 = vunpack.c.l.b16 %v8629
      %v8711 = vunpack.c.l.b16 %v8630
      %v8712 = vunpack.c.l.b16 %v8631
      %v8713 = vunpack.c.l.b16 %v8632
      %v8714 = vunpack.c.l.b16 %v8633
      %v8715 = vunpack.c.l.b16 %v8634
      %v8716 = vunpack.c.l.b16 %v8635
      %v8717 = vunpack.c.l.b16 %v8636
      %v8718 = vunpack.c.l.b16 %v8637
      %v8719 = vunpack.c.l.b16 %v8638
      %v8720 = vunpack.c.l.b16 %v8639
      %v8721 = vunpack.c.l.b16 %v8640
      %v8722 = vunpack.c.l.b16 %v8641
      %v8723 = vunpack.c.l.b16 %v8642
      %v8724 = vunpack.c.l.b16 %v8643
      %v8725 = vunpack.c.l.b16 %v8644
      %v8726 = vunpack.c.l.b16 %v8645
      %v8727 = vunpack.c.l.b16 %v8646
      %v8728 = vunpack.c.l.b16 %v8647
      %v8729 = vunpack.c.l.b16 %v8648
      %v8730 = vunpack.c.l.b16 %v8649
      %v8731 = vunpack.c.l.b16 %v8650
      %v8732 = vunpack.c.l.b16 %v8651
      %v8733 = vunpack.c.l.b16 %v8652
      %v8734 = vunpack.c.l.b16 %v8653
      %v8735 = vunpack.c.l.b16 %v8654
      %v8736 = vunpack.c.l.b16 %v8655
      %v8737 = vunpack.c.l.b16 %v8656
      %v8738 = vunpack.c.l.b16 %v8657
      %v8739 = vrot.slane %v8708, 7
      %v8740 = vsel %vm8210, %v8739, %v8707
      %v8741 = vrot.slane %v8709, 6
      %v8742 = vsel %vm8213, %v8741, %v8740
      %v8743 = vrot.slane %v8710, 5
      %v8744 = vsel %vm8216, %v8743, %v8742
      %v8745 = vrot.slane %v8711, 4
      %v8746 = vsel %vm8219, %v8745, %v8744
      %v8747 = vrot.slane %v8712, 3
      %v8748 = vsel %vm8222, %v8747, %v8746
      %v8749 = vrot.slane %v8713, 2
      %v8750 = vsel %vm8225, %v8749, %v8748
      %v8751 = vrot.slane %v8714, 1
      %v8752 = vsel %vm8228, %v8751, %v8750
      %v8753 = vrot.slane %v8716, 7
      %v8754 = vsel %vm8210, %v8753, %v8715
      %v8755 = vrot.slane %v8717, 6
      %v8756 = vsel %vm8213, %v8755, %v8754
      %v8757 = vrot.slane %v8718, 5
      %v8758 = vsel %vm8216, %v8757, %v8756
      %v8759 = vrot.slane %v8719, 4
      %v8760 = vsel %vm8219, %v8759, %v8758
      %v8761 = vrot.slane %v8720, 3
      %v8762 = vsel %vm8222, %v8761, %v8760
      %v8763 = vrot.slane %v8721, 2
      %v8764 = vsel %vm8225, %v8763, %v8762
      %v8765 = vrot.slane %v8722, 1
      %v8766 = vsel %vm8228, %v8765, %v8764
      %v8767 = vrot.slane %v8724, 7
      %v8768 = vsel %vm8210, %v8767, %v8723
      %v8769 = vrot.slane %v8725, 6
      %v8770 = vsel %vm8213, %v8769, %v8768
      %v8771 = vrot.slane %v8726, 5
      %v8772 = vsel %vm8216, %v8771, %v8770
      %v8773 = vrot.slane %v8727, 4
      %v8774 = vsel %vm8219, %v8773, %v8772
      %v8775 = vrot.slane %v8728, 3
      %v8776 = vsel %vm8222, %v8775, %v8774
      %v8777 = vrot.slane %v8729, 2
      %v8778 = vsel %vm8225, %v8777, %v8776
      %v8779 = vrot.slane %v8730, 1
      %v8780 = vsel %vm8228, %v8779, %v8778
      %v8781 = vrot.slane %v8732, 7
      %v8782 = vsel %vm8210, %v8781, %v8731
      %v8783 = vrot.slane %v8733, 6
      %v8784 = vsel %vm8213, %v8783, %v8782
      %v8785 = vrot.slane %v8734, 5
      %v8786 = vsel %vm8216, %v8785, %v8784
      %v8787 = vrot.slane %v8735, 4
      %v8788 = vsel %vm8219, %v8787, %v8786
      %v8789 = vrot.slane %v8736, 3
      %v8790 = vsel %vm8222, %v8789, %v8788
      %v8791 = vrot.slane %v8737, 2
      %v8792 = vsel %vm8225, %v8791, %v8790
      %v8793 = vrot.slane %v8738, 1
      %v8794 = vsel %vm8228, %v8793, %v8792
      %v8795 = vpack.c.b16 %v8766, %v8752
      %v8796 = vpack.c.b16 %v8794, %v8780
      %v8815 = vunpack.c.l.b16 %v8659
      %v8816 = vunpack.c.l.b16 %v8660
      %v8817 = vunpack.c.l.b16 %v8661
      %v8818 = vunpack.c.l.b16 %v8662
      %v8819 = vunpack.c.l.b16 %v8663
      %v8820 = vunpack.c.l.b16 %v8664
      %v8821 = vunpack.c.l.b16 %v8665
      %v8822 = vunpack.c.l.b16 %v8666
      %v8823 = vunpack.c.l.b16 %v8667
      %v8824 = vunpack.c.l.b16 %v8668
      %v8825 = vunpack.c.l.b16 %v8669
      %v8826 = vunpack.c.l.b16 %v8670
      %v8827 = vunpack.c.l.b16 %v8671
      %v8828 = vunpack.c.l.b16 %v8672
      %v8829 = vunpack.c.l.b16 %v8673
      %v8830 = vunpack.c.l.b16 %v8674
      %v8831 = vpack.c.b16 %v8816, %v8815
      %v8832 = vpack.c.b16 %v8818, %v8817
      %v8833 = vpack.c.b16 %v8820, %v8819
      %v8834 = vpack.c.b16 %v8822, %v8821
      %v8835 = vpack.c.b16 %v8824, %v8823
      %v8836 = vpack.c.b16 %v8826, %v8825
      %v8837 = vpack.c.b16 %v8828, %v8827
      %v8838 = vpack.c.b16 %v8830, %v8829
      %8847 = vmatprep.subr.bf16.mxu0 0
      %8848 = vmatpush1.bf16.msra.mxu0 %v8831
      %8849 = vmatprep.subr.bf16.mxu0 0
      %8850 = vmatpush1.bf16.msra.mxu0 %v8832
      %8851 = vmatprep.subr.bf16.mxu0 0
      %8852 = vmatpush1.bf16.msra.mxu0 %v8833
      %8853 = vmatprep.subr.bf16.mxu0 0
      %8854 = vmatpush1.bf16.msra.mxu0 %v8834
      %8855 = vmatprep.subr.bf16.mxu0 0
      %8856 = vmatpush1.bf16.msra.mxu0 %v8835
      %8857 = vmatprep.subr.bf16.mxu0 0
      %8858 = vmatpush1.bf16.msra.mxu0 %v8836
      %8859 = vmatprep.subr.bf16.mxu0 0
      %8860 = vmatpush1.bf16.msra.mxu0 %v8837
      %8861 = vmatprep.subr.bf16.mxu0 0
      %8862 = vmatpush1.bf16.msra.mxu0 %v8838
      %8863 = vmatprep.subr.bf16.mxu0 0
      %8864 = vmatpush1.bf16.msra.mxu0 0
      %8865 = vmatprep.subr.bf16.mxu0 0
      %8866 = vmatpush1.bf16.msra.mxu0 0
      %8867 = vmatprep.subr.bf16.mxu0 0
      %8868 = vmatpush1.bf16.msra.mxu0 0
      %8869 = vmatprep.subr.bf16.mxu0 0
      %8870 = vmatpush1.bf16.msra.mxu0 0
      %8871 = vmatprep.subr.bf16.mxu0 0
      %8872 = vmatpush1.bf16.msra.mxu0 0
      %8873 = vmatprep.subr.bf16.mxu0 0
      %8874 = vmatpush1.bf16.msra.mxu0 0
      %8875 = vmatprep.subr.bf16.mxu0 0
      %8876 = vmatpush1.bf16.msra.mxu0 0
      %8877 = vmatprep.subr.bf16.mxu0 0
      %8878 = vmatpush1.bf16.msra.mxu0 0
      %8879 = vmatprep.mubr.bf16.mxu0 0
      %8880 = vmatmul.mubr.bf16.gmra.mrb[0].mxu0 %v8795
      %v8881 = vpop.f32.mrb[0].mxu0
      %v8882 = vadd.f32 0.0, %v8881
      %v8883 = vpop.f32.mrb[0].mxu0
      %v8884 = vpop.f32.mrb[0].mxu0
      %v8885 = vadd.f32 0.0, %v8884
      %v8886 = vpop.f32.mrb[0].mxu0
      %8887 = vmatprep.mubr.bf16.mxu0 0
      %8888 = vmatmul.mubr.bf16.gmra.mrb[0].mxu0 %v8796
      %v8889 = vpop.f32.mrb[0].mxu0
      %v8890 = vadd.f32 0.0, %v8889
      %v8891 = vpop.f32.mrb[0].mxu0
      %v8892 = vpop.f32.mrb[0].mxu0
      %v8893 = vadd.f32 0.0, %v8892
      %v8894 = vpop.f32.mrb[0].mxu0
      %8895 = vdwg.mxu0
      %v8896 = vadd.f32 %v8580, %v8882
      %v8897 = vadd.f32 %v8583, %v8885
      %v8898 = vadd.f32 %v8588, %v8890
      %v8899 = vadd.f32 %v8591, %v8893
      %v8900 = vld [vmem:[#allocation5 + $0x3] sm:$0x1]
      %v8901 = vld [vmem:[#allocation5 + $0x7] sm:$0x1]
      %v8902 = vld [vmem:[#allocation5 + $0xb] sm:$0x1]
      %v8903 = vld [vmem:[#allocation5 + $0xf] sm:$0x1]
      %v8904 = vld [vmem:[#allocation5 + $0x13] sm:$0x1]
      %v8905 = vld [vmem:[#allocation5 + $0x17] sm:$0x1]
      %v8906 = vld [vmem:[#allocation5 + $0x1b] sm:$0x1]
      %v8907 = vld [vmem:[#allocation5 + $0x1f] sm:$0x1]
      %v8908 = vld [vmem:[#allocation5 + $0x23] sm:$0x1]
      %v8909 = vld [vmem:[#allocation5 + $0x27] sm:$0x1]
      %v8910 = vld [vmem:[#allocation5 + $0x2b] sm:$0x1]
      %v8911 = vld [vmem:[#allocation5 + $0x2f] sm:$0x1]
      %v8912 = vld [vmem:[#allocation5 + $0x33] sm:$0x1]
      %v8913 = vld [vmem:[#allocation5 + $0x37] sm:$0x1]
      %v8914 = vld [vmem:[#allocation5 + $0x3b] sm:$0x1]
      %v8915 = vld [vmem:[#allocation5 + $0x3f] sm:$0x1]
      %v8916 = vld [vmem:[#allocation5 + $0x43] sm:$0x1]
      %v8917 = vld [vmem:[#allocation5 + $0x47] sm:$0x1]
      %v8918 = vld [vmem:[#allocation5 + $0x4b] sm:$0x1]
      %v8919 = vld [vmem:[#allocation5 + $0x4f] sm:$0x1]
      %v8920 = vld [vmem:[#allocation5 + $0x53] sm:$0x1]
      %v8921 = vld [vmem:[#allocation5 + $0x57] sm:$0x1]
      %v8922 = vld [vmem:[#allocation5 + $0x5b] sm:$0x1]
      %v8923 = vld [vmem:[#allocation5 + $0x5f] sm:$0x1]
      %v8924 = vld [vmem:[#allocation5 + $0x63] sm:$0x1]
      %v8925 = vld [vmem:[#allocation5 + $0x67] sm:$0x1]
      %v8926 = vld [vmem:[#allocation5 + $0x6b] sm:$0x1]
      %v8927 = vld [vmem:[#allocation5 + $0x6f] sm:$0x1]
      %v8928 = vld [vmem:[#allocation5 + $0x73] sm:$0x1]
      %v8929 = vld [vmem:[#allocation5 + $0x77] sm:$0x1]
      %v8930 = vld [vmem:[#allocation5 + $0x7b] sm:$0x1]
      %v8931 = vld [vmem:[#allocation5 + $0x7f] sm:$0x1]
      %v8932 = vpack.c.bf16 %v8900, %v8900
      %v8933 = vpack.c.bf16 %v8901, %v8901
      %v8934 = vpack.c.bf16 %v8902, %v8902
      %v8935 = vpack.c.bf16 %v8903, %v8903
      %v8936 = vpack.c.bf16 %v8904, %v8904
      %v8937 = vpack.c.bf16 %v8905, %v8905
      %v8938 = vpack.c.bf16 %v8906, %v8906
      %v8939 = vpack.c.bf16 %v8907, %v8907
      %v8940 = vpack.c.bf16 %v8908, %v8908
      %v8941 = vpack.c.bf16 %v8909, %v8909
      %v8942 = vpack.c.bf16 %v8910, %v8910
      %v8943 = vpack.c.bf16 %v8911, %v8911
      %v8944 = vpack.c.bf16 %v8912, %v8912
      %v8945 = vpack.c.bf16 %v8913, %v8913
      %v8946 = vpack.c.bf16 %v8914, %v8914
      %v8947 = vpack.c.bf16 %v8915, %v8915
      %v8948 = vpack.c.bf16 %v8916, %v8916
      %v8949 = vpack.c.bf16 %v8917, %v8917
      %v8950 = vpack.c.bf16 %v8918, %v8918
      %v8951 = vpack.c.bf16 %v8919, %v8919
      %v8952 = vpack.c.bf16 %v8920, %v8920
      %v8953 = vpack.c.bf16 %v8921, %v8921
      %v8954 = vpack.c.bf16 %v8922, %v8922
      %v8955 = vpack.c.bf16 %v8923, %v8923
      %v8956 = vpack.c.bf16 %v8924, %v8924
      %v8957 = vpack.c.bf16 %v8925, %v8925
      %v8958 = vpack.c.bf16 %v8926, %v8926
      %v8959 = vpack.c.bf16 %v8927, %v8927
      %v8960 = vpack.c.bf16 %v8928, %v8928
      %v8961 = vpack.c.bf16 %v8929, %v8929
      %v8962 = vpack.c.bf16 %v8930, %v8930
      %v8963 = vpack.c.bf16 %v8931, %v8931
      %s8964 = scalar_lea.vmem %s5, 192
      %v8965 = vld [vmem:[%s8964] sm:$0xf]
      %v8966 = vld [vmem:[%s8964 + $0x4] sm:$0xf]
      %v8967 = vld [vmem:[%s8964 + $0x8] sm:$0xf]
      %v8968 = vld [vmem:[%s8964 + $0xc] sm:$0xf]
      %v8969 = vld [vmem:[%s8964 + $0x10] sm:$0xf]
      %v8970 = vld [vmem:[%s8964 + $0x14] sm:$0xf]
      %v8971 = vld [vmem:[%s8964 + $0x18] sm:$0xf]
      %v8972 = vld [vmem:[%s8964 + $0x1c] sm:$0xf]
      %v8973 = vld [vmem:[%s8964 + $0x20] sm:$0xf]
      %v8974 = vld [vmem:[%s8964 + $0x24] sm:$0xf]
      %v8975 = vld [vmem:[%s8964 + $0x28] sm:$0xf]
      %v8976 = vld [vmem:[%s8964 + $0x2c] sm:$0xf]
      %v8977 = vld [vmem:[%s8964 + $0x30] sm:$0xf]
      %v8978 = vld [vmem:[%s8964 + $0x34] sm:$0xf]
      %v8979 = vld [vmem:[%s8964 + $0x38] sm:$0xf]
      %v8980 = vld [vmem:[%s8964 + $0x3c] sm:$0xf]
      %v9013 = vunpack.c.l.b16 %v8932
      %v9014 = vunpack.c.l.b16 %v8933
      %v9015 = vunpack.c.l.b16 %v8934
      %v9016 = vunpack.c.l.b16 %v8935
      %v9017 = vunpack.c.l.b16 %v8936
      %v9018 = vunpack.c.l.b16 %v8937
      %v9019 = vunpack.c.l.b16 %v8938
      %v9020 = vunpack.c.l.b16 %v8939
      %v9021 = vunpack.c.l.b16 %v8940
      %v9022 = vunpack.c.l.b16 %v8941
      %v9023 = vunpack.c.l.b16 %v8942
      %v9024 = vunpack.c.l.b16 %v8943
      %v9025 = vunpack.c.l.b16 %v8944
      %v9026 = vunpack.c.l.b16 %v8945
      %v9027 = vunpack.c.l.b16 %v8946
      %v9028 = vunpack.c.l.b16 %v8947
      %v9029 = vunpack.c.l.b16 %v8948
      %v9030 = vunpack.c.l.b16 %v8949
      %v9031 = vunpack.c.l.b16 %v8950
      %v9032 = vunpack.c.l.b16 %v8951
      %v9033 = vunpack.c.l.b16 %v8952
      %v9034 = vunpack.c.l.b16 %v8953
      %v9035 = vunpack.c.l.b16 %v8954
      %v9036 = vunpack.c.l.b16 %v8955
      %v9037 = vunpack.c.l.b16 %v8956
      %v9038 = vunpack.c.l.b16 %v8957
      %v9039 = vunpack.c.l.b16 %v8958
      %v9040 = vunpack.c.l.b16 %v8959
      %v9041 = vunpack.c.l.b16 %v8960
      %v9042 = vunpack.c.l.b16 %v8961
      %v9043 = vunpack.c.l.b16 %v8962
      %v9044 = vunpack.c.l.b16 %v8963
      %v9045 = vrot.slane %v9014, 7
      %v9046 = vsel %vm8210, %v9045, %v9013
      %v9047 = vrot.slane %v9015, 6
      %v9048 = vsel %vm8213, %v9047, %v9046
      %v9049 = vrot.slane %v9016, 5
      %v9050 = vsel %vm8216, %v9049, %v9048
      %v9051 = vrot.slane %v9017, 4
      %v9052 = vsel %vm8219, %v9051, %v9050
      %v9053 = vrot.slane %v9018, 3
      %v9054 = vsel %vm8222, %v9053, %v9052
      %v9055 = vrot.slane %v9019, 2
      %v9056 = vsel %vm8225, %v9055, %v9054
      %v9057 = vrot.slane %v9020, 1
      %v9058 = vsel %vm8228, %v9057, %v9056
      %v9059 = vrot.slane %v9022, 7
      %v9060 = vsel %vm8210, %v9059, %v9021
      %v9061 = vrot.slane %v9023, 6
      %v9062 = vsel %vm8213, %v9061, %v9060
      %v9063 = vrot.slane %v9024, 5
      %v9064 = vsel %vm8216, %v9063, %v9062
      %v9065 = vrot.slane %v9025, 4
      %v9066 = vsel %vm8219, %v9065, %v9064
      %v9067 = vrot.slane %v9026, 3
      %v9068 = vsel %vm8222, %v9067, %v9066
      %v9069 = vrot.slane %v9027, 2
      %v9070 = vsel %vm8225, %v9069, %v9068
      %v9071 = vrot.slane %v9028, 1
      %v9072 = vsel %vm8228, %v9071, %v9070
      %v9073 = vrot.slane %v9030, 7
      %v9074 = vsel %vm8210, %v9073, %v9029
      %v9075 = vrot.slane %v9031, 6
      %v9076 = vsel %vm8213, %v9075, %v9074
      %v9077 = vrot.slane %v9032, 5
      %v9078 = vsel %vm8216, %v9077, %v9076
      %v9079 = vrot.slane %v9033, 4
      %v9080 = vsel %vm8219, %v9079, %v9078
      %v9081 = vrot.slane %v9034, 3
      %v9082 = vsel %vm8222, %v9081, %v9080
      %v9083 = vrot.slane %v9035, 2
      %v9084 = vsel %vm8225, %v9083, %v9082
      %v9085 = vrot.slane %v9036, 1
      %v9086 = vsel %vm8228, %v9085, %v9084
      %v9087 = vrot.slane %v9038, 7
      %v9088 = vsel %vm8210, %v9087, %v9037
      %v9089 = vrot.slane %v9039, 6
      %v9090 = vsel %vm8213, %v9089, %v9088
      %v9091 = vrot.slane %v9040, 5
      %v9092 = vsel %vm8216, %v9091, %v9090
      %v9093 = vrot.slane %v9041, 4
      %v9094 = vsel %vm8219, %v9093, %v9092
      %v9095 = vrot.slane %v9042, 3
      %v9096 = vsel %vm8222, %v9095, %v9094
      %v9097 = vrot.slane %v9043, 2
      %v9098 = vsel %vm8225, %v9097, %v9096
      %v9099 = vrot.slane %v9044, 1
      %v9100 = vsel %vm8228, %v9099, %v9098
      %v9101 = vpack.c.b16 %v9072, %v9058
      %v9102 = vpack.c.b16 %v9100, %v9086
      %v9121 = vunpack.c.l.b16 %v8965
      %v9122 = vunpack.c.l.b16 %v8966
      %v9123 = vunpack.c.l.b16 %v8967
      %v9124 = vunpack.c.l.b16 %v8968
      %v9125 = vunpack.c.l.b16 %v8969
      %v9126 = vunpack.c.l.b16 %v8970
      %v9127 = vunpack.c.l.b16 %v8971
      %v9128 = vunpack.c.l.b16 %v8972
      %v9129 = vunpack.c.l.b16 %v8973
      %v9130 = vunpack.c.l.b16 %v8974
      %v9131 = vunpack.c.l.b16 %v8975
      %v9132 = vunpack.c.l.b16 %v8976
      %v9133 = vunpack.c.l.b16 %v8977
      %v9134 = vunpack.c.l.b16 %v8978
      %v9135 = vunpack.c.l.b16 %v8979
      %v9136 = vunpack.c.l.b16 %v8980
      %v9137 = vpack.c.b16 %v9122, %v9121
      %v9138 = vpack.c.b16 %v9124, %v9123
      %v9139 = vpack.c.b16 %v9126, %v9125
      %v9140 = vpack.c.b16 %v9128, %v9127
      %v9141 = vpack.c.b16 %v9130, %v9129
      %v9142 = vpack.c.b16 %v9132, %v9131
      %v9143 = vpack.c.b16 %v9134, %v9133
      %v9144 = vpack.c.b16 %v9136, %v9135
      %9153 = vmatprep.subr.bf16.mxu0 0
      %9154 = vmatpush1.bf16.msra.mxu0 %v9137
      %9155 = vmatprep.subr.bf16.mxu0 0
      %9156 = vmatpush1.bf16.msra.mxu0 %v9138
      %9157 = vmatprep.subr.bf16.mxu0 0
      %9158 = vmatpush1.bf16.msra.mxu0 %v9139
      %9159 = vmatprep.subr.bf16.mxu0 0
      %9160 = vmatpush1.bf16.msra.mxu0 %v9140
      %9161 = vmatprep.subr.bf16.mxu0 0
      %9162 = vmatpush1.bf16.msra.mxu0 %v9141
      %9163 = vmatprep.subr.bf16.mxu0 0
      %9164 = vmatpush1.bf16.msra.mxu0 %v9142
      %9165 = vmatprep.subr.bf16.mxu0 0
      %9166 = vmatpush1.bf16.msra.mxu0 %v9143
      %9167 = vmatprep.subr.bf16.mxu0 0
      %9168 = vmatpush1.bf16.msra.mxu0 %v9144
      %9169 = vmatprep.subr.bf16.mxu0 0
      %9170 = vmatpush1.bf16.msra.mxu0 0
      %9171 = vmatprep.subr.bf16.mxu0 0
      %9172 = vmatpush1.bf16.msra.mxu0 0
      %9173 = vmatprep.subr.bf16.mxu0 0
      %9174 = vmatpush1.bf16.msra.mxu0 0
      %9175 = vmatprep.subr.bf16.mxu0 0
      %9176 = vmatpush1.bf16.msra.mxu0 0
      %9177 = vmatprep.subr.bf16.mxu0 0
      %9178 = vmatpush1.bf16.msra.mxu0 0
      %9179 = vmatprep.subr.bf16.mxu0 0
      %9180 = vmatpush1.bf16.msra.mxu0 0
      %9181 = vmatprep.subr.bf16.mxu0 0
      %9182 = vmatpush1.bf16.msra.mxu0 0
      %9183 = vmatprep.subr.bf16.mxu0 0
      %9184 = vmatpush1.bf16.msra.mxu0 0
      %9185 = vmatprep.mubr.bf16.mxu0 0
      %9186 = vmatmul.mubr.bf16.gmra.mrb[0].mxu0 %v9101
      %v9187 = vpop.f32.mrb[0].mxu0
      %v9188 = vadd.f32 0.0, %v9187
      %v9189 = vpop.f32.mrb[0].mxu0
      %v9190 = vpop.f32.mrb[0].mxu0
      %v9191 = vadd.f32 0.0, %v9190
      %v9192 = vpop.f32.mrb[0].mxu0
      %9193 = vmatprep.mubr.bf16.mxu0 0
      %9194 = vmatmul.mubr.bf16.gmra.mrb[0].mxu0 %v9102
      %v9195 = vpop.f32.mrb[0].mxu0
      %v9196 = vadd.f32 0.0, %v9195
      %v9197 = vpop.f32.mrb[0].mxu0
      %v9198 = vpop.f32.mrb[0].mxu0
      %v9199 = vadd.f32 0.0, %v9198
      %v9200 = vpop.f32.mrb[0].mxu0
      %9201 = vdwg.mxu0
      %v9202 = vadd.f32 %v8896, %v9188
      %v9203 = vadd.f32 %v8897, %v9191
      %v9204 = vadd.f32 %v8898, %v9196
      %v9205 = vadd.f32 %v8899, %v9199
      %v9206 = vld [vmem:[%s6] sm:$0x1]
      %v9208 = vlaneseq
      %v9209 = vshrl.u32 %v9208, 7
      %v9210 = vsub.s32 0, %v9209
      %v9211 = vrot.slane %v9206, %v9210
      %v9213 = vadd.f32 %v9202, %v9211
      %v9214 = vadd.f32 %v9203, %v9211
      %v9215 = vadd.f32 %v9204, %v9211
      %v9216 = vadd.f32 %v9205, %v9211
      %v9217 = vmax.f32 %v9213, 0.0
      %v9218 = vmax.f32 %v9214, 0.0
      %v9219 = vmax.f32 %v9215, 0.0
      %v9220 = vmax.f32 %v9216, 0.0
      %v9221 = vpack.c.bf16 %v9218, %v9217
      %v9222 = vpack.c.bf16 %v9220, %v9219
      %v9223 = vld [vmem:[%s7] sm:$0xf]
      %v9224 = vld [vmem:[%s7 + $0x4] sm:$0xf]
      %v9225 = vld [vmem:[%s7 + $0x8] sm:$0xf]
      %v9226 = vld [vmem:[%s7 + $0xc] sm:$0xf]
      %v9227 = vld [vmem:[%s7 + $0x10] sm:$0xf]
      %v9228 = vld [vmem:[%s7 + $0x14] sm:$0xf]
      %v9229 = vld [vmem:[%s7 + $0x18] sm:$0xf]
      %v9230 = vld [vmem:[%s7 + $0x1c] sm:$0xf]
      %v9231 = vld [vmem:[%s7 + $0x20] sm:$0xf]
      %v9232 = vld [vmem:[%s7 + $0x24] sm:$0xf]
      %v9233 = vld [vmem:[%s7 + $0x28] sm:$0xf]
      %v9234 = vld [vmem:[%s7 + $0x2c] sm:$0xf]
      %v9235 = vld [vmem:[%s7 + $0x30] sm:$0xf]
      %v9236 = vld [vmem:[%s7 + $0x34] sm:$0xf]
      %v9237 = vld [vmem:[%s7 + $0x38] sm:$0xf]
      %v9238 = vld [vmem:[%s7 + $0x3c] sm:$0xf]
      %v9239 = vld [vmem:[%s8] sm:$0x1]
      %v9241 = vlaneseq
      %v9242 = vshrl.u32 %v9241, 7
      %v9243 = vsub.s32 0, %v9242
      %v9244 = vrot.slane %v9239, %v9243
      %v9262 = vunpack.c.l.b16 %v9223
      %v9263 = vunpack.c.l.b16 %v9224
      %v9264 = vunpack.c.l.b16 %v9225
      %v9265 = vunpack.c.l.b16 %v9226
      %v9266 = vunpack.c.l.b16 %v9227
      %v9267 = vunpack.c.l.b16 %v9228
      %v9268 = vunpack.c.l.b16 %v9229
      %v9269 = vunpack.c.l.b16 %v9230
      %v9270 = vunpack.c.l.b16 %v9231
      %v9271 = vunpack.c.l.b16 %v9232
      %v9272 = vunpack.c.l.b16 %v9233
      %v9273 = vunpack.c.l.b16 %v9234
      %v9274 = vunpack.c.l.b16 %v9235
      %v9275 = vunpack.c.l.b16 %v9236
      %v9276 = vunpack.c.l.b16 %v9237
      %v9277 = vunpack.c.l.b16 %v9238
      %v9278 = vpack.c.b16 %v9263, %v9262
      %v9279 = vpack.c.b16 %v9265, %v9264
      %v9280 = vpack.c.b16 %v9267, %v9266
      %v9281 = vpack.c.b16 %v9269, %v9268
      %v9282 = vpack.c.b16 %v9271, %v9270
      %v9283 = vpack.c.b16 %v9273, %v9272
      %v9284 = vpack.c.b16 %v9275, %v9274
      %v9285 = vpack.c.b16 %v9277, %v9276
      %9294 = vmatprep.subr.bf16.mxu0 0
      %9295 = vmatpush1.bf16.msra.mxu0 %v9278
      %9296 = vmatprep.subr.bf16.mxu0 0
      %9297 = vmatpush1.bf16.msra.mxu0 %v9279
      %9298 = vmatprep.subr.bf16.mxu0 0
      %9299 = vmatpush1.bf16.msra.mxu0 %v9280
      %9300 = vmatprep.subr.bf16.mxu0 0
      %9301 = vmatpush1.bf16.msra.mxu0 %v9281
      %9302 = vmatprep.subr.bf16.mxu0 0
      %9303 = vmatpush1.bf16.msra.mxu0 %v9282
      %9304 = vmatprep.subr.bf16.mxu0 0
      %9305 = vmatpush1.bf16.msra.mxu0 %v9283
      %9306 = vmatprep.subr.bf16.mxu0 0
      %9307 = vmatpush1.bf16.msra.mxu0 %v9284
      %9308 = vmatprep.subr.bf16.mxu0 0
      %9309 = vmatpush1.bf16.msra.mxu0 %v9285
      %9310 = vmatprep.subr.bf16.mxu0 0
      %9311 = vmatpush1.bf16.msra.mxu0 0
      %9312 = vmatprep.subr.bf16.mxu0 0
      %9313 = vmatpush1.bf16.msra.mxu0 0
      %9314 = vmatprep.subr.bf16.mxu0 0
      %9315 = vmatpush1.bf16.msra.mxu0 0
      %9316 = vmatprep.subr.bf16.mxu0 0
      %9317 = vmatpush1.bf16.msra.mxu0 0
      %9318 = vmatprep.subr.bf16.mxu0 0
      %9319 = vmatpush1.bf16.msra.mxu0 0
      %9320 = vmatprep.subr.bf16.mxu0 0
      %9321 = vmatpush1.bf16.msra.mxu0 0
      %9322 = vmatprep.subr.bf16.mxu0 0
      %9323 = vmatpush1.bf16.msra.mxu0 0
      %9324 = vmatprep.subr.bf16.mxu0 0
      %9325 = vmatpush1.bf16.msra.mxu0 0
      %9326 = vmatprep.mubr.bf16.mxu0 0
      %9327 = vmatmul.mubr.bf16.gmra.mrb[0].mxu0 %v9221
      %v9328 = vpop.f32.mrb[0].mxu0
      %v9329 = vadd.f32 %v9244, %v9328
      %v9330 = vpop.f32.mrb[0].mxu0
      %v9331 = vpop.f32.mrb[0].mxu0
      %v9332 = vadd.f32 %v9244, %v9331
      %v9333 = vpop.f32.mrb[0].mxu0
      %9334 = vmatprep.mubr.bf16.mxu0 0
      %9335 = vmatmul.mubr.bf16.gmra.mrb[0].mxu0 %v9222
      %v9336 = vpop.f32.mrb[0].mxu0
      %v9337 = vadd.f32 %v9244, %v9336
      %v9338 = vpop.f32.mrb[0].mxu0
      %v9339 = vpop.f32.mrb[0].mxu0
      %v9340 = vadd.f32 %v9244, %v9339
      %v9341 = vpop.f32.mrb[0].mxu0
      %9342 = vdwg.mxu0
      %9343 = vmax.xlane.f32.xlu0 %v9329
      %v9344 = vpop.xlane.xlu0 %9343
      %9345 = vmax.xlane.f32.xlu0 %v9332
      %v9346 = vpop.xlane.xlu0 %9345
      %9347 = vmax.xlane.f32.xlu0 %v9337
      %v9348 = vpop.xlane.xlu0 %9347
      %9349 = vmax.xlane.f32.xlu0 %v9340
      %v9350 = vpop.xlane.xlu0 %9349
      %v9351 = vsub.f32 %v9329, %v9344
      %v9352 = vsub.f32 %v9332, %v9346
      %v9353 = vsub.f32 %v9337, %v9348
      %v9354 = vsub.f32 %v9340, %v9350
      %v9355 = vmul.f32 %v9351, 1.442695
      %v9356 = vpow.pop %v9355
      %v9357 = vmul.f32 %v9352, 1.442695
      %v9358 = vpow.pop %v9357
      %v9359 = vmul.f32 %v9353, 1.442695
      %v9360 = vpow.pop %v9359
      %v9361 = vmul.f32 %v9354, 1.442695
      %v9362 = vpow.pop %v9361
      %9363 = vadd.xlane.f32.xlu0 %v9356
      %v9364 = vpop.xlane.xlu0 %9363
      %9365 = vadd.xlane.f32.xlu0 %v9358
      %v9366 = vpop.xlane.xlu0 %9365
      %9367 = vadd.xlane.f32.xlu0 %v9360
      %v9368 = vpop.xlane.xlu0 %9367
      %9369 = vadd.xlane.f32.xlu0 %v9362
      %v9370 = vpop.xlane.xlu0 %9369
      %v9371 = vlog2.pop %v9364
      %v9372 = vmul.f32 %v9371, 0.6931472
      %v9373 = vlog2.pop %v9366
      %v9374 = vmul.f32 %v9373, 0.6931472
      %v9375 = vlog2.pop %v9368
      %v9376 = vmul.f32 %v9375, 0.6931472
      %v9377 = vlog2.pop %v9370
      %v9378 = vmul.f32 %v9377, 0.6931472
      %v9379 = vadd.f32 %v9344, %v9372
      %v9380 = vadd.f32 %v9346, %v9374
      %v9381 = vadd.f32 %v9348, %v9376
      %v9382 = vadd.f32 %v9350, %v9378
      %v9383 = vsub.f32 %v9329, %v9379
      %v9384 = vsub.f32 %v9332, %v9380
      %v9385 = vsub.f32 %v9337, %v9381
      %v9386 = vsub.f32 %v9340, %v9382
      %9387 = vst [vmem:[%s337] sm:$0xff] %v9383
      %9388 = vst [vmem:[%s337 + $0x8] sm:$0xff] %v9384
      %9389 = vst [vmem:[%s337 + $0x10] sm:$0xff] %v9385
      %9390 = vst [vmem:[%s337 + $0x18] sm:$0xff] %v9386
      %s9391 = smul.u32 4, %s20
      %p9392 = scmp.lt.s32.totalorder %s9391, 7
      %s9393 = scalar_select %p9392, %s9391, 7
      %s9394 = smul.addr %s9393, 8
      %s9395 = scalar_lea.vmem %s9, %s9394
      // Predicated region
      $region57: #{_lambda_.1} parent=55 // pred_check
        %p9396 = pneg %p232
      $region58: #{_lambda_.1} parent=55 // pred_check_branch
        %9398 = sbr.rel (%p9396) target = $region60
      $region59: #{_lambda_.1} parent=55 // pred_region
        %s9399 = smul.u32 4, %s20
      $region60: #{_lambda_.1} parent=55 // pred_fallthru
        _
    $region56: #{_lambda_.1} parent=5 // pred_fallthru
      _
    %p9400 = scmp.le.s32.totalorder 2, %s15
    // Predicated region
    $region61: #{_lambda_.1} parent=5 // pred_check
      %p9401 = pneg %p9400
    $region62: #{_lambda_.1} parent=5 // pred_check_branch
      %9403 = sbr.rel (%p9401) target = $region64
    $region63: #{_lambda_.1} parent=5 // pred_region
      %s9404 = ssub.s32 %s15, 2
      // Predicated region
      $region65: #{_lambda_.1} parent=63 // pred_check
        %p9405 = pneg %p238
      $region66: #{_lambda_.1} parent=63 // pred_check_branch
        %9407 = sbr.rel (%p9405) target = $region68
      $region67: #{_lambda_.1} parent=63 // pred_region
        %s9408 = smul.u32 4, %s21
        %p9409 = scmp.lt.s32.totalorder %s9408, 7
        %s9410 = scalar_select %p9409, %s9408, 7
        %s9411 = smul.addr %s9410, 8
        %s9412 = scalar_lea.vmem %s9, %s9411
      $region68: #{_lambda_.1} parent=63 // pred_fallthru
        _
    $region64: #{_lambda_.1} parent=5 // pred_fallthru
      _
  $region6: #{_lambda_.1} parent=0 // loop_footer
    %s19 = sadd.s32 1, %s15
  $region7: #{_lambda_.1} parent=0 // loop_footer_branch
    %14 = sbr.rel target = $region3
  $region8: #{_lambda_.1} parent=0 // loop_exit
    _

</llo_original>
